<compile_context>
chip_gen: v7x
topology: tpu7x:2x2x1
jax: 0.10.0
libtpu: 0.0.40
codegen_flags: <defaults>
</compile_context>

<pallas_src>
import functools

import numpy as np
import jax
import jax.numpy as jnp
from jax import lax
from jax.experimental import pallas as pl
from jax.experimental.pallas import tpu as pltpu

NUM_NODES = 33
SKELETON_EDGES = [(0, 1), (1, 2), (2, 3), (3, 7), (0, 4), (4, 5), (5, 6), (6, 8),
                  (9, 10), (11, 12), (11, 23), (12, 24), (23, 24), (11, 13),
                  (13, 15), (15, 17), (15, 19), (15, 21), (17, 19), (12, 14),
                  (14, 16), (16, 18), (16, 20), (16, 22), (18, 20), (23, 25),
                  (25, 27), (27, 29), (27, 31), (29, 31), (24, 26), (26, 28),
                  (28, 30), (28, 32), (30, 32)]

IN_FEAT = 4          # input features per node
NUM_CLASSES = 5
TKS = 9              # temporal kernel size
PAD = (TKS - 1) // 2
C1, C2 = 64, 128     # hidden channels of the two ST-GCN blocks
BN_EPS = 1e-5


def build_adjacency_matrix(num_nodes, edges):
    """Normalized adjacency D^-1/2 (A + I) D^-1/2 (same as the PyTorch code)."""
    adj = np.zeros((num_nodes, num_nodes), dtype=np.float32)
    for i, j in edges:
        adj[i, j] = 1.0
        adj[j, i] = 1.0
    adj = adj + np.eye(num_nodes, dtype=np.float32)
    row_sum = adj.sum(1)
    d_inv_sqrt = np.power(row_sum, -0.5)
    d_inv_sqrt[np.isinf(d_inv_sqrt)] = 0.0
    d = np.diag(d_inv_sqrt)
    return (d @ adj @ d).astype(np.float32)


def stgcn_kernel(x_ref, adj_ref, poolw_ref,
                 w1_ref, b1_ref, bg1_ref, wt1_ref, bt1_ref,
                 w2_ref, b2_ref, bg2_ref, wt2_ref, bt2_ref,
                 wfc_ref, bfc_ref,
                 out_ref,
                 h1_ref, h2_ref,
                 *, T, NP):
    """One batch element per grid step; matmuls are bf16 with f32 accumulation."""
    f32, bf16 = jnp.float32, jnp.bfloat16
    TN = T * NP                      # rows of one (time, node) slab
    POFF = PAD * NP                  # temporal pad offset (rows)
    TPN = (T + 2 * PAD) * NP         # rows of the temporally-padded slab

    adj = adj_ref[...]               # (NP, NP) bf16, zero rows/cols for padded nodes
    x = x_ref[0].astype(bf16)        # (TN, Cin)

    # ---------------- Block 1: fused [GCN-support | residual] projection ----------------
    proj1 = jnp.dot(x, w1_ref[...], preferred_element_type=f32) + b1_ref[...]   # (TN, 2*C1)
    sup1 = proj1[:, :C1].astype(bf16)     # includes folded input-BN shift (pre-adjacency)
    res1 = proj1[:, C1:]                  # f32 residual branch

    # per-timestep adjacency, bias, relu -> temporally padded bf16 scratch
    h1_ref[0:POFF, :] = jnp.zeros((POFF, C1), bf16)
    h1_ref[POFF + TN:TPN, :] = jnp.zeros((TPN - POFF - TN, C1), bf16)
    bg1 = bg1_ref[...]
    for t in range(T):
        g_t = jnp.dot(adj, sup1[t * NP:(t + 1) * NP, :],
                      preferred_element_type=f32) + bg1
        h1_ref[POFF + t * NP:POFF + (t + 1) * NP, :] = jnp.maximum(g_t, 0.0).astype(bf16)

    # fused 9-tap temporal conv: one (TN, TKS*C1) @ (TKS*C1, C1) matmul (bn1 folded)
    slab1 = jnp.concatenate(
        [h1_ref[k * NP:k * NP + TN, :] for k in range(TKS)], axis=1)            # (TN, 576)
    tcn1 = jnp.dot(slab1, wt1_ref[...], preferred_element_type=f32) + bt1_ref[...]
    y1 = jnp.maximum(tcn1, 0.0) + res1                                          # (TN, C1) f32

    # ---------------- Block 2 ----------------
    proj2 = jnp.dot(y1.astype(bf16), w2_ref[...], preferred_element_type=f32) + b2_ref[...]
    sup2 = proj2[:, :C2].astype(bf16)
    res2 = proj2[:, C2:]

    h2_ref[0:POFF, :] = jnp.zeros((POFF, C2), bf16)
    h2_ref[POFF + TN:TPN, :] = jnp.zeros((TPN - POFF - TN, C2), bf16)
    bg2 = bg2_ref[...]
    for t in range(T):
        g_t = jnp.dot(adj, sup2[t * NP:(t + 1) * NP, :],
                      preferred_element_type=f32) + bg2
        h2_ref[POFF + t * NP:POFF + (t + 1) * NP, :] = jnp.maximum(g_t, 0.0).astype(bf16)

    slab2 = jnp.concatenate(
        [h2_ref[k * NP:k * NP + TN, :] for k in range(TKS)], axis=1)            # (TN, 1152)
    tcn2 = jnp.dot(slab2, wt2_ref[...], preferred_element_type=f32) + bt2_ref[...]
    y2 = jnp.maximum(tcn2, 0.0) + res2                                          # (TN, C2) f32

    # ---------------- Masked mean pool (as a matmul) + FC (f32) + sigmoid ----------------
    pooled = jnp.dot(poolw_ref[...], y2.astype(bf16), preferred_element_type=f32)  # (1, C2)
    logits = jnp.dot(pooled, wfc_ref[...], preferred_element_type=f32) + bfc_ref[...]
    out_ref[0] = jax.nn.sigmoid(logits)


def prepare_constants(adj, params, T):
    """One-time host-side prep: node padding, BN folding, weight fusion, bf16 casts."""
    N = NUM_NODES
    NP = 16 * ((N + 15) // 16)                    # pad nodes to a bf16 tile multiple (33 -> 48)
    TN = T * NP
    bf = jnp.bfloat16

    adj_pad = jnp.pad(jnp.asarray(adj, jnp.float32), ((0, NP - N), (0, NP - N)))

    node_mask = (jnp.arange(NP) < N).astype(jnp.float32)
    poolw = (jnp.tile(node_mask, T) / float(T * N)).reshape(1, TN)   # masks padded nodes

    def scale_shift(bn):
        gamma, beta, mean, var = bn[0], bn[1], bn[2], bn[3]          # each (1, C)
        scale = gamma * lax.rsqrt(var + BN_EPS)
        shift = beta - mean * scale
        return scale, shift

    # fold input BN into the block-1 GCN and residual weights
    s_in, sh_in = scale_shift(params["bn_in"])
    wg1f = params["wg1"] * s_in.reshape(-1, 1)
    cg1 = sh_in @ params["wg1"]                   # added to support BEFORE the adjacency
    wr1f = params["wr1"] * s_in.reshape(-1, 1)
    br1f = params["br1"] + sh_in @ params["wr1"]

    # fold the post-tcn BNs into the temporal-conv weights, reshape to (TKS*C, C)
    s1, sh1 = scale_shift(params["bn1"])
    wt1f = (params["wt1"] * s1.reshape(1, 1, -1)).reshape(TKS * C1, C1)
    bt1f = params["bt1"] * s1 + sh1
    s2, sh2 = scale_shift(params["bn2"])
    wt2f = (params["wt2"] * s2.reshape(1, 1, -1)).reshape(TKS * C2, C2)
    bt2f = params["bt2"] * s2 + sh2

    return dict(
        adj=adj_pad.astype(bf),
        poolw=poolw.astype(bf),
        w1=jnp.concatenate([wg1f, wr1f], axis=1).astype(bf),                   # (Cin, 2*C1)
        b1=jnp.concatenate([cg1, br1f], axis=1),                               # (1, 2*C1) f32
        bg1=params["bg1"],
        wt1=wt1f.astype(bf),                                                   # (TKS*C1, C1)
        bt1=bt1f,
        w2=jnp.concatenate([params["wg2"], params["wr2"]], axis=1).astype(bf), # (C1, 2*C2)
        b2=jnp.concatenate([jnp.zeros((1, C2), jnp.float32), params["br2"]], axis=1),
        bg2=params["bg2"],
        wt2=wt2f.astype(bf),                                                   # (TKS*C2, C2)
        bt2=bt2f,
        wfc=params["wfc"],          # final classifier kept f32 (negligible cost)
        bfc=params["bfc"],
    )


def stgcn_forward(x, consts):
    """x: (B, T, N, C) float32 — same axis convention as the PyTorch model input."""
    B, T, N, Cin = x.shape
    NP = consts["adj"].shape[0]
    TN = T * NP
    Tp = T + 2 * PAD

    xp = jnp.pad(x, ((0, 0), (0, 0), (0, NP - N), (0, 0)))
    x2 = xp.reshape(B, TN, Cin)                   # rows ordered (t, n), channels-last

    kernel = functools.partial(stgcn_kernel, T=T, NP=NP)
    vmem = pl.BlockSpec(memory_space=pltpu.MemorySpace.VMEM)

    const_args = (consts["adj"], consts["poolw"],
                  consts["w1"], consts["b1"], consts["bg1"], consts["wt1"], consts["bt1"],
                  consts["w2"], consts["b2"], consts["bg2"], consts["wt2"], consts["bt2"],
                  consts["wfc"], consts["bfc"])
    in_specs = [pl.BlockSpec((1, TN, Cin), lambda b: (b, 0, 0))] + [vmem] * len(const_args)

    out = pl.pallas_call(
        kernel,
        grid=(B,),                                # B=2 splits evenly across v7x's 2 TCs
        out_shape=jax.ShapeDtypeStruct((B, 1, NUM_CLASSES), jnp.float32),
        in_specs=in_specs,
        out_specs=pl.BlockSpec((1, 1, NUM_CLASSES), lambda b: (b, 0, 0)),
        scratch_shapes=[
            pltpu.VMEM((Tp * NP, C1), jnp.bfloat16),   # temporally-padded GCN1 output
            pltpu.VMEM((Tp * NP, C2), jnp.bfloat16),   # temporally-padded GCN2 output
        ],
        compiler_params=pltpu.CompilerParams(
            dimension_semantics=("parallel",)),
    )(x2, *const_args)
    return out.reshape(B, NUM_CLASSES)


def stgcn_reference(x, adj, params):
    """Pure-JAX f32 forward mirroring the PyTorch module (eval-mode BN). For validation."""
    def bn(v, p):
        gamma, beta, mean, var = p[0], p[1], p[2], p[3]
        return (v - mean) * (gamma / jnp.sqrt(var + BN_EPS)) + beta

    def block(v, wg, bg, wt, bt, bnp, wr, br):
        _, T, _, _ = v.shape
        res = jnp.einsum('btnc,cd->btnd', v, wr) + br
        sup = jnp.einsum('btnc,cd->btnd', v, wg)
        g = jnp.einsum('uv,btvd->btud', adj, sup) + bg
        h = jnp.maximum(g, 0.0)
        hp = jnp.pad(h, ((0, 0), (PAD, PAD), (0, 0), (0, 0)))
        tc = bt
        for k in range(TKS):
            tc = tc + jnp.einsum('btnc,cd->btnd', hp[:, k:k + T], wt[k])
        return jnp.maximum(bn(tc, bnp), 0.0) + res

    xb = bn(x, params["bn_in"])
    y1 = block(xb, params["wg1"], params["bg1"], params["wt1"], params["bt1"],
               params["bn1"], params["wr1"], params["br1"])
    y2 = block(y1, params["wg2"], params["bg2"], params["wt2"], params["bt2"],
               params["bn2"], params["wr2"], params["br2"])
    pooled = y2.mean(axis=(1, 2))                          # (B, C2)
    return jax.nn.sigmoid(pooled @ params["wfc"] + params["bfc"])


def init_params(key):
    """Deterministic synthetic parameters (shapes match the PyTorch module)."""
    ks = jax.random.split(key, 14)

    def unif(k, shape, fan):
        s = 1.0 / np.sqrt(fan)
        return jax.random.uniform(k, shape, jnp.float32, -s, s)

    def bn_params(c):
        # gamma, beta, running_mean, running_var (fresh PyTorch BN defaults)
        return jnp.stack([jnp.ones((1, c), jnp.float32),
                          jnp.zeros((1, c), jnp.float32),
                          jnp.zeros((1, c), jnp.float32),
                          jnp.ones((1, c), jnp.float32)])

    return dict(
        bn_in=bn_params(IN_FEAT),
        # block 1
        wg1=unif(ks[0], (IN_FEAT, C1), C1),          # GCN weight (in, out)
        bg1=unif(ks[1], (1, C1), C1),
        wt1=unif(ks[2], (TKS, C1, C1), C1 * TKS),    # temporal conv (k, cin, cout)
        bt1=unif(ks[3], (1, C1), C1 * TKS),
        bn1=bn_params(C1),
        wr1=unif(ks[4], (IN_FEAT, C1), IN_FEAT),     # residual 1x1 conv (cin, cout)
        br1=unif(ks[5], (1, C1), IN_FEAT),
        # block 2
        wg2=unif(ks[6], (C1, C2), C2),
        bg2=unif(ks[7], (1, C2), C2),
        wt2=unif(ks[8], (TKS, C2, C2), C2 * TKS),
        bt2=unif(ks[9], (1, C2), C2 * TKS),
        bn2=bn_params(C2),
        wr2=unif(ks[10], (C1, C2), C1),
        br2=unif(ks[11], (1, C2), C1),
        # classifier
        wfc=unif(ks[12], (C2, NUM_CLASSES), C2),
        bfc=unif(ks[13], (1, NUM_CLASSES), C2),
    )


if __name__ == "__main__":
    key = jax.random.PRNGKey(0)
    k_x, k_p = jax.random.split(key)

    B, T = 2, 8
    x = jax.random.normal(k_x, (B, T, NUM_NODES, IN_FEAT), jnp.float32)
    adj = jnp.asarray(build_adjacency_matrix(NUM_NODES, SKELETON_EDGES))
    params = init_params(k_p)

    consts = prepare_constants(adj, params, T)     # one-time host-side folding / casts
    fwd = jax.jit(stgcn_forward)

    out = fwd(x, consts)
    out = jax.block_until_ready(out)
    ref = stgcn_reference(x, adj, params)

    assert out.shape == (B, NUM_CLASSES)
    assert bool(jnp.all(jnp.isfinite(out)))
    assert bool(jnp.all((out >= 0.0) & (out <= 1.0)))
    # bf16 matmul inputs (f32 accumulation) -> slightly looser tolerance vs f32 reference
    assert np.allclose(np.asarray(out), np.asarray(ref), atol=1e-2, rtol=1e-2)
    print("KERNEL_OK")
</pallas_src>

<mosaic_0001>
module attributes {stable_mosaic.version = 11 : i64} {
  func.func @stgcn_kernel(%arg0: i32, %arg1: memref<1x384x4xf32, #tpu.memory_space<vmem>>, %arg2: memref<48x48xbf16, #tpu.memory_space<vmem>>, %arg3: memref<1x384xbf16, #tpu.memory_space<vmem>>, %arg4: memref<4x128xbf16, #tpu.memory_space<vmem>>, %arg5: memref<1x128xf32, #tpu.memory_space<vmem>>, %arg6: memref<1x64xf32, #tpu.memory_space<vmem>>, %arg7: memref<576x64xbf16, #tpu.memory_space<vmem>>, %arg8: memref<1x64xf32, #tpu.memory_space<vmem>>, %arg9: memref<64x256xbf16, #tpu.memory_space<vmem>>, %arg10: memref<1x256xf32, #tpu.memory_space<vmem>>, %arg11: memref<1x128xf32, #tpu.memory_space<vmem>>, %arg12: memref<1152x128xbf16, #tpu.memory_space<vmem>>, %arg13: memref<1x128xf32, #tpu.memory_space<vmem>>, %arg14: memref<128x5xf32, #tpu.memory_space<vmem>>, %arg15: memref<1x5xf32, #tpu.memory_space<vmem>>, %arg16: memref<1x1x5xf32, #tpu.memory_space<vmem>>, %arg17: memref<768x64xbf16, #tpu.memory_space<vmem>>, %arg18: memref<768x128xbf16, #tpu.memory_space<vmem>>) attributes {dimension_semantics = [#tpu.dimension_semantics<parallel>], iteration_bounds = array<i64: 2>, scalar_prefetch = 0 : i64, scratch_operands = 2 : i64, tpu.core_type = #tpu.core_type<tc>, window_params = [{transform_indices = @transform_0, window_bounds = array<i64: 1, 384, 4>}, {pipeline_mode = #tpu.pipeline_mode<synchronous>, transform_indices = @transform_1, window_bounds = array<i64: 48, 48>}, {pipeline_mode = #tpu.pipeline_mode<synchronous>, transform_indices = @transform_2, window_bounds = array<i64: 1, 384>}, {pipeline_mode = #tpu.pipeline_mode<synchronous>, transform_indices = @transform_3, window_bounds = array<i64: 4, 128>}, {pipeline_mode = #tpu.pipeline_mode<synchronous>, transform_indices = @transform_4, window_bounds = array<i64: 1, 128>}, {pipeline_mode = #tpu.pipeline_mode<synchronous>, transform_indices = @transform_5, window_bounds = array<i64: 1, 64>}, {pipeline_mode = #tpu.pipeline_mode<synchronous>, transform_indices = @transform_6, window_bounds = array<i64: 576, 64>}, {pipeline_mode = #tpu.pipeline_mode<synchronous>, transform_indices = @transform_7, window_bounds = array<i64: 1, 64>}, {pipeline_mode = #tpu.pipeline_mode<synchronous>, transform_indices = @transform_8, window_bounds = array<i64: 64, 256>}, {pipeline_mode = #tpu.pipeline_mode<synchronous>, transform_indices = @transform_9, window_bounds = array<i64: 1, 256>}, {pipeline_mode = #tpu.pipeline_mode<synchronous>, transform_indices = @transform_10, window_bounds = array<i64: 1, 128>}, {pipeline_mode = #tpu.pipeline_mode<synchronous>, transform_indices = @transform_11, window_bounds = array<i64: 1152, 128>}, {pipeline_mode = #tpu.pipeline_mode<synchronous>, transform_indices = @transform_12, window_bounds = array<i64: 1, 128>}, {pipeline_mode = #tpu.pipeline_mode<synchronous>, transform_indices = @transform_13, window_bounds = array<i64: 128, 5>}, {pipeline_mode = #tpu.pipeline_mode<synchronous>, transform_indices = @transform_14, window_bounds = array<i64: 1, 5>}, {transform_indices = @transform_15, window_bounds = array<i64: 1, 1, 5>}]} {
    %c0 = arith.constant 0 : index
    %c0_0 = arith.constant 0 : index
    %0 = vector.load %arg2[%c0, %c0_0] : memref<48x48xbf16, #tpu.memory_space<vmem>>, vector<48x48xbf16>
    %c0_1 = arith.constant 0 : index
    %c0_2 = arith.constant 0 : index
    %c0_3 = arith.constant 0 : index
    %1 = vector.load %arg1[%c0_1, %c0_2, %c0_3] : memref<1x384x4xf32, #tpu.memory_space<vmem>>, vector<1x384x4xf32>
    %2 = vector.shape_cast %1 : vector<1x384x4xf32> to vector<384x4xf32>
    %3 = arith.truncf %2 : vector<384x4xf32> to vector<384x4xbf16>
    %c0_4 = arith.constant 0 : index
    %c0_5 = arith.constant 0 : index
    %4 = vector.load %arg4[%c0_4, %c0_5] : memref<4x128xbf16, #tpu.memory_space<vmem>>, vector<4x128xbf16>
    %cst = arith.constant dense<0.000000e+00> : vector<384x128xf32>
    %5 = tpu.matmul %3, %4, %cst {dimension_numbers = #tpu.dot_dimension_numbers<[1], [0], [0], [1], [0, 0, 1, 1], [], []>} : vector<384x4xbf16>, vector<4x128xbf16>, vector<384x128xf32> -> vector<384x128xf32>
    %c0_6 = arith.constant 0 : index
    %c0_7 = arith.constant 0 : index
    %6 = vector.load %arg5[%c0_6, %c0_7] : memref<1x128xf32, #tpu.memory_space<vmem>>, vector<1x128xf32>
    %7 = vector.broadcast %6 : vector<1x128xf32> to vector<384x128xf32>
    %8 = arith.addf %5, %7 : vector<384x128xf32>
    %9 = vector.extract_strided_slice %8 {offsets = [0, 0], sizes = [384, 64], strides = [1, 1]} : vector<384x128xf32> to vector<384x64xf32>
    %10 = arith.truncf %9 : vector<384x64xf32> to vector<384x64xbf16>
    %11 = vector.extract_strided_slice %8 {offsets = [0, 64], sizes = [384, 64], strides = [1, 1]} : vector<384x128xf32> to vector<384x64xf32>
    %cst_8 = arith.constant 0.000000e+00 : bf16
    %12 = vector.broadcast %cst_8 : bf16 to vector<192x64xbf16>
    %c0_9 = arith.constant 0 : index
    %c0_10 = arith.constant 0 : index
    %13 = vector.load %arg17[%c0_9, %c0_10] : memref<768x64xbf16, #tpu.memory_space<vmem>>, vector<192x64xbf16>
    tpu.vector_store %arg17[%c0_9, %c0_10], %12 {strides = array<i32>} : memref<768x64xbf16, #tpu.memory_space<vmem>>, vector<192x64xbf16>,
    %cst_11 = arith.constant 0.000000e+00 : bf16
    %14 = vector.broadcast %cst_11 : bf16 to vector<192x64xbf16>
    %c576 = arith.constant 576 : index
    %c0_12 = arith.constant 0 : index
    %15 = vector.load %arg17[%c576, %c0_12] : memref<768x64xbf16, #tpu.memory_space<vmem>>, vector<192x64xbf16>
    tpu.vector_store %arg17[%c576, %c0_12], %14 {strides = array<i32>} : memref<768x64xbf16, #tpu.memory_space<vmem>>, vector<192x64xbf16>,
    %c0_13 = arith.constant 0 : index
    %c0_14 = arith.constant 0 : index
    %16 = vector.load %arg6[%c0_13, %c0_14] : memref<1x64xf32, #tpu.memory_space<vmem>>, vector<1x64xf32>
    %17 = vector.extract_strided_slice %10 {offsets = [0, 0], sizes = [48, 64], strides = [1, 1]} : vector<384x64xbf16> to vector<48x64xbf16>
    %cst_15 = arith.constant dense<0.000000e+00> : vector<48x64xf32>
    %18 = tpu.matmul %0, %17, %cst_15 {dimension_numbers = #tpu.dot_dimension_numbers<[1], [0], [0], [1], [0, 0, 1, 1], [], []>} : vector<48x48xbf16>, vector<48x64xbf16>, vector<48x64xf32> -> vector<48x64xf32>
    %19 = vector.broadcast %16 : vector<1x64xf32> to vector<48x64xf32>
    %20 = arith.addf %18, %19 : vector<48x64xf32>
    %cst_16 = arith.constant 0.000000e+00 : f32
    %21 = vector.broadcast %cst_16 : f32 to vector<48x64xf32>
    %22 = arith.maximumf %20, %21 : vector<48x64xf32>
    %23 = arith.truncf %22 : vector<48x64xf32> to vector<48x64xbf16>
    %c192 = arith.constant 192 : index
    %c0_17 = arith.constant 0 : index
    %24 = vector.load %arg17[%c192, %c0_17] : memref<768x64xbf16, #tpu.memory_space<vmem>>, vector<48x64xbf16>
    tpu.vector_store %arg17[%c192, %c0_17], %23 {strides = array<i32>} : memref<768x64xbf16, #tpu.memory_space<vmem>>, vector<48x64xbf16>,
    %25 = vector.extract_strided_slice %10 {offsets = [48, 0], sizes = [48, 64], strides = [1, 1]} : vector<384x64xbf16> to vector<48x64xbf16>
    %cst_18 = arith.constant dense<0.000000e+00> : vector<48x64xf32>
    %26 = tpu.matmul %0, %25, %cst_18 {dimension_numbers = #tpu.dot_dimension_numbers<[1], [0], [0], [1], [0, 0, 1, 1], [], []>} : vector<48x48xbf16>, vector<48x64xbf16>, vector<48x64xf32> -> vector<48x64xf32>
    %27 = vector.broadcast %16 : vector<1x64xf32> to vector<48x64xf32>
    %28 = arith.addf %26, %27 : vector<48x64xf32>
    %cst_19 = arith.constant 0.000000e+00 : f32
    %29 = vector.broadcast %cst_19 : f32 to vector<48x64xf32>
    %30 = arith.maximumf %28, %29 : vector<48x64xf32>
    %31 = arith.truncf %30 : vector<48x64xf32> to vector<48x64xbf16>
    %c240 = arith.constant 240 : index
    %c0_20 = arith.constant 0 : index
    %32 = vector.load %arg17[%c240, %c0_20] : memref<768x64xbf16, #tpu.memory_space<vmem>>, vector<48x64xbf16>
    tpu.vector_store %arg17[%c240, %c0_20], %31 {strides = array<i32>} : memref<768x64xbf16, #tpu.memory_space<vmem>>, vector<48x64xbf16>,
    %33 = vector.extract_strided_slice %10 {offsets = [96, 0], sizes = [48, 64], strides = [1, 1]} : vector<384x64xbf16> to vector<48x64xbf16>
    %cst_21 = arith.constant dense<0.000000e+00> : vector<48x64xf32>
    %34 = tpu.matmul %0, %33, %cst_21 {dimension_numbers = #tpu.dot_dimension_numbers<[1], [0], [0], [1], [0, 0, 1, 1], [], []>} : vector<48x48xbf16>, vector<48x64xbf16>, vector<48x64xf32> -> vector<48x64xf32>
    %35 = vector.broadcast %16 : vector<1x64xf32> to vector<48x64xf32>
    %36 = arith.addf %34, %35 : vector<48x64xf32>
    %cst_22 = arith.constant 0.000000e+00 : f32
    %37 = vector.broadcast %cst_22 : f32 to vector<48x64xf32>
    %38 = arith.maximumf %36, %37 : vector<48x64xf32>
    %39 = arith.truncf %38 : vector<48x64xf32> to vector<48x64xbf16>
    %c288 = arith.constant 288 : index
    %c0_23 = arith.constant 0 : index
    %40 = vector.load %arg17[%c288, %c0_23] : memref<768x64xbf16, #tpu.memory_space<vmem>>, vector<48x64xbf16>
    tpu.vector_store %arg17[%c288, %c0_23], %39 {strides = array<i32>} : memref<768x64xbf16, #tpu.memory_space<vmem>>, vector<48x64xbf16>,
    %41 = vector.extract_strided_slice %10 {offsets = [144, 0], sizes = [48, 64], strides = [1, 1]} : vector<384x64xbf16> to vector<48x64xbf16>
    %cst_24 = arith.constant dense<0.000000e+00> : vector<48x64xf32>
    %42 = tpu.matmul %0, %41, %cst_24 {dimension_numbers = #tpu.dot_dimension_numbers<[1], [0], [0], [1], [0, 0, 1, 1], [], []>} : vector<48x48xbf16>, vector<48x64xbf16>, vector<48x64xf32> -> vector<48x64xf32>
    %43 = vector.broadcast %16 : vector<1x64xf32> to vector<48x64xf32>
    %44 = arith.addf %42, %43 : vector<48x64xf32>
    %cst_25 = arith.constant 0.000000e+00 : f32
    %45 = vector.broadcast %cst_25 : f32 to vector<48x64xf32>
    %46 = arith.maximumf %44, %45 : vector<48x64xf32>
    %47 = arith.truncf %46 : vector<48x64xf32> to vector<48x64xbf16>
    %c336 = arith.constant 336 : index
    %c0_26 = arith.constant 0 : index
    %48 = vector.load %arg17[%c336, %c0_26] : memref<768x64xbf16, #tpu.memory_space<vmem>>, vector<48x64xbf16>
    tpu.vector_store %arg17[%c336, %c0_26], %47 {strides = array<i32>} : memref<768x64xbf16, #tpu.memory_space<vmem>>, vector<48x64xbf16>,
    %49 = vector.extract_strided_slice %10 {offsets = [192, 0], sizes = [48, 64], strides = [1, 1]} : vector<384x64xbf16> to vector<48x64xbf16>
    %cst_27 = arith.constant dense<0.000000e+00> : vector<48x64xf32>
    %50 = tpu.matmul %0, %49, %cst_27 {dimension_numbers = #tpu.dot_dimension_numbers<[1], [0], [0], [1], [0, 0, 1, 1], [], []>} : vector<48x48xbf16>, vector<48x64xbf16>, vector<48x64xf32> -> vector<48x64xf32>
    %51 = vector.broadcast %16 : vector<1x64xf32> to vector<48x64xf32>
    %52 = arith.addf %50, %51 : vector<48x64xf32>
    %cst_28 = arith.constant 0.000000e+00 : f32
    %53 = vector.broadcast %cst_28 : f32 to vector<48x64xf32>
    %54 = arith.maximumf %52, %53 : vector<48x64xf32>
    %55 = arith.truncf %54 : vector<48x64xf32> to vector<48x64xbf16>
    %c384 = arith.constant 384 : index
    %c0_29 = arith.constant 0 : index
    %56 = vector.load %arg17[%c384, %c0_29] : memref<768x64xbf16, #tpu.memory_space<vmem>>, vector<48x64xbf16>
    tpu.vector_store %arg17[%c384, %c0_29], %55 {strides = array<i32>} : memref<768x64xbf16, #tpu.memory_space<vmem>>, vector<48x64xbf16>,
    %57 = vector.extract_strided_slice %10 {offsets = [240, 0], sizes = [48, 64], strides = [1, 1]} : vector<384x64xbf16> to vector<48x64xbf16>
    %cst_30 = arith.constant dense<0.000000e+00> : vector<48x64xf32>
    %58 = tpu.matmul %0, %57, %cst_30 {dimension_numbers = #tpu.dot_dimension_numbers<[1], [0], [0], [1], [0, 0, 1, 1], [], []>} : vector<48x48xbf16>, vector<48x64xbf16>, vector<48x64xf32> -> vector<48x64xf32>
    %59 = vector.broadcast %16 : vector<1x64xf32> to vector<48x64xf32>
    %60 = arith.addf %58, %59 : vector<48x64xf32>
    %cst_31 = arith.constant 0.000000e+00 : f32
    %61 = vector.broadcast %cst_31 : f32 to vector<48x64xf32>
    %62 = arith.maximumf %60, %61 : vector<48x64xf32>
    %63 = arith.truncf %62 : vector<48x64xf32> to vector<48x64xbf16>
    %c432 = arith.constant 432 : index
    %c0_32 = arith.constant 0 : index
    %64 = vector.load %arg17[%c432, %c0_32] : memref<768x64xbf16, #tpu.memory_space<vmem>>, vector<48x64xbf16>
    tpu.vector_store %arg17[%c432, %c0_32], %63 {strides = array<i32>} : memref<768x64xbf16, #tpu.memory_space<vmem>>, vector<48x64xbf16>,
    %65 = vector.extract_strided_slice %10 {offsets = [288, 0], sizes = [48, 64], strides = [1, 1]} : vector<384x64xbf16> to vector<48x64xbf16>
    %cst_33 = arith.constant dense<0.000000e+00> : vector<48x64xf32>
    %66 = tpu.matmul %0, %65, %cst_33 {dimension_numbers = #tpu.dot_dimension_numbers<[1], [0], [0], [1], [0, 0, 1, 1], [], []>} : vector<48x48xbf16>, vector<48x64xbf16>, vector<48x64xf32> -> vector<48x64xf32>
    %67 = vector.broadcast %16 : vector<1x64xf32> to vector<48x64xf32>
    %68 = arith.addf %66, %67 : vector<48x64xf32>
    %cst_34 = arith.constant 0.000000e+00 : f32
    %69 = vector.broadcast %cst_34 : f32 to vector<48x64xf32>
    %70 = arith.maximumf %68, %69 : vector<48x64xf32>
    %71 = arith.truncf %70 : vector<48x64xf32> to vector<48x64xbf16>
    %c480 = arith.constant 480 : index
    %c0_35 = arith.constant 0 : index
    %72 = vector.load %arg17[%c480, %c0_35] : memref<768x64xbf16, #tpu.memory_space<vmem>>, vector<48x64xbf16>
    tpu.vector_store %arg17[%c480, %c0_35], %71 {strides = array<i32>} : memref<768x64xbf16, #tpu.memory_space<vmem>>, vector<48x64xbf16>,
    %73 = vector.extract_strided_slice %10 {offsets = [336, 0], sizes = [48, 64], strides = [1, 1]} : vector<384x64xbf16> to vector<48x64xbf16>
    %cst_36 = arith.constant dense<0.000000e+00> : vector<48x64xf32>
    %74 = tpu.matmul %0, %73, %cst_36 {dimension_numbers = #tpu.dot_dimension_numbers<[1], [0], [0], [1], [0, 0, 1, 1], [], []>} : vector<48x48xbf16>, vector<48x64xbf16>, vector<48x64xf32> -> vector<48x64xf32>
    %75 = vector.broadcast %16 : vector<1x64xf32> to vector<48x64xf32>
    %76 = arith.addf %74, %75 : vector<48x64xf32>
    %cst_37 = arith.constant 0.000000e+00 : f32
    %77 = vector.broadcast %cst_37 : f32 to vector<48x64xf32>
    %78 = arith.maximumf %76, %77 : vector<48x64xf32>
    %79 = arith.truncf %78 : vector<48x64xf32> to vector<48x64xbf16>
    %c528 = arith.constant 528 : index
    %c0_38 = arith.constant 0 : index
    %80 = vector.load %arg17[%c528, %c0_38] : memref<768x64xbf16, #tpu.memory_space<vmem>>, vector<48x64xbf16>
    tpu.vector_store %arg17[%c528, %c0_38], %79 {strides = array<i32>} : memref<768x64xbf16, #tpu.memory_space<vmem>>, vector<48x64xbf16>,
    %c0_39 = arith.constant 0 : index
    %c0_40 = arith.constant 0 : index
    %81 = vector.load %arg17[%c0_39, %c0_40] : memref<768x64xbf16, #tpu.memory_space<vmem>>, vector<384x64xbf16>
    %c48 = arith.constant 48 : index
    %c0_41 = arith.constant 0 : index
    %82 = vector.load %arg17[%c48, %c0_41] : memref<768x64xbf16, #tpu.memory_space<vmem>>, vector<384x64xbf16>
    %c96 = arith.constant 96 : index
    %c0_42 = arith.constant 0 : index
    %83 = vector.load %arg17[%c96, %c0_42] : memref<768x64xbf16, #tpu.memory_space<vmem>>, vector<384x64xbf16>
    %c144 = arith.constant 144 : index
    %c0_43 = arith.constant 0 : index
    %84 = vector.load %arg17[%c144, %c0_43] : memref<768x64xbf16, #tpu.memory_space<vmem>>, vector<384x64xbf16>
    %c192_44 = arith.constant 192 : index
    %c0_45 = arith.constant 0 : index
    %85 = vector.load %arg17[%c192_44, %c0_45] : memref<768x64xbf16, #tpu.memory_space<vmem>>, vector<384x64xbf16>
    %c240_46 = arith.constant 240 : index
    %c0_47 = arith.constant 0 : index
    %86 = vector.load %arg17[%c240_46, %c0_47] : memref<768x64xbf16, #tpu.memory_space<vmem>>, vector<384x64xbf16>
    %c288_48 = arith.constant 288 : index
    %c0_49 = arith.constant 0 : index
    %87 = vector.load %arg17[%c288_48, %c0_49] : memref<768x64xbf16, #tpu.memory_space<vmem>>, vector<384x64xbf16>
    %c336_50 = arith.constant 336 : index
    %c0_51 = arith.constant 0 : index
    %88 = vector.load %arg17[%c336_50, %c0_51] : memref<768x64xbf16, #tpu.memory_space<vmem>>, vector<384x64xbf16>
    %c384_52 = arith.constant 384 : index
    %c0_53 = arith.constant 0 : index
    %89 = vector.load %arg17[%c384_52, %c0_53] : memref<768x64xbf16, #tpu.memory_space<vmem>>, vector<384x64xbf16>
    %90 = tpu.concatenate %81, %82, %83, %84, %85, %86, %87, %88, %89 in 1 : vector<384x64xbf16>, vector<384x64xbf16>, vector<384x64xbf16>, vector<384x64xbf16>, vector<384x64xbf16>, vector<384x64xbf16>, vector<384x64xbf16>, vector<384x64xbf16>, vector<384x64xbf16> -> vector<384x576xbf16>
    %c0_54 = arith.constant 0 : index
    %c0_55 = arith.constant 0 : index
    %91 = vector.load %arg7[%c0_54, %c0_55] : memref<576x64xbf16, #tpu.memory_space<vmem>>, vector<576x64xbf16>
    %cst_56 = arith.constant dense<0.000000e+00> : vector<384x64xf32>
    %92 = tpu.matmul %90, %91, %cst_56 {dimension_numbers = #tpu.dot_dimension_numbers<[1], [0], [0], [1], [0, 0, 1, 1], [], []>} : vector<384x576xbf16>, vector<576x64xbf16>, vector<384x64xf32> -> vector<384x64xf32>
    %c0_57 = arith.constant 0 : index
    %c0_58 = arith.constant 0 : index
    %93 = vector.load %arg8[%c0_57, %c0_58] : memref<1x64xf32, #tpu.memory_space<vmem>>, vector<1x64xf32>
    %94 = vector.broadcast %93 : vector<1x64xf32> to vector<384x64xf32>
    %95 = arith.addf %92, %94 : vector<384x64xf32>
    %cst_59 = arith.constant 0.000000e+00 : f32
    %96 = vector.broadcast %cst_59 : f32 to vector<384x64xf32>
    %97 = arith.maximumf %95, %96 : vector<384x64xf32>
    %98 = arith.addf %97, %11 : vector<384x64xf32>
    %99 = arith.truncf %98 : vector<384x64xf32> to vector<384x64xbf16>
    %c0_60 = arith.constant 0 : index
    %c0_61 = arith.constant 0 : index
    %100 = vector.load %arg9[%c0_60, %c0_61] : memref<64x256xbf16, #tpu.memory_space<vmem>>, vector<64x256xbf16>
    %cst_62 = arith.constant dense<0.000000e+00> : vector<384x256xf32>
    %101 = tpu.matmul %99, %100, %cst_62 {dimension_numbers = #tpu.dot_dimension_numbers<[1], [0], [0], [1], [0, 0, 1, 1], [], []>} : vector<384x64xbf16>, vector<64x256xbf16>, vector<384x256xf32> -> vector<384x256xf32>
    %c0_63 = arith.constant 0 : index
    %c0_64 = arith.constant 0 : index
    %102 = vector.load %arg10[%c0_63, %c0_64] : memref<1x256xf32, #tpu.memory_space<vmem>>, vector<1x256xf32>
    %103 = vector.broadcast %102 : vector<1x256xf32> to vector<384x256xf32>
    %104 = arith.addf %101, %103 : vector<384x256xf32>
    %105 = vector.extract_strided_slice %104 {offsets = [0, 0], sizes = [384, 128], strides = [1, 1]} : vector<384x256xf32> to vector<384x128xf32>
    %106 = arith.truncf %105 : vector<384x128xf32> to vector<384x128xbf16>
    %107 = vector.extract_strided_slice %104 {offsets = [0, 128], sizes = [384, 128], strides = [1, 1]} : vector<384x256xf32> to vector<384x128xf32>
    %cst_65 = arith.constant 0.000000e+00 : bf16
    %108 = vector.broadcast %cst_65 : bf16 to vector<192x128xbf16>
    %c0_66 = arith.constant 0 : index
    %c0_67 = arith.constant 0 : index
    %109 = vector.load %arg18[%c0_66, %c0_67] : memref<768x128xbf16, #tpu.memory_space<vmem>>, vector<192x128xbf16>
    tpu.vector_store %arg18[%c0_66, %c0_67], %108 {strides = array<i32>} : memref<768x128xbf16, #tpu.memory_space<vmem>>, vector<192x128xbf16>,
    %cst_68 = arith.constant 0.000000e+00 : bf16
    %110 = vector.broadcast %cst_68 : bf16 to vector<192x128xbf16>
    %c576_69 = arith.constant 576 : index
    %c0_70 = arith.constant 0 : index
    %111 = vector.load %arg18[%c576_69, %c0_70] : memref<768x128xbf16, #tpu.memory_space<vmem>>, vector<192x128xbf16>
    tpu.vector_store %arg18[%c576_69, %c0_70], %110 {strides = array<i32>} : memref<768x128xbf16, #tpu.memory_space<vmem>>, vector<192x128xbf16>,
    %c0_71 = arith.constant 0 : index
    %c0_72 = arith.constant 0 : index
    %112 = vector.load %arg11[%c0_71, %c0_72] : memref<1x128xf32, #tpu.memory_space<vmem>>, vector<1x128xf32>
    %113 = vector.extract_strided_slice %106 {offsets = [0, 0], sizes = [48, 128], strides = [1, 1]} : vector<384x128xbf16> to vector<48x128xbf16>
    %cst_73 = arith.constant dense<0.000000e+00> : vector<48x128xf32>
    %114 = tpu.matmul %0, %113, %cst_73 {dimension_numbers = #tpu.dot_dimension_numbers<[1], [0], [0], [1], [0, 0, 1, 1], [], []>} : vector<48x48xbf16>, vector<48x128xbf16>, vector<48x128xf32> -> vector<48x128xf32>
    %115 = vector.broadcast %112 : vector<1x128xf32> to vector<48x128xf32>
    %116 = arith.addf %114, %115 : vector<48x128xf32>
    %cst_74 = arith.constant 0.000000e+00 : f32
    %117 = vector.broadcast %cst_74 : f32 to vector<48x128xf32>
    %118 = arith.maximumf %116, %117 : vector<48x128xf32>
    %119 = arith.truncf %118 : vector<48x128xf32> to vector<48x128xbf16>
    %c192_75 = arith.constant 192 : index
    %c0_76 = arith.constant 0 : index
    %120 = vector.load %arg18[%c192_75, %c0_76] : memref<768x128xbf16, #tpu.memory_space<vmem>>, vector<48x128xbf16>
    tpu.vector_store %arg18[%c192_75, %c0_76], %119 {strides = array<i32>} : memref<768x128xbf16, #tpu.memory_space<vmem>>, vector<48x128xbf16>,
    %121 = vector.extract_strided_slice %106 {offsets = [48, 0], sizes = [48, 128], strides = [1, 1]} : vector<384x128xbf16> to vector<48x128xbf16>
    %cst_77 = arith.constant dense<0.000000e+00> : vector<48x128xf32>
    %122 = tpu.matmul %0, %121, %cst_77 {dimension_numbers = #tpu.dot_dimension_numbers<[1], [0], [0], [1], [0, 0, 1, 1], [], []>} : vector<48x48xbf16>, vector<48x128xbf16>, vector<48x128xf32> -> vector<48x128xf32>
    %123 = vector.broadcast %112 : vector<1x128xf32> to vector<48x128xf32>
    %124 = arith.addf %122, %123 : vector<48x128xf32>
    %cst_78 = arith.constant 0.000000e+00 : f32
    %125 = vector.broadcast %cst_78 : f32 to vector<48x128xf32>
    %126 = arith.maximumf %124, %125 : vector<48x128xf32>
    %127 = arith.truncf %126 : vector<48x128xf32> to vector<48x128xbf16>
    %c240_79 = arith.constant 240 : index
    %c0_80 = arith.constant 0 : index
    %128 = vector.load %arg18[%c240_79, %c0_80] : memref<768x128xbf16, #tpu.memory_space<vmem>>, vector<48x128xbf16>
    tpu.vector_store %arg18[%c240_79, %c0_80], %127 {strides = array<i32>} : memref<768x128xbf16, #tpu.memory_space<vmem>>, vector<48x128xbf16>,
    %129 = vector.extract_strided_slice %106 {offsets = [96, 0], sizes = [48, 128], strides = [1, 1]} : vector<384x128xbf16> to vector<48x128xbf16>
    %cst_81 = arith.constant dense<0.000000e+00> : vector<48x128xf32>
    %130 = tpu.matmul %0, %129, %cst_81 {dimension_numbers = #tpu.dot_dimension_numbers<[1], [0], [0], [1], [0, 0, 1, 1], [], []>} : vector<48x48xbf16>, vector<48x128xbf16>, vector<48x128xf32> -> vector<48x128xf32>
    %131 = vector.broadcast %112 : vector<1x128xf32> to vector<48x128xf32>
    %132 = arith.addf %130, %131 : vector<48x128xf32>
    %cst_82 = arith.constant 0.000000e+00 : f32
    %133 = vector.broadcast %cst_82 : f32 to vector<48x128xf32>
    %134 = arith.maximumf %132, %133 : vector<48x128xf32>
    %135 = arith.truncf %134 : vector<48x128xf32> to vector<48x128xbf16>
    %c288_83 = arith.constant 288 : index
    %c0_84 = arith.constant 0 : index
    %136 = vector.load %arg18[%c288_83, %c0_84] : memref<768x128xbf16, #tpu.memory_space<vmem>>, vector<48x128xbf16>
    tpu.vector_store %arg18[%c288_83, %c0_84], %135 {strides = array<i32>} : memref<768x128xbf16, #tpu.memory_space<vmem>>, vector<48x128xbf16>,
    %137 = vector.extract_strided_slice %106 {offsets = [144, 0], sizes = [48, 128], strides = [1, 1]} : vector<384x128xbf16> to vector<48x128xbf16>
    %cst_85 = arith.constant dense<0.000000e+00> : vector<48x128xf32>
    %138 = tpu.matmul %0, %137, %cst_85 {dimension_numbers = #tpu.dot_dimension_numbers<[1], [0], [0], [1], [0, 0, 1, 1], [], []>} : vector<48x48xbf16>, vector<48x128xbf16>, vector<48x128xf32> -> vector<48x128xf32>
    %139 = vector.broadcast %112 : vector<1x128xf32> to vector<48x128xf32>
    %140 = arith.addf %138, %139 : vector<48x128xf32>
    %cst_86 = arith.constant 0.000000e+00 : f32
    %141 = vector.broadcast %cst_86 : f32 to vector<48x128xf32>
    %142 = arith.maximumf %140, %141 : vector<48x128xf32>
    %143 = arith.truncf %142 : vector<48x128xf32> to vector<48x128xbf16>
    %c336_87 = arith.constant 336 : index
    %c0_88 = arith.constant 0 : index
    %144 = vector.load %arg18[%c336_87, %c0_88] : memref<768x128xbf16, #tpu.memory_space<vmem>>, vector<48x128xbf16>
    tpu.vector_store %arg18[%c336_87, %c0_88], %143 {strides = array<i32>} : memref<768x128xbf16, #tpu.memory_space<vmem>>, vector<48x128xbf16>,
    %145 = vector.extract_strided_slice %106 {offsets = [192, 0], sizes = [48, 128], strides = [1, 1]} : vector<384x128xbf16> to vector<48x128xbf16>
    %cst_89 = arith.constant dense<0.000000e+00> : vector<48x128xf32>
    %146 = tpu.matmul %0, %145, %cst_89 {dimension_numbers = #tpu.dot_dimension_numbers<[1], [0], [0], [1], [0, 0, 1, 1], [], []>} : vector<48x48xbf16>, vector<48x128xbf16>, vector<48x128xf32> -> vector<48x128xf32>
    %147 = vector.broadcast %112 : vector<1x128xf32> to vector<48x128xf32>
    %148 = arith.addf %146, %147 : vector<48x128xf32>
    %cst_90 = arith.constant 0.000000e+00 : f32
    %149 = vector.broadcast %cst_90 : f32 to vector<48x128xf32>
    %150 = arith.maximumf %148, %149 : vector<48x128xf32>
    %151 = arith.truncf %150 : vector<48x128xf32> to vector<48x128xbf16>
    %c384_91 = arith.constant 384 : index
    %c0_92 = arith.constant 0 : index
    %152 = vector.load %arg18[%c384_91, %c0_92] : memref<768x128xbf16, #tpu.memory_space<vmem>>, vector<48x128xbf16>
    tpu.vector_store %arg18[%c384_91, %c0_92], %151 {strides = array<i32>} : memref<768x128xbf16, #tpu.memory_space<vmem>>, vector<48x128xbf16>,
    %153 = vector.extract_strided_slice %106 {offsets = [240, 0], sizes = [48, 128], strides = [1, 1]} : vector<384x128xbf16> to vector<48x128xbf16>
    %cst_93 = arith.constant dense<0.000000e+00> : vector<48x128xf32>
    %154 = tpu.matmul %0, %153, %cst_93 {dimension_numbers = #tpu.dot_dimension_numbers<[1], [0], [0], [1], [0, 0, 1, 1], [], []>} : vector<48x48xbf16>, vector<48x128xbf16>, vector<48x128xf32> -> vector<48x128xf32>
    %155 = vector.broadcast %112 : vector<1x128xf32> to vector<48x128xf32>
    %156 = arith.addf %154, %155 : vector<48x128xf32>
    %cst_94 = arith.constant 0.000000e+00 : f32
    %157 = vector.broadcast %cst_94 : f32 to vector<48x128xf32>
    %158 = arith.maximumf %156, %157 : vector<48x128xf32>
    %159 = arith.truncf %158 : vector<48x128xf32> to vector<48x128xbf16>
    %c432_95 = arith.constant 432 : index
    %c0_96 = arith.constant 0 : index
    %160 = vector.load %arg18[%c432_95, %c0_96] : memref<768x128xbf16, #tpu.memory_space<vmem>>, vector<48x128xbf16>
    tpu.vector_store %arg18[%c432_95, %c0_96], %159 {strides = array<i32>} : memref<768x128xbf16, #tpu.memory_space<vmem>>, vector<48x128xbf16>,
    %161 = vector.extract_strided_slice %106 {offsets = [288, 0], sizes = [48, 128], strides = [1, 1]} : vector<384x128xbf16> to vector<48x128xbf16>
    %cst_97 = arith.constant dense<0.000000e+00> : vector<48x128xf32>
    %162 = tpu.matmul %0, %161, %cst_97 {dimension_numbers = #tpu.dot_dimension_numbers<[1], [0], [0], [1], [0, 0, 1, 1], [], []>} : vector<48x48xbf16>, vector<48x128xbf16>, vector<48x128xf32> -> vector<48x128xf32>
    %163 = vector.broadcast %112 : vector<1x128xf32> to vector<48x128xf32>
    %164 = arith.addf %162, %163 : vector<48x128xf32>
    %cst_98 = arith.constant 0.000000e+00 : f32
    %165 = vector.broadcast %cst_98 : f32 to vector<48x128xf32>
    %166 = arith.maximumf %164, %165 : vector<48x128xf32>
    %167 = arith.truncf %166 : vector<48x128xf32> to vector<48x128xbf16>
    %c480_99 = arith.constant 480 : index
    %c0_100 = arith.constant 0 : index
    %168 = vector.load %arg18[%c480_99, %c0_100] : memref<768x128xbf16, #tpu.memory_space<vmem>>, vector<48x128xbf16>
    tpu.vector_store %arg18[%c480_99, %c0_100], %167 {strides = array<i32>} : memref<768x128xbf16, #tpu.memory_space<vmem>>, vector<48x128xbf16>,
    %169 = vector.extract_strided_slice %106 {offsets = [336, 0], sizes = [48, 128], strides = [1, 1]} : vector<384x128xbf16> to vector<48x128xbf16>
    %cst_101 = arith.constant dense<0.000000e+00> : vector<48x128xf32>
    %170 = tpu.matmul %0, %169, %cst_101 {dimension_numbers = #tpu.dot_dimension_numbers<[1], [0], [0], [1], [0, 0, 1, 1], [], []>} : vector<48x48xbf16>, vector<48x128xbf16>, vector<48x128xf32> -> vector<48x128xf32>
    %171 = vector.broadcast %112 : vector<1x128xf32> to vector<48x128xf32>
    %172 = arith.addf %170, %171 : vector<48x128xf32>
    %cst_102 = arith.constant 0.000000e+00 : f32
    %173 = vector.broadcast %cst_102 : f32 to vector<48x128xf32>
    %174 = arith.maximumf %172, %173 : vector<48x128xf32>
    %175 = arith.truncf %174 : vector<48x128xf32> to vector<48x128xbf16>
    %c528_103 = arith.constant 528 : index
    %c0_104 = arith.constant 0 : index
    %176 = vector.load %arg18[%c528_103, %c0_104] : memref<768x128xbf16, #tpu.memory_space<vmem>>, vector<48x128xbf16>
    tpu.vector_store %arg18[%c528_103, %c0_104], %175 {strides = array<i32>} : memref<768x128xbf16, #tpu.memory_space<vmem>>, vector<48x128xbf16>,
    %c0_105 = arith.constant 0 : index
    %c0_106 = arith.constant 0 : index
    %177 = vector.load %arg18[%c0_105, %c0_106] : memref<768x128xbf16, #tpu.memory_space<vmem>>, vector<384x128xbf16>
    %c48_107 = arith.constant 48 : index
    %c0_108 = arith.constant 0 : index
    %178 = vector.load %arg18[%c48_107, %c0_108] : memref<768x128xbf16, #tpu.memory_space<vmem>>, vector<384x128xbf16>
    %c96_109 = arith.constant 96 : index
    %c0_110 = arith.constant 0 : index
    %179 = vector.load %arg18[%c96_109, %c0_110] : memref<768x128xbf16, #tpu.memory_space<vmem>>, vector<384x128xbf16>
    %c144_111 = arith.constant 144 : index
    %c0_112 = arith.constant 0 : index
    %180 = vector.load %arg18[%c144_111, %c0_112] : memref<768x128xbf16, #tpu.memory_space<vmem>>, vector<384x128xbf16>
    %c192_113 = arith.constant 192 : index
    %c0_114 = arith.constant 0 : index
    %181 = vector.load %arg18[%c192_113, %c0_114] : memref<768x128xbf16, #tpu.memory_space<vmem>>, vector<384x128xbf16>
    %c240_115 = arith.constant 240 : index
    %c0_116 = arith.constant 0 : index
    %182 = vector.load %arg18[%c240_115, %c0_116] : memref<768x128xbf16, #tpu.memory_space<vmem>>, vector<384x128xbf16>
    %c288_117 = arith.constant 288 : index
    %c0_118 = arith.constant 0 : index
    %183 = vector.load %arg18[%c288_117, %c0_118] : memref<768x128xbf16, #tpu.memory_space<vmem>>, vector<384x128xbf16>
    %c336_119 = arith.constant 336 : index
    %c0_120 = arith.constant 0 : index
    %184 = vector.load %arg18[%c336_119, %c0_120] : memref<768x128xbf16, #tpu.memory_space<vmem>>, vector<384x128xbf16>
    %c384_121 = arith.constant 384 : index
    %c0_122 = arith.constant 0 : index
    %185 = vector.load %arg18[%c384_121, %c0_122] : memref<768x128xbf16, #tpu.memory_space<vmem>>, vector<384x128xbf16>
    %186 = tpu.concatenate %177, %178, %179, %180, %181, %182, %183, %184, %185 in 1 : vector<384x128xbf16>, vector<384x128xbf16>, vector<384x128xbf16>, vector<384x128xbf16>, vector<384x128xbf16>, vector<384x128xbf16>, vector<384x128xbf16>, vector<384x128xbf16>, vector<384x128xbf16> -> vector<384x1152xbf16>
    %c0_123 = arith.constant 0 : index
    %c0_124 = arith.constant 0 : index
    %187 = vector.load %arg12[%c0_123, %c0_124] : memref<1152x128xbf16, #tpu.memory_space<vmem>>, vector<1152x128xbf16>
    %cst_125 = arith.constant dense<0.000000e+00> : vector<384x128xf32>
    %188 = tpu.matmul %186, %187, %cst_125 {dimension_numbers = #tpu.dot_dimension_numbers<[1], [0], [0], [1], [0, 0, 1, 1], [], []>} : vector<384x1152xbf16>, vector<1152x128xbf16>, vector<384x128xf32> -> vector<384x128xf32>
    %c0_126 = arith.constant 0 : index
    %c0_127 = arith.constant 0 : index
    %189 = vector.load %arg13[%c0_126, %c0_127] : memref<1x128xf32, #tpu.memory_space<vmem>>, vector<1x128xf32>
    %190 = vector.broadcast %189 : vector<1x128xf32> to vector<384x128xf32>
    %191 = arith.addf %188, %190 : vector<384x128xf32>
    %cst_128 = arith.constant 0.000000e+00 : f32
    %192 = vector.broadcast %cst_128 : f32 to vector<384x128xf32>
    %193 = arith.maximumf %191, %192 : vector<384x128xf32>
    %194 = arith.addf %193, %107 : vector<384x128xf32>
    %c0_129 = arith.constant 0 : index
    %c0_130 = arith.constant 0 : index
    %195 = vector.load %arg3[%c0_129, %c0_130] : memref<1x384xbf16, #tpu.memory_space<vmem>>, vector<1x384xbf16>
    %196 = arith.truncf %194 : vector<384x128xf32> to vector<384x128xbf16>
    %cst_131 = arith.constant dense<0.000000e+00> : vector<1x128xf32>
    %197 = tpu.matmul %195, %196, %cst_131 {dimension_numbers = #tpu.dot_dimension_numbers<[1], [0], [0], [1], [0, 0, 1, 1], [], []>} : vector<1x384xbf16>, vector<384x128xbf16>, vector<1x128xf32> -> vector<1x128xf32>
    %c0_132 = arith.constant 0 : index
    %c0_133 = arith.constant 0 : index
    %198 = vector.load %arg14[%c0_132, %c0_133] : memref<128x5xf32, #tpu.memory_space<vmem>>, vector<128x5xf32>
    %cst_134 = arith.constant dense<0.000000e+00> : vector<1x5xf32>
    %199 = tpu.matmul %197, %198, %cst_134 {dimension_numbers = #tpu.dot_dimension_numbers<[1], [0], [0], [1], [0, 0, 1, 1], [], []>} : vector<1x128xf32>, vector<128x5xf32>, vector<1x5xf32> -> vector<1x5xf32>
    %c0_135 = arith.constant 0 : index
    %c0_136 = arith.constant 0 : index
    %200 = vector.load %arg15[%c0_135, %c0_136] : memref<1x5xf32, #tpu.memory_space<vmem>>, vector<1x5xf32>
    %201 = arith.addf %199, %200 : vector<1x5xf32>
    %202 = arith.negf %201 : vector<1x5xf32>
    %203 = math.exp %202 : vector<1x5xf32>
    %cst_137 = arith.constant 1.000000e+00 : f32
    %204 = vector.broadcast %cst_137 : f32 to vector<1x5xf32>
    %205 = arith.addf %204, %203 : vector<1x5xf32>
    %206 = arith.divf %204, %205 : vector<1x5xf32>
    %c0_138 = arith.constant 0 : index
    %c0_139 = arith.constant 0 : index
    %c0_140 = arith.constant 0 : index
    %207 = vector.load %arg16[%c0_138, %c0_139, %c0_140] : memref<1x1x5xf32, #tpu.memory_space<vmem>>, vector<1x1x5xf32>
    %208 = vector.shape_cast %207 : vector<1x1x5xf32> to vector<1x5xf32>
    %209 = vector.shape_cast %206 : vector<1x5xf32> to vector<1x1x5xf32>
    tpu.vector_store %arg16[%c0_138, %c0_139, %c0_140], %209 {strides = array<i32>} : memref<1x1x5xf32, #tpu.memory_space<vmem>>, vector<1x1x5xf32>,
    return
  }
  func.func @transform_0(%arg0: i32) -> (i32, i32, i32) {
    %c0_i32 = arith.constant 0 : i32
    %c0_i32_0 = arith.constant 0 : i32
    %c0_i32_1 = arith.constant 0 : i32
    return %arg0, %c0_i32, %c0_i32_0 : i32, i32, i32
  }
  func.func @transform_1(%arg0: i32) -> (i32, i32) {
    %c0_i32 = arith.constant 0 : i32
    %c0_i32_0 = arith.constant 0 : i32
    %c0_i32_1 = arith.constant 0 : i32
    return %c0_i32, %c0_i32_0 : i32, i32
  }
  func.func @transform_2(%arg0: i32) -> (i32, i32) {
    %c0_i32 = arith.constant 0 : i32
    %c0_i32_0 = arith.constant 0 : i32
    %c0_i32_1 = arith.constant 0 : i32
    return %c0_i32, %c0_i32_0 : i32, i32
  }
  func.func @transform_3(%arg0: i32) -> (i32, i32) {
    %c0_i32 = arith.constant 0 : i32
    %c0_i32_0 = arith.constant 0 : i32
    %c0_i32_1 = arith.constant 0 : i32
    return %c0_i32, %c0_i32_0 : i32, i32
  }
  func.func @transform_4(%arg0: i32) -> (i32, i32) {
    %c0_i32 = arith.constant 0 : i32
    %c0_i32_0 = arith.constant 0 : i32
    %c0_i32_1 = arith.constant 0 : i32
    return %c0_i32, %c0_i32_0 : i32, i32
  }
  func.func @transform_5(%arg0: i32) -> (i32, i32) {
    %c0_i32 = arith.constant 0 : i32
    %c0_i32_0 = arith.constant 0 : i32
    %c0_i32_1 = arith.constant 0 : i32
    return %c0_i32, %c0_i32_0 : i32, i32
  }
  func.func @transform_6(%arg0: i32) -> (i32, i32) {
    %c0_i32 = arith.constant 0 : i32
    %c0_i32_0 = arith.constant 0 : i32
    %c0_i32_1 = arith.constant 0 : i32
    return %c0_i32, %c0_i32_0 : i32, i32
  }
  func.func @transform_7(%arg0: i32) -> (i32, i32) {
    %c0_i32 = arith.constant 0 : i32
    %c0_i32_0 = arith.constant 0 : i32
    %c0_i32_1 = arith.constant 0 : i32
    return %c0_i32, %c0_i32_0 : i32, i32
  }
  func.func @transform_8(%arg0: i32) -> (i32, i32) {
    %c0_i32 = arith.constant 0 : i32
    %c0_i32_0 = arith.constant 0 : i32
    %c0_i32_1 = arith.constant 0 : i32
    return %c0_i32, %c0_i32_0 : i32, i32
  }
  func.func @transform_9(%arg0: i32) -> (i32, i32) {
    %c0_i32 = arith.constant 0 : i32
    %c0_i32_0 = arith.constant 0 : i32
    %c0_i32_1 = arith.constant 0 : i32
    return %c0_i32, %c0_i32_0 : i32, i32
  }
  func.func @transform_10(%arg0: i32) -> (i32, i32) {
    %c0_i32 = arith.constant 0 : i32
    %c0_i32_0 = arith.constant 0 : i32
    %c0_i32_1 = arith.constant 0 : i32
    return %c0_i32, %c0_i32_0 : i32, i32
  }
  func.func @transform_11(%arg0: i32) -> (i32, i32) {
    %c0_i32 = arith.constant 0 : i32
    %c0_i32_0 = arith.constant 0 : i32
    %c0_i32_1 = arith.constant 0 : i32
    return %c0_i32, %c0_i32_0 : i32, i32
  }
  func.func @transform_12(%arg0: i32) -> (i32, i32) {
    %c0_i32 = arith.constant 0 : i32
    %c0_i32_0 = arith.constant 0 : i32
    %c0_i32_1 = arith.constant 0 : i32
    return %c0_i32, %c0_i32_0 : i32, i32
  }
  func.func @transform_13(%arg0: i32) -> (i32, i32) {
    %c0_i32 = arith.constant 0 : i32
    %c0_i32_0 = arith.constant 0 : i32
    %c0_i32_1 = arith.constant 0 : i32
    return %c0_i32, %c0_i32_0 : i32, i32
  }
  func.func @transform_14(%arg0: i32) -> (i32, i32) {
    %c0_i32 = arith.constant 0 : i32
    %c0_i32_0 = arith.constant 0 : i32
    %c0_i32_1 = arith.constant 0 : i32
    return %c0_i32, %c0_i32_0 : i32, i32
  }
  func.func @transform_15(%arg0: i32) -> (i32, i32, i32) {
    %c0_i32 = arith.constant 0 : i32
    %c0_i32_0 = arith.constant 0 : i32
    %c0_i32_1 = arith.constant 0 : i32
    return %arg0, %c0_i32, %c0_i32_0 : i32, i32, i32
  }
}

</mosaic_0001>

<llo_original>
// kernel: stgcn_forward.1
$region0: #{stgcn_forward.1}
  #allocation0 [shape = 'u32[]', space=smem, size = 0x4, offset = 0x4, fixed_abs, tag = 'smem constant byte address 0x4 - core index']
  #allocation1 [shape = 'u32[144,128]{1,0:T(1,128)}', space=vmem, size = 0x12000, scoped, tag = 'internal scratch']
  #allocation2 [shape = 'bf16[768,64]{1,0:T(16,128)(2,1)}', space=vmem, size = 0x30000, scoped, tag = 'scratch operand']
  #allocation3 [shape = 'bf16[768,128]{1,0:T(16,128)(2,1)}', space=vmem, size = 0x30000, scoped, tag = 'scratch operand']
  %s0 = inlined_call_operand.vmem [shape: f32[2,384,4], index: 0, kind: input, shape index: {}]
  %s1 = inlined_call_operand.vmem [shape: bf16[48,48], index: 1, kind: input, shape index: {}]
  %s2 = inlined_call_operand.vmem [shape: bf16[1,384], index: 2, kind: input, shape index: {}]
  %s3 = inlined_call_operand.vmem [shape: bf16[4,128], index: 3, kind: input, shape index: {}]
  %s4 = inlined_call_operand.vmem [shape: f32[1,128], index: 4, kind: input, shape index: {}]
  %s5 = inlined_call_operand.vmem [shape: f32[1,64], index: 5, kind: input, shape index: {}]
  %s6 = inlined_call_operand.vmem [shape: bf16[576,64], index: 6, kind: input, shape index: {}]
  %s7 = inlined_call_operand.vmem [shape: f32[1,64], index: 7, kind: input, shape index: {}]
  %s8 = inlined_call_operand.vmem [shape: bf16[64,256], index: 8, kind: input, shape index: {}]
  %s9 = inlined_call_operand.vmem [shape: f32[1,256], index: 9, kind: input, shape index: {}]
  %s10 = inlined_call_operand.vmem [shape: f32[1,128], index: 10, kind: input, shape index: {}]
  %s11 = inlined_call_operand.vmem [shape: bf16[1152,128], index: 11, kind: input, shape index: {}]
  %s12 = inlined_call_operand.vmem [shape: f32[1,128], index: 12, kind: input, shape index: {}]
  %s13 = inlined_call_operand.vmem [shape: f32[128,5], index: 13, kind: input, shape index: {}]
  %s14 = inlined_call_operand.vmem [shape: f32[1,5], index: 14, kind: input, shape index: {}]
  %s15 = inlined_call_operand.hbm [shape: f32[2,1,5], index: 15, kind: output, shape index: {}]
  %s16 = sld [smem:[#allocation0]]
  $region93: #{stgcn_forward.1} parent=0
    _
  %s18 = ssub.s32 1, %s16
  %s19 = scalar_select 0, %s18, %s16
  $region1: #{stgcn_forward.1} parent=0
    #allocation4 [shape = 'u8[1024]{0}', space=vmem, size = 0x400, scoped, tag = 'output window, operand 0']
    #allocation5 [shape = 's32[2]{0}', space=sflag, size = 0x8, scoped, tag = 'scoped memory for stgcn_forward.1']
    %20 = vsyncpa [#allocation5], 0
    %s21 = scalar_lea.sflag [#allocation5], 1
    %22 = vsyncpa %s21, 0
    loop: start=0, step=1, limit=4
    $region2: #{stgcn_forward.1} parent=1 // loop_pre_header
      _
    $region3: #{stgcn_forward.1} parent=1 // loop_header
      %s24 = sphi 0, %s28
      %p25 = scmp.ge.s32.totalorder %s24, 4
      %s34 = sphi 0, %s36
      %s37 = sphi 0, %s34
      %s38 = sphi 0, %s37
      %s54 = sphi 0, %s38
      %s58 = sphi 0, %s58
      %s60 = sphi 0, %s58
      %s61 = sphi 0, %s60
      %s75 = sphi 0, %s61
      %s79 = sphi 0, %s79
      %s81 = sphi 0, %s79
      %s82 = sphi 0, %s81
      %s96 = sphi 0, %s82
      %s100 = sphi 0, %s100
      %s102 = sphi 0, %s100
      %s103 = sphi 0, %s102
      %s117 = sphi 0, %s103
      %s121 = sphi 0, %s121
      %s123 = sphi 0, %s121
      %s124 = sphi 0, %s123
      %s138 = sphi 0, %s124
      %s142 = sphi 0, %s142
      %s144 = sphi 0, %s142
      %s145 = sphi 0, %s144
      %s159 = sphi 0, %s145
      %s163 = sphi 0, %s163
      %s165 = sphi 0, %s163
      %s166 = sphi 0, %s165
      %s180 = sphi 0, %s166
      %s184 = sphi 0, %s184
      %s186 = sphi 0, %s184
      %s187 = sphi 0, %s186
      %s201 = sphi 0, %s187
      %s205 = sphi 0, %s205
      %s207 = sphi 0, %s205
      %s208 = sphi 0, %s207
      %s222 = sphi 0, %s208
      %s226 = sphi 0, %s226
      %s228 = sphi 0, %s226
      %s229 = sphi 0, %s228
      %s243 = sphi 0, %s229
      %s247 = sphi 0, %s247
      %s249 = sphi 0, %s247
      %s250 = sphi 0, %s249
      %s264 = sphi 0, %s250
      %s268 = sphi 0, %s268
      %s270 = sphi 0, %s268
      %s271 = sphi 0, %s270
      %s285 = sphi 0, %s271
      %s289 = sphi 0, %s289
      %s291 = sphi 0, %s289
      %s292 = sphi 0, %s291
      %s306 = sphi 0, %s292
      %s310 = sphi 0, %s310
      %s312 = sphi 0, %s310
      %s313 = sphi 0, %s312
      %s327 = sphi 0, %s313
      %s331 = sphi 0, %s331
      %s333 = sphi 0, %s331
      %s334 = sphi 0, %s333
      %s348 = sphi 0, %s334
      %s354 = sphi 0, %s356
      %s357 = sphi 0, %s354
      %s358 = sphi 0, %s357
      %s374 = sphi 0, %s358
    $region4: #{stgcn_forward.1} parent=1 // loop_header_branch
      %27 = sbr.rel (%p25) target = $region8
    $region5: #{stgcn_forward.1} parent=1 // loop_body
      %s29 = ssub.s32 %s24, 1
      %s30 = ssub.s32 %s24, 2
      %s31 = sadd.s32 %s24, 1
      %s32 = ssub.s32 %s24, %s31
      %p33 = scmp.eq.s32.totalorder %s32, 0
      %s35 = sadd.s32 %s34, 1
      %s36 = scalar_select %p33, %s34, %s35
      %p39 = pneg %p33
      %p40 = scmp.eq.s32.totalorder %s24, 1
      %p41 = por %p39, %p40
      %p42 = scmp.ne.s32.totalorder %s34, %s37
      %p43 = scmp.eq.s32.totalorder %s24, 0
      %p44 = por %p42, %p43
      %p45 = scmp.ne.s32.totalorder %s34, %s37
      %p46 = scmp.eq.s32.totalorder %s29, 1
      %p47 = por %p45, %p46
      %p48 = scmp.ne.s32.totalorder %s37, %s38
      %p49 = scmp.eq.s32.totalorder %s29, 0
      %p50 = por %p48, %p49
      %p51 = scmp.ne.s32.totalorder %s37, %s38
      %p52 = scmp.eq.s32.totalorder %s30, 1
      %p53 = por %p51, %p52
      %p55 = scmp.ne.s32.totalorder %s38, %s54
      %p56 = scmp.eq.s32.totalorder %s30, 0
      %p57 = por %p55, %p56
      %s59 = sadd.s32 %s58, 1
      %p62 = scmp.eq.s32.totalorder %s24, 1
      %p63 = scmp.ne.s32.totalorder %s58, %s60
      %p64 = scmp.eq.s32.totalorder %s24, 0
      %p65 = por %p63, %p64
      %p66 = scmp.ne.s32.totalorder %s58, %s60
      %p67 = scmp.eq.s32.totalorder %s29, 1
      %p68 = por %p66, %p67
      %p69 = scmp.ne.s32.totalorder %s60, %s61
      %p70 = scmp.eq.s32.totalorder %s29, 0
      %p71 = por %p69, %p70
      %p72 = scmp.ne.s32.totalorder %s60, %s61
      %p73 = scmp.eq.s32.totalorder %s30, 1
      %p74 = por %p72, %p73
      %p76 = scmp.ne.s32.totalorder %s61, %s75
      %p77 = scmp.eq.s32.totalorder %s30, 0
      %p78 = por %p76, %p77
      %s80 = sadd.s32 %s79, 1
      %p83 = scmp.eq.s32.totalorder %s24, 1
      %p84 = scmp.ne.s32.totalorder %s79, %s81
      %p85 = scmp.eq.s32.totalorder %s24, 0
      %p86 = por %p84, %p85
      %p87 = scmp.ne.s32.totalorder %s79, %s81
      %p88 = scmp.eq.s32.totalorder %s29, 1
      %p89 = por %p87, %p88
      %p90 = scmp.ne.s32.totalorder %s81, %s82
      %p91 = scmp.eq.s32.totalorder %s29, 0
      %p92 = por %p90, %p91
      %p93 = scmp.ne.s32.totalorder %s81, %s82
      %p94 = scmp.eq.s32.totalorder %s30, 1
      %p95 = por %p93, %p94
      %p97 = scmp.ne.s32.totalorder %s82, %s96
      %p98 = scmp.eq.s32.totalorder %s30, 0
      %p99 = por %p97, %p98
      %s101 = sadd.s32 %s100, 1
      %p104 = scmp.eq.s32.totalorder %s24, 1
      %p105 = scmp.ne.s32.totalorder %s100, %s102
      %p106 = scmp.eq.s32.totalorder %s24, 0
      %p107 = por %p105, %p106
      %p108 = scmp.ne.s32.totalorder %s100, %s102
      %p109 = scmp.eq.s32.totalorder %s29, 1
      %p110 = por %p108, %p109
      %p111 = scmp.ne.s32.totalorder %s102, %s103
      %p112 = scmp.eq.s32.totalorder %s29, 0
      %p113 = por %p111, %p112
      %p114 = scmp.ne.s32.totalorder %s102, %s103
      %p115 = scmp.eq.s32.totalorder %s30, 1
      %p116 = por %p114, %p115
      %p118 = scmp.ne.s32.totalorder %s103, %s117
      %p119 = scmp.eq.s32.totalorder %s30, 0
      %p120 = por %p118, %p119
      %s122 = sadd.s32 %s121, 1
      %p125 = scmp.eq.s32.totalorder %s24, 1
      %p126 = scmp.ne.s32.totalorder %s121, %s123
      %p127 = scmp.eq.s32.totalorder %s24, 0
      %p128 = por %p126, %p127
      %p129 = scmp.ne.s32.totalorder %s121, %s123
      %p130 = scmp.eq.s32.totalorder %s29, 1
      %p131 = por %p129, %p130
      %p132 = scmp.ne.s32.totalorder %s123, %s124
      %p133 = scmp.eq.s32.totalorder %s29, 0
      %p134 = por %p132, %p133
      %p135 = scmp.ne.s32.totalorder %s123, %s124
      %p136 = scmp.eq.s32.totalorder %s30, 1
      %p137 = por %p135, %p136
      %p139 = scmp.ne.s32.totalorder %s124, %s138
      %p140 = scmp.eq.s32.totalorder %s30, 0
      %p141 = por %p139, %p140
      %s143 = sadd.s32 %s142, 1
      %p146 = scmp.eq.s32.totalorder %s24, 1
      %p147 = scmp.ne.s32.totalorder %s142, %s144
      %p148 = scmp.eq.s32.totalorder %s24, 0
      %p149 = por %p147, %p148
      %p150 = scmp.ne.s32.totalorder %s142, %s144
      %p151 = scmp.eq.s32.totalorder %s29, 1
      %p152 = por %p150, %p151
      %p153 = scmp.ne.s32.totalorder %s144, %s145
      %p154 = scmp.eq.s32.totalorder %s29, 0
      %p155 = por %p153, %p154
      %p156 = scmp.ne.s32.totalorder %s144, %s145
      %p157 = scmp.eq.s32.totalorder %s30, 1
      %p158 = por %p156, %p157
      %p160 = scmp.ne.s32.totalorder %s145, %s159
      %p161 = scmp.eq.s32.totalorder %s30, 0
      %p162 = por %p160, %p161
      %s164 = sadd.s32 %s163, 1
      %p167 = scmp.eq.s32.totalorder %s24, 1
      %p168 = scmp.ne.s32.totalorder %s163, %s165
      %p169 = scmp.eq.s32.totalorder %s24, 0
      %p170 = por %p168, %p169
      %p171 = scmp.ne.s32.totalorder %s163, %s165
      %p172 = scmp.eq.s32.totalorder %s29, 1
      %p173 = por %p171, %p172
      %p174 = scmp.ne.s32.totalorder %s165, %s166
      %p175 = scmp.eq.s32.totalorder %s29, 0
      %p176 = por %p174, %p175
      %p177 = scmp.ne.s32.totalorder %s165, %s166
      %p178 = scmp.eq.s32.totalorder %s30, 1
      %p179 = por %p177, %p178
      %p181 = scmp.ne.s32.totalorder %s166, %s180
      %p182 = scmp.eq.s32.totalorder %s30, 0
      %p183 = por %p181, %p182
      %s185 = sadd.s32 %s184, 1
      %p188 = scmp.eq.s32.totalorder %s24, 1
      %p189 = scmp.ne.s32.totalorder %s184, %s186
      %p190 = scmp.eq.s32.totalorder %s24, 0
      %p191 = por %p189, %p190
      %p192 = scmp.ne.s32.totalorder %s184, %s186
      %p193 = scmp.eq.s32.totalorder %s29, 1
      %p194 = por %p192, %p193
      %p195 = scmp.ne.s32.totalorder %s186, %s187
      %p196 = scmp.eq.s32.totalorder %s29, 0
      %p197 = por %p195, %p196
      %p198 = scmp.ne.s32.totalorder %s186, %s187
      %p199 = scmp.eq.s32.totalorder %s30, 1
      %p200 = por %p198, %p199
      %p202 = scmp.ne.s32.totalorder %s187, %s201
      %p203 = scmp.eq.s32.totalorder %s30, 0
      %p204 = por %p202, %p203
      %s206 = sadd.s32 %s205, 1
      %p209 = scmp.eq.s32.totalorder %s24, 1
      %p210 = scmp.ne.s32.totalorder %s205, %s207
      %p211 = scmp.eq.s32.totalorder %s24, 0
      %p212 = por %p210, %p211
      %p213 = scmp.ne.s32.totalorder %s205, %s207
      %p214 = scmp.eq.s32.totalorder %s29, 1
      %p215 = por %p213, %p214
      %p216 = scmp.ne.s32.totalorder %s207, %s208
      %p217 = scmp.eq.s32.totalorder %s29, 0
      %p218 = por %p216, %p217
      %p219 = scmp.ne.s32.totalorder %s207, %s208
      %p220 = scmp.eq.s32.totalorder %s30, 1
      %p221 = por %p219, %p220
      %p223 = scmp.ne.s32.totalorder %s208, %s222
      %p224 = scmp.eq.s32.totalorder %s30, 0
      %p225 = por %p223, %p224
      %s227 = sadd.s32 %s226, 1
      %p230 = scmp.eq.s32.totalorder %s24, 1
      %p231 = scmp.ne.s32.totalorder %s226, %s228
      %p232 = scmp.eq.s32.totalorder %s24, 0
      %p233 = por %p231, %p232
      %p234 = scmp.ne.s32.totalorder %s226, %s228
      %p235 = scmp.eq.s32.totalorder %s29, 1
      %p236 = por %p234, %p235
      %p237 = scmp.ne.s32.totalorder %s228, %s229
      %p238 = scmp.eq.s32.totalorder %s29, 0
      %p239 = por %p237, %p238
      %p240 = scmp.ne.s32.totalorder %s228, %s229
      %p241 = scmp.eq.s32.totalorder %s30, 1
      %p242 = por %p240, %p241
      %p244 = scmp.ne.s32.totalorder %s229, %s243
      %p245 = scmp.eq.s32.totalorder %s30, 0
      %p246 = por %p244, %p245
      %s248 = sadd.s32 %s247, 1
      %p251 = scmp.eq.s32.totalorder %s24, 1
      %p252 = scmp.ne.s32.totalorder %s247, %s249
      %p253 = scmp.eq.s32.totalorder %s24, 0
      %p254 = por %p252, %p253
      %p255 = scmp.ne.s32.totalorder %s247, %s249
      %p256 = scmp.eq.s32.totalorder %s29, 1
      %p257 = por %p255, %p256
      %p258 = scmp.ne.s32.totalorder %s249, %s250
      %p259 = scmp.eq.s32.totalorder %s29, 0
      %p260 = por %p258, %p259
      %p261 = scmp.ne.s32.totalorder %s249, %s250
      %p262 = scmp.eq.s32.totalorder %s30, 1
      %p263 = por %p261, %p262
      %p265 = scmp.ne.s32.totalorder %s250, %s264
      %p266 = scmp.eq.s32.totalorder %s30, 0
      %p267 = por %p265, %p266
      %s269 = sadd.s32 %s268, 1
      %p272 = scmp.eq.s32.totalorder %s24, 1
      %p273 = scmp.ne.s32.totalorder %s268, %s270
      %p274 = scmp.eq.s32.totalorder %s24, 0
      %p275 = por %p273, %p274
      %p276 = scmp.ne.s32.totalorder %s268, %s270
      %p277 = scmp.eq.s32.totalorder %s29, 1
      %p278 = por %p276, %p277
      %p279 = scmp.ne.s32.totalorder %s270, %s271
      %p280 = scmp.eq.s32.totalorder %s29, 0
      %p281 = por %p279, %p280
      %p282 = scmp.ne.s32.totalorder %s270, %s271
      %p283 = scmp.eq.s32.totalorder %s30, 1
      %p284 = por %p282, %p283
      %p286 = scmp.ne.s32.totalorder %s271, %s285
      %p287 = scmp.eq.s32.totalorder %s30, 0
      %p288 = por %p286, %p287
      %s290 = sadd.s32 %s289, 1
      %p293 = scmp.eq.s32.totalorder %s24, 1
      %p294 = scmp.ne.s32.totalorder %s289, %s291
      %p295 = scmp.eq.s32.totalorder %s24, 0
      %p296 = por %p294, %p295
      %p297 = scmp.ne.s32.totalorder %s289, %s291
      %p298 = scmp.eq.s32.totalorder %s29, 1
      %p299 = por %p297, %p298
      %p300 = scmp.ne.s32.totalorder %s291, %s292
      %p301 = scmp.eq.s32.totalorder %s29, 0
      %p302 = por %p300, %p301
      %p303 = scmp.ne.s32.totalorder %s291, %s292
      %p304 = scmp.eq.s32.totalorder %s30, 1
      %p305 = por %p303, %p304
      %p307 = scmp.ne.s32.totalorder %s292, %s306
      %p308 = scmp.eq.s32.totalorder %s30, 0
      %p309 = por %p307, %p308
      %s311 = sadd.s32 %s310, 1
      %p314 = scmp.eq.s32.totalorder %s24, 1
      %p315 = scmp.ne.s32.totalorder %s310, %s312
      %p316 = scmp.eq.s32.totalorder %s24, 0
      %p317 = por %p315, %p316
      %p318 = scmp.ne.s32.totalorder %s310, %s312
      %p319 = scmp.eq.s32.totalorder %s29, 1
      %p320 = por %p318, %p319
      %p321 = scmp.ne.s32.totalorder %s312, %s313
      %p322 = scmp.eq.s32.totalorder %s29, 0
      %p323 = por %p321, %p322
      %p324 = scmp.ne.s32.totalorder %s312, %s313
      %p325 = scmp.eq.s32.totalorder %s30, 1
      %p326 = por %p324, %p325
      %p328 = scmp.ne.s32.totalorder %s313, %s327
      %p329 = scmp.eq.s32.totalorder %s30, 0
      %p330 = por %p328, %p329
      %s332 = sadd.s32 %s331, 1
      %p335 = scmp.eq.s32.totalorder %s24, 1
      %p336 = scmp.ne.s32.totalorder %s331, %s333
      %p337 = scmp.eq.s32.totalorder %s24, 0
      %p338 = por %p336, %p337
      %p339 = scmp.ne.s32.totalorder %s331, %s333
      %p340 = scmp.eq.s32.totalorder %s29, 1
      %p341 = por %p339, %p340
      %p342 = scmp.ne.s32.totalorder %s333, %s334
      %p343 = scmp.eq.s32.totalorder %s29, 0
      %p344 = por %p342, %p343
      %p345 = scmp.ne.s32.totalorder %s333, %s334
      %p346 = scmp.eq.s32.totalorder %s30, 1
      %p347 = por %p345, %p346
      %p349 = scmp.ne.s32.totalorder %s334, %s348
      %p350 = scmp.eq.s32.totalorder %s30, 0
      %p351 = por %p349, %p350
      %s352 = ssub.s32 %s24, %s31
      %p353 = scmp.eq.s32.totalorder %s352, 0
      %s355 = sadd.s32 %s354, 1
      %s356 = scalar_select %p353, %s354, %s355
      %p359 = pneg %p353
      %p360 = scmp.eq.s32.totalorder %s24, 1
      %p361 = por %p359, %p360
      %p362 = scmp.ne.s32.totalorder %s354, %s357
      %p363 = scmp.eq.s32.totalorder %s24, 0
      %p364 = por %p362, %p363
      %p365 = scmp.ne.s32.totalorder %s354, %s357
      %p366 = scmp.eq.s32.totalorder %s29, 1
      %p367 = por %p365, %p366
      %p368 = scmp.ne.s32.totalorder %s357, %s358
      %p369 = scmp.eq.s32.totalorder %s29, 0
      %p370 = por %p368, %p369
      %p371 = scmp.ne.s32.totalorder %s357, %s358
      %p372 = scmp.eq.s32.totalorder %s30, 1
      %p373 = por %p371, %p372
      %p375 = scmp.ne.s32.totalorder %s358, %s374
      %p376 = scmp.eq.s32.totalorder %s30, 0
      %p377 = por %p375, %p376
      %p378 = scmp.le.s32.totalorder 1, %s24
      %p379 = scmp.lt.s32.totalorder %s24, 3
      %p380 = pnand %p378, %p379
      %p381 = pneg %p380
      // Predicated region
      $region9: #{stgcn_forward.1} parent=5 // pred_check
        _
      $region10: #{stgcn_forward.1} parent=5 // pred_check_branch
        %383 = sbr.rel (%p380) target = $region12
      $region11: #{stgcn_forward.1} parent=5 // pred_region
        %s384 = ssub.s32 %s24, 1
        // Predicated region
        $region13: #{stgcn_forward.1} parent=11 // pred_check
          %p385 = pneg %p71
        $region14: #{stgcn_forward.1} parent=11 // pred_check_branch
          %387 = sbr.rel (%p385) target = $region16
        $region15: #{stgcn_forward.1} parent=11 // pred_region
          _
        $region16: #{stgcn_forward.1} parent=11 // pred_fallthru
          _
        // Predicated region
        $region17: #{stgcn_forward.1} parent=11 // pred_check
          %p388 = pneg %p92
        $region18: #{stgcn_forward.1} parent=11 // pred_check_branch
          %390 = sbr.rel (%p388) target = $region20
        $region19: #{stgcn_forward.1} parent=11 // pred_region
          _
        $region20: #{stgcn_forward.1} parent=11 // pred_fallthru
          _
        // Predicated region
        $region21: #{stgcn_forward.1} parent=11 // pred_check
          %p391 = pneg %p113
        $region22: #{stgcn_forward.1} parent=11 // pred_check_branch
          %393 = sbr.rel (%p391) target = $region24
        $region23: #{stgcn_forward.1} parent=11 // pred_region
          _
        $region24: #{stgcn_forward.1} parent=11 // pred_fallthru
          _
        // Predicated region
        $region25: #{stgcn_forward.1} parent=11 // pred_check
          %p394 = pneg %p134
        $region26: #{stgcn_forward.1} parent=11 // pred_check_branch
          %396 = sbr.rel (%p394) target = $region28
        $region27: #{stgcn_forward.1} parent=11 // pred_region
          _
        $region28: #{stgcn_forward.1} parent=11 // pred_fallthru
          _
        // Predicated region
        $region29: #{stgcn_forward.1} parent=11 // pred_check
          %p397 = pneg %p155
        $region30: #{stgcn_forward.1} parent=11 // pred_check_branch
          %399 = sbr.rel (%p397) target = $region32
        $region31: #{stgcn_forward.1} parent=11 // pred_region
          _
        $region32: #{stgcn_forward.1} parent=11 // pred_fallthru
          _
        // Predicated region
        $region33: #{stgcn_forward.1} parent=11 // pred_check
          %p400 = pneg %p176
        $region34: #{stgcn_forward.1} parent=11 // pred_check_branch
          %402 = sbr.rel (%p400) target = $region36
        $region35: #{stgcn_forward.1} parent=11 // pred_region
          _
        $region36: #{stgcn_forward.1} parent=11 // pred_fallthru
          _
        // Predicated region
        $region37: #{stgcn_forward.1} parent=11 // pred_check
          %p403 = pneg %p197
        $region38: #{stgcn_forward.1} parent=11 // pred_check_branch
          %405 = sbr.rel (%p403) target = $region40
        $region39: #{stgcn_forward.1} parent=11 // pred_region
          _
        $region40: #{stgcn_forward.1} parent=11 // pred_fallthru
          _
        // Predicated region
        $region41: #{stgcn_forward.1} parent=11 // pred_check
          %p406 = pneg %p218
        $region42: #{stgcn_forward.1} parent=11 // pred_check_branch
          %408 = sbr.rel (%p406) target = $region44
        $region43: #{stgcn_forward.1} parent=11 // pred_region
          _
        $region44: #{stgcn_forward.1} parent=11 // pred_fallthru
          _
        // Predicated region
        $region45: #{stgcn_forward.1} parent=11 // pred_check
          %p409 = pneg %p239
        $region46: #{stgcn_forward.1} parent=11 // pred_check_branch
          %411 = sbr.rel (%p409) target = $region48
        $region47: #{stgcn_forward.1} parent=11 // pred_region
          _
        $region48: #{stgcn_forward.1} parent=11 // pred_fallthru
          _
        // Predicated region
        $region49: #{stgcn_forward.1} parent=11 // pred_check
          %p412 = pneg %p260
        $region50: #{stgcn_forward.1} parent=11 // pred_check_branch
          %414 = sbr.rel (%p412) target = $region52
        $region51: #{stgcn_forward.1} parent=11 // pred_region
          _
        $region52: #{stgcn_forward.1} parent=11 // pred_fallthru
          _
        // Predicated region
        $region53: #{stgcn_forward.1} parent=11 // pred_check
          %p415 = pneg %p281
        $region54: #{stgcn_forward.1} parent=11 // pred_check_branch
          %417 = sbr.rel (%p415) target = $region56
        $region55: #{stgcn_forward.1} parent=11 // pred_region
          _
        $region56: #{stgcn_forward.1} parent=11 // pred_fallthru
          _
        // Predicated region
        $region57: #{stgcn_forward.1} parent=11 // pred_check
          %p418 = pneg %p302
        $region58: #{stgcn_forward.1} parent=11 // pred_check_branch
          %420 = sbr.rel (%p418) target = $region60
        $region59: #{stgcn_forward.1} parent=11 // pred_region
          _
        $region60: #{stgcn_forward.1} parent=11 // pred_fallthru
          _
        // Predicated region
        $region61: #{stgcn_forward.1} parent=11 // pred_check
          %p421 = pneg %p323
        $region62: #{stgcn_forward.1} parent=11 // pred_check_branch
          %423 = sbr.rel (%p421) target = $region64
        $region63: #{stgcn_forward.1} parent=11 // pred_region
          _
        $region64: #{stgcn_forward.1} parent=11 // pred_fallthru
          _
        // Predicated region
        $region65: #{stgcn_forward.1} parent=11 // pred_check
          %p424 = pneg %p344
        $region66: #{stgcn_forward.1} parent=11 // pred_check_branch
          %426 = sbr.rel (%p424) target = $region68
        $region67: #{stgcn_forward.1} parent=11 // pred_region
          _
        $region68: #{stgcn_forward.1} parent=11 // pred_fallthru
          _
      $region12: #{stgcn_forward.1} parent=5 // pred_fallthru
        _
      %p427 = scmp.lt.s32.totalorder %s24, 2
      // Predicated region
      $region69: #{stgcn_forward.1} parent=5 // pred_check
        %p428 = pneg %p427
      $region70: #{stgcn_forward.1} parent=5 // pred_check_branch
        %430 = sbr.rel (%p428) target = $region72
      $region71: #{stgcn_forward.1} parent=5 // pred_region
        // Predicated region
        $region73: #{stgcn_forward.1} parent=71 // pred_check
          %p431 = pneg %p44
        $region74: #{stgcn_forward.1} parent=71 // pred_check_branch
          %433 = sbr.rel (%p431) target = $region76
        $region75: #{stgcn_forward.1} parent=71 // pred_region
          %p434 = scmp.lt.s32.totalorder %s24, 1
          %s435 = scalar_select %p434, %s24, 1
          %s436 = smul.addr %s435, 48
          %s437 = smul.addr %s436, 8
          %s438 = scalar_lea.vmem %s0, %s437
        $region76: #{stgcn_forward.1} parent=71 // pred_fallthru
          _
      $region72: #{stgcn_forward.1} parent=5 // pred_fallthru
        _
      %p439 = scmp.le.s32.totalorder 1, %s24
      %p440 = scmp.lt.s32.totalorder %s24, 3
      %p441 = pnand %p439, %p440
      %p442 = pneg %p441
      // Predicated region
      $region77: #{stgcn_forward.1} parent=5 // pred_check
        _
      $region78: #{stgcn_forward.1} parent=5 // pred_check_branch
        %444 = sbr.rel (%p441) target = $region80
      $region79: #{stgcn_forward.1} parent=5 // pred_region
        %s445 = ssub.s32 %s24, 1
        %p446 = scmp.lt.s32.totalorder %s29, 1
        %s447 = scalar_select %p446, %s29, 1
        %s448 = smul.addr %s447, 48
        %s449 = smul.addr %s448, 8
        %s450 = scalar_lea.vmem %s0, %s449
        %p451 = pneg %p50
        %p452 = pneg %p47
        %p453 = pneg %p71
        %p454 = pneg %p68
        %p455 = pneg %p92
        %p456 = pneg %p89
        %p457 = pneg %p113
        %p458 = pneg %p110
        %p459 = pneg %p134
        %p460 = pneg %p131
        %p461 = pneg %p155
        %p462 = pneg %p152
        %p463 = pneg %p176
        %p464 = pneg %p173
        %p465 = pneg %p197
        %p466 = pneg %p194
        %p467 = pneg %p218
        %p468 = pneg %p215
        %p469 = pneg %p239
        %p470 = pneg %p236
        %p471 = pneg %p260
        %p472 = pneg %p257
        %p473 = pneg %p281
        %p474 = pneg %p278
        %p475 = pneg %p302
        %p476 = pneg %p299
        %p477 = pneg %p323
        %p478 = pneg %p320
        %p479 = pneg %p344
        %p480 = pneg %p341
        %p481 = pneg %p370
        %p482 = pneg %p367
        %s483 = sand.u32 %s357, 1
        %s484 = scalar_lea.sflag [#allocation5], %s483
        %s485 = sand.u32 %s357, 1
        %s486 = scalar_lea.vmem [#allocation4], %s485
        %p487 = scmp.lt.s32.totalorder %s29, 1
        %s488 = scalar_select %p487, %s29, 1
        %s489 = smul.addr %s488, 48
        %s490 = smul.addr %s489, 8
        %s491 = scalar_lea.vmem %s0, %s490
        %v493 = vld [vmem:[%s1] sm:$0xf]
        %v494 = vld [vmem:[%s1 + $0x4] sm:$0xf]
        %v495 = vld [vmem:[%s1 + $0x8] sm:$0xf]
        %v496 = vld [vmem:[%s1 + $0xc] sm:$0xf]
        %v497 = vld [vmem:[%s1 + $0x10] sm:$0xf]
        %v498 = vld [vmem:[%s1 + $0x14] sm:$0xf]
        %v499 = vld [vmem:[%s491] sm:$0xff]
        %v500 = vld [vmem:[%s491 + $0x8] sm:$0xff]
        %v501 = vld [vmem:[%s491 + $0x10] sm:$0xff]
        %v502 = vld [vmem:[%s491 + $0x18] sm:$0xff]
        %v503 = vld [vmem:[%s491 + $0x20] sm:$0xff]
        %v504 = vld [vmem:[%s491 + $0x28] sm:$0xff]
        %v505 = vld [vmem:[%s491 + $0x30] sm:$0xff]
        %v506 = vld [vmem:[%s491 + $0x38] sm:$0xff]
        %v507 = vld [vmem:[%s491 + $0x40] sm:$0xff]
        %v508 = vld [vmem:[%s491 + $0x48] sm:$0xff]
        %v509 = vld [vmem:[%s491 + $0x50] sm:$0xff]
        %v510 = vld [vmem:[%s491 + $0x58] sm:$0xff]
        %v511 = vld [vmem:[%s491 + $0x60] sm:$0xff]
        %v512 = vld [vmem:[%s491 + $0x68] sm:$0xff]
        %v513 = vld [vmem:[%s491 + $0x70] sm:$0xff]
        %v514 = vld [vmem:[%s491 + $0x78] sm:$0xff]
        %v515 = vld [vmem:[%s491 + $0x80] sm:$0xff]
        %v516 = vld [vmem:[%s491 + $0x88] sm:$0xff]
        %v517 = vld [vmem:[%s491 + $0x90] sm:$0xff]
        %v518 = vld [vmem:[%s491 + $0x98] sm:$0xff]
        %v519 = vld [vmem:[%s491 + $0xa0] sm:$0xff]
        %v520 = vld [vmem:[%s491 + $0xa8] sm:$0xff]
        %v521 = vld [vmem:[%s491 + $0xb0] sm:$0xff]
        %v522 = vld [vmem:[%s491 + $0xb8] sm:$0xff]
        %v523 = vld [vmem:[%s491 + $0xc0] sm:$0xff]
        %v524 = vld [vmem:[%s491 + $0xc8] sm:$0xff]
        %v525 = vld [vmem:[%s491 + $0xd0] sm:$0xff]
        %v526 = vld [vmem:[%s491 + $0xd8] sm:$0xff]
        %v527 = vld [vmem:[%s491 + $0xe0] sm:$0xff]
        %v528 = vld [vmem:[%s491 + $0xe8] sm:$0xff]
        %v529 = vld [vmem:[%s491 + $0xf0] sm:$0xff]
        %v530 = vld [vmem:[%s491 + $0xf8] sm:$0xff]
        %v531 = vld [vmem:[%s491 + $0x100] sm:$0xff]
        %v532 = vld [vmem:[%s491 + $0x108] sm:$0xff]
        %v533 = vld [vmem:[%s491 + $0x110] sm:$0xff]
        %v534 = vld [vmem:[%s491 + $0x118] sm:$0xff]
        %v535 = vld [vmem:[%s491 + $0x120] sm:$0xff]
        %v536 = vld [vmem:[%s491 + $0x128] sm:$0xff]
        %v537 = vld [vmem:[%s491 + $0x130] sm:$0xff]
        %v538 = vld [vmem:[%s491 + $0x138] sm:$0xff]
        %v539 = vld [vmem:[%s491 + $0x140] sm:$0xff]
        %v540 = vld [vmem:[%s491 + $0x148] sm:$0xff]
        %v541 = vld [vmem:[%s491 + $0x150] sm:$0xff]
        %v542 = vld [vmem:[%s491 + $0x158] sm:$0xff]
        %v543 = vld [vmem:[%s491 + $0x160] sm:$0xff]
        %v544 = vld [vmem:[%s491 + $0x168] sm:$0xff]
        %v545 = vld [vmem:[%s491 + $0x170] sm:$0xff]
        %v546 = vld [vmem:[%s491 + $0x178] sm:$0xff]
        %v547 = vpack.c.bf16 %v500, %v499
        %v548 = vpack.c.bf16 %v502, %v501
        %v549 = vpack.c.bf16 %v504, %v503
        %v550 = vpack.c.bf16 %v506, %v505
        %v551 = vpack.c.bf16 %v508, %v507
        %v552 = vpack.c.bf16 %v510, %v509
        %v553 = vpack.c.bf16 %v512, %v511
        %v554 = vpack.c.bf16 %v514, %v513
        %v555 = vpack.c.bf16 %v516, %v515
        %v556 = vpack.c.bf16 %v518, %v517
        %v557 = vpack.c.bf16 %v520, %v519
        %v558 = vpack.c.bf16 %v522, %v521
        %v559 = vpack.c.bf16 %v524, %v523
        %v560 = vpack.c.bf16 %v526, %v525
        %v561 = vpack.c.bf16 %v528, %v527
        %v562 = vpack.c.bf16 %v530, %v529
        %v563 = vpack.c.bf16 %v532, %v531
        %v564 = vpack.c.bf16 %v534, %v533
        %v565 = vpack.c.bf16 %v536, %v535
        %v566 = vpack.c.bf16 %v538, %v537
        %v567 = vpack.c.bf16 %v540, %v539
        %v568 = vpack.c.bf16 %v542, %v541
        %v569 = vpack.c.bf16 %v544, %v543
        %v570 = vpack.c.bf16 %v546, %v545
        %v571 = vld [vmem:[%s3] sm:$0x3]
        %v572 = vld [vmem:[%s4] sm:$0x1]
        %v574 = vlaneseq
        %v575 = vshrl.u32 %v574, 7
        %v576 = vsub.s32 0, %v575
        %v577 = vrot.slane %v572, %v576
        %vm579 = vcmask 31744
        %v581 = vsel %vm579, %v547, 0
        %v584 = vsel %vm579, %v548, 0
        %v587 = vsel %vm579, %v549, 0
        %v590 = vsel %vm579, %v550, 0
        %v593 = vsel %vm579, %v551, 0
        %v596 = vsel %vm579, %v552, 0
        %v599 = vsel %vm579, %v553, 0
        %v602 = vsel %vm579, %v554, 0
        %v605 = vsel %vm579, %v555, 0
        %v608 = vsel %vm579, %v556, 0
        %v611 = vsel %vm579, %v557, 0
        %v614 = vsel %vm579, %v558, 0
        %v617 = vsel %vm579, %v559, 0
        %v620 = vsel %vm579, %v560, 0
        %v623 = vsel %vm579, %v561, 0
        %v626 = vsel %vm579, %v562, 0
        %v629 = vsel %vm579, %v563, 0
        %v632 = vsel %vm579, %v564, 0
        %v635 = vsel %vm579, %v565, 0
        %v638 = vsel %vm579, %v566, 0
        %v641 = vsel %vm579, %v567, 0
        %v644 = vsel %vm579, %v568, 0
        %v647 = vsel %vm579, %v569, 0
        %v650 = vsel %vm579, %v570, 0
        %vm652 = vcmask 1041408
        %v654 = vsel %vm652, %v571, 0
        %656 = vmatprep.subr.bf16.mxu0 0
        %657 = vmatpush1.bf16.msra.mxu0 %v654
        %658 = vmatprep.subr.bf16.mxu0 0
        %659 = vmatpush1.bf16.msra.mxu0 0
        %660 = vmatprep.subr.bf16.mxu0 0
        %661 = vmatpush1.bf16.msra.mxu0 0
        %662 = vmatprep.subr.bf16.mxu0 0
        %663 = vmatpush1.bf16.msra.mxu0 0
        %664 = vmatprep.subr.bf16.mxu0 0
        %665 = vmatpush1.bf16.msra.mxu0 0
        %666 = vmatprep.subr.bf16.mxu0 0
        %667 = vmatpush1.bf16.msra.mxu0 0
        %668 = vmatprep.subr.bf16.mxu0 0
        %669 = vmatpush1.bf16.msra.mxu0 0
        %670 = vmatprep.subr.bf16.mxu0 0
        %671 = vmatpush1.bf16.msra.mxu0 0
        %672 = vmatprep.subr.bf16.mxu0 0
        %673 = vmatpush1.bf16.msra.mxu0 0
        %674 = vmatprep.subr.bf16.mxu0 0
        %675 = vmatpush1.bf16.msra.mxu0 0
        %676 = vmatprep.subr.bf16.mxu0 0
        %677 = vmatpush1.bf16.msra.mxu0 0
        %678 = vmatprep.subr.bf16.mxu0 0
        %679 = vmatpush1.bf16.msra.mxu0 0
        %680 = vmatprep.subr.bf16.mxu0 0
        %681 = vmatpush1.bf16.msra.mxu0 0
        %682 = vmatprep.subr.bf16.mxu0 0
        %683 = vmatpush1.bf16.msra.mxu0 0
        %684 = vmatprep.subr.bf16.mxu0 0
        %685 = vmatpush1.bf16.msra.mxu0 0
        %686 = vmatprep.subr.bf16.mxu0 0
        %687 = vmatpush1.bf16.msra.mxu0 0
        %688 = vmatprep.mubr.bf16.mxu0 0
        %689 = vmatmul.mubr.bf16.gmra.mrb[0].mxu0 %v581
        %v690 = vpop.f32.mrb[0].mxu0
        %v691 = vadd.f32 %v577, %v690
        %v692 = vpop.f32.mrb[0].mxu0
        %v693 = vpop.f32.mrb[0].mxu0
        %v694 = vadd.f32 %v577, %v693
        %v695 = vpop.f32.mrb[0].mxu0
        %696 = vmatprep.mubr.bf16.mxu0 0
        %697 = vmatmul.mubr.bf16.gmra.mrb[0].mxu0 %v584
        %v698 = vpop.f32.mrb[0].mxu0
        %v699 = vadd.f32 %v577, %v698
        %v700 = vpop.f32.mrb[0].mxu0
        %v701 = vpop.f32.mrb[0].mxu0
        %v702 = vadd.f32 %v577, %v701
        %v703 = vpop.f32.mrb[0].mxu0
        %704 = vmatprep.mubr.bf16.mxu0 0
        %705 = vmatmul.mubr.bf16.gmra.mrb[0].mxu0 %v587
        %v706 = vpop.f32.mrb[0].mxu0
        %v707 = vadd.f32 %v577, %v706
        %v708 = vpop.f32.mrb[0].mxu0
        %v709 = vpop.f32.mrb[0].mxu0
        %v710 = vadd.f32 %v577, %v709
        %v711 = vpop.f32.mrb[0].mxu0
        %712 = vmatprep.mubr.bf16.mxu0 0
        %713 = vmatmul.mubr.bf16.gmra.mrb[0].mxu0 %v590
        %v714 = vpop.f32.mrb[0].mxu0
        %v715 = vadd.f32 %v577, %v714
        %v716 = vpop.f32.mrb[0].mxu0
        %v717 = vpop.f32.mrb[0].mxu0
        %v718 = vadd.f32 %v577, %v717
        %v719 = vpop.f32.mrb[0].mxu0
        %720 = vmatprep.mubr.bf16.mxu0 0
        %721 = vmatmul.mubr.bf16.gmra.mrb[0].mxu0 %v593
        %v722 = vpop.f32.mrb[0].mxu0
        %v723 = vadd.f32 %v577, %v722
        %v724 = vpop.f32.mrb[0].mxu0
        %v725 = vpop.f32.mrb[0].mxu0
        %v726 = vadd.f32 %v577, %v725
        %v727 = vpop.f32.mrb[0].mxu0
        %728 = vmatprep.mubr.bf16.mxu0 0
        %729 = vmatmul.mubr.bf16.gmra.mrb[0].mxu0 %v596
        %v730 = vpop.f32.mrb[0].mxu0
        %v731 = vadd.f32 %v577, %v730
        %v732 = vpop.f32.mrb[0].mxu0
        %v733 = vpop.f32.mrb[0].mxu0
        %v734 = vadd.f32 %v577, %v733
        %v735 = vpop.f32.mrb[0].mxu0
        %736 = vmatprep.mubr.bf16.mxu0 0
        %737 = vmatmul.mubr.bf16.gmra.mrb[0].mxu0 %v599
        %v738 = vpop.f32.mrb[0].mxu0
        %v739 = vadd.f32 %v577, %v738
        %v740 = vpop.f32.mrb[0].mxu0
        %v741 = vpop.f32.mrb[0].mxu0
        %v742 = vadd.f32 %v577, %v741
        %v743 = vpop.f32.mrb[0].mxu0
        %744 = vmatprep.mubr.bf16.mxu0 0
        %745 = vmatmul.mubr.bf16.gmra.mrb[0].mxu0 %v602
        %v746 = vpop.f32.mrb[0].mxu0
        %v747 = vadd.f32 %v577, %v746
        %v748 = vpop.f32.mrb[0].mxu0
        %v749 = vpop.f32.mrb[0].mxu0
        %v750 = vadd.f32 %v577, %v749
        %v751 = vpop.f32.mrb[0].mxu0
        %752 = vmatprep.mubr.bf16.mxu0 0
        %753 = vmatmul.mubr.bf16.gmra.mrb[0].mxu0 %v605
        %v754 = vpop.f32.mrb[0].mxu0
        %v755 = vadd.f32 %v577, %v754
        %v756 = vpop.f32.mrb[0].mxu0
        %v757 = vpop.f32.mrb[0].mxu0
        %v758 = vadd.f32 %v577, %v757
        %v759 = vpop.f32.mrb[0].mxu0
        %760 = vmatprep.mubr.bf16.mxu0 0
        %761 = vmatmul.mubr.bf16.gmra.mrb[0].mxu0 %v608
        %v762 = vpop.f32.mrb[0].mxu0
        %v763 = vadd.f32 %v577, %v762
        %v764 = vpop.f32.mrb[0].mxu0
        %v765 = vpop.f32.mrb[0].mxu0
        %v766 = vadd.f32 %v577, %v765
        %v767 = vpop.f32.mrb[0].mxu0
        %768 = vmatprep.mubr.bf16.mxu0 0
        %769 = vmatmul.mubr.bf16.gmra.mrb[0].mxu0 %v611
        %v770 = vpop.f32.mrb[0].mxu0
        %v771 = vadd.f32 %v577, %v770
        %v772 = vpop.f32.mrb[0].mxu0
        %v773 = vpop.f32.mrb[0].mxu0
        %v774 = vadd.f32 %v577, %v773
        %v775 = vpop.f32.mrb[0].mxu0
        %776 = vmatprep.mubr.bf16.mxu0 0
        %777 = vmatmul.mubr.bf16.gmra.mrb[0].mxu0 %v614
        %v778 = vpop.f32.mrb[0].mxu0
        %v779 = vadd.f32 %v577, %v778
        %v780 = vpop.f32.mrb[0].mxu0
        %v781 = vpop.f32.mrb[0].mxu0
        %v782 = vadd.f32 %v577, %v781
        %v783 = vpop.f32.mrb[0].mxu0
        %784 = vmatprep.mubr.bf16.mxu0 0
        %785 = vmatmul.mubr.bf16.gmra.mrb[0].mxu0 %v617
        %v786 = vpop.f32.mrb[0].mxu0
        %v787 = vadd.f32 %v577, %v786
        %v788 = vpop.f32.mrb[0].mxu0
        %v789 = vpop.f32.mrb[0].mxu0
        %v790 = vadd.f32 %v577, %v789
        %v791 = vpop.f32.mrb[0].mxu0
        %792 = vmatprep.mubr.bf16.mxu0 0
        %793 = vmatmul.mubr.bf16.gmra.mrb[0].mxu0 %v620
        %v794 = vpop.f32.mrb[0].mxu0
        %v795 = vadd.f32 %v577, %v794
        %v796 = vpop.f32.mrb[0].mxu0
        %v797 = vpop.f32.mrb[0].mxu0
        %v798 = vadd.f32 %v577, %v797
        %v799 = vpop.f32.mrb[0].mxu0
        %800 = vmatprep.mubr.bf16.mxu0 0
        %801 = vmatmul.mubr.bf16.gmra.mrb[0].mxu0 %v623
        %v802 = vpop.f32.mrb[0].mxu0
        %v803 = vadd.f32 %v577, %v802
        %v804 = vpop.f32.mrb[0].mxu0
        %v805 = vpop.f32.mrb[0].mxu0
        %v806 = vadd.f32 %v577, %v805
        %v807 = vpop.f32.mrb[0].mxu0
        %808 = vmatprep.mubr.bf16.mxu0 0
        %809 = vmatmul.mubr.bf16.gmra.mrb[0].mxu0 %v626
        %v810 = vpop.f32.mrb[0].mxu0
        %v811 = vadd.f32 %v577, %v810
        %v812 = vpop.f32.mrb[0].mxu0
        %v813 = vpop.f32.mrb[0].mxu0
        %v814 = vadd.f32 %v577, %v813
        %v815 = vpop.f32.mrb[0].mxu0
        %816 = vmatprep.mubr.bf16.mxu0 0
        %817 = vmatmul.mubr.bf16.gmra.mrb[0].mxu0 %v629
        %v818 = vpop.f32.mrb[0].mxu0
        %v819 = vadd.f32 %v577, %v818
        %v820 = vpop.f32.mrb[0].mxu0
        %v821 = vpop.f32.mrb[0].mxu0
        %v822 = vadd.f32 %v577, %v821
        %v823 = vpop.f32.mrb[0].mxu0
        %824 = vmatprep.mubr.bf16.mxu0 0
        %825 = vmatmul.mubr.bf16.gmra.mrb[0].mxu0 %v632
        %v826 = vpop.f32.mrb[0].mxu0
        %v827 = vadd.f32 %v577, %v826
        %v828 = vpop.f32.mrb[0].mxu0
        %v829 = vpop.f32.mrb[0].mxu0
        %v830 = vadd.f32 %v577, %v829
        %v831 = vpop.f32.mrb[0].mxu0
        %832 = vmatprep.mubr.bf16.mxu0 0
        %833 = vmatmul.mubr.bf16.gmra.mrb[0].mxu0 %v635
        %v834 = vpop.f32.mrb[0].mxu0
        %v835 = vadd.f32 %v577, %v834
        %v836 = vpop.f32.mrb[0].mxu0
        %v837 = vpop.f32.mrb[0].mxu0
        %v838 = vadd.f32 %v577, %v837
        %v839 = vpop.f32.mrb[0].mxu0
        %840 = vmatprep.mubr.bf16.mxu0 0
        %841 = vmatmul.mubr.bf16.gmra.mrb[0].mxu0 %v638
        %v842 = vpop.f32.mrb[0].mxu0
        %v843 = vadd.f32 %v577, %v842
        %v844 = vpop.f32.mrb[0].mxu0
        %v845 = vpop.f32.mrb[0].mxu0
        %v846 = vadd.f32 %v577, %v845
        %v847 = vpop.f32.mrb[0].mxu0
        %848 = vmatprep.mubr.bf16.mxu0 0
        %849 = vmatmul.mubr.bf16.gmra.mrb[0].mxu0 %v641
        %v850 = vpop.f32.mrb[0].mxu0
        %v851 = vadd.f32 %v577, %v850
        %v852 = vpop.f32.mrb[0].mxu0
        %v853 = vpop.f32.mrb[0].mxu0
        %v854 = vadd.f32 %v577, %v853
        %v855 = vpop.f32.mrb[0].mxu0
        %856 = vmatprep.mubr.bf16.mxu0 0
        %857 = vmatmul.mubr.bf16.gmra.mrb[0].mxu0 %v644
        %v858 = vpop.f32.mrb[0].mxu0
        %v859 = vadd.f32 %v577, %v858
        %v860 = vpop.f32.mrb[0].mxu0
        %v861 = vpop.f32.mrb[0].mxu0
        %v862 = vadd.f32 %v577, %v861
        %v863 = vpop.f32.mrb[0].mxu0
        %864 = vmatprep.mubr.bf16.mxu0 0
        %865 = vmatmul.mubr.bf16.gmra.mrb[0].mxu0 %v647
        %v866 = vpop.f32.mrb[0].mxu0
        %v867 = vadd.f32 %v577, %v866
        %v868 = vpop.f32.mrb[0].mxu0
        %v869 = vpop.f32.mrb[0].mxu0
        %v870 = vadd.f32 %v577, %v869
        %v871 = vpop.f32.mrb[0].mxu0
        %872 = vmatprep.mubr.bf16.mxu0 0
        %873 = vmatmul.mubr.bf16.gmra.mrb[0].mxu0 %v650
        %v874 = vpop.f32.mrb[0].mxu0
        %v875 = vadd.f32 %v577, %v874
        %v876 = vpop.f32.mrb[0].mxu0
        %v877 = vpop.f32.mrb[0].mxu0
        %v878 = vadd.f32 %v577, %v877
        %v879 = vpop.f32.mrb[0].mxu0
        %880 = vdwg.mxu0
        %v881 = vpack.c.bf16 %v694, %v691
        %v882 = vpack.c.bf16 %v702, %v699
        %v883 = vpack.c.bf16 %v710, %v707
        %v884 = vpack.c.bf16 %v718, %v715
        %v885 = vpack.c.bf16 %v726, %v723
        %v886 = vpack.c.bf16 %v734, %v731
        %v887 = vpack.c.bf16 %v742, %v739
        %v888 = vpack.c.bf16 %v750, %v747
        %v889 = vpack.c.bf16 %v758, %v755
        %v890 = vpack.c.bf16 %v766, %v763
        %v891 = vpack.c.bf16 %v774, %v771
        %v892 = vpack.c.bf16 %v782, %v779
        %v893 = vpack.c.bf16 %v790, %v787
        %v894 = vpack.c.bf16 %v798, %v795
        %v895 = vpack.c.bf16 %v806, %v803
        %v896 = vpack.c.bf16 %v814, %v811
        %v897 = vpack.c.bf16 %v822, %v819
        %v898 = vpack.c.bf16 %v830, %v827
        %v899 = vpack.c.bf16 %v838, %v835
        %v900 = vpack.c.bf16 %v846, %v843
        %v901 = vpack.c.bf16 %v854, %v851
        %v902 = vpack.c.bf16 %v862, %v859
        %v903 = vpack.c.bf16 %v870, %v867
        %v904 = vpack.c.bf16 %v878, %v875
        %vm905 = vcmask 523264
        %906 = vst.msk [vmem:[#allocation2] sm:$0xff] %vm905, 0
        %907 = vst.msk [vmem:[#allocation2 + $0x8] sm:$0xff] %vm905, 0
        %908 = vst.msk [vmem:[#allocation2 + $0x10] sm:$0xff] %vm905, 0
        %909 = vst.msk [vmem:[#allocation2 + $0x18] sm:$0xff] %vm905, 0
        %910 = vst.msk [vmem:[#allocation2 + $0x20] sm:$0xff] %vm905, 0
        %911 = vst.msk [vmem:[#allocation2 + $0x28] sm:$0xff] %vm905, 0
        %912 = vst.msk [vmem:[#allocation2 + $0x30] sm:$0xff] %vm905, 0
        %913 = vst.msk [vmem:[#allocation2 + $0x38] sm:$0xff] %vm905, 0
        %914 = vst.msk [vmem:[#allocation2 + $0x40] sm:$0xff] %vm905, 0
        %915 = vst.msk [vmem:[#allocation2 + $0x48] sm:$0xff] %vm905, 0
        %916 = vst.msk [vmem:[#allocation2 + $0x50] sm:$0xff] %vm905, 0
        %917 = vst.msk [vmem:[#allocation2 + $0x58] sm:$0xff] %vm905, 0
        %918 = vst.msk [vmem:[#allocation2 + $0x120] sm:$0xff] %vm905, 0
        %919 = vst.msk [vmem:[#allocation2 + $0x128] sm:$0xff] %vm905, 0
        %920 = vst.msk [vmem:[#allocation2 + $0x130] sm:$0xff] %vm905, 0
        %921 = vst.msk [vmem:[#allocation2 + $0x138] sm:$0xff] %vm905, 0
        %922 = vst.msk [vmem:[#allocation2 + $0x140] sm:$0xff] %vm905, 0
        %923 = vst.msk [vmem:[#allocation2 + $0x148] sm:$0xff] %vm905, 0
        %924 = vst.msk [vmem:[#allocation2 + $0x150] sm:$0xff] %vm905, 0
        %925 = vst.msk [vmem:[#allocation2 + $0x158] sm:$0xff] %vm905, 0
        %926 = vst.msk [vmem:[#allocation2 + $0x160] sm:$0xff] %vm905, 0
        %927 = vst.msk [vmem:[#allocation2 + $0x168] sm:$0xff] %vm905, 0
        %928 = vst.msk [vmem:[#allocation2 + $0x170] sm:$0xff] %vm905, 0
        %929 = vst.msk [vmem:[#allocation2 + $0x178] sm:$0xff] %vm905, 0
        %v930 = vld [vmem:[%s5] sm:$0x1]
        %v932 = vlaneseq
        %v933 = vshrl.u32 %v932, 7
        %v934 = vsub.s32 0, %v933
        %v935 = vrot.slane %v930, %v934
        %v943 = vunpack.c.l.b16 %v493
        %v944 = vunpack.c.l.b16 %v494
        %v945 = vunpack.c.l.b16 %v495
        %v946 = vunpack.c.l.b16 %v496
        %v947 = vunpack.c.l.b16 %v497
        %v948 = vunpack.c.l.b16 %v498
        %v949 = vpack.c.b16 %v944, %v943
        %v950 = vpack.c.b16 %v946, %v945
        %v951 = vpack.c.b16 %v948, %v947
        %vm952 = vcmask 392192
        %v954 = vsel %vm952, %v949, 0
        %v957 = vsel %vm952, %v950, 0
        %v960 = vsel %vm952, %v951, 0
        %962 = vmatprep.subr.bf16.mxu0 0
        %963 = vmatpush1.bf16.msra.mxu0 %v881
        %964 = vmatprep.subr.bf16.mxu0 0
        %965 = vmatpush1.bf16.msra.mxu0 %v882
        %966 = vmatprep.subr.bf16.mxu0 0
        %967 = vmatpush1.bf16.msra.mxu0 %v883
        %968 = vmatprep.subr.bf16.mxu0 0
        %969 = vmatpush1.bf16.msra.mxu0 0
        %970 = vmatprep.subr.bf16.mxu0 0
        %971 = vmatpush1.bf16.msra.mxu0 0
        %972 = vmatprep.subr.bf16.mxu0 0
        %973 = vmatpush1.bf16.msra.mxu0 0
        %974 = vmatprep.subr.bf16.mxu0 0
        %975 = vmatpush1.bf16.msra.mxu0 0
        %976 = vmatprep.subr.bf16.mxu0 0
        %977 = vmatpush1.bf16.msra.mxu0 0
        %978 = vmatprep.subr.bf16.mxu0 0
        %979 = vmatpush1.bf16.msra.mxu0 0
        %980 = vmatprep.subr.bf16.mxu0 0
        %981 = vmatpush1.bf16.msra.mxu0 0
        %982 = vmatprep.subr.bf16.mxu0 0
        %983 = vmatpush1.bf16.msra.mxu0 0
        %984 = vmatprep.subr.bf16.mxu0 0
        %985 = vmatpush1.bf16.msra.mxu0 0
        %986 = vmatprep.subr.bf16.mxu0 0
        %987 = vmatpush1.bf16.msra.mxu0 0
        %988 = vmatprep.subr.bf16.mxu0 0
        %989 = vmatpush1.bf16.msra.mxu0 0
        %990 = vmatprep.subr.bf16.mxu0 0
        %991 = vmatpush1.bf16.msra.mxu0 0
        %992 = vmatprep.subr.bf16.mxu0 0
        %993 = vmatpush1.bf16.msra.mxu0 0
        %994 = vmatprep.mubr.bf16.mxu0 0
        %995 = vmatmul.mubr.bf16.gmra.mrb[0].mxu0 %v954
        %v996 = vpop.f32.mrb[0].mxu0
        %v997 = vadd.f32 %v935, %v996
        %v998 = vpop.f32.mrb[0].mxu0
        %v999 = vpop.f32.mrb[0].mxu0
        %v1000 = vadd.f32 %v935, %v999
        %v1001 = vpop.f32.mrb[0].mxu0
        %1002 = vmatprep.mubr.bf16.mxu0 0
        %1003 = vmatmul.mubr.bf16.gmra.mrb[0].mxu0 %v957
        %v1004 = vpop.f32.mrb[0].mxu0
        %v1005 = vadd.f32 %v935, %v1004
        %v1006 = vpop.f32.mrb[0].mxu0
        %v1007 = vpop.f32.mrb[0].mxu0
        %v1008 = vadd.f32 %v935, %v1007
        %v1009 = vpop.f32.mrb[0].mxu0
        %1010 = vmatprep.mubr.bf16.mxu0 0
        %1011 = vmatmul.mubr.bf16.gmra.mrb[0].mxu0 %v960
        %v1012 = vpop.f32.mrb[0].mxu0
        %v1013 = vadd.f32 %v935, %v1012
        %v1014 = vpop.f32.mrb[0].mxu0
        %v1015 = vpop.f32.mrb[0].mxu0
        %v1016 = vadd.f32 %v935, %v1015
        %v1017 = vpop.f32.mrb[0].mxu0
        %1018 = vdwg.mxu0
        %v1019 = vmax.f32 %v997, 0.0
        %v1020 = vmax.f32 %v1000, 0.0
        %v1021 = vmax.f32 %v1005, 0.0
        %v1022 = vmax.f32 %v1008, 0.0
        %v1023 = vmax.f32 %v1013, 0.0
        %v1024 = vmax.f32 %v1016, 0.0
        %v1025 = vpack.c.bf16 %v1020, %v1019
        %v1026 = vpack.c.bf16 %v1022, %v1021
        %v1027 = vpack.c.bf16 %v1024, %v1023
        %1028 = vst.msk [vmem:[#allocation2 + $0x60] sm:$0xff] %vm905, %v1025
        %1029 = vst.msk [vmem:[#allocation2 + $0x68] sm:$0xff] %vm905, %v1026
        %1030 = vst.msk [vmem:[#allocation2 + $0x70] sm:$0xff] %vm905, %v1027
        %1031 = vmatprep.subr.bf16.mxu0 0
        %1032 = vmatpush1.bf16.msra.mxu0 %v884
        %1033 = vmatprep.subr.bf16.mxu0 0
        %1034 = vmatpush1.bf16.msra.mxu0 %v885
        %1035 = vmatprep.subr.bf16.mxu0 0
        %1036 = vmatpush1.bf16.msra.mxu0 %v886
        %1037 = vmatprep.subr.bf16.mxu0 0
        %1038 = vmatpush1.bf16.msra.mxu0 0
        %1039 = vmatprep.subr.bf16.mxu0 0
        %1040 = vmatpush1.bf16.msra.mxu0 0
        %1041 = vmatprep.subr.bf16.mxu0 0
        %1042 = vmatpush1.bf16.msra.mxu0 0
        %1043 = vmatprep.subr.bf16.mxu0 0
        %1044 = vmatpush1.bf16.msra.mxu0 0
        %1045 = vmatprep.subr.bf16.mxu0 0
        %1046 = vmatpush1.bf16.msra.mxu0 0
        %1047 = vmatprep.subr.bf16.mxu0 0
        %1048 = vmatpush1.bf16.msra.mxu0 0
        %1049 = vmatprep.subr.bf16.mxu0 0
        %1050 = vmatpush1.bf16.msra.mxu0 0
        %1051 = vmatprep.subr.bf16.mxu0 0
        %1052 = vmatpush1.bf16.msra.mxu0 0
        %1053 = vmatprep.subr.bf16.mxu0 0
        %1054 = vmatpush1.bf16.msra.mxu0 0
        %1055 = vmatprep.subr.bf16.mxu0 0
        %1056 = vmatpush1.bf16.msra.mxu0 0
        %1057 = vmatprep.subr.bf16.mxu0 0
        %1058 = vmatpush1.bf16.msra.mxu0 0
        %1059 = vmatprep.subr.bf16.mxu0 0
        %1060 = vmatpush1.bf16.msra.mxu0 0
        %1061 = vmatprep.subr.bf16.mxu0 0
        %1062 = vmatpush1.bf16.msra.mxu0 0
        %1063 = vmatprep.mubr.bf16.mxu0 0
        %1064 = vmatmul.mubr.bf16.gmra.mrb[0].mxu0 %v954
        %v1065 = vpop.f32.mrb[0].mxu0
        %v1066 = vadd.f32 %v935, %v1065
        %v1067 = vpop.f32.mrb[0].mxu0
        %v1068 = vpop.f32.mrb[0].mxu0
        %v1069 = vadd.f32 %v935, %v1068
        %v1070 = vpop.f32.mrb[0].mxu0
        %1071 = vmatprep.mubr.bf16.mxu0 0
        %1072 = vmatmul.mubr.bf16.gmra.mrb[0].mxu0 %v957
        %v1073 = vpop.f32.mrb[0].mxu0
        %v1074 = vadd.f32 %v935, %v1073
        %v1075 = vpop.f32.mrb[0].mxu0
        %v1076 = vpop.f32.mrb[0].mxu0
        %v1077 = vadd.f32 %v935, %v1076
        %v1078 = vpop.f32.mrb[0].mxu0
        %1079 = vmatprep.mubr.bf16.mxu0 0
        %1080 = vmatmul.mubr.bf16.gmra.mrb[0].mxu0 %v960
        %v1081 = vpop.f32.mrb[0].mxu0
        %v1082 = vadd.f32 %v935, %v1081
        %v1083 = vpop.f32.mrb[0].mxu0
        %v1084 = vpop.f32.mrb[0].mxu0
        %v1085 = vadd.f32 %v935, %v1084
        %v1086 = vpop.f32.mrb[0].mxu0
        %1087 = vdwg.mxu0
        %v1088 = vmax.f32 %v1066, 0.0
        %v1089 = vmax.f32 %v1069, 0.0
        %v1090 = vmax.f32 %v1074, 0.0
        %v1091 = vmax.f32 %v1077, 0.0
        %v1092 = vmax.f32 %v1082, 0.0
        %v1093 = vmax.f32 %v1085, 0.0
        %v1094 = vpack.c.bf16 %v1089, %v1088
        %v1095 = vpack.c.bf16 %v1091, %v1090
        %v1096 = vpack.c.bf16 %v1093, %v1092
        %1097 = vst.msk [vmem:[#allocation2 + $0x78] sm:$0xff] %vm905, %v1094
        %1098 = vst.msk [vmem:[#allocation2 + $0x80] sm:$0xff] %vm905, %v1095
        %1099 = vst.msk [vmem:[#allocation2 + $0x88] sm:$0xff] %vm905, %v1096
        %1100 = vmatprep.subr.bf16.mxu0 0
        %1101 = vmatpush1.bf16.msra.mxu0 %v887
        %1102 = vmatprep.subr.bf16.mxu0 0
        %1103 = vmatpush1.bf16.msra.mxu0 %v888
        %1104 = vmatprep.subr.bf16.mxu0 0
        %1105 = vmatpush1.bf16.msra.mxu0 %v889
        %1106 = vmatprep.subr.bf16.mxu0 0
        %1107 = vmatpush1.bf16.msra.mxu0 0
        %1108 = vmatprep.subr.bf16.mxu0 0
        %1109 = vmatpush1.bf16.msra.mxu0 0
        %1110 = vmatprep.subr.bf16.mxu0 0
        %1111 = vmatpush1.bf16.msra.mxu0 0
        %1112 = vmatprep.subr.bf16.mxu0 0
        %1113 = vmatpush1.bf16.msra.mxu0 0
        %1114 = vmatprep.subr.bf16.mxu0 0
        %1115 = vmatpush1.bf16.msra.mxu0 0
        %1116 = vmatprep.subr.bf16.mxu0 0
        %1117 = vmatpush1.bf16.msra.mxu0 0
        %1118 = vmatprep.subr.bf16.mxu0 0
        %1119 = vmatpush1.bf16.msra.mxu0 0
        %1120 = vmatprep.subr.bf16.mxu0 0
        %1121 = vmatpush1.bf16.msra.mxu0 0
        %1122 = vmatprep.subr.bf16.mxu0 0
        %1123 = vmatpush1.bf16.msra.mxu0 0
        %1124 = vmatprep.subr.bf16.mxu0 0
        %1125 = vmatpush1.bf16.msra.mxu0 0
        %1126 = vmatprep.subr.bf16.mxu0 0
        %1127 = vmatpush1.bf16.msra.mxu0 0
        %1128 = vmatprep.subr.bf16.mxu0 0
        %1129 = vmatpush1.bf16.msra.mxu0 0
        %1130 = vmatprep.subr.bf16.mxu0 0
        %1131 = vmatpush1.bf16.msra.mxu0 0
        %1132 = vmatprep.mubr.bf16.mxu0 0
        %1133 = vmatmul.mubr.bf16.gmra.mrb[0].mxu0 %v954
        %v1134 = vpop.f32.mrb[0].mxu0
        %v1135 = vadd.f32 %v935, %v1134
        %v1136 = vpop.f32.mrb[0].mxu0
        %v1137 = vpop.f32.mrb[0].mxu0
        %v1138 = vadd.f32 %v935, %v1137
        %v1139 = vpop.f32.mrb[0].mxu0
        %1140 = vmatprep.mubr.bf16.mxu0 0
        %1141 = vmatmul.mubr.bf16.gmra.mrb[0].mxu0 %v957
        %v1142 = vpop.f32.mrb[0].mxu0
        %v1143 = vadd.f32 %v935, %v1142
        %v1144 = vpop.f32.mrb[0].mxu0
        %v1145 = vpop.f32.mrb[0].mxu0
        %v1146 = vadd.f32 %v935, %v1145
        %v1147 = vpop.f32.mrb[0].mxu0
        %1148 = vmatprep.mubr.bf16.mxu0 0
        %1149 = vmatmul.mubr.bf16.gmra.mrb[0].mxu0 %v960
        %v1150 = vpop.f32.mrb[0].mxu0
        %v1151 = vadd.f32 %v935, %v1150
        %v1152 = vpop.f32.mrb[0].mxu0
        %v1153 = vpop.f32.mrb[0].mxu0
        %v1154 = vadd.f32 %v935, %v1153
        %v1155 = vpop.f32.mrb[0].mxu0
        %1156 = vdwg.mxu0
        %v1157 = vmax.f32 %v1135, 0.0
        %v1158 = vmax.f32 %v1138, 0.0
        %v1159 = vmax.f32 %v1143, 0.0
        %v1160 = vmax.f32 %v1146, 0.0
        %v1161 = vmax.f32 %v1151, 0.0
        %v1162 = vmax.f32 %v1154, 0.0
        %v1163 = vpack.c.bf16 %v1158, %v1157
        %v1164 = vpack.c.bf16 %v1160, %v1159
        %v1165 = vpack.c.bf16 %v1162, %v1161
        %1166 = vst.msk [vmem:[#allocation2 + $0x90] sm:$0xff] %vm905, %v1163
        %1167 = vst.msk [vmem:[#allocation2 + $0x98] sm:$0xff] %vm905, %v1164
        %1168 = vst.msk [vmem:[#allocation2 + $0xa0] sm:$0xff] %vm905, %v1165
        %1169 = vmatprep.subr.bf16.mxu0 0
        %1170 = vmatpush1.bf16.msra.mxu0 %v890
        %1171 = vmatprep.subr.bf16.mxu0 0
        %1172 = vmatpush1.bf16.msra.mxu0 %v891
        %1173 = vmatprep.subr.bf16.mxu0 0
        %1174 = vmatpush1.bf16.msra.mxu0 %v892
        %1175 = vmatprep.subr.bf16.mxu0 0
        %1176 = vmatpush1.bf16.msra.mxu0 0
        %1177 = vmatprep.subr.bf16.mxu0 0
        %1178 = vmatpush1.bf16.msra.mxu0 0
        %1179 = vmatprep.subr.bf16.mxu0 0
        %1180 = vmatpush1.bf16.msra.mxu0 0
        %1181 = vmatprep.subr.bf16.mxu0 0
        %1182 = vmatpush1.bf16.msra.mxu0 0
        %1183 = vmatprep.subr.bf16.mxu0 0
        %1184 = vmatpush1.bf16.msra.mxu0 0
        %1185 = vmatprep.subr.bf16.mxu0 0
        %1186 = vmatpush1.bf16.msra.mxu0 0
        %1187 = vmatprep.subr.bf16.mxu0 0
        %1188 = vmatpush1.bf16.msra.mxu0 0
        %1189 = vmatprep.subr.bf16.mxu0 0
        %1190 = vmatpush1.bf16.msra.mxu0 0
        %1191 = vmatprep.subr.bf16.mxu0 0
        %1192 = vmatpush1.bf16.msra.mxu0 0
        %1193 = vmatprep.subr.bf16.mxu0 0
        %1194 = vmatpush1.bf16.msra.mxu0 0
        %1195 = vmatprep.subr.bf16.mxu0 0
        %1196 = vmatpush1.bf16.msra.mxu0 0
        %1197 = vmatprep.subr.bf16.mxu0 0
        %1198 = vmatpush1.bf16.msra.mxu0 0
        %1199 = vmatprep.subr.bf16.mxu0 0
        %1200 = vmatpush1.bf16.msra.mxu0 0
        %1201 = vmatprep.mubr.bf16.mxu0 0
        %1202 = vmatmul.mubr.bf16.gmra.mrb[0].mxu0 %v954
        %v1203 = vpop.f32.mrb[0].mxu0
        %v1204 = vadd.f32 %v935, %v1203
        %v1205 = vpop.f32.mrb[0].mxu0
        %v1206 = vpop.f32.mrb[0].mxu0
        %v1207 = vadd.f32 %v935, %v1206
        %v1208 = vpop.f32.mrb[0].mxu0
        %1209 = vmatprep.mubr.bf16.mxu0 0
        %1210 = vmatmul.mubr.bf16.gmra.mrb[0].mxu0 %v957
        %v1211 = vpop.f32.mrb[0].mxu0
        %v1212 = vadd.f32 %v935, %v1211
        %v1213 = vpop.f32.mrb[0].mxu0
        %v1214 = vpop.f32.mrb[0].mxu0
        %v1215 = vadd.f32 %v935, %v1214
        %v1216 = vpop.f32.mrb[0].mxu0
        %1217 = vmatprep.mubr.bf16.mxu0 0
        %1218 = vmatmul.mubr.bf16.gmra.mrb[0].mxu0 %v960
        %v1219 = vpop.f32.mrb[0].mxu0
        %v1220 = vadd.f32 %v935, %v1219
        %v1221 = vpop.f32.mrb[0].mxu0
        %v1222 = vpop.f32.mrb[0].mxu0
        %v1223 = vadd.f32 %v935, %v1222
        %v1224 = vpop.f32.mrb[0].mxu0
        %1225 = vdwg.mxu0
        %v1226 = vmax.f32 %v1204, 0.0
        %v1227 = vmax.f32 %v1207, 0.0
        %v1228 = vmax.f32 %v1212, 0.0
        %v1229 = vmax.f32 %v1215, 0.0
        %v1230 = vmax.f32 %v1220, 0.0
        %v1231 = vmax.f32 %v1223, 0.0
        %v1232 = vpack.c.bf16 %v1227, %v1226
        %v1233 = vpack.c.bf16 %v1229, %v1228
        %v1234 = vpack.c.bf16 %v1231, %v1230
        %1235 = vst.msk [vmem:[#allocation2 + $0xa8] sm:$0xff] %vm905, %v1232
        %1236 = vst.msk [vmem:[#allocation2 + $0xb0] sm:$0xff] %vm905, %v1233
        %1237 = vst.msk [vmem:[#allocation2 + $0xb8] sm:$0xff] %vm905, %v1234
        %1238 = vmatprep.subr.bf16.mxu0 0
        %1239 = vmatpush1.bf16.msra.mxu0 %v893
        %1240 = vmatprep.subr.bf16.mxu0 0
        %1241 = vmatpush1.bf16.msra.mxu0 %v894
        %1242 = vmatprep.subr.bf16.mxu0 0
        %1243 = vmatpush1.bf16.msra.mxu0 %v895
        %1244 = vmatprep.subr.bf16.mxu0 0
        %1245 = vmatpush1.bf16.msra.mxu0 0
        %1246 = vmatprep.subr.bf16.mxu0 0
        %1247 = vmatpush1.bf16.msra.mxu0 0
        %1248 = vmatprep.subr.bf16.mxu0 0
        %1249 = vmatpush1.bf16.msra.mxu0 0
        %1250 = vmatprep.subr.bf16.mxu0 0
        %1251 = vmatpush1.bf16.msra.mxu0 0
        %1252 = vmatprep.subr.bf16.mxu0 0
        %1253 = vmatpush1.bf16.msra.mxu0 0
        %1254 = vmatprep.subr.bf16.mxu0 0
        %1255 = vmatpush1.bf16.msra.mxu0 0
        %1256 = vmatprep.subr.bf16.mxu0 0
        %1257 = vmatpush1.bf16.msra.mxu0 0
        %1258 = vmatprep.subr.bf16.mxu0 0
        %1259 = vmatpush1.bf16.msra.mxu0 0
        %1260 = vmatprep.subr.bf16.mxu0 0
        %1261 = vmatpush1.bf16.msra.mxu0 0
        %1262 = vmatprep.subr.bf16.mxu0 0
        %1263 = vmatpush1.bf16.msra.mxu0 0
        %1264 = vmatprep.subr.bf16.mxu0 0
        %1265 = vmatpush1.bf16.msra.mxu0 0
        %1266 = vmatprep.subr.bf16.mxu0 0
        %1267 = vmatpush1.bf16.msra.mxu0 0
        %1268 = vmatprep.subr.bf16.mxu0 0
        %1269 = vmatpush1.bf16.msra.mxu0 0
        %1270 = vmatprep.mubr.bf16.mxu0 0
        %1271 = vmatmul.mubr.bf16.gmra.mrb[0].mxu0 %v954
        %v1272 = vpop.f32.mrb[0].mxu0
        %v1273 = vadd.f32 %v935, %v1272
        %v1274 = vpop.f32.mrb[0].mxu0
        %v1275 = vpop.f32.mrb[0].mxu0
        %v1276 = vadd.f32 %v935, %v1275
        %v1277 = vpop.f32.mrb[0].mxu0
        %1278 = vmatprep.mubr.bf16.mxu0 0
        %1279 = vmatmul.mubr.bf16.gmra.mrb[0].mxu0 %v957
        %v1280 = vpop.f32.mrb[0].mxu0
        %v1281 = vadd.f32 %v935, %v1280
        %v1282 = vpop.f32.mrb[0].mxu0
        %v1283 = vpop.f32.mrb[0].mxu0
        %v1284 = vadd.f32 %v935, %v1283
        %v1285 = vpop.f32.mrb[0].mxu0
        %1286 = vmatprep.mubr.bf16.mxu0 0
        %1287 = vmatmul.mubr.bf16.gmra.mrb[0].mxu0 %v960
        %v1288 = vpop.f32.mrb[0].mxu0
        %v1289 = vadd.f32 %v935, %v1288
        %v1290 = vpop.f32.mrb[0].mxu0
        %v1291 = vpop.f32.mrb[0].mxu0
        %v1292 = vadd.f32 %v935, %v1291
        %v1293 = vpop.f32.mrb[0].mxu0
        %1294 = vdwg.mxu0
        %v1295 = vmax.f32 %v1273, 0.0
        %v1296 = vmax.f32 %v1276, 0.0
        %v1297 = vmax.f32 %v1281, 0.0
        %v1298 = vmax.f32 %v1284, 0.0
        %v1299 = vmax.f32 %v1289, 0.0
        %v1300 = vmax.f32 %v1292, 0.0
        %v1301 = vpack.c.bf16 %v1296, %v1295
        %v1302 = vpack.c.bf16 %v1298, %v1297
        %v1303 = vpack.c.bf16 %v1300, %v1299
        %1304 = vst.msk [vmem:[#allocation2 + $0xc0] sm:$0xff] %vm905, %v1301
        %1305 = vst.msk [vmem:[#allocation2 + $0xc8] sm:$0xff] %vm905, %v1302
        %1306 = vst.msk [vmem:[#allocation2 + $0xd0] sm:$0xff] %vm905, %v1303
        %1307 = vmatprep.subr.bf16.mxu0 0
        %1308 = vmatpush1.bf16.msra.mxu0 %v896
        %1309 = vmatprep.subr.bf16.mxu0 0
        %1310 = vmatpush1.bf16.msra.mxu0 %v897
        %1311 = vmatprep.subr.bf16.mxu0 0
        %1312 = vmatpush1.bf16.msra.mxu0 %v898
        %1313 = vmatprep.subr.bf16.mxu0 0
        %1314 = vmatpush1.bf16.msra.mxu0 0
        %1315 = vmatprep.subr.bf16.mxu0 0
        %1316 = vmatpush1.bf16.msra.mxu0 0
        %1317 = vmatprep.subr.bf16.mxu0 0
        %1318 = vmatpush1.bf16.msra.mxu0 0
        %1319 = vmatprep.subr.bf16.mxu0 0
        %1320 = vmatpush1.bf16.msra.mxu0 0
        %1321 = vmatprep.subr.bf16.mxu0 0
        %1322 = vmatpush1.bf16.msra.mxu0 0
        %1323 = vmatprep.subr.bf16.mxu0 0
        %1324 = vmatpush1.bf16.msra.mxu0 0
        %1325 = vmatprep.subr.bf16.mxu0 0
        %1326 = vmatpush1.bf16.msra.mxu0 0
        %1327 = vmatprep.subr.bf16.mxu0 0
        %1328 = vmatpush1.bf16.msra.mxu0 0
        %1329 = vmatprep.subr.bf16.mxu0 0
        %1330 = vmatpush1.bf16.msra.mxu0 0
        %1331 = vmatprep.subr.bf16.mxu0 0
        %1332 = vmatpush1.bf16.msra.mxu0 0
        %1333 = vmatprep.subr.bf16.mxu0 0
        %1334 = vmatpush1.bf16.msra.mxu0 0
        %1335 = vmatprep.subr.bf16.mxu0 0
        %1336 = vmatpush1.bf16.msra.mxu0 0
        %1337 = vmatprep.subr.bf16.mxu0 0
        %1338 = vmatpush1.bf16.msra.mxu0 0
        %1339 = vmatprep.mubr.bf16.mxu0 0
        %1340 = vmatmul.mubr.bf16.gmra.mrb[0].mxu0 %v954
        %v1341 = vpop.f32.mrb[0].mxu0
        %v1342 = vadd.f32 %v935, %v1341
        %v1343 = vpop.f32.mrb[0].mxu0
        %v1344 = vpop.f32.mrb[0].mxu0
        %v1345 = vadd.f32 %v935, %v1344
        %v1346 = vpop.f32.mrb[0].mxu0
        %1347 = vmatprep.mubr.bf16.mxu0 0
        %1348 = vmatmul.mubr.bf16.gmra.mrb[0].mxu0 %v957
        %v1349 = vpop.f32.mrb[0].mxu0
        %v1350 = vadd.f32 %v935, %v1349
        %v1351 = vpop.f32.mrb[0].mxu0
        %v1352 = vpop.f32.mrb[0].mxu0
        %v1353 = vadd.f32 %v935, %v1352
        %v1354 = vpop.f32.mrb[0].mxu0
        %1355 = vmatprep.mubr.bf16.mxu0 0
        %1356 = vmatmul.mubr.bf16.gmra.mrb[0].mxu0 %v960
        %v1357 = vpop.f32.mrb[0].mxu0
        %v1358 = vadd.f32 %v935, %v1357
        %v1359 = vpop.f32.mrb[0].mxu0
        %v1360 = vpop.f32.mrb[0].mxu0
        %v1361 = vadd.f32 %v935, %v1360
        %v1362 = vpop.f32.mrb[0].mxu0
        %1363 = vdwg.mxu0
        %v1364 = vmax.f32 %v1342, 0.0
        %v1365 = vmax.f32 %v1345, 0.0
        %v1366 = vmax.f32 %v1350, 0.0
        %v1367 = vmax.f32 %v1353, 0.0
        %v1368 = vmax.f32 %v1358, 0.0
        %v1369 = vmax.f32 %v1361, 0.0
        %v1370 = vpack.c.bf16 %v1365, %v1364
        %v1371 = vpack.c.bf16 %v1367, %v1366
        %v1372 = vpack.c.bf16 %v1369, %v1368
        %1373 = vst.msk [vmem:[#allocation2 + $0xd8] sm:$0xff] %vm905, %v1370
        %1374 = vst.msk [vmem:[#allocation2 + $0xe0] sm:$0xff] %vm905, %v1371
        %1375 = vst.msk [vmem:[#allocation2 + $0xe8] sm:$0xff] %vm905, %v1372
        %1376 = vmatprep.subr.bf16.mxu0 0
        %1377 = vmatpush1.bf16.msra.mxu0 %v899
        %1378 = vmatprep.subr.bf16.mxu0 0
        %1379 = vmatpush1.bf16.msra.mxu0 %v900
        %1380 = vmatprep.subr.bf16.mxu0 0
        %1381 = vmatpush1.bf16.msra.mxu0 %v901
        %1382 = vmatprep.subr.bf16.mxu0 0
        %1383 = vmatpush1.bf16.msra.mxu0 0
        %1384 = vmatprep.subr.bf16.mxu0 0
        %1385 = vmatpush1.bf16.msra.mxu0 0
        %1386 = vmatprep.subr.bf16.mxu0 0
        %1387 = vmatpush1.bf16.msra.mxu0 0
        %1388 = vmatprep.subr.bf16.mxu0 0
        %1389 = vmatpush1.bf16.msra.mxu0 0
        %1390 = vmatprep.subr.bf16.mxu0 0
        %1391 = vmatpush1.bf16.msra.mxu0 0
        %1392 = vmatprep.subr.bf16.mxu0 0
        %1393 = vmatpush1.bf16.msra.mxu0 0
        %1394 = vmatprep.subr.bf16.mxu0 0
        %1395 = vmatpush1.bf16.msra.mxu0 0
        %1396 = vmatprep.subr.bf16.mxu0 0
        %1397 = vmatpush1.bf16.msra.mxu0 0
        %1398 = vmatprep.subr.bf16.mxu0 0
        %1399 = vmatpush1.bf16.msra.mxu0 0
        %1400 = vmatprep.subr.bf16.mxu0 0
        %1401 = vmatpush1.bf16.msra.mxu0 0
        %1402 = vmatprep.subr.bf16.mxu0 0
        %1403 = vmatpush1.bf16.msra.mxu0 0
        %1404 = vmatprep.subr.bf16.mxu0 0
        %1405 = vmatpush1.bf16.msra.mxu0 0
        %1406 = vmatprep.subr.bf16.mxu0 0
        %1407 = vmatpush1.bf16.msra.mxu0 0
        %1408 = vmatprep.mubr.bf16.mxu0 0
        %1409 = vmatmul.mubr.bf16.gmra.mrb[0].mxu0 %v954
        %v1410 = vpop.f32.mrb[0].mxu0
        %v1411 = vadd.f32 %v935, %v1410
        %v1412 = vpop.f32.mrb[0].mxu0
        %v1413 = vpop.f32.mrb[0].mxu0
        %v1414 = vadd.f32 %v935, %v1413
        %v1415 = vpop.f32.mrb[0].mxu0
        %1416 = vmatprep.mubr.bf16.mxu0 0
        %1417 = vmatmul.mubr.bf16.gmra.mrb[0].mxu0 %v957
        %v1418 = vpop.f32.mrb[0].mxu0
        %v1419 = vadd.f32 %v935, %v1418
        %v1420 = vpop.f32.mrb[0].mxu0
        %v1421 = vpop.f32.mrb[0].mxu0
        %v1422 = vadd.f32 %v935, %v1421
        %v1423 = vpop.f32.mrb[0].mxu0
        %1424 = vmatprep.mubr.bf16.mxu0 0
        %1425 = vmatmul.mubr.bf16.gmra.mrb[0].mxu0 %v960
        %v1426 = vpop.f32.mrb[0].mxu0
        %v1427 = vadd.f32 %v935, %v1426
        %v1428 = vpop.f32.mrb[0].mxu0
        %v1429 = vpop.f32.mrb[0].mxu0
        %v1430 = vadd.f32 %v935, %v1429
        %v1431 = vpop.f32.mrb[0].mxu0
        %1432 = vdwg.mxu0
        %v1433 = vmax.f32 %v1411, 0.0
        %v1434 = vmax.f32 %v1414, 0.0
        %v1435 = vmax.f32 %v1419, 0.0
        %v1436 = vmax.f32 %v1422, 0.0
        %v1437 = vmax.f32 %v1427, 0.0
        %v1438 = vmax.f32 %v1430, 0.0
        %v1439 = vpack.c.bf16 %v1434, %v1433
        %v1440 = vpack.c.bf16 %v1436, %v1435
        %v1441 = vpack.c.bf16 %v1438, %v1437
        %1442 = vst.msk [vmem:[#allocation2 + $0xf0] sm:$0xff] %vm905, %v1439
        %1443 = vst.msk [vmem:[#allocation2 + $0xf8] sm:$0xff] %vm905, %v1440
        %1444 = vst.msk [vmem:[#allocation2 + $0x100] sm:$0xff] %vm905, %v1441
        %1445 = vmatprep.subr.bf16.mxu0 0
        %1446 = vmatpush1.bf16.msra.mxu0 %v902
        %1447 = vmatprep.subr.bf16.mxu0 0
        %1448 = vmatpush1.bf16.msra.mxu0 %v903
        %1449 = vmatprep.subr.bf16.mxu0 0
        %1450 = vmatpush1.bf16.msra.mxu0 %v904
        %1451 = vmatprep.subr.bf16.mxu0 0
        %1452 = vmatpush1.bf16.msra.mxu0 0
        %1453 = vmatprep.subr.bf16.mxu0 0
        %1454 = vmatpush1.bf16.msra.mxu0 0
        %1455 = vmatprep.subr.bf16.mxu0 0
        %1456 = vmatpush1.bf16.msra.mxu0 0
        %1457 = vmatprep.subr.bf16.mxu0 0
        %1458 = vmatpush1.bf16.msra.mxu0 0
        %1459 = vmatprep.subr.bf16.mxu0 0
        %1460 = vmatpush1.bf16.msra.mxu0 0
        %1461 = vmatprep.subr.bf16.mxu0 0
        %1462 = vmatpush1.bf16.msra.mxu0 0
        %1463 = vmatprep.subr.bf16.mxu0 0
        %1464 = vmatpush1.bf16.msra.mxu0 0
        %1465 = vmatprep.subr.bf16.mxu0 0
        %1466 = vmatpush1.bf16.msra.mxu0 0
        %1467 = vmatprep.subr.bf16.mxu0 0
        %1468 = vmatpush1.bf16.msra.mxu0 0
        %1469 = vmatprep.subr.bf16.mxu0 0
        %1470 = vmatpush1.bf16.msra.mxu0 0
        %1471 = vmatprep.subr.bf16.mxu0 0
        %1472 = vmatpush1.bf16.msra.mxu0 0
        %1473 = vmatprep.subr.bf16.mxu0 0
        %1474 = vmatpush1.bf16.msra.mxu0 0
        %1475 = vmatprep.subr.bf16.mxu0 0
        %1476 = vmatpush1.bf16.msra.mxu0 0
        %1477 = vmatprep.mubr.bf16.mxu0 0
        %1478 = vmatmul.mubr.bf16.gmra.mrb[0].mxu0 %v954
        %v1479 = vpop.f32.mrb[0].mxu0
        %v1480 = vadd.f32 %v935, %v1479
        %v1481 = vpop.f32.mrb[0].mxu0
        %v1482 = vpop.f32.mrb[0].mxu0
        %v1483 = vadd.f32 %v935, %v1482
        %v1484 = vpop.f32.mrb[0].mxu0
        %1485 = vmatprep.mubr.bf16.mxu0 0
        %1486 = vmatmul.mubr.bf16.gmra.mrb[0].mxu0 %v957
        %v1487 = vpop.f32.mrb[0].mxu0
        %v1488 = vadd.f32 %v935, %v1487
        %v1489 = vpop.f32.mrb[0].mxu0
        %v1490 = vpop.f32.mrb[0].mxu0
        %v1491 = vadd.f32 %v935, %v1490
        %v1492 = vpop.f32.mrb[0].mxu0
        %1493 = vmatprep.mubr.bf16.mxu0 0
        %1494 = vmatmul.mubr.bf16.gmra.mrb[0].mxu0 %v960
        %v1495 = vpop.f32.mrb[0].mxu0
        %v1496 = vadd.f32 %v935, %v1495
        %v1497 = vpop.f32.mrb[0].mxu0
        %v1498 = vpop.f32.mrb[0].mxu0
        %v1499 = vadd.f32 %v935, %v1498
        %v1500 = vpop.f32.mrb[0].mxu0
        %1501 = vdwg.mxu0
        %v1502 = vmax.f32 %v1480, 0.0
        %v1503 = vmax.f32 %v1483, 0.0
        %v1504 = vmax.f32 %v1488, 0.0
        %v1505 = vmax.f32 %v1491, 0.0
        %v1506 = vmax.f32 %v1496, 0.0
        %v1507 = vmax.f32 %v1499, 0.0
        %v1508 = vpack.c.bf16 %v1503, %v1502
        %v1509 = vpack.c.bf16 %v1505, %v1504
        %v1510 = vpack.c.bf16 %v1507, %v1506
        %1511 = vst.msk [vmem:[#allocation2 + $0x108] sm:$0xff] %vm905, %v1508
        %1512 = vst.msk [vmem:[#allocation2 + $0x110] sm:$0xff] %vm905, %v1509
        %1513 = vst.msk [vmem:[#allocation2 + $0x118] sm:$0xff] %vm905, %v1510
        %v1514 = vld [vmem:[#allocation2] sm:$0xff]
        %v1515 = vld [vmem:[#allocation2 + $0x8] sm:$0xff]
        %v1516 = vld [vmem:[#allocation2 + $0x10] sm:$0xff]
        %v1517 = vld [vmem:[#allocation2 + $0x18] sm:$0xff]
        %v1518 = vld [vmem:[#allocation2 + $0x20] sm:$0xff]
        %v1519 = vld [vmem:[#allocation2 + $0x28] sm:$0xff]
        %v1520 = vld [vmem:[#allocation2 + $0x30] sm:$0xff]
        %v1521 = vld [vmem:[#allocation2 + $0x38] sm:$0xff]
        %v1522 = vld [vmem:[#allocation2 + $0x40] sm:$0xff]
        %v1523 = vld [vmem:[#allocation2 + $0x48] sm:$0xff]
        %v1524 = vld [vmem:[#allocation2 + $0x50] sm:$0xff]
        %v1525 = vld [vmem:[#allocation2 + $0x58] sm:$0xff]
        %v1526 = vld [vmem:[#allocation2 + $0x60] sm:$0xff]
        %v1527 = vld [vmem:[#allocation2 + $0x68] sm:$0xff]
        %v1528 = vld [vmem:[#allocation2 + $0x70] sm:$0xff]
        %v1529 = vld [vmem:[#allocation2 + $0x78] sm:$0xff]
        %v1530 = vld [vmem:[#allocation2 + $0x80] sm:$0xff]
        %v1531 = vld [vmem:[#allocation2 + $0x88] sm:$0xff]
        %v1532 = vld [vmem:[#allocation2 + $0x90] sm:$0xff]
        %v1533 = vld [vmem:[#allocation2 + $0x98] sm:$0xff]
        %v1534 = vld [vmem:[#allocation2 + $0xa0] sm:$0xff]
        %v1535 = vld [vmem:[#allocation2 + $0xa8] sm:$0xff]
        %v1536 = vld [vmem:[#allocation2 + $0xb0] sm:$0xff]
        %v1537 = vld [vmem:[#allocation2 + $0xb8] sm:$0xff]
        %v1538 = vld [vmem:[#allocation2 + $0xc0] sm:$0xff]
        %v1539 = vld [vmem:[#allocation2 + $0xc8] sm:$0xff]
        %v1540 = vld [vmem:[#allocation2 + $0xd0] sm:$0xff]
        %v1541 = vld [vmem:[#allocation2 + $0xd8] sm:$0xff]
        %v1542 = vld [vmem:[#allocation2 + $0xe0] sm:$0xff]
        %v1543 = vld [vmem:[#allocation2 + $0xe8] sm:$0xff]
        %v1544 = vld [vmem:[#allocation2 + $0xf0] sm:$0xff]
        %v1545 = vld [vmem:[#allocation2 + $0xf8] sm:$0xff]
        %v1546 = vld [vmem:[#allocation2 + $0x100] sm:$0xff]
        %v1547 = vld [vmem:[#allocation2 + $0x108] sm:$0xff]
        %v1548 = vld [vmem:[#allocation2 + $0x110] sm:$0xff]
        %v1549 = vld [vmem:[#allocation2 + $0x118] sm:$0xff]
        %v1550 = vld [vmem:[#allocation2 + $0x120] sm:$0xff]
        %v1551 = vld [vmem:[#allocation2 + $0x128] sm:$0xff]
        %v1552 = vld [vmem:[#allocation2 + $0x130] sm:$0xff]
        %v1553 = vld [vmem:[#allocation2 + $0x138] sm:$0xff]
        %v1554 = vld [vmem:[#allocation2 + $0x140] sm:$0xff]
        %v1555 = vld [vmem:[#allocation2 + $0x148] sm:$0xff]
        %v1556 = vld [vmem:[#allocation2 + $0x150] sm:$0xff]
        %v1557 = vld [vmem:[#allocation2 + $0x158] sm:$0xff]
        %v1558 = vld [vmem:[#allocation2 + $0x160] sm:$0xff]
        %v1559 = vld [vmem:[#allocation2 + $0x168] sm:$0xff]
        %v1560 = vld [vmem:[#allocation2 + $0x170] sm:$0xff]
        %v1561 = vld [vmem:[#allocation2 + $0x178] sm:$0xff]
        %1586 = vrot.lane.b32.xlu0 %v1517, 64
        %v1587 = vpop.permute.xlu0 %1586
        %1588 = vrot.lane.b32.xlu0 %v1518, 64
        %v1589 = vpop.permute.xlu0 %1588
        %1590 = vrot.lane.b32.xlu0 %v1519, 64
        %v1591 = vpop.permute.xlu0 %1590
        %1592 = vrot.lane.b32.xlu0 %v1520, 64
        %v1593 = vpop.permute.xlu0 %1592
        %1594 = vrot.lane.b32.xlu0 %v1521, 64
        %v1595 = vpop.permute.xlu0 %1594
        %1596 = vrot.lane.b32.xlu0 %v1522, 64
        %v1597 = vpop.permute.xlu0 %1596
        %1598 = vrot.lane.b32.xlu0 %v1523, 64
        %v1599 = vpop.permute.xlu0 %1598
        %1600 = vrot.lane.b32.xlu0 %v1524, 64
        %v1601 = vpop.permute.xlu0 %1600
        %1602 = vrot.lane.b32.xlu0 %v1525, 64
        %v1603 = vpop.permute.xlu0 %1602
        %1604 = vrot.lane.b32.xlu0 %v1526, 64
        %v1605 = vpop.permute.xlu0 %1604
        %1606 = vrot.lane.b32.xlu0 %v1527, 64
        %v1607 = vpop.permute.xlu0 %1606
        %1608 = vrot.lane.b32.xlu0 %v1528, 64
        %v1609 = vpop.permute.xlu0 %1608
        %1610 = vrot.lane.b32.xlu0 %v1529, 64
        %v1611 = vpop.permute.xlu0 %1610
        %1612 = vrot.lane.b32.xlu0 %v1530, 64
        %v1613 = vpop.permute.xlu0 %1612
        %1614 = vrot.lane.b32.xlu0 %v1531, 64
        %v1615 = vpop.permute.xlu0 %1614
        %1616 = vrot.lane.b32.xlu0 %v1532, 64
        %v1617 = vpop.permute.xlu0 %1616
        %1618 = vrot.lane.b32.xlu0 %v1533, 64
        %v1619 = vpop.permute.xlu0 %1618
        %1620 = vrot.lane.b32.xlu0 %v1534, 64
        %v1621 = vpop.permute.xlu0 %1620
        %1622 = vrot.lane.b32.xlu0 %v1535, 64
        %v1623 = vpop.permute.xlu0 %1622
        %1624 = vrot.lane.b32.xlu0 %v1536, 64
        %v1625 = vpop.permute.xlu0 %1624
        %1626 = vrot.lane.b32.xlu0 %v1537, 64
        %v1627 = vpop.permute.xlu0 %1626
        %1628 = vrot.lane.b32.xlu0 %v1538, 64
        %v1629 = vpop.permute.xlu0 %1628
        %1630 = vrot.lane.b32.xlu0 %v1539, 64
        %v1631 = vpop.permute.xlu0 %1630
        %1632 = vrot.lane.b32.xlu0 %v1540, 64
        %v1633 = vpop.permute.xlu0 %1632
        %1640 = vrot.lane.b32.xlu0 %v1541, 64
        %v1641 = vpop.permute.xlu0 %1640
        %1642 = vrot.lane.b32.xlu0 %v1542, 64
        %v1643 = vpop.permute.xlu0 %1642
        %1644 = vrot.lane.b32.xlu0 %v1543, 64
        %v1645 = vpop.permute.xlu0 %1644
        %1646 = vrot.lane.b32.xlu0 %v1544, 64
        %v1647 = vpop.permute.xlu0 %1646
        %1648 = vrot.lane.b32.xlu0 %v1545, 64
        %v1649 = vpop.permute.xlu0 %1648
        %1650 = vrot.lane.b32.xlu0 %v1546, 64
        %v1651 = vpop.permute.xlu0 %1650
        %1658 = vrot.lane.b32.xlu0 %v1547, 64
        %v1659 = vpop.permute.xlu0 %1658
        %1660 = vrot.lane.b32.xlu0 %v1548, 64
        %v1661 = vpop.permute.xlu0 %1660
        %1662 = vrot.lane.b32.xlu0 %v1549, 64
        %v1663 = vpop.permute.xlu0 %1662
        %1664 = vrot.lane.b32.xlu0 %v1550, 64
        %v1665 = vpop.permute.xlu0 %1664
        %1666 = vrot.lane.b32.xlu0 %v1551, 64
        %v1667 = vpop.permute.xlu0 %1666
        %1668 = vrot.lane.b32.xlu0 %v1552, 64
        %v1669 = vpop.permute.xlu0 %1668
        %1676 = vrot.lane.b32.xlu0 %v1553, 64
        %v1677 = vpop.permute.xlu0 %1676
        %1678 = vrot.lane.b32.xlu0 %v1554, 64
        %v1679 = vpop.permute.xlu0 %1678
        %1680 = vrot.lane.b32.xlu0 %v1555, 64
        %v1681 = vpop.permute.xlu0 %1680
        %1682 = vrot.lane.b32.xlu0 %v1556, 64
        %v1683 = vpop.permute.xlu0 %1682
        %1684 = vrot.lane.b32.xlu0 %v1557, 64
        %v1685 = vpop.permute.xlu0 %1684
        %1686 = vrot.lane.b32.xlu0 %v1558, 64
        %v1687 = vpop.permute.xlu0 %1686
        %v1690 = vsel %vm905, %v1514, %v1587
        %v1694 = vsel %vm905, %v1515, %v1589
        %v1698 = vsel %vm905, %v1516, %v1591
        %v1702 = vsel %vm905, %v1517, %v1593
        %v1706 = vsel %vm905, %v1518, %v1595
        %v1710 = vsel %vm905, %v1519, %v1597
        %v1714 = vsel %vm905, %v1520, %v1599
        %v1718 = vsel %vm905, %v1521, %v1601
        %v1722 = vsel %vm905, %v1522, %v1603
        %v1726 = vsel %vm905, %v1523, %v1605
        %v1730 = vsel %vm905, %v1524, %v1607
        %v1734 = vsel %vm905, %v1525, %v1609
        %v1738 = vsel %vm905, %v1526, %v1611
        %v1742 = vsel %vm905, %v1527, %v1613
        %v1746 = vsel %vm905, %v1528, %v1615
        %v1750 = vsel %vm905, %v1529, %v1617
        %v1754 = vsel %vm905, %v1530, %v1619
        %v1758 = vsel %vm905, %v1531, %v1621
        %v1762 = vsel %vm905, %v1532, %v1623
        %v1766 = vsel %vm905, %v1533, %v1625
        %v1770 = vsel %vm905, %v1534, %v1627
        %v1774 = vsel %vm905, %v1535, %v1629
        %v1778 = vsel %vm905, %v1536, %v1631
        %v1782 = vsel %vm905, %v1537, %v1633
        %v1786 = vsel %vm905, %v1538, %v1641
        %v1790 = vsel %vm905, %v1539, %v1643
        %v1794 = vsel %vm905, %v1540, %v1645
        %v1798 = vsel %vm905, %v1541, %v1647
        %v1802 = vsel %vm905, %v1542, %v1649
        %v1806 = vsel %vm905, %v1543, %v1651
        %v1810 = vsel %vm905, %v1544, %v1659
        %v1814 = vsel %vm905, %v1545, %v1661
        %v1818 = vsel %vm905, %v1546, %v1663
        %v1822 = vsel %vm905, %v1547, %v1665
        %v1826 = vsel %vm905, %v1548, %v1667
        %v1830 = vsel %vm905, %v1549, %v1669
        %v1834 = vsel %vm905, %v1550, %v1677
        %v1838 = vsel %vm905, %v1551, %v1679
        %v1842 = vsel %vm905, %v1552, %v1681
        %v1846 = vsel %vm905, %v1553, %v1683
        %v1850 = vsel %vm905, %v1554, %v1685
        %v1854 = vsel %vm905, %v1555, %v1687
        %v1856 = vld [vmem:[%s6] sm:$0xf]
        %v1857 = vld [vmem:[%s6 + $0x4] sm:$0xf]
        %v1858 = vld [vmem:[%s6 + $0x8] sm:$0xf]
        %v1859 = vld [vmem:[%s6 + $0xc] sm:$0xf]
        %v1860 = vld [vmem:[%s6 + $0x10] sm:$0xf]
        %v1861 = vld [vmem:[%s6 + $0x14] sm:$0xf]
        %v1862 = vld [vmem:[%s6 + $0x18] sm:$0xf]
        %v1863 = vld [vmem:[%s6 + $0x1c] sm:$0xf]
        %v1864 = vld [vmem:[%s6 + $0x20] sm:$0xf]
        %v1865 = vld [vmem:[%s6 + $0x24] sm:$0xf]
        %v1866 = vld [vmem:[%s6 + $0x28] sm:$0xf]
        %v1867 = vld [vmem:[%s6 + $0x2c] sm:$0xf]
        %v1868 = vld [vmem:[%s6 + $0x30] sm:$0xf]
        %v1869 = vld [vmem:[%s6 + $0x34] sm:$0xf]
        %v1870 = vld [vmem:[%s6 + $0x38] sm:$0xf]
        %v1871 = vld [vmem:[%s6 + $0x3c] sm:$0xf]
        %v1872 = vld [vmem:[%s6 + $0x40] sm:$0xf]
        %v1873 = vld [vmem:[%s6 + $0x44] sm:$0xf]
        %v1874 = vld [vmem:[%s6 + $0x48] sm:$0xf]
        %v1875 = vld [vmem:[%s6 + $0x4c] sm:$0xf]
        %v1876 = vld [vmem:[%s6 + $0x50] sm:$0xf]
        %v1877 = vld [vmem:[%s6 + $0x54] sm:$0xf]
        %v1878 = vld [vmem:[%s6 + $0x58] sm:$0xf]
        %v1879 = vld [vmem:[%s6 + $0x5c] sm:$0xf]
        %v1880 = vld [vmem:[%s6 + $0x60] sm:$0xf]
        %v1881 = vld [vmem:[%s6 + $0x64] sm:$0xf]
        %v1882 = vld [vmem:[%s6 + $0x68] sm:$0xf]
        %v1883 = vld [vmem:[%s6 + $0x6c] sm:$0xf]
        %v1884 = vld [vmem:[%s6 + $0x70] sm:$0xf]
        %v1885 = vld [vmem:[%s6 + $0x74] sm:$0xf]
        %v1886 = vld [vmem:[%s6 + $0x78] sm:$0xf]
        %v1887 = vld [vmem:[%s6 + $0x7c] sm:$0xf]
        %v1888 = vld [vmem:[%s6 + $0x80] sm:$0xf]
        %v1889 = vld [vmem:[%s6 + $0x84] sm:$0xf]
        %v1890 = vld [vmem:[%s6 + $0x88] sm:$0xf]
        %v1891 = vld [vmem:[%s6 + $0x8c] sm:$0xf]
        %v1892 = vld [vmem:[%s6 + $0x90] sm:$0xf]
        %v1893 = vld [vmem:[%s6 + $0x94] sm:$0xf]
        %v1894 = vld [vmem:[%s6 + $0x98] sm:$0xf]
        %v1895 = vld [vmem:[%s6 + $0x9c] sm:$0xf]
        %v1896 = vld [vmem:[%s6 + $0xa0] sm:$0xf]
        %v1897 = vld [vmem:[%s6 + $0xa4] sm:$0xf]
        %v1898 = vld [vmem:[%s6 + $0xa8] sm:$0xf]
        %v1899 = vld [vmem:[%s6 + $0xac] sm:$0xf]
        %v1900 = vld [vmem:[%s6 + $0xb0] sm:$0xf]
        %v1901 = vld [vmem:[%s6 + $0xb4] sm:$0xf]
        %v1902 = vld [vmem:[%s6 + $0xb8] sm:$0xf]
        %v1903 = vld [vmem:[%s6 + $0xbc] sm:$0xf]
        %v1904 = vld [vmem:[%s6 + $0xc0] sm:$0xf]
        %v1905 = vld [vmem:[%s6 + $0xc4] sm:$0xf]
        %v1906 = vld [vmem:[%s6 + $0xc8] sm:$0xf]
        %v1907 = vld [vmem:[%s6 + $0xcc] sm:$0xf]
        %v1908 = vld [vmem:[%s6 + $0xd0] sm:$0xf]
        %v1909 = vld [vmem:[%s6 + $0xd4] sm:$0xf]
        %v1910 = vld [vmem:[%s6 + $0xd8] sm:$0xf]
        %v1911 = vld [vmem:[%s6 + $0xdc] sm:$0xf]
        %v1912 = vld [vmem:[%s6 + $0xe0] sm:$0xf]
        %v1913 = vld [vmem:[%s6 + $0xe4] sm:$0xf]
        %v1914 = vld [vmem:[%s6 + $0xe8] sm:$0xf]
        %v1915 = vld [vmem:[%s6 + $0xec] sm:$0xf]
        %v1916 = vld [vmem:[%s6 + $0xf0] sm:$0xf]
        %v1917 = vld [vmem:[%s6 + $0xf4] sm:$0xf]
        %v1918 = vld [vmem:[%s6 + $0xf8] sm:$0xf]
        %v1919 = vld [vmem:[%s6 + $0xfc] sm:$0xf]
        %v1920 = vld [vmem:[%s6 + $0x100] sm:$0xf]
        %v1921 = vld [vmem:[%s6 + $0x104] sm:$0xf]
        %v1922 = vld [vmem:[%s6 + $0x108] sm:$0xf]
        %v1923 = vld [vmem:[%s6 + $0x10c] sm:$0xf]
        %v1924 = vld [vmem:[%s6 + $0x110] sm:$0xf]
        %v1925 = vld [vmem:[%s6 + $0x114] sm:$0xf]
        %v1926 = vld [vmem:[%s6 + $0x118] sm:$0xf]
        %v1927 = vld [vmem:[%s6 + $0x11c] sm:$0xf]
        %v1928 = vld [vmem:[%s7] sm:$0x1]
        %v1930 = vlaneseq
        %v1931 = vshrl.u32 %v1930, 7
        %v1932 = vsub.s32 0, %v1931
        %v1933 = vrot.slane %v1928, %v1932
        %v2007 = vunpack.c.l.b16 %v1856
        %v2008 = vunpack.c.l.b16 %v1857
        %v2009 = vunpack.c.l.b16 %v1858
        %v2010 = vunpack.c.l.b16 %v1859
        %v2011 = vunpack.c.l.b16 %v1860
        %v2012 = vunpack.c.l.b16 %v1861
        %v2013 = vunpack.c.l.b16 %v1862
        %v2014 = vunpack.c.l.b16 %v1863
        %v2015 = vunpack.c.l.b16 %v1864
        %v2016 = vunpack.c.l.b16 %v1865
        %v2017 = vunpack.c.l.b16 %v1866
        %v2018 = vunpack.c.l.b16 %v1867
        %v2019 = vunpack.c.l.b16 %v1868
        %v2020 = vunpack.c.l.b16 %v1869
        %v2021 = vunpack.c.l.b16 %v1870
        %v2022 = vunpack.c.l.b16 %v1871
        %v2023 = vunpack.c.l.b16 %v1872
        %v2024 = vunpack.c.l.b16 %v1873
        %v2025 = vunpack.c.l.b16 %v1874
        %v2026 = vunpack.c.l.b16 %v1875
        %v2027 = vunpack.c.l.b16 %v1876
        %v2028 = vunpack.c.l.b16 %v1877
        %v2029 = vunpack.c.l.b16 %v1878
        %v2030 = vunpack.c.l.b16 %v1879
        %v2031 = vunpack.c.l.b16 %v1880
        %v2032 = vunpack.c.l.b16 %v1881
        %v2033 = vunpack.c.l.b16 %v1882
        %v2034 = vunpack.c.l.b16 %v1883
        %v2035 = vunpack.c.l.b16 %v1884
        %v2036 = vunpack.c.l.b16 %v1885
        %v2037 = vunpack.c.l.b16 %v1886
        %v2038 = vunpack.c.l.b16 %v1887
        %v2039 = vunpack.c.l.b16 %v1888
        %v2040 = vunpack.c.l.b16 %v1889
        %v2041 = vunpack.c.l.b16 %v1890
        %v2042 = vunpack.c.l.b16 %v1891
        %v2043 = vunpack.c.l.b16 %v1892
        %v2044 = vunpack.c.l.b16 %v1893
        %v2045 = vunpack.c.l.b16 %v1894
        %v2046 = vunpack.c.l.b16 %v1895
        %v2047 = vunpack.c.l.b16 %v1896
        %v2048 = vunpack.c.l.b16 %v1897
        %v2049 = vunpack.c.l.b16 %v1898
        %v2050 = vunpack.c.l.b16 %v1899
        %v2051 = vunpack.c.l.b16 %v1900
        %v2052 = vunpack.c.l.b16 %v1901
        %v2053 = vunpack.c.l.b16 %v1902
        %v2054 = vunpack.c.l.b16 %v1903
        %v2055 = vunpack.c.l.b16 %v1904
        %v2056 = vunpack.c.l.b16 %v1905
        %v2057 = vunpack.c.l.b16 %v1906
        %v2058 = vunpack.c.l.b16 %v1907
        %v2059 = vunpack.c.l.b16 %v1908
        %v2060 = vunpack.c.l.b16 %v1909
        %v2061 = vunpack.c.l.b16 %v1910
        %v2062 = vunpack.c.l.b16 %v1911
        %v2063 = vunpack.c.l.b16 %v1912
        %v2064 = vunpack.c.l.b16 %v1913
        %v2065 = vunpack.c.l.b16 %v1914
        %v2066 = vunpack.c.l.b16 %v1915
        %v2067 = vunpack.c.l.b16 %v1916
        %v2068 = vunpack.c.l.b16 %v1917
        %v2069 = vunpack.c.l.b16 %v1918
        %v2070 = vunpack.c.l.b16 %v1919
        %v2071 = vunpack.c.l.b16 %v1920
        %v2072 = vunpack.c.l.b16 %v1921
        %v2073 = vunpack.c.l.b16 %v1922
        %v2074 = vunpack.c.l.b16 %v1923
        %v2075 = vunpack.c.l.b16 %v1924
        %v2076 = vunpack.c.l.b16 %v1925
        %v2077 = vunpack.c.l.b16 %v1926
        %v2078 = vunpack.c.l.b16 %v1927
        %v2079 = vpack.c.b16 %v2008, %v2007
        %v2080 = vpack.c.b16 %v2010, %v2009
        %v2081 = vpack.c.b16 %v2012, %v2011
        %v2082 = vpack.c.b16 %v2014, %v2013
        %v2083 = vpack.c.b16 %v2016, %v2015
        %v2084 = vpack.c.b16 %v2018, %v2017
        %v2085 = vpack.c.b16 %v2020, %v2019
        %v2086 = vpack.c.b16 %v2022, %v2021
        %v2087 = vpack.c.b16 %v2024, %v2023
        %v2088 = vpack.c.b16 %v2026, %v2025
        %v2089 = vpack.c.b16 %v2028, %v2027
        %v2090 = vpack.c.b16 %v2030, %v2029
        %v2091 = vpack.c.b16 %v2032, %v2031
        %v2092 = vpack.c.b16 %v2034, %v2033
        %v2093 = vpack.c.b16 %v2036, %v2035
        %v2094 = vpack.c.b16 %v2038, %v2037
        %v2095 = vpack.c.b16 %v2040, %v2039
        %v2096 = vpack.c.b16 %v2042, %v2041
        %v2097 = vpack.c.b16 %v2044, %v2043
        %v2098 = vpack.c.b16 %v2046, %v2045
        %v2099 = vpack.c.b16 %v2048, %v2047
        %v2100 = vpack.c.b16 %v2050, %v2049
        %v2101 = vpack.c.b16 %v2052, %v2051
        %v2102 = vpack.c.b16 %v2054, %v2053
        %v2103 = vpack.c.b16 %v2056, %v2055
        %v2104 = vpack.c.b16 %v2058, %v2057
        %v2105 = vpack.c.b16 %v2060, %v2059
        %v2106 = vpack.c.b16 %v2062, %v2061
        %v2107 = vpack.c.b16 %v2064, %v2063
        %v2108 = vpack.c.b16 %v2066, %v2065
        %v2109 = vpack.c.b16 %v2068, %v2067
        %v2110 = vpack.c.b16 %v2070, %v2069
        %v2111 = vpack.c.b16 %v2072, %v2071
        %v2112 = vpack.c.b16 %v2074, %v2073
        %v2113 = vpack.c.b16 %v2076, %v2075
        %v2114 = vpack.c.b16 %v2078, %v2077
        %v2151 = vsel %vm905, %v1538, 0
        %v2153 = vsel %vm905, %v1539, 0
        %v2155 = vsel %vm905, %v1540, 0
        %v2157 = vsel %vm905, %v1541, 0
        %v2159 = vsel %vm905, %v1542, 0
        %v2161 = vsel %vm905, %v1543, 0
        %v2163 = vsel %vm905, %v1544, 0
        %v2165 = vsel %vm905, %v1545, 0
        %v2167 = vsel %vm905, %v1546, 0
        %v2169 = vsel %vm905, %v1547, 0
        %v2171 = vsel %vm905, %v1548, 0
        %v2173 = vsel %vm905, %v1549, 0
        %v2175 = vsel %vm905, %v1550, 0
        %v2177 = vsel %vm905, %v1551, 0
        %v2179 = vsel %vm905, %v1552, 0
        %v2181 = vsel %vm905, %v1553, 0
        %v2183 = vsel %vm905, %v1554, 0
        %v2185 = vsel %vm905, %v1555, 0
        %v2188 = vsel %vm905, %v1556, 0
        %v2191 = vsel %vm905, %v1557, 0
        %v2194 = vsel %vm905, %v1558, 0
        %v2197 = vsel %vm905, %v1559, 0
        %v2200 = vsel %vm905, %v1560, 0
        %v2203 = vsel %vm905, %v1561, 0
        %2205 = vmatprep.subr.bf16.mxu0 0
        %2206 = vmatpush1.bf16.msra.mxu0 %v2079
        %2207 = vmatprep.subr.bf16.mxu0 0
        %2208 = vmatpush1.bf16.msra.mxu0 %v2080
        %2209 = vmatprep.subr.bf16.mxu0 0
        %2210 = vmatpush1.bf16.msra.mxu0 %v2081
        %2211 = vmatprep.subr.bf16.mxu0 0
        %2212 = vmatpush1.bf16.msra.mxu0 %v2082
        %2213 = vmatprep.subr.bf16.mxu0 0
        %2214 = vmatpush1.bf16.msra.mxu0 %v2083
        %2215 = vmatprep.subr.bf16.mxu0 0
        %2216 = vmatpush1.bf16.msra.mxu0 %v2084
        %2217 = vmatprep.subr.bf16.mxu0 0
        %2218 = vmatpush1.bf16.msra.mxu0 %v2085
        %2219 = vmatprep.subr.bf16.mxu0 0
        %2220 = vmatpush1.bf16.msra.mxu0 %v2086
        %2221 = vmatprep.subr.bf16.mxu0 0
        %2222 = vmatpush1.bf16.msra.mxu0 %v2087
        %2223 = vmatprep.subr.bf16.mxu0 0
        %2224 = vmatpush1.bf16.msra.mxu0 %v2088
        %2225 = vmatprep.subr.bf16.mxu0 0
        %2226 = vmatpush1.bf16.msra.mxu0 %v2089
        %2227 = vmatprep.subr.bf16.mxu0 0
        %2228 = vmatpush1.bf16.msra.mxu0 %v2090
        %2229 = vmatprep.subr.bf16.mxu0 0
        %2230 = vmatpush1.bf16.msra.mxu0 %v2091
        %2231 = vmatprep.subr.bf16.mxu0 0
        %2232 = vmatpush1.bf16.msra.mxu0 %v2092
        %2233 = vmatprep.subr.bf16.mxu0 0
        %2234 = vmatpush1.bf16.msra.mxu0 %v2093
        %2235 = vmatprep.subr.bf16.mxu0 0
        %2236 = vmatpush1.bf16.msra.mxu0 %v2094
        %2237 = vmatprep.mubr.bf16.mxu0 %v1714
        %2238 = vmatmul.mubr.bf16.gmra.mrb[0].mxu0 %v1690
        %v2239 = vpop.f32.mrb[0].mxu0
        %v2240 = vadd.f32 %v1933, %v2239
        %v2241 = vpop.f32.mrb[0].mxu0
        %v2242 = vpop.f32.mrb[0].mxu0
        %v2243 = vadd.f32 %v1933, %v2242
        %v2244 = vpop.f32.mrb[0].mxu0
        %2245 = vmatprep.mubr.bf16.mxu0 %v1718
        %2246 = vmatmul.mubr.bf16.gmra.mrb[0].mxu0 %v1694
        %v2247 = vpop.f32.mrb[0].mxu0
        %v2248 = vadd.f32 %v1933, %v2247
        %v2249 = vpop.f32.mrb[0].mxu0
        %v2250 = vpop.f32.mrb[0].mxu0
        %v2251 = vadd.f32 %v1933, %v2250
        %v2252 = vpop.f32.mrb[0].mxu0
        %2253 = vmatprep.mubr.bf16.mxu0 %v1722
        %2254 = vmatmul.mubr.bf16.gmra.mrb[0].mxu0 %v1698
        %v2255 = vpop.f32.mrb[0].mxu0
        %v2256 = vadd.f32 %v1933, %v2255
        %v2257 = vpop.f32.mrb[0].mxu0
        %v2258 = vpop.f32.mrb[0].mxu0
        %v2259 = vadd.f32 %v1933, %v2258
        %v2260 = vpop.f32.mrb[0].mxu0
        %2261 = vmatprep.mubr.bf16.mxu0 %v1726
        %2262 = vmatmul.mubr.bf16.gmra.mrb[0].mxu0 %v1702
        %v2263 = vpop.f32.mrb[0].mxu0
        %v2264 = vadd.f32 %v1933, %v2263
        %v2265 = vpop.f32.mrb[0].mxu0
        %v2266 = vpop.f32.mrb[0].mxu0
        %v2267 = vadd.f32 %v1933, %v2266
        %v2268 = vpop.f32.mrb[0].mxu0
        %2269 = vmatprep.mubr.bf16.mxu0 %v1730
        %2270 = vmatmul.mubr.bf16.gmra.mrb[0].mxu0 %v1706
        %v2271 = vpop.f32.mrb[0].mxu0
        %v2272 = vadd.f32 %v1933, %v2271
        %v2273 = vpop.f32.mrb[0].mxu0
        %v2274 = vpop.f32.mrb[0].mxu0
        %v2275 = vadd.f32 %v1933, %v2274
        %v2276 = vpop.f32.mrb[0].mxu0
        %2277 = vmatprep.mubr.bf16.mxu0 %v1734
        %2278 = vmatmul.mubr.bf16.gmra.mrb[0].mxu0 %v1710
        %v2279 = vpop.f32.mrb[0].mxu0
        %v2280 = vadd.f32 %v1933, %v2279
        %v2281 = vpop.f32.mrb[0].mxu0
        %v2282 = vpop.f32.mrb[0].mxu0
        %v2283 = vadd.f32 %v1933, %v2282
        %v2284 = vpop.f32.mrb[0].mxu0
        %2285 = vmatprep.mubr.bf16.mxu0 %v1738
        %2286 = vmatmul.mubr.bf16.gmra.mrb[0].mxu0 %v1714
        %v2287 = vpop.f32.mrb[0].mxu0
        %v2288 = vadd.f32 %v1933, %v2287
        %v2289 = vpop.f32.mrb[0].mxu0
        %v2290 = vpop.f32.mrb[0].mxu0
        %v2291 = vadd.f32 %v1933, %v2290
        %v2292 = vpop.f32.mrb[0].mxu0
        %2293 = vmatprep.mubr.bf16.mxu0 %v1742
        %2294 = vmatmul.mubr.bf16.gmra.mrb[0].mxu0 %v1718
        %v2295 = vpop.f32.mrb[0].mxu0
        %v2296 = vadd.f32 %v1933, %v2295
        %v2297 = vpop.f32.mrb[0].mxu0
        %v2298 = vpop.f32.mrb[0].mxu0
        %v2299 = vadd.f32 %v1933, %v2298
        %v2300 = vpop.f32.mrb[0].mxu0
        %2301 = vmatprep.mubr.bf16.mxu0 %v1746
        %2302 = vmatmul.mubr.bf16.gmra.mrb[0].mxu0 %v1722
        %v2303 = vpop.f32.mrb[0].mxu0
        %v2304 = vadd.f32 %v1933, %v2303
        %v2305 = vpop.f32.mrb[0].mxu0
        %v2306 = vpop.f32.mrb[0].mxu0
        %v2307 = vadd.f32 %v1933, %v2306
        %v2308 = vpop.f32.mrb[0].mxu0
        %2309 = vmatprep.mubr.bf16.mxu0 %v1750
        %2310 = vmatmul.mubr.bf16.gmra.mrb[0].mxu0 %v1726
        %v2311 = vpop.f32.mrb[0].mxu0
        %v2312 = vadd.f32 %v1933, %v2311
        %v2313 = vpop.f32.mrb[0].mxu0
        %v2314 = vpop.f32.mrb[0].mxu0
        %v2315 = vadd.f32 %v1933, %v2314
        %v2316 = vpop.f32.mrb[0].mxu0
        %2317 = vmatprep.mubr.bf16.mxu0 %v1754
        %2318 = vmatmul.mubr.bf16.gmra.mrb[0].mxu0 %v1730
        %v2319 = vpop.f32.mrb[0].mxu0
        %v2320 = vadd.f32 %v1933, %v2319
        %v2321 = vpop.f32.mrb[0].mxu0
        %v2322 = vpop.f32.mrb[0].mxu0
        %v2323 = vadd.f32 %v1933, %v2322
        %v2324 = vpop.f32.mrb[0].mxu0
        %2325 = vmatprep.mubr.bf16.mxu0 %v1758
        %2326 = vmatmul.mubr.bf16.gmra.mrb[0].mxu0 %v1734
        %v2327 = vpop.f32.mrb[0].mxu0
        %v2328 = vadd.f32 %v1933, %v2327
        %v2329 = vpop.f32.mrb[0].mxu0
        %v2330 = vpop.f32.mrb[0].mxu0
        %v2331 = vadd.f32 %v1933, %v2330
        %v2332 = vpop.f32.mrb[0].mxu0
        %2333 = vmatprep.mubr.bf16.mxu0 %v1762
        %2334 = vmatmul.mubr.bf16.gmra.mrb[0].mxu0 %v1738
        %v2335 = vpop.f32.mrb[0].mxu0
        %v2336 = vadd.f32 %v1933, %v2335
        %v2337 = vpop.f32.mrb[0].mxu0
        %v2338 = vpop.f32.mrb[0].mxu0
        %v2339 = vadd.f32 %v1933, %v2338
        %v2340 = vpop.f32.mrb[0].mxu0
        %2341 = vmatprep.mubr.bf16.mxu0 %v1766
        %2342 = vmatmul.mubr.bf16.gmra.mrb[0].mxu0 %v1742
        %v2343 = vpop.f32.mrb[0].mxu0
        %v2344 = vadd.f32 %v1933, %v2343
        %v2345 = vpop.f32.mrb[0].mxu0
        %v2346 = vpop.f32.mrb[0].mxu0
        %v2347 = vadd.f32 %v1933, %v2346
        %v2348 = vpop.f32.mrb[0].mxu0
        %2349 = vmatprep.mubr.bf16.mxu0 %v1770
        %2350 = vmatmul.mubr.bf16.gmra.mrb[0].mxu0 %v1746
        %v2351 = vpop.f32.mrb[0].mxu0
        %v2352 = vadd.f32 %v1933, %v2351
        %v2353 = vpop.f32.mrb[0].mxu0
        %v2354 = vpop.f32.mrb[0].mxu0
        %v2355 = vadd.f32 %v1933, %v2354
        %v2356 = vpop.f32.mrb[0].mxu0
        %2357 = vmatprep.mubr.bf16.mxu0 %v1774
        %2358 = vmatmul.mubr.bf16.gmra.mrb[0].mxu0 %v1750
        %v2359 = vpop.f32.mrb[0].mxu0
        %v2360 = vadd.f32 %v1933, %v2359
        %v2361 = vpop.f32.mrb[0].mxu0
        %v2362 = vpop.f32.mrb[0].mxu0
        %v2363 = vadd.f32 %v1933, %v2362
        %v2364 = vpop.f32.mrb[0].mxu0
        %2365 = vmatprep.mubr.bf16.mxu0 %v1778
        %2366 = vmatmul.mubr.bf16.gmra.mrb[0].mxu0 %v1754
        %v2367 = vpop.f32.mrb[0].mxu0
        %v2368 = vadd.f32 %v1933, %v2367
        %v2369 = vpop.f32.mrb[0].mxu0
        %v2370 = vpop.f32.mrb[0].mxu0
        %v2371 = vadd.f32 %v1933, %v2370
        %v2372 = vpop.f32.mrb[0].mxu0
        %2373 = vmatprep.mubr.bf16.mxu0 %v1782
        %2374 = vmatmul.mubr.bf16.gmra.mrb[0].mxu0 %v1758
        %v2375 = vpop.f32.mrb[0].mxu0
        %v2376 = vadd.f32 %v1933, %v2375
        %v2377 = vpop.f32.mrb[0].mxu0
        %v2378 = vpop.f32.mrb[0].mxu0
        %v2379 = vadd.f32 %v1933, %v2378
        %v2380 = vpop.f32.mrb[0].mxu0
        %2381 = vmatprep.mubr.bf16.mxu0 %v1786
        %2382 = vmatmul.mubr.bf16.gmra.mrb[0].mxu0 %v1762
        %v2383 = vpop.f32.mrb[0].mxu0
        %v2384 = vadd.f32 %v1933, %v2383
        %v2385 = vpop.f32.mrb[0].mxu0
        %v2386 = vpop.f32.mrb[0].mxu0
        %v2387 = vadd.f32 %v1933, %v2386
        %v2388 = vpop.f32.mrb[0].mxu0
        %2389 = vmatprep.mubr.bf16.mxu0 %v1790
        %2390 = vmatmul.mubr.bf16.gmra.mrb[0].mxu0 %v1766
        %v2391 = vpop.f32.mrb[0].mxu0
        %v2392 = vadd.f32 %v1933, %v2391
        %v2393 = vpop.f32.mrb[0].mxu0
        %v2394 = vpop.f32.mrb[0].mxu0
        %v2395 = vadd.f32 %v1933, %v2394
        %v2396 = vpop.f32.mrb[0].mxu0
        %2397 = vmatprep.mubr.bf16.mxu0 %v1794
        %2398 = vmatmul.mubr.bf16.gmra.mrb[0].mxu0 %v1770
        %v2399 = vpop.f32.mrb[0].mxu0
        %v2400 = vadd.f32 %v1933, %v2399
        %v2401 = vpop.f32.mrb[0].mxu0
        %v2402 = vpop.f32.mrb[0].mxu0
        %v2403 = vadd.f32 %v1933, %v2402
        %v2404 = vpop.f32.mrb[0].mxu0
        %2405 = vmatprep.mubr.bf16.mxu0 %v1798
        %2406 = vmatmul.mubr.bf16.gmra.mrb[0].mxu0 %v1774
        %v2407 = vpop.f32.mrb[0].mxu0
        %v2408 = vadd.f32 %v1933, %v2407
        %v2409 = vpop.f32.mrb[0].mxu0
        %v2410 = vpop.f32.mrb[0].mxu0
        %v2411 = vadd.f32 %v1933, %v2410
        %v2412 = vpop.f32.mrb[0].mxu0
        %2413 = vmatprep.mubr.bf16.mxu0 %v1802
        %2414 = vmatmul.mubr.bf16.gmra.mrb[0].mxu0 %v1778
        %v2415 = vpop.f32.mrb[0].mxu0
        %v2416 = vadd.f32 %v1933, %v2415
        %v2417 = vpop.f32.mrb[0].mxu0
        %v2418 = vpop.f32.mrb[0].mxu0
        %v2419 = vadd.f32 %v1933, %v2418
        %v2420 = vpop.f32.mrb[0].mxu0
        %2421 = vmatprep.mubr.bf16.mxu0 %v1806
        %2422 = vmatmul.mubr.bf16.gmra.mrb[0].mxu0 %v1782
        %v2423 = vpop.f32.mrb[0].mxu0
        %v2424 = vadd.f32 %v1933, %v2423
        %v2425 = vpop.f32.mrb[0].mxu0
        %v2426 = vpop.f32.mrb[0].mxu0
        %v2427 = vadd.f32 %v1933, %v2426
        %v2428 = vpop.f32.mrb[0].mxu0
        %2429 = vdwg.mxu0
        %2430 = vmatprep.subr.bf16.mxu0 0
        %2431 = vmatpush1.bf16.msra.mxu0 %v2095
        %2432 = vmatprep.subr.bf16.mxu0 0
        %2433 = vmatpush1.bf16.msra.mxu0 %v2096
        %2434 = vmatprep.subr.bf16.mxu0 0
        %2435 = vmatpush1.bf16.msra.mxu0 %v2097
        %2436 = vmatprep.subr.bf16.mxu0 0
        %2437 = vmatpush1.bf16.msra.mxu0 %v2098
        %2438 = vmatprep.subr.bf16.mxu0 0
        %2439 = vmatpush1.bf16.msra.mxu0 %v2099
        %2440 = vmatprep.subr.bf16.mxu0 0
        %2441 = vmatpush1.bf16.msra.mxu0 %v2100
        %2442 = vmatprep.subr.bf16.mxu0 0
        %2443 = vmatpush1.bf16.msra.mxu0 %v2101
        %2444 = vmatprep.subr.bf16.mxu0 0
        %2445 = vmatpush1.bf16.msra.mxu0 %v2102
        %2446 = vmatprep.subr.bf16.mxu0 0
        %2447 = vmatpush1.bf16.msra.mxu0 %v2103
        %2448 = vmatprep.subr.bf16.mxu0 0
        %2449 = vmatpush1.bf16.msra.mxu0 %v2104
        %2450 = vmatprep.subr.bf16.mxu0 0
        %2451 = vmatpush1.bf16.msra.mxu0 %v2105
        %2452 = vmatprep.subr.bf16.mxu0 0
        %2453 = vmatpush1.bf16.msra.mxu0 %v2106
        %2454 = vmatprep.subr.bf16.mxu0 0
        %2455 = vmatpush1.bf16.msra.mxu0 %v2107
        %2456 = vmatprep.subr.bf16.mxu0 0
        %2457 = vmatpush1.bf16.msra.mxu0 %v2108
        %2458 = vmatprep.subr.bf16.mxu0 0
        %2459 = vmatpush1.bf16.msra.mxu0 %v2109
        %2460 = vmatprep.subr.bf16.mxu0 0
        %2461 = vmatpush1.bf16.msra.mxu0 %v2110
        %2462 = vmatprep.mubr.bf16.mxu0 %v1762
        %2463 = vmatmul.mubr.bf16.gmra.mrb[0].mxu0 %v1738
        %v2464 = vpop.f32.mrb[0].mxu0
        %v2465 = vadd.f32 %v2240, %v2464
        %v2466 = vpop.f32.mrb[0].mxu0
        %v2467 = vpop.f32.mrb[0].mxu0
        %v2468 = vadd.f32 %v2243, %v2467
        %v2469 = vpop.f32.mrb[0].mxu0
        %2470 = vmatprep.mubr.bf16.mxu0 %v1766
        %2471 = vmatmul.mubr.bf16.gmra.mrb[0].mxu0 %v1742
        %v2472 = vpop.f32.mrb[0].mxu0
        %v2473 = vadd.f32 %v2248, %v2472
        %v2474 = vpop.f32.mrb[0].mxu0
        %v2475 = vpop.f32.mrb[0].mxu0
        %v2476 = vadd.f32 %v2251, %v2475
        %v2477 = vpop.f32.mrb[0].mxu0
        %2478 = vmatprep.mubr.bf16.mxu0 %v1770
        %2479 = vmatmul.mubr.bf16.gmra.mrb[0].mxu0 %v1746
        %v2480 = vpop.f32.mrb[0].mxu0
        %v2481 = vadd.f32 %v2256, %v2480
        %v2482 = vpop.f32.mrb[0].mxu0
        %v2483 = vpop.f32.mrb[0].mxu0
        %v2484 = vadd.f32 %v2259, %v2483
        %v2485 = vpop.f32.mrb[0].mxu0
        %2486 = vmatprep.mubr.bf16.mxu0 %v1774
        %2487 = vmatmul.mubr.bf16.gmra.mrb[0].mxu0 %v1750
        %v2488 = vpop.f32.mrb[0].mxu0
        %v2489 = vadd.f32 %v2264, %v2488
        %v2490 = vpop.f32.mrb[0].mxu0
        %v2491 = vpop.f32.mrb[0].mxu0
        %v2492 = vadd.f32 %v2267, %v2491
        %v2493 = vpop.f32.mrb[0].mxu0
        %2494 = vmatprep.mubr.bf16.mxu0 %v1778
        %2495 = vmatmul.mubr.bf16.gmra.mrb[0].mxu0 %v1754
        %v2496 = vpop.f32.mrb[0].mxu0
        %v2497 = vadd.f32 %v2272, %v2496
        %v2498 = vpop.f32.mrb[0].mxu0
        %v2499 = vpop.f32.mrb[0].mxu0
        %v2500 = vadd.f32 %v2275, %v2499
        %v2501 = vpop.f32.mrb[0].mxu0
        %2502 = vmatprep.mubr.bf16.mxu0 %v1782
        %2503 = vmatmul.mubr.bf16.gmra.mrb[0].mxu0 %v1758
        %v2504 = vpop.f32.mrb[0].mxu0
        %v2505 = vadd.f32 %v2280, %v2504
        %v2506 = vpop.f32.mrb[0].mxu0
        %v2507 = vpop.f32.mrb[0].mxu0
        %v2508 = vadd.f32 %v2283, %v2507
        %v2509 = vpop.f32.mrb[0].mxu0
        %2510 = vmatprep.mubr.bf16.mxu0 %v1786
        %2511 = vmatmul.mubr.bf16.gmra.mrb[0].mxu0 %v1762
        %v2512 = vpop.f32.mrb[0].mxu0
        %v2513 = vadd.f32 %v2288, %v2512
        %v2514 = vpop.f32.mrb[0].mxu0
        %v2515 = vpop.f32.mrb[0].mxu0
        %v2516 = vadd.f32 %v2291, %v2515
        %v2517 = vpop.f32.mrb[0].mxu0
        %2518 = vmatprep.mubr.bf16.mxu0 %v1790
        %2519 = vmatmul.mubr.bf16.gmra.mrb[0].mxu0 %v1766
        %v2520 = vpop.f32.mrb[0].mxu0
        %v2521 = vadd.f32 %v2296, %v2520
        %v2522 = vpop.f32.mrb[0].mxu0
        %v2523 = vpop.f32.mrb[0].mxu0
        %v2524 = vadd.f32 %v2299, %v2523
        %v2525 = vpop.f32.mrb[0].mxu0
        %2526 = vmatprep.mubr.bf16.mxu0 %v1794
        %2527 = vmatmul.mubr.bf16.gmra.mrb[0].mxu0 %v1770
        %v2528 = vpop.f32.mrb[0].mxu0
        %v2529 = vadd.f32 %v2304, %v2528
        %v2530 = vpop.f32.mrb[0].mxu0
        %v2531 = vpop.f32.mrb[0].mxu0
        %v2532 = vadd.f32 %v2307, %v2531
        %v2533 = vpop.f32.mrb[0].mxu0
        %2534 = vmatprep.mubr.bf16.mxu0 %v1798
        %2535 = vmatmul.mubr.bf16.gmra.mrb[0].mxu0 %v1774
        %v2536 = vpop.f32.mrb[0].mxu0
        %v2537 = vadd.f32 %v2312, %v2536
        %v2538 = vpop.f32.mrb[0].mxu0
        %v2539 = vpop.f32.mrb[0].mxu0
        %v2540 = vadd.f32 %v2315, %v2539
        %v2541 = vpop.f32.mrb[0].mxu0
        %2542 = vmatprep.mubr.bf16.mxu0 %v1802
        %2543 = vmatmul.mubr.bf16.gmra.mrb[0].mxu0 %v1778
        %v2544 = vpop.f32.mrb[0].mxu0
        %v2545 = vadd.f32 %v2320, %v2544
        %v2546 = vpop.f32.mrb[0].mxu0
        %v2547 = vpop.f32.mrb[0].mxu0
        %v2548 = vadd.f32 %v2323, %v2547
        %v2549 = vpop.f32.mrb[0].mxu0
        %2550 = vmatprep.mubr.bf16.mxu0 %v1806
        %2551 = vmatmul.mubr.bf16.gmra.mrb[0].mxu0 %v1782
        %v2552 = vpop.f32.mrb[0].mxu0
        %v2553 = vadd.f32 %v2328, %v2552
        %v2554 = vpop.f32.mrb[0].mxu0
        %v2555 = vpop.f32.mrb[0].mxu0
        %v2556 = vadd.f32 %v2331, %v2555
        %v2557 = vpop.f32.mrb[0].mxu0
        %2558 = vmatprep.mubr.bf16.mxu0 %v1810
        %2559 = vmatmul.mubr.bf16.gmra.mrb[0].mxu0 %v1786
        %v2560 = vpop.f32.mrb[0].mxu0
        %v2561 = vadd.f32 %v2336, %v2560
        %v2562 = vpop.f32.mrb[0].mxu0
        %v2563 = vpop.f32.mrb[0].mxu0
        %v2564 = vadd.f32 %v2339, %v2563
        %v2565 = vpop.f32.mrb[0].mxu0
        %2566 = vmatprep.mubr.bf16.mxu0 %v1814
        %2567 = vmatmul.mubr.bf16.gmra.mrb[0].mxu0 %v1790
        %v2568 = vpop.f32.mrb[0].mxu0
        %v2569 = vadd.f32 %v2344, %v2568
        %v2570 = vpop.f32.mrb[0].mxu0
        %v2571 = vpop.f32.mrb[0].mxu0
        %v2572 = vadd.f32 %v2347, %v2571
        %v2573 = vpop.f32.mrb[0].mxu0
        %2574 = vmatprep.mubr.bf16.mxu0 %v1818
        %2575 = vmatmul.mubr.bf16.gmra.mrb[0].mxu0 %v1794
        %v2576 = vpop.f32.mrb[0].mxu0
        %v2577 = vadd.f32 %v2352, %v2576
        %v2578 = vpop.f32.mrb[0].mxu0
        %v2579 = vpop.f32.mrb[0].mxu0
        %v2580 = vadd.f32 %v2355, %v2579
        %v2581 = vpop.f32.mrb[0].mxu0
        %2582 = vmatprep.mubr.bf16.mxu0 %v1822
        %2583 = vmatmul.mubr.bf16.gmra.mrb[0].mxu0 %v1798
        %v2584 = vpop.f32.mrb[0].mxu0
        %v2585 = vadd.f32 %v2360, %v2584
        %v2586 = vpop.f32.mrb[0].mxu0
        %v2587 = vpop.f32.mrb[0].mxu0
        %v2588 = vadd.f32 %v2363, %v2587
        %v2589 = vpop.f32.mrb[0].mxu0
        %2590 = vmatprep.mubr.bf16.mxu0 %v1826
        %2591 = vmatmul.mubr.bf16.gmra.mrb[0].mxu0 %v1802
        %v2592 = vpop.f32.mrb[0].mxu0
        %v2593 = vadd.f32 %v2368, %v2592
        %v2594 = vpop.f32.mrb[0].mxu0
        %v2595 = vpop.f32.mrb[0].mxu0
        %v2596 = vadd.f32 %v2371, %v2595
        %v2597 = vpop.f32.mrb[0].mxu0
        %2598 = vmatprep.mubr.bf16.mxu0 %v1830
        %2599 = vmatmul.mubr.bf16.gmra.mrb[0].mxu0 %v1806
        %v2600 = vpop.f32.mrb[0].mxu0
        %v2601 = vadd.f32 %v2376, %v2600
        %v2602 = vpop.f32.mrb[0].mxu0
        %v2603 = vpop.f32.mrb[0].mxu0
        %v2604 = vadd.f32 %v2379, %v2603
        %v2605 = vpop.f32.mrb[0].mxu0
        %2606 = vmatprep.mubr.bf16.mxu0 %v1834
        %2607 = vmatmul.mubr.bf16.gmra.mrb[0].mxu0 %v1810
        %v2608 = vpop.f32.mrb[0].mxu0
        %v2609 = vadd.f32 %v2384, %v2608
        %v2610 = vpop.f32.mrb[0].mxu0
        %v2611 = vpop.f32.mrb[0].mxu0
        %v2612 = vadd.f32 %v2387, %v2611
        %v2613 = vpop.f32.mrb[0].mxu0
        %2614 = vmatprep.mubr.bf16.mxu0 %v1838
        %2615 = vmatmul.mubr.bf16.gmra.mrb[0].mxu0 %v1814
        %v2616 = vpop.f32.mrb[0].mxu0
        %v2617 = vadd.f32 %v2392, %v2616
        %v2618 = vpop.f32.mrb[0].mxu0
        %v2619 = vpop.f32.mrb[0].mxu0
        %v2620 = vadd.f32 %v2395, %v2619
        %v2621 = vpop.f32.mrb[0].mxu0
        %2622 = vmatprep.mubr.bf16.mxu0 %v1842
        %2623 = vmatmul.mubr.bf16.gmra.mrb[0].mxu0 %v1818
        %v2624 = vpop.f32.mrb[0].mxu0
        %v2625 = vadd.f32 %v2400, %v2624
        %v2626 = vpop.f32.mrb[0].mxu0
        %v2627 = vpop.f32.mrb[0].mxu0
        %v2628 = vadd.f32 %v2403, %v2627
        %v2629 = vpop.f32.mrb[0].mxu0
        %2630 = vmatprep.mubr.bf16.mxu0 %v1846
        %2631 = vmatmul.mubr.bf16.gmra.mrb[0].mxu0 %v1822
        %v2632 = vpop.f32.mrb[0].mxu0
        %v2633 = vadd.f32 %v2408, %v2632
        %v2634 = vpop.f32.mrb[0].mxu0
        %v2635 = vpop.f32.mrb[0].mxu0
        %v2636 = vadd.f32 %v2411, %v2635
        %v2637 = vpop.f32.mrb[0].mxu0
        %2638 = vmatprep.mubr.bf16.mxu0 %v1850
        %2639 = vmatmul.mubr.bf16.gmra.mrb[0].mxu0 %v1826
        %v2640 = vpop.f32.mrb[0].mxu0
        %v2641 = vadd.f32 %v2416, %v2640
        %v2642 = vpop.f32.mrb[0].mxu0
        %v2643 = vpop.f32.mrb[0].mxu0
        %v2644 = vadd.f32 %v2419, %v2643
        %v2645 = vpop.f32.mrb[0].mxu0
        %2646 = vmatprep.mubr.bf16.mxu0 %v1854
        %2647 = vmatmul.mubr.bf16.gmra.mrb[0].mxu0 %v1830
        %v2648 = vpop.f32.mrb[0].mxu0
        %v2649 = vadd.f32 %v2424, %v2648
        %v2650 = vpop.f32.mrb[0].mxu0
        %v2651 = vpop.f32.mrb[0].mxu0
        %v2652 = vadd.f32 %v2427, %v2651
        %v2653 = vpop.f32.mrb[0].mxu0
        %2654 = vdwg.mxu0
        %2655 = vmatprep.subr.bf16.mxu0 0
        %2656 = vmatpush1.bf16.msra.mxu0 %v2111
        %2657 = vmatprep.subr.bf16.mxu0 0
        %2658 = vmatpush1.bf16.msra.mxu0 %v2112
        %2659 = vmatprep.subr.bf16.mxu0 0
        %2660 = vmatpush1.bf16.msra.mxu0 %v2113
        %2661 = vmatprep.subr.bf16.mxu0 0
        %2662 = vmatpush1.bf16.msra.mxu0 %v2114
        %2663 = vmatprep.subr.bf16.mxu0 0
        %2664 = vmatpush1.bf16.msra.mxu0 0
        %2665 = vmatprep.subr.bf16.mxu0 0
        %2666 = vmatpush1.bf16.msra.mxu0 0
        %2667 = vmatprep.subr.bf16.mxu0 0
        %2668 = vmatpush1.bf16.msra.mxu0 0
        %2669 = vmatprep.subr.bf16.mxu0 0
        %2670 = vmatpush1.bf16.msra.mxu0 0
        %2671 = vmatprep.subr.bf16.mxu0 0
        %2672 = vmatpush1.bf16.msra.mxu0 0
        %2673 = vmatprep.subr.bf16.mxu0 0
        %2674 = vmatpush1.bf16.msra.mxu0 0
        %2675 = vmatprep.subr.bf16.mxu0 0
        %2676 = vmatpush1.bf16.msra.mxu0 0
        %2677 = vmatprep.subr.bf16.mxu0 0
        %2678 = vmatpush1.bf16.msra.mxu0 0
        %2679 = vmatprep.subr.bf16.mxu0 0
        %2680 = vmatpush1.bf16.msra.mxu0 0
        %2681 = vmatprep.subr.bf16.mxu0 0
        %2682 = vmatpush1.bf16.msra.mxu0 0
        %2683 = vmatprep.subr.bf16.mxu0 0
        %2684 = vmatpush1.bf16.msra.mxu0 0
        %2685 = vmatprep.subr.bf16.mxu0 0
        %2686 = vmatpush1.bf16.msra.mxu0 0
        %2687 = vmatprep.mubr.bf16.mxu0 0
        %2688 = vmatmul.mubr.bf16.gmra.mrb[0].mxu0 %v2151
        %v2689 = vpop.f32.mrb[0].mxu0
        %v2690 = vadd.f32 %v2465, %v2689
        %v2691 = vpop.f32.mrb[0].mxu0
        %v2692 = vpop.f32.mrb[0].mxu0
        %v2693 = vadd.f32 %v2468, %v2692
        %v2694 = vpop.f32.mrb[0].mxu0
        %2695 = vmatprep.mubr.bf16.mxu0 0
        %2696 = vmatmul.mubr.bf16.gmra.mrb[0].mxu0 %v2153
        %v2697 = vpop.f32.mrb[0].mxu0
        %v2698 = vadd.f32 %v2473, %v2697
        %v2699 = vpop.f32.mrb[0].mxu0
        %v2700 = vpop.f32.mrb[0].mxu0
        %v2701 = vadd.f32 %v2476, %v2700
        %v2702 = vpop.f32.mrb[0].mxu0
        %2703 = vmatprep.mubr.bf16.mxu0 0
        %2704 = vmatmul.mubr.bf16.gmra.mrb[0].mxu0 %v2155
        %v2705 = vpop.f32.mrb[0].mxu0
        %v2706 = vadd.f32 %v2481, %v2705
        %v2707 = vpop.f32.mrb[0].mxu0
        %v2708 = vpop.f32.mrb[0].mxu0
        %v2709 = vadd.f32 %v2484, %v2708
        %v2710 = vpop.f32.mrb[0].mxu0
        %2711 = vmatprep.mubr.bf16.mxu0 0
        %2712 = vmatmul.mubr.bf16.gmra.mrb[0].mxu0 %v2157
        %v2713 = vpop.f32.mrb[0].mxu0
        %v2714 = vadd.f32 %v2489, %v2713
        %v2715 = vpop.f32.mrb[0].mxu0
        %v2716 = vpop.f32.mrb[0].mxu0
        %v2717 = vadd.f32 %v2492, %v2716
        %v2718 = vpop.f32.mrb[0].mxu0
        %2719 = vmatprep.mubr.bf16.mxu0 0
        %2720 = vmatmul.mubr.bf16.gmra.mrb[0].mxu0 %v2159
        %v2721 = vpop.f32.mrb[0].mxu0
        %v2722 = vadd.f32 %v2497, %v2721
        %v2723 = vpop.f32.mrb[0].mxu0
        %v2724 = vpop.f32.mrb[0].mxu0
        %v2725 = vadd.f32 %v2500, %v2724
        %v2726 = vpop.f32.mrb[0].mxu0
        %2727 = vmatprep.mubr.bf16.mxu0 0
        %2728 = vmatmul.mubr.bf16.gmra.mrb[0].mxu0 %v2161
        %v2729 = vpop.f32.mrb[0].mxu0
        %v2730 = vadd.f32 %v2505, %v2729
        %v2731 = vpop.f32.mrb[0].mxu0
        %v2732 = vpop.f32.mrb[0].mxu0
        %v2733 = vadd.f32 %v2508, %v2732
        %v2734 = vpop.f32.mrb[0].mxu0
        %2735 = vmatprep.mubr.bf16.mxu0 0
        %2736 = vmatmul.mubr.bf16.gmra.mrb[0].mxu0 %v2163
        %v2737 = vpop.f32.mrb[0].mxu0
        %v2738 = vadd.f32 %v2513, %v2737
        %v2739 = vpop.f32.mrb[0].mxu0
        %v2740 = vpop.f32.mrb[0].mxu0
        %v2741 = vadd.f32 %v2516, %v2740
        %v2742 = vpop.f32.mrb[0].mxu0
        %2743 = vmatprep.mubr.bf16.mxu0 0
        %2744 = vmatmul.mubr.bf16.gmra.mrb[0].mxu0 %v2165
        %v2745 = vpop.f32.mrb[0].mxu0
        %v2746 = vadd.f32 %v2521, %v2745
        %v2747 = vpop.f32.mrb[0].mxu0
        %v2748 = vpop.f32.mrb[0].mxu0
        %v2749 = vadd.f32 %v2524, %v2748
        %v2750 = vpop.f32.mrb[0].mxu0
        %2751 = vmatprep.mubr.bf16.mxu0 0
        %2752 = vmatmul.mubr.bf16.gmra.mrb[0].mxu0 %v2167
        %v2753 = vpop.f32.mrb[0].mxu0
        %v2754 = vadd.f32 %v2529, %v2753
        %v2755 = vpop.f32.mrb[0].mxu0
        %v2756 = vpop.f32.mrb[0].mxu0
        %v2757 = vadd.f32 %v2532, %v2756
        %v2758 = vpop.f32.mrb[0].mxu0
        %2759 = vmatprep.mubr.bf16.mxu0 0
        %2760 = vmatmul.mubr.bf16.gmra.mrb[0].mxu0 %v2169
        %v2761 = vpop.f32.mrb[0].mxu0
        %v2762 = vadd.f32 %v2537, %v2761
        %v2763 = vpop.f32.mrb[0].mxu0
        %v2764 = vpop.f32.mrb[0].mxu0
        %v2765 = vadd.f32 %v2540, %v2764
        %v2766 = vpop.f32.mrb[0].mxu0
        %2767 = vmatprep.mubr.bf16.mxu0 0
        %2768 = vmatmul.mubr.bf16.gmra.mrb[0].mxu0 %v2171
        %v2769 = vpop.f32.mrb[0].mxu0
        %v2770 = vadd.f32 %v2545, %v2769
        %v2771 = vpop.f32.mrb[0].mxu0
        %v2772 = vpop.f32.mrb[0].mxu0
        %v2773 = vadd.f32 %v2548, %v2772
        %v2774 = vpop.f32.mrb[0].mxu0
        %2775 = vmatprep.mubr.bf16.mxu0 0
        %2776 = vmatmul.mubr.bf16.gmra.mrb[0].mxu0 %v2173
        %v2777 = vpop.f32.mrb[0].mxu0
        %v2778 = vadd.f32 %v2553, %v2777
        %v2779 = vpop.f32.mrb[0].mxu0
        %v2780 = vpop.f32.mrb[0].mxu0
        %v2781 = vadd.f32 %v2556, %v2780
        %v2782 = vpop.f32.mrb[0].mxu0
        %2783 = vmatprep.mubr.bf16.mxu0 0
        %2784 = vmatmul.mubr.bf16.gmra.mrb[0].mxu0 %v2175
        %v2785 = vpop.f32.mrb[0].mxu0
        %v2786 = vadd.f32 %v2561, %v2785
        %v2787 = vpop.f32.mrb[0].mxu0
        %v2788 = vpop.f32.mrb[0].mxu0
        %v2789 = vadd.f32 %v2564, %v2788
        %v2790 = vpop.f32.mrb[0].mxu0
        %2791 = vmatprep.mubr.bf16.mxu0 0
        %2792 = vmatmul.mubr.bf16.gmra.mrb[0].mxu0 %v2177
        %v2793 = vpop.f32.mrb[0].mxu0
        %v2794 = vadd.f32 %v2569, %v2793
        %v2795 = vpop.f32.mrb[0].mxu0
        %v2796 = vpop.f32.mrb[0].mxu0
        %v2797 = vadd.f32 %v2572, %v2796
        %v2798 = vpop.f32.mrb[0].mxu0
        %2799 = vmatprep.mubr.bf16.mxu0 0
        %2800 = vmatmul.mubr.bf16.gmra.mrb[0].mxu0 %v2179
        %v2801 = vpop.f32.mrb[0].mxu0
        %v2802 = vadd.f32 %v2577, %v2801
        %v2803 = vpop.f32.mrb[0].mxu0
        %v2804 = vpop.f32.mrb[0].mxu0
        %v2805 = vadd.f32 %v2580, %v2804
        %v2806 = vpop.f32.mrb[0].mxu0
        %2807 = vmatprep.mubr.bf16.mxu0 0
        %2808 = vmatmul.mubr.bf16.gmra.mrb[0].mxu0 %v2181
        %v2809 = vpop.f32.mrb[0].mxu0
        %v2810 = vadd.f32 %v2585, %v2809
        %v2811 = vpop.f32.mrb[0].mxu0
        %v2812 = vpop.f32.mrb[0].mxu0
        %v2813 = vadd.f32 %v2588, %v2812
        %v2814 = vpop.f32.mrb[0].mxu0
        %2815 = vmatprep.mubr.bf16.mxu0 0
        %2816 = vmatmul.mubr.bf16.gmra.mrb[0].mxu0 %v2183
        %v2817 = vpop.f32.mrb[0].mxu0
        %v2818 = vadd.f32 %v2593, %v2817
        %v2819 = vpop.f32.mrb[0].mxu0
        %v2820 = vpop.f32.mrb[0].mxu0
        %v2821 = vadd.f32 %v2596, %v2820
        %v2822 = vpop.f32.mrb[0].mxu0
        %2823 = vmatprep.mubr.bf16.mxu0 0
        %2824 = vmatmul.mubr.bf16.gmra.mrb[0].mxu0 %v2185
        %v2825 = vpop.f32.mrb[0].mxu0
        %v2826 = vadd.f32 %v2601, %v2825
        %v2827 = vpop.f32.mrb[0].mxu0
        %v2828 = vpop.f32.mrb[0].mxu0
        %v2829 = vadd.f32 %v2604, %v2828
        %v2830 = vpop.f32.mrb[0].mxu0
        %2831 = vmatprep.mubr.bf16.mxu0 0
        %2832 = vmatmul.mubr.bf16.gmra.mrb[0].mxu0 %v2188
        %v2833 = vpop.f32.mrb[0].mxu0
        %v2834 = vadd.f32 %v2609, %v2833
        %v2835 = vpop.f32.mrb[0].mxu0
        %v2836 = vpop.f32.mrb[0].mxu0
        %v2837 = vadd.f32 %v2612, %v2836
        %v2838 = vpop.f32.mrb[0].mxu0
        %2839 = vmatprep.mubr.bf16.mxu0 0
        %2840 = vmatmul.mubr.bf16.gmra.mrb[0].mxu0 %v2191
        %v2841 = vpop.f32.mrb[0].mxu0
        %v2842 = vadd.f32 %v2617, %v2841
        %v2843 = vpop.f32.mrb[0].mxu0
        %v2844 = vpop.f32.mrb[0].mxu0
        %v2845 = vadd.f32 %v2620, %v2844
        %v2846 = vpop.f32.mrb[0].mxu0
        %2847 = vmatprep.mubr.bf16.mxu0 0
        %2848 = vmatmul.mubr.bf16.gmra.mrb[0].mxu0 %v2194
        %v2849 = vpop.f32.mrb[0].mxu0
        %v2850 = vadd.f32 %v2625, %v2849
        %v2851 = vpop.f32.mrb[0].mxu0
        %v2852 = vpop.f32.mrb[0].mxu0
        %v2853 = vadd.f32 %v2628, %v2852
        %v2854 = vpop.f32.mrb[0].mxu0
        %2855 = vmatprep.mubr.bf16.mxu0 0
        %2856 = vmatmul.mubr.bf16.gmra.mrb[0].mxu0 %v2197
        %v2857 = vpop.f32.mrb[0].mxu0
        %v2858 = vadd.f32 %v2633, %v2857
        %v2859 = vpop.f32.mrb[0].mxu0
        %v2860 = vpop.f32.mrb[0].mxu0
        %v2861 = vadd.f32 %v2636, %v2860
        %v2862 = vpop.f32.mrb[0].mxu0
        %2863 = vmatprep.mubr.bf16.mxu0 0
        %2864 = vmatmul.mubr.bf16.gmra.mrb[0].mxu0 %v2200
        %v2865 = vpop.f32.mrb[0].mxu0
        %v2866 = vadd.f32 %v2641, %v2865
        %v2867 = vpop.f32.mrb[0].mxu0
        %v2868 = vpop.f32.mrb[0].mxu0
        %v2869 = vadd.f32 %v2644, %v2868
        %v2870 = vpop.f32.mrb[0].mxu0
        %2871 = vmatprep.mubr.bf16.mxu0 0
        %2872 = vmatmul.mubr.bf16.gmra.mrb[0].mxu0 %v2203
        %v2873 = vpop.f32.mrb[0].mxu0
        %v2874 = vadd.f32 %v2649, %v2873
        %v2875 = vpop.f32.mrb[0].mxu0
        %v2876 = vpop.f32.mrb[0].mxu0
        %v2877 = vadd.f32 %v2652, %v2876
        %v2878 = vpop.f32.mrb[0].mxu0
        %2879 = vdwg.mxu0
        %v2880 = vmax.f32 %v2690, 0.0
        %v2881 = vmax.f32 %v2693, 0.0
        %v2882 = vmax.f32 %v2698, 0.0
        %v2883 = vmax.f32 %v2701, 0.0
        %v2884 = vmax.f32 %v2706, 0.0
        %v2885 = vmax.f32 %v2709, 0.0
        %v2886 = vmax.f32 %v2714, 0.0
        %v2887 = vmax.f32 %v2717, 0.0
        %v2888 = vmax.f32 %v2722, 0.0
        %v2889 = vmax.f32 %v2725, 0.0
        %v2890 = vmax.f32 %v2730, 0.0
        %v2891 = vmax.f32 %v2733, 0.0
        %v2892 = vmax.f32 %v2738, 0.0
        %v2893 = vmax.f32 %v2741, 0.0
        %v2894 = vmax.f32 %v2746, 0.0
        %v2895 = vmax.f32 %v2749, 0.0
        %v2896 = vmax.f32 %v2754, 0.0
        %v2897 = vmax.f32 %v2757, 0.0
        %v2898 = vmax.f32 %v2762, 0.0
        %v2899 = vmax.f32 %v2765, 0.0
        %v2900 = vmax.f32 %v2770, 0.0
        %v2901 = vmax.f32 %v2773, 0.0
        %v2902 = vmax.f32 %v2778, 0.0
        %v2903 = vmax.f32 %v2781, 0.0
        %v2904 = vmax.f32 %v2786, 0.0
        %v2905 = vmax.f32 %v2789, 0.0
        %v2906 = vmax.f32 %v2794, 0.0
        %v2907 = vmax.f32 %v2797, 0.0
        %v2908 = vmax.f32 %v2802, 0.0
        %v2909 = vmax.f32 %v2805, 0.0
        %v2910 = vmax.f32 %v2810, 0.0
        %v2911 = vmax.f32 %v2813, 0.0
        %v2912 = vmax.f32 %v2818, 0.0
        %v2913 = vmax.f32 %v2821, 0.0
        %v2914 = vmax.f32 %v2826, 0.0
        %v2915 = vmax.f32 %v2829, 0.0
        %v2916 = vmax.f32 %v2834, 0.0
        %v2917 = vmax.f32 %v2837, 0.0
        %v2918 = vmax.f32 %v2842, 0.0
        %v2919 = vmax.f32 %v2845, 0.0
        %v2920 = vmax.f32 %v2850, 0.0
        %v2921 = vmax.f32 %v2853, 0.0
        %v2922 = vmax.f32 %v2858, 0.0
        %v2923 = vmax.f32 %v2861, 0.0
        %v2924 = vmax.f32 %v2866, 0.0
        %v2925 = vmax.f32 %v2869, 0.0
        %v2926 = vmax.f32 %v2874, 0.0
        %v2927 = vmax.f32 %v2877, 0.0
        %2976 = vrot.lane.b32.xlu0 %v691, 64
        %v2977 = vpop.permute.xlu0 %2976
        %2978 = vrot.lane.b32.xlu0 %v694, 64
        %v2979 = vpop.permute.xlu0 %2978
        %2980 = vrot.lane.b32.xlu0 %v699, 64
        %v2981 = vpop.permute.xlu0 %2980
        %2982 = vrot.lane.b32.xlu0 %v702, 64
        %v2983 = vpop.permute.xlu0 %2982
        %2984 = vrot.lane.b32.xlu0 %v707, 64
        %v2985 = vpop.permute.xlu0 %2984
        %2986 = vrot.lane.b32.xlu0 %v710, 64
        %v2987 = vpop.permute.xlu0 %2986
        %2988 = vrot.lane.b32.xlu0 %v715, 64
        %v2989 = vpop.permute.xlu0 %2988
        %2990 = vrot.lane.b32.xlu0 %v718, 64
        %v2991 = vpop.permute.xlu0 %2990
        %2992 = vrot.lane.b32.xlu0 %v723, 64
        %v2993 = vpop.permute.xlu0 %2992
        %2994 = vrot.lane.b32.xlu0 %v726, 64
        %v2995 = vpop.permute.xlu0 %2994
        %2996 = vrot.lane.b32.xlu0 %v731, 64
        %v2997 = vpop.permute.xlu0 %2996
        %2998 = vrot.lane.b32.xlu0 %v734, 64
        %v2999 = vpop.permute.xlu0 %2998
        %3000 = vrot.lane.b32.xlu0 %v739, 64
        %v3001 = vpop.permute.xlu0 %3000
        %3002 = vrot.lane.b32.xlu0 %v742, 64
        %v3003 = vpop.permute.xlu0 %3002
        %3004 = vrot.lane.b32.xlu0 %v747, 64
        %v3005 = vpop.permute.xlu0 %3004
        %3006 = vrot.lane.b32.xlu0 %v750, 64
        %v3007 = vpop.permute.xlu0 %3006
        %3008 = vrot.lane.b32.xlu0 %v755, 64
        %v3009 = vpop.permute.xlu0 %3008
        %3010 = vrot.lane.b32.xlu0 %v758, 64
        %v3011 = vpop.permute.xlu0 %3010
        %3012 = vrot.lane.b32.xlu0 %v763, 64
        %v3013 = vpop.permute.xlu0 %3012
        %3014 = vrot.lane.b32.xlu0 %v766, 64
        %v3015 = vpop.permute.xlu0 %3014
        %3016 = vrot.lane.b32.xlu0 %v771, 64
        %v3017 = vpop.permute.xlu0 %3016
        %3018 = vrot.lane.b32.xlu0 %v774, 64
        %v3019 = vpop.permute.xlu0 %3018
        %3020 = vrot.lane.b32.xlu0 %v779, 64
        %v3021 = vpop.permute.xlu0 %3020
        %3022 = vrot.lane.b32.xlu0 %v782, 64
        %v3023 = vpop.permute.xlu0 %3022
        %3024 = vrot.lane.b32.xlu0 %v787, 64
        %v3025 = vpop.permute.xlu0 %3024
        %3026 = vrot.lane.b32.xlu0 %v790, 64
        %v3027 = vpop.permute.xlu0 %3026
        %3028 = vrot.lane.b32.xlu0 %v795, 64
        %v3029 = vpop.permute.xlu0 %3028
        %3030 = vrot.lane.b32.xlu0 %v798, 64
        %v3031 = vpop.permute.xlu0 %3030
        %3032 = vrot.lane.b32.xlu0 %v803, 64
        %v3033 = vpop.permute.xlu0 %3032
        %3034 = vrot.lane.b32.xlu0 %v806, 64
        %v3035 = vpop.permute.xlu0 %3034
        %3036 = vrot.lane.b32.xlu0 %v811, 64
        %v3037 = vpop.permute.xlu0 %3036
        %3038 = vrot.lane.b32.xlu0 %v814, 64
        %v3039 = vpop.permute.xlu0 %3038
        %3040 = vrot.lane.b32.xlu0 %v819, 64
        %v3041 = vpop.permute.xlu0 %3040
        %3042 = vrot.lane.b32.xlu0 %v822, 64
        %v3043 = vpop.permute.xlu0 %3042
        %3044 = vrot.lane.b32.xlu0 %v827, 64
        %v3045 = vpop.permute.xlu0 %3044
        %3046 = vrot.lane.b32.xlu0 %v830, 64
        %v3047 = vpop.permute.xlu0 %3046
        %3048 = vrot.lane.b32.xlu0 %v835, 64
        %v3049 = vpop.permute.xlu0 %3048
        %3050 = vrot.lane.b32.xlu0 %v838, 64
        %v3051 = vpop.permute.xlu0 %3050
        %3052 = vrot.lane.b32.xlu0 %v843, 64
        %v3053 = vpop.permute.xlu0 %3052
        %3054 = vrot.lane.b32.xlu0 %v846, 64
        %v3055 = vpop.permute.xlu0 %3054
        %3056 = vrot.lane.b32.xlu0 %v851, 64
        %v3057 = vpop.permute.xlu0 %3056
        %3058 = vrot.lane.b32.xlu0 %v854, 64
        %v3059 = vpop.permute.xlu0 %3058
        %3060 = vrot.lane.b32.xlu0 %v859, 64
        %v3061 = vpop.permute.xlu0 %3060
        %3062 = vrot.lane.b32.xlu0 %v862, 64
        %v3063 = vpop.permute.xlu0 %3062
        %3064 = vrot.lane.b32.xlu0 %v867, 64
        %v3065 = vpop.permute.xlu0 %3064
        %3066 = vrot.lane.b32.xlu0 %v870, 64
        %v3067 = vpop.permute.xlu0 %3066
        %3068 = vrot.lane.b32.xlu0 %v875, 64
        %v3069 = vpop.permute.xlu0 %3068
        %3070 = vrot.lane.b32.xlu0 %v878, 64
        %v3071 = vpop.permute.xlu0 %3070
        %v3120 = vadd.f32 %v2880, %v2977
        %v3121 = vadd.f32 %v2881, %v2979
        %v3122 = vadd.f32 %v2882, %v2981
        %v3123 = vadd.f32 %v2883, %v2983
        %v3124 = vadd.f32 %v2884, %v2985
        %v3125 = vadd.f32 %v2885, %v2987
        %v3126 = vadd.f32 %v2886, %v2989
        %v3127 = vadd.f32 %v2887, %v2991
        %v3128 = vadd.f32 %v2888, %v2993
        %v3129 = vadd.f32 %v2889, %v2995
        %v3130 = vadd.f32 %v2890, %v2997
        %v3131 = vadd.f32 %v2891, %v2999
        %v3132 = vadd.f32 %v2892, %v3001
        %v3133 = vadd.f32 %v2893, %v3003
        %v3134 = vadd.f32 %v2894, %v3005
        %v3135 = vadd.f32 %v2895, %v3007
        %v3136 = vadd.f32 %v2896, %v3009
        %v3137 = vadd.f32 %v2897, %v3011
        %v3138 = vadd.f32 %v2898, %v3013
        %v3139 = vadd.f32 %v2899, %v3015
        %v3140 = vadd.f32 %v2900, %v3017
        %v3141 = vadd.f32 %v2901, %v3019
        %v3142 = vadd.f32 %v2902, %v3021
        %v3143 = vadd.f32 %v2903, %v3023
        %v3144 = vadd.f32 %v2904, %v3025
        %v3145 = vadd.f32 %v2905, %v3027
        %v3146 = vadd.f32 %v2906, %v3029
        %v3147 = vadd.f32 %v2907, %v3031
        %v3148 = vadd.f32 %v2908, %v3033
        %v3149 = vadd.f32 %v2909, %v3035
        %v3150 = vadd.f32 %v2910, %v3037
        %v3151 = vadd.f32 %v2911, %v3039
        %v3152 = vadd.f32 %v2912, %v3041
        %v3153 = vadd.f32 %v2913, %v3043
        %v3154 = vadd.f32 %v2914, %v3045
        %v3155 = vadd.f32 %v2915, %v3047
        %v3156 = vadd.f32 %v2916, %v3049
        %v3157 = vadd.f32 %v2917, %v3051
        %v3158 = vadd.f32 %v2918, %v3053
        %v3159 = vadd.f32 %v2919, %v3055
        %v3160 = vadd.f32 %v2920, %v3057
        %v3161 = vadd.f32 %v2921, %v3059
        %v3162 = vadd.f32 %v2922, %v3061
        %v3163 = vadd.f32 %v2923, %v3063
        %v3164 = vadd.f32 %v2924, %v3065
        %v3165 = vadd.f32 %v2925, %v3067
        %v3166 = vadd.f32 %v2926, %v3069
        %v3167 = vadd.f32 %v2927, %v3071
        %v3168 = vpack.c.bf16 %v3121, %v3120
        %v3169 = vpack.c.bf16 %v3123, %v3122
        %v3170 = vpack.c.bf16 %v3125, %v3124
        %v3171 = vpack.c.bf16 %v3127, %v3126
        %v3172 = vpack.c.bf16 %v3129, %v3128
        %v3173 = vpack.c.bf16 %v3131, %v3130
        %v3174 = vpack.c.bf16 %v3133, %v3132
        %v3175 = vpack.c.bf16 %v3135, %v3134
        %v3176 = vpack.c.bf16 %v3137, %v3136
        %v3177 = vpack.c.bf16 %v3139, %v3138
        %v3178 = vpack.c.bf16 %v3141, %v3140
        %v3179 = vpack.c.bf16 %v3143, %v3142
        %v3180 = vpack.c.bf16 %v3145, %v3144
        %v3181 = vpack.c.bf16 %v3147, %v3146
        %v3182 = vpack.c.bf16 %v3149, %v3148
        %v3183 = vpack.c.bf16 %v3151, %v3150
        %v3184 = vpack.c.bf16 %v3153, %v3152
        %v3185 = vpack.c.bf16 %v3155, %v3154
        %v3186 = vpack.c.bf16 %v3157, %v3156
        %v3187 = vpack.c.bf16 %v3159, %v3158
        %v3188 = vpack.c.bf16 %v3161, %v3160
        %v3189 = vpack.c.bf16 %v3163, %v3162
        %v3190 = vpack.c.bf16 %v3165, %v3164
        %v3191 = vpack.c.bf16 %v3167, %v3166
        %v3192 = vld [vmem:[%s8] sm:$0xff]
        %v3193 = vld [vmem:[%s8 + $0x8] sm:$0xff]
        %v3194 = vld [vmem:[%s8 + $0x10] sm:$0xff]
        %v3195 = vld [vmem:[%s8 + $0x18] sm:$0xff]
        %v3196 = vld [vmem:[%s8 + $0x20] sm:$0xff]
        %v3197 = vld [vmem:[%s8 + $0x28] sm:$0xff]
        %v3198 = vld [vmem:[%s8 + $0x30] sm:$0xff]
        %v3199 = vld [vmem:[%s8 + $0x38] sm:$0xff]
        %v3200 = vld [vmem:[%s9] sm:$0x3]
        %v3202 = vlaneseq
        %v3203 = vshrl.u32 %v3202, 7
        %v3204 = vsub.s32 0, %v3203
        %v3205 = vrot.slane %v3200, %v3204
        %v3206 = vlaneseq
        %v3207 = vshrl.u32 %v3206, 7
        %v3208 = vsub.s32 1, %v3207
        %v3209 = vrot.slane %v3200, %v3208
        %v3220 = vunpack.c.l.b16 %v3192
        %v3221 = vunpack.c.h.b16 %v3192
        %v3222 = vunpack.c.l.b16 %v3193
        %v3223 = vunpack.c.h.b16 %v3193
        %v3224 = vunpack.c.l.b16 %v3194
        %v3225 = vunpack.c.h.b16 %v3194
        %v3226 = vunpack.c.l.b16 %v3195
        %v3227 = vunpack.c.h.b16 %v3195
        %v3228 = vunpack.c.l.b16 %v3196
        %v3229 = vunpack.c.h.b16 %v3196
        %v3230 = vunpack.c.l.b16 %v3197
        %v3231 = vunpack.c.h.b16 %v3197
        %v3232 = vunpack.c.l.b16 %v3198
        %v3233 = vunpack.c.h.b16 %v3198
        %v3234 = vunpack.c.l.b16 %v3199
        %v3235 = vunpack.c.h.b16 %v3199
        %v3236 = vpack.c.b16 %v3222, %v3220
        %v3237 = vpack.c.b16 %v3223, %v3221
        %v3238 = vpack.c.b16 %v3226, %v3224
        %v3239 = vpack.c.b16 %v3227, %v3225
        %v3240 = vpack.c.b16 %v3230, %v3228
        %v3241 = vpack.c.b16 %v3231, %v3229
        %v3242 = vpack.c.b16 %v3234, %v3232
        %v3243 = vpack.c.b16 %v3235, %v3233
        %v3253 = vsel %vm905, %v3168, 0
        %v3256 = vsel %vm905, %v3169, 0
        %v3259 = vsel %vm905, %v3170, 0
        %v3262 = vsel %vm905, %v3171, 0
        %v3265 = vsel %vm905, %v3172, 0
        %v3268 = vsel %vm905, %v3173, 0
        %v3271 = vsel %vm905, %v3174, 0
        %v3274 = vsel %vm905, %v3175, 0
        %v3277 = vsel %vm905, %v3176, 0
        %v3280 = vsel %vm905, %v3177, 0
        %v3283 = vsel %vm905, %v3178, 0
        %v3286 = vsel %vm905, %v3179, 0
        %v3289 = vsel %vm905, %v3180, 0
        %v3292 = vsel %vm905, %v3181, 0
        %v3295 = vsel %vm905, %v3182, 0
        %v3298 = vsel %vm905, %v3183, 0
        %v3301 = vsel %vm905, %v3184, 0
        %v3304 = vsel %vm905, %v3185, 0
        %v3307 = vsel %vm905, %v3186, 0
        %v3310 = vsel %vm905, %v3187, 0
        %v3313 = vsel %vm905, %v3188, 0
        %v3316 = vsel %vm905, %v3189, 0
        %v3319 = vsel %vm905, %v3190, 0
        %v3322 = vsel %vm905, %v3191, 0
        %3324 = vmatprep.subr.bf16.mxu0 %v3237
        %3325 = vmatpush1.bf16.msra.mxu0 %v3236
        %3326 = vmatprep.subr.bf16.mxu0 %v3239
        %3327 = vmatpush1.bf16.msra.mxu0 %v3238
        %3328 = vmatprep.subr.bf16.mxu0 %v3241
        %3329 = vmatpush1.bf16.msra.mxu0 %v3240
        %3330 = vmatprep.subr.bf16.mxu0 %v3243
        %3331 = vmatpush1.bf16.msra.mxu0 %v3242
        %3332 = vmatprep.subr.bf16.mxu0 0
        %3333 = vmatpush1.bf16.msra.mxu0 0
        %3334 = vmatprep.subr.bf16.mxu0 0
        %3335 = vmatpush1.bf16.msra.mxu0 0
        %3336 = vmatprep.subr.bf16.mxu0 0
        %3337 = vmatpush1.bf16.msra.mxu0 0
        %3338 = vmatprep.subr.bf16.mxu0 0
        %3339 = vmatpush1.bf16.msra.mxu0 0
        %3340 = vmatprep.subr.bf16.mxu0 0
        %3341 = vmatpush1.bf16.msra.mxu0 0
        %3342 = vmatprep.subr.bf16.mxu0 0
        %3343 = vmatpush1.bf16.msra.mxu0 0
        %3344 = vmatprep.subr.bf16.mxu0 0
        %3345 = vmatpush1.bf16.msra.mxu0 0
        %3346 = vmatprep.subr.bf16.mxu0 0
        %3347 = vmatpush1.bf16.msra.mxu0 0
        %3348 = vmatprep.subr.bf16.mxu0 0
        %3349 = vmatpush1.bf16.msra.mxu0 0
        %3350 = vmatprep.subr.bf16.mxu0 0
        %3351 = vmatpush1.bf16.msra.mxu0 0
        %3352 = vmatprep.subr.bf16.mxu0 0
        %3353 = vmatpush1.bf16.msra.mxu0 0
        %3354 = vmatprep.subr.bf16.mxu0 0
        %3355 = vmatpush1.bf16.msra.mxu0 0
        %3356 = vmatprep.mubr.bf16.mxu0 0
        %3357 = vmatmul.mubr.bf16.gmra.mrb[0].mxu0 %v3253
        %v3358 = vpop.f32.mrb[0].mxu0
        %v3359 = vadd.f32 %v3205, %v3358
        %v3360 = vpop.f32.mrb[0].mxu0
        %v3361 = vadd.f32 %v3209, %v3360
        %v3362 = vpop.f32.mrb[0].mxu0
        %v3363 = vadd.f32 %v3205, %v3362
        %v3364 = vpop.f32.mrb[0].mxu0
        %v3365 = vadd.f32 %v3209, %v3364
        %3366 = vmatprep.mubr.bf16.mxu0 0
        %3367 = vmatmul.mubr.bf16.gmra.mrb[0].mxu0 %v3256
        %v3368 = vpop.f32.mrb[0].mxu0
        %v3369 = vadd.f32 %v3205, %v3368
        %v3370 = vpop.f32.mrb[0].mxu0
        %v3371 = vadd.f32 %v3209, %v3370
        %v3372 = vpop.f32.mrb[0].mxu0
        %v3373 = vadd.f32 %v3205, %v3372
        %v3374 = vpop.f32.mrb[0].mxu0
        %v3375 = vadd.f32 %v3209, %v3374
        %3376 = vmatprep.mubr.bf16.mxu0 0
        %3377 = vmatmul.mubr.bf16.gmra.mrb[0].mxu0 %v3259
        %v3378 = vpop.f32.mrb[0].mxu0
        %v3379 = vadd.f32 %v3205, %v3378
        %v3380 = vpop.f32.mrb[0].mxu0
        %v3381 = vadd.f32 %v3209, %v3380
        %v3382 = vpop.f32.mrb[0].mxu0
        %v3383 = vadd.f32 %v3205, %v3382
        %v3384 = vpop.f32.mrb[0].mxu0
        %v3385 = vadd.f32 %v3209, %v3384
        %3386 = vmatprep.mubr.bf16.mxu0 0
        %3387 = vmatmul.mubr.bf16.gmra.mrb[0].mxu0 %v3262
        %v3388 = vpop.f32.mrb[0].mxu0
        %v3389 = vadd.f32 %v3205, %v3388
        %v3390 = vpop.f32.mrb[0].mxu0
        %v3391 = vadd.f32 %v3209, %v3390
        %v3392 = vpop.f32.mrb[0].mxu0
        %v3393 = vadd.f32 %v3205, %v3392
        %v3394 = vpop.f32.mrb[0].mxu0
        %v3395 = vadd.f32 %v3209, %v3394
        %3396 = vmatprep.mubr.bf16.mxu0 0
        %3397 = vmatmul.mubr.bf16.gmra.mrb[0].mxu0 %v3265
        %v3398 = vpop.f32.mrb[0].mxu0
        %v3399 = vadd.f32 %v3205, %v3398
        %v3400 = vpop.f32.mrb[0].mxu0
        %v3401 = vadd.f32 %v3209, %v3400
        %v3402 = vpop.f32.mrb[0].mxu0
        %v3403 = vadd.f32 %v3205, %v3402
        %v3404 = vpop.f32.mrb[0].mxu0
        %v3405 = vadd.f32 %v3209, %v3404
        %3406 = vmatprep.mubr.bf16.mxu0 0
        %3407 = vmatmul.mubr.bf16.gmra.mrb[0].mxu0 %v3268
        %v3408 = vpop.f32.mrb[0].mxu0
        %v3409 = vadd.f32 %v3205, %v3408
        %v3410 = vpop.f32.mrb[0].mxu0
        %v3411 = vadd.f32 %v3209, %v3410
        %v3412 = vpop.f32.mrb[0].mxu0
        %v3413 = vadd.f32 %v3205, %v3412
        %v3414 = vpop.f32.mrb[0].mxu0
        %v3415 = vadd.f32 %v3209, %v3414
        %3416 = vmatprep.mubr.bf16.mxu0 0
        %3417 = vmatmul.mubr.bf16.gmra.mrb[0].mxu0 %v3271
        %v3418 = vpop.f32.mrb[0].mxu0
        %v3419 = vadd.f32 %v3205, %v3418
        %v3420 = vpop.f32.mrb[0].mxu0
        %v3421 = vadd.f32 %v3209, %v3420
        %v3422 = vpop.f32.mrb[0].mxu0
        %v3423 = vadd.f32 %v3205, %v3422
        %v3424 = vpop.f32.mrb[0].mxu0
        %v3425 = vadd.f32 %v3209, %v3424
        %3426 = vmatprep.mubr.bf16.mxu0 0
        %3427 = vmatmul.mubr.bf16.gmra.mrb[0].mxu0 %v3274
        %v3428 = vpop.f32.mrb[0].mxu0
        %v3429 = vadd.f32 %v3205, %v3428
        %v3430 = vpop.f32.mrb[0].mxu0
        %v3431 = vadd.f32 %v3209, %v3430
        %v3432 = vpop.f32.mrb[0].mxu0
        %v3433 = vadd.f32 %v3205, %v3432
        %v3434 = vpop.f32.mrb[0].mxu0
        %v3435 = vadd.f32 %v3209, %v3434
        %3436 = vmatprep.mubr.bf16.mxu0 0
        %3437 = vmatmul.mubr.bf16.gmra.mrb[0].mxu0 %v3277
        %v3438 = vpop.f32.mrb[0].mxu0
        %v3439 = vadd.f32 %v3205, %v3438
        %v3440 = vpop.f32.mrb[0].mxu0
        %v3441 = vadd.f32 %v3209, %v3440
        %v3442 = vpop.f32.mrb[0].mxu0
        %v3443 = vadd.f32 %v3205, %v3442
        %v3444 = vpop.f32.mrb[0].mxu0
        %v3445 = vadd.f32 %v3209, %v3444
        %3446 = vmatprep.mubr.bf16.mxu0 0
        %3447 = vmatmul.mubr.bf16.gmra.mrb[0].mxu0 %v3280
        %v3448 = vpop.f32.mrb[0].mxu0
        %v3449 = vadd.f32 %v3205, %v3448
        %v3450 = vpop.f32.mrb[0].mxu0
        %v3451 = vadd.f32 %v3209, %v3450
        %v3452 = vpop.f32.mrb[0].mxu0
        %v3453 = vadd.f32 %v3205, %v3452
        %v3454 = vpop.f32.mrb[0].mxu0
        %v3455 = vadd.f32 %v3209, %v3454
        %3456 = vmatprep.mubr.bf16.mxu0 0
        %3457 = vmatmul.mubr.bf16.gmra.mrb[0].mxu0 %v3283
        %v3458 = vpop.f32.mrb[0].mxu0
        %v3459 = vadd.f32 %v3205, %v3458
        %v3460 = vpop.f32.mrb[0].mxu0
        %v3461 = vadd.f32 %v3209, %v3460
        %v3462 = vpop.f32.mrb[0].mxu0
        %v3463 = vadd.f32 %v3205, %v3462
        %v3464 = vpop.f32.mrb[0].mxu0
        %v3465 = vadd.f32 %v3209, %v3464
        %3466 = vmatprep.mubr.bf16.mxu0 0
        %3467 = vmatmul.mubr.bf16.gmra.mrb[0].mxu0 %v3286
        %v3468 = vpop.f32.mrb[0].mxu0
        %v3469 = vadd.f32 %v3205, %v3468
        %v3470 = vpop.f32.mrb[0].mxu0
        %v3471 = vadd.f32 %v3209, %v3470
        %v3472 = vpop.f32.mrb[0].mxu0
        %v3473 = vadd.f32 %v3205, %v3472
        %v3474 = vpop.f32.mrb[0].mxu0
        %v3475 = vadd.f32 %v3209, %v3474
        %3476 = vmatprep.mubr.bf16.mxu0 0
        %3477 = vmatmul.mubr.bf16.gmra.mrb[0].mxu0 %v3289
        %v3478 = vpop.f32.mrb[0].mxu0
        %v3479 = vadd.f32 %v3205, %v3478
        %v3480 = vpop.f32.mrb[0].mxu0
        %v3481 = vadd.f32 %v3209, %v3480
        %v3482 = vpop.f32.mrb[0].mxu0
        %v3483 = vadd.f32 %v3205, %v3482
        %v3484 = vpop.f32.mrb[0].mxu0
        %v3485 = vadd.f32 %v3209, %v3484
        %3486 = vmatprep.mubr.bf16.mxu0 0
        %3487 = vmatmul.mubr.bf16.gmra.mrb[0].mxu0 %v3292
        %v3488 = vpop.f32.mrb[0].mxu0
        %v3489 = vadd.f32 %v3205, %v3488
        %v3490 = vpop.f32.mrb[0].mxu0
        %v3491 = vadd.f32 %v3209, %v3490
        %v3492 = vpop.f32.mrb[0].mxu0
        %v3493 = vadd.f32 %v3205, %v3492
        %v3494 = vpop.f32.mrb[0].mxu0
        %v3495 = vadd.f32 %v3209, %v3494
        %3496 = vmatprep.mubr.bf16.mxu0 0
        %3497 = vmatmul.mubr.bf16.gmra.mrb[0].mxu0 %v3295
        %v3498 = vpop.f32.mrb[0].mxu0
        %v3499 = vadd.f32 %v3205, %v3498
        %v3500 = vpop.f32.mrb[0].mxu0
        %v3501 = vadd.f32 %v3209, %v3500
        %v3502 = vpop.f32.mrb[0].mxu0
        %v3503 = vadd.f32 %v3205, %v3502
        %v3504 = vpop.f32.mrb[0].mxu0
        %v3505 = vadd.f32 %v3209, %v3504
        %3506 = vmatprep.mubr.bf16.mxu0 0
        %3507 = vmatmul.mubr.bf16.gmra.mrb[0].mxu0 %v3298
        %v3508 = vpop.f32.mrb[0].mxu0
        %v3509 = vadd.f32 %v3205, %v3508
        %v3510 = vpop.f32.mrb[0].mxu0
        %v3511 = vadd.f32 %v3209, %v3510
        %v3512 = vpop.f32.mrb[0].mxu0
        %v3513 = vadd.f32 %v3205, %v3512
        %v3514 = vpop.f32.mrb[0].mxu0
        %v3515 = vadd.f32 %v3209, %v3514
        %3516 = vmatprep.mubr.bf16.mxu0 0
        %3517 = vmatmul.mubr.bf16.gmra.mrb[0].mxu0 %v3301
        %v3518 = vpop.f32.mrb[0].mxu0
        %v3519 = vadd.f32 %v3205, %v3518
        %v3520 = vpop.f32.mrb[0].mxu0
        %v3521 = vadd.f32 %v3209, %v3520
        %v3522 = vpop.f32.mrb[0].mxu0
        %v3523 = vadd.f32 %v3205, %v3522
        %v3524 = vpop.f32.mrb[0].mxu0
        %v3525 = vadd.f32 %v3209, %v3524
        %3526 = vmatprep.mubr.bf16.mxu0 0
        %3527 = vmatmul.mubr.bf16.gmra.mrb[0].mxu0 %v3304
        %v3528 = vpop.f32.mrb[0].mxu0
        %v3529 = vadd.f32 %v3205, %v3528
        %v3530 = vpop.f32.mrb[0].mxu0
        %v3531 = vadd.f32 %v3209, %v3530
        %v3532 = vpop.f32.mrb[0].mxu0
        %v3533 = vadd.f32 %v3205, %v3532
        %v3534 = vpop.f32.mrb[0].mxu0
        %v3535 = vadd.f32 %v3209, %v3534
        %3536 = vmatprep.mubr.bf16.mxu0 0
        %3537 = vmatmul.mubr.bf16.gmra.mrb[0].mxu0 %v3307
        %v3538 = vpop.f32.mrb[0].mxu0
        %v3539 = vadd.f32 %v3205, %v3538
        %v3540 = vpop.f32.mrb[0].mxu0
        %v3541 = vadd.f32 %v3209, %v3540
        %v3542 = vpop.f32.mrb[0].mxu0
        %v3543 = vadd.f32 %v3205, %v3542
        %v3544 = vpop.f32.mrb[0].mxu0
        %v3545 = vadd.f32 %v3209, %v3544
        %3546 = vmatprep.mubr.bf16.mxu0 0
        %3547 = vmatmul.mubr.bf16.gmra.mrb[0].mxu0 %v3310
        %v3548 = vpop.f32.mrb[0].mxu0
        %v3549 = vadd.f32 %v3205, %v3548
        %v3550 = vpop.f32.mrb[0].mxu0
        %v3551 = vadd.f32 %v3209, %v3550
        %v3552 = vpop.f32.mrb[0].mxu0
        %v3553 = vadd.f32 %v3205, %v3552
        %v3554 = vpop.f32.mrb[0].mxu0
        %v3555 = vadd.f32 %v3209, %v3554
        %3556 = vmatprep.mubr.bf16.mxu0 0
        %3557 = vmatmul.mubr.bf16.gmra.mrb[0].mxu0 %v3313
        %v3558 = vpop.f32.mrb[0].mxu0
        %v3559 = vadd.f32 %v3205, %v3558
        %v3560 = vpop.f32.mrb[0].mxu0
        %v3561 = vadd.f32 %v3209, %v3560
        %v3562 = vpop.f32.mrb[0].mxu0
        %v3563 = vadd.f32 %v3205, %v3562
        %v3564 = vpop.f32.mrb[0].mxu0
        %v3565 = vadd.f32 %v3209, %v3564
        %3566 = vmatprep.mubr.bf16.mxu0 0
        %3567 = vmatmul.mubr.bf16.gmra.mrb[0].mxu0 %v3316
        %v3568 = vpop.f32.mrb[0].mxu0
        %v3569 = vadd.f32 %v3205, %v3568
        %v3570 = vpop.f32.mrb[0].mxu0
        %v3571 = vadd.f32 %v3209, %v3570
        %v3572 = vpop.f32.mrb[0].mxu0
        %v3573 = vadd.f32 %v3205, %v3572
        %v3574 = vpop.f32.mrb[0].mxu0
        %v3575 = vadd.f32 %v3209, %v3574
        %3576 = vmatprep.mubr.bf16.mxu0 0
        %3577 = vmatmul.mubr.bf16.gmra.mrb[0].mxu0 %v3319
        %v3578 = vpop.f32.mrb[0].mxu0
        %v3579 = vadd.f32 %v3205, %v3578
        %v3580 = vpop.f32.mrb[0].mxu0
        %v3581 = vadd.f32 %v3209, %v3580
        %v3582 = vpop.f32.mrb[0].mxu0
        %v3583 = vadd.f32 %v3205, %v3582
        %v3584 = vpop.f32.mrb[0].mxu0
        %v3585 = vadd.f32 %v3209, %v3584
        %3586 = vmatprep.mubr.bf16.mxu0 0
        %3587 = vmatmul.mubr.bf16.gmra.mrb[0].mxu0 %v3322
        %v3588 = vpop.f32.mrb[0].mxu0
        %v3589 = vadd.f32 %v3205, %v3588
        %v3590 = vpop.f32.mrb[0].mxu0
        %v3591 = vadd.f32 %v3209, %v3590
        %v3592 = vpop.f32.mrb[0].mxu0
        %v3593 = vadd.f32 %v3205, %v3592
        %v3594 = vpop.f32.mrb[0].mxu0
        %v3595 = vadd.f32 %v3209, %v3594
        %3596 = vdwg.mxu0
        %v3597 = vpack.c.bf16 %v3363, %v3359
        %v3598 = vpack.c.bf16 %v3373, %v3369
        %v3599 = vpack.c.bf16 %v3383, %v3379
        %v3600 = vpack.c.bf16 %v3393, %v3389
        %v3601 = vpack.c.bf16 %v3403, %v3399
        %v3602 = vpack.c.bf16 %v3413, %v3409
        %v3603 = vpack.c.bf16 %v3423, %v3419
        %v3604 = vpack.c.bf16 %v3433, %v3429
        %v3605 = vpack.c.bf16 %v3443, %v3439
        %v3606 = vpack.c.bf16 %v3453, %v3449
        %v3607 = vpack.c.bf16 %v3463, %v3459
        %v3608 = vpack.c.bf16 %v3473, %v3469
        %v3609 = vpack.c.bf16 %v3483, %v3479
        %v3610 = vpack.c.bf16 %v3493, %v3489
        %v3611 = vpack.c.bf16 %v3503, %v3499
        %v3612 = vpack.c.bf16 %v3513, %v3509
        %v3613 = vpack.c.bf16 %v3523, %v3519
        %v3614 = vpack.c.bf16 %v3533, %v3529
        %v3615 = vpack.c.bf16 %v3543, %v3539
        %v3616 = vpack.c.bf16 %v3553, %v3549
        %v3617 = vpack.c.bf16 %v3563, %v3559
        %v3618 = vpack.c.bf16 %v3573, %v3569
        %v3619 = vpack.c.bf16 %v3583, %v3579
        %v3620 = vpack.c.bf16 %v3593, %v3589
        %3621 = vst [vmem:[#allocation3] sm:$0xff] 0
        %3622 = vst [vmem:[#allocation3 + $0x8] sm:$0xff] 0
        %3623 = vst [vmem:[#allocation3 + $0x10] sm:$0xff] 0
        %3624 = vst [vmem:[#allocation3 + $0x18] sm:$0xff] 0
        %3625 = vst [vmem:[#allocation3 + $0x20] sm:$0xff] 0
        %3626 = vst [vmem:[#allocation3 + $0x28] sm:$0xff] 0
        %3627 = vst [vmem:[#allocation3 + $0x30] sm:$0xff] 0
        %3628 = vst [vmem:[#allocation3 + $0x38] sm:$0xff] 0
        %3629 = vst [vmem:[#allocation3 + $0x40] sm:$0xff] 0
        %3630 = vst [vmem:[#allocation3 + $0x48] sm:$0xff] 0
        %3631 = vst [vmem:[#allocation3 + $0x50] sm:$0xff] 0
        %3632 = vst [vmem:[#allocation3 + $0x58] sm:$0xff] 0
        %3633 = vst [vmem:[#allocation3 + $0x120] sm:$0xff] 0
        %3634 = vst [vmem:[#allocation3 + $0x128] sm:$0xff] 0
        %3635 = vst [vmem:[#allocation3 + $0x130] sm:$0xff] 0
        %3636 = vst [vmem:[#allocation3 + $0x138] sm:$0xff] 0
        %3637 = vst [vmem:[#allocation3 + $0x140] sm:$0xff] 0
        %3638 = vst [vmem:[#allocation3 + $0x148] sm:$0xff] 0
        %3639 = vst [vmem:[#allocation3 + $0x150] sm:$0xff] 0
        %3640 = vst [vmem:[#allocation3 + $0x158] sm:$0xff] 0
        %3641 = vst [vmem:[#allocation3 + $0x160] sm:$0xff] 0
        %3642 = vst [vmem:[#allocation3 + $0x168] sm:$0xff] 0
        %3643 = vst [vmem:[#allocation3 + $0x170] sm:$0xff] 0
        %3644 = vst [vmem:[#allocation3 + $0x178] sm:$0xff] 0
        %v3645 = vld [vmem:[%s10] sm:$0x1]
        %v3647 = vlaneseq
        %v3648 = vshrl.u32 %v3647, 7
        %v3649 = vsub.s32 0, %v3648
        %v3650 = vrot.slane %v3645, %v3649
        %3652 = vmatprep.subr.bf16.mxu0 0
        %3653 = vmatpush1.bf16.msra.mxu0 %v3597
        %3654 = vmatprep.subr.bf16.mxu0 0
        %3655 = vmatpush1.bf16.msra.mxu0 %v3598
        %3656 = vmatprep.subr.bf16.mxu0 0
        %3657 = vmatpush1.bf16.msra.mxu0 %v3599
        %3658 = vmatprep.subr.bf16.mxu0 0
        %3659 = vmatpush1.bf16.msra.mxu0 0
        %3660 = vmatprep.subr.bf16.mxu0 0
        %3661 = vmatpush1.bf16.msra.mxu0 0
        %3662 = vmatprep.subr.bf16.mxu0 0
        %3663 = vmatpush1.bf16.msra.mxu0 0
        %3664 = vmatprep.subr.bf16.mxu0 0
        %3665 = vmatpush1.bf16.msra.mxu0 0
        %3666 = vmatprep.subr.bf16.mxu0 0
        %3667 = vmatpush1.bf16.msra.mxu0 0
        %3668 = vmatprep.subr.bf16.mxu0 0
        %3669 = vmatpush1.bf16.msra.mxu0 0
        %3670 = vmatprep.subr.bf16.mxu0 0
        %3671 = vmatpush1.bf16.msra.mxu0 0
        %3672 = vmatprep.subr.bf16.mxu0 0
        %3673 = vmatpush1.bf16.msra.mxu0 0
        %3674 = vmatprep.subr.bf16.mxu0 0
        %3675 = vmatpush1.bf16.msra.mxu0 0
        %3676 = vmatprep.subr.bf16.mxu0 0
        %3677 = vmatpush1.bf16.msra.mxu0 0
        %3678 = vmatprep.subr.bf16.mxu0 0
        %3679 = vmatpush1.bf16.msra.mxu0 0
        %3680 = vmatprep.subr.bf16.mxu0 0
        %3681 = vmatpush1.bf16.msra.mxu0 0
        %3682 = vmatprep.subr.bf16.mxu0 0
        %3683 = vmatpush1.bf16.msra.mxu0 0
        %3684 = vmatprep.mubr.bf16.mxu0 0
        %3685 = vmatmul.mubr.bf16.gmra.mrb[0].mxu0 %v954
        %v3686 = vpop.f32.mrb[0].mxu0
        %v3687 = vadd.f32 %v3650, %v3686
        %v3688 = vpop.f32.mrb[0].mxu0
        %v3689 = vpop.f32.mrb[0].mxu0
        %v3690 = vadd.f32 %v3650, %v3689
        %v3691 = vpop.f32.mrb[0].mxu0
        %3692 = vmatprep.mubr.bf16.mxu0 0
        %3693 = vmatmul.mubr.bf16.gmra.mrb[0].mxu0 %v957
        %v3694 = vpop.f32.mrb[0].mxu0
        %v3695 = vadd.f32 %v3650, %v3694
        %v3696 = vpop.f32.mrb[0].mxu0
        %v3697 = vpop.f32.mrb[0].mxu0
        %v3698 = vadd.f32 %v3650, %v3697
        %v3699 = vpop.f32.mrb[0].mxu0
        %3700 = vmatprep.mubr.bf16.mxu0 0
        %3701 = vmatmul.mubr.bf16.gmra.mrb[0].mxu0 %v960
        %v3702 = vpop.f32.mrb[0].mxu0
        %v3703 = vadd.f32 %v3650, %v3702
        %v3704 = vpop.f32.mrb[0].mxu0
        %v3705 = vpop.f32.mrb[0].mxu0
        %v3706 = vadd.f32 %v3650, %v3705
        %v3707 = vpop.f32.mrb[0].mxu0
        %3708 = vdwg.mxu0
        %v3709 = vmax.f32 %v3687, 0.0
        %v3710 = vmax.f32 %v3690, 0.0
        %v3711 = vmax.f32 %v3695, 0.0
        %v3712 = vmax.f32 %v3698, 0.0
        %v3713 = vmax.f32 %v3703, 0.0
        %v3714 = vmax.f32 %v3706, 0.0
        %v3715 = vpack.c.bf16 %v3710, %v3709
        %v3716 = vpack.c.bf16 %v3712, %v3711
        %v3717 = vpack.c.bf16 %v3714, %v3713
        %3718 = vst [vmem:[#allocation3 + $0x60] sm:$0xff] %v3715
        %3719 = vst [vmem:[#allocation3 + $0x68] sm:$0xff] %v3716
        %3720 = vst [vmem:[#allocation3 + $0x70] sm:$0xff] %v3717
        %3721 = vmatprep.subr.bf16.mxu0 0
        %3722 = vmatpush1.bf16.msra.mxu0 %v3600
        %3723 = vmatprep.subr.bf16.mxu0 0
        %3724 = vmatpush1.bf16.msra.mxu0 %v3601
        %3725 = vmatprep.subr.bf16.mxu0 0
        %3726 = vmatpush1.bf16.msra.mxu0 %v3602
        %3727 = vmatprep.subr.bf16.mxu0 0
        %3728 = vmatpush1.bf16.msra.mxu0 0
        %3729 = vmatprep.subr.bf16.mxu0 0
        %3730 = vmatpush1.bf16.msra.mxu0 0
        %3731 = vmatprep.subr.bf16.mxu0 0
        %3732 = vmatpush1.bf16.msra.mxu0 0
        %3733 = vmatprep.subr.bf16.mxu0 0
        %3734 = vmatpush1.bf16.msra.mxu0 0
        %3735 = vmatprep.subr.bf16.mxu0 0
        %3736 = vmatpush1.bf16.msra.mxu0 0
        %3737 = vmatprep.subr.bf16.mxu0 0
        %3738 = vmatpush1.bf16.msra.mxu0 0
        %3739 = vmatprep.subr.bf16.mxu0 0
        %3740 = vmatpush1.bf16.msra.mxu0 0
        %3741 = vmatprep.subr.bf16.mxu0 0
        %3742 = vmatpush1.bf16.msra.mxu0 0
        %3743 = vmatprep.subr.bf16.mxu0 0
        %3744 = vmatpush1.bf16.msra.mxu0 0
        %3745 = vmatprep.subr.bf16.mxu0 0
        %3746 = vmatpush1.bf16.msra.mxu0 0
        %3747 = vmatprep.subr.bf16.mxu0 0
        %3748 = vmatpush1.bf16.msra.mxu0 0
        %3749 = vmatprep.subr.bf16.mxu0 0
        %3750 = vmatpush1.bf16.msra.mxu0 0
        %3751 = vmatprep.subr.bf16.mxu0 0
        %3752 = vmatpush1.bf16.msra.mxu0 0
        %3753 = vmatprep.mubr.bf16.mxu0 0
        %3754 = vmatmul.mubr.bf16.gmra.mrb[0].mxu0 %v954
        %v3755 = vpop.f32.mrb[0].mxu0
        %v3756 = vadd.f32 %v3650, %v3755
        %v3757 = vpop.f32.mrb[0].mxu0
        %v3758 = vpop.f32.mrb[0].mxu0
        %v3759 = vadd.f32 %v3650, %v3758
        %v3760 = vpop.f32.mrb[0].mxu0
        %3761 = vmatprep.mubr.bf16.mxu0 0
        %3762 = vmatmul.mubr.bf16.gmra.mrb[0].mxu0 %v957
        %v3763 = vpop.f32.mrb[0].mxu0
        %v3764 = vadd.f32 %v3650, %v3763
        %v3765 = vpop.f32.mrb[0].mxu0
        %v3766 = vpop.f32.mrb[0].mxu0
        %v3767 = vadd.f32 %v3650, %v3766
        %v3768 = vpop.f32.mrb[0].mxu0
        %3769 = vmatprep.mubr.bf16.mxu0 0
        %3770 = vmatmul.mubr.bf16.gmra.mrb[0].mxu0 %v960
        %v3771 = vpop.f32.mrb[0].mxu0
        %v3772 = vadd.f32 %v3650, %v3771
        %v3773 = vpop.f32.mrb[0].mxu0
        %v3774 = vpop.f32.mrb[0].mxu0
        %v3775 = vadd.f32 %v3650, %v3774
        %v3776 = vpop.f32.mrb[0].mxu0
        %3777 = vdwg.mxu0
        %v3778 = vmax.f32 %v3756, 0.0
        %v3779 = vmax.f32 %v3759, 0.0
        %v3780 = vmax.f32 %v3764, 0.0
        %v3781 = vmax.f32 %v3767, 0.0
        %v3782 = vmax.f32 %v3772, 0.0
        %v3783 = vmax.f32 %v3775, 0.0
        %v3784 = vpack.c.bf16 %v3779, %v3778
        %v3785 = vpack.c.bf16 %v3781, %v3780
        %v3786 = vpack.c.bf16 %v3783, %v3782
        %3787 = vst [vmem:[#allocation3 + $0x78] sm:$0xff] %v3784
        %3788 = vst [vmem:[#allocation3 + $0x80] sm:$0xff] %v3785
        %3789 = vst [vmem:[#allocation3 + $0x88] sm:$0xff] %v3786
        %3790 = vmatprep.subr.bf16.mxu0 0
        %3791 = vmatpush1.bf16.msra.mxu0 %v3603
        %3792 = vmatprep.subr.bf16.mxu0 0
        %3793 = vmatpush1.bf16.msra.mxu0 %v3604
        %3794 = vmatprep.subr.bf16.mxu0 0
        %3795 = vmatpush1.bf16.msra.mxu0 %v3605
        %3796 = vmatprep.subr.bf16.mxu0 0
        %3797 = vmatpush1.bf16.msra.mxu0 0
        %3798 = vmatprep.subr.bf16.mxu0 0
        %3799 = vmatpush1.bf16.msra.mxu0 0
        %3800 = vmatprep.subr.bf16.mxu0 0
        %3801 = vmatpush1.bf16.msra.mxu0 0
        %3802 = vmatprep.subr.bf16.mxu0 0
        %3803 = vmatpush1.bf16.msra.mxu0 0
        %3804 = vmatprep.subr.bf16.mxu0 0
        %3805 = vmatpush1.bf16.msra.mxu0 0
        %3806 = vmatprep.subr.bf16.mxu0 0
        %3807 = vmatpush1.bf16.msra.mxu0 0
        %3808 = vmatprep.subr.bf16.mxu0 0
        %3809 = vmatpush1.bf16.msra.mxu0 0
        %3810 = vmatprep.subr.bf16.mxu0 0
        %3811 = vmatpush1.bf16.msra.mxu0 0
        %3812 = vmatprep.subr.bf16.mxu0 0
        %3813 = vmatpush1.bf16.msra.mxu0 0
        %3814 = vmatprep.subr.bf16.mxu0 0
        %3815 = vmatpush1.bf16.msra.mxu0 0
        %3816 = vmatprep.subr.bf16.mxu0 0
        %3817 = vmatpush1.bf16.msra.mxu0 0
        %3818 = vmatprep.subr.bf16.mxu0 0
        %3819 = vmatpush1.bf16.msra.mxu0 0
        %3820 = vmatprep.subr.bf16.mxu0 0
        %3821 = vmatpush1.bf16.msra.mxu0 0
        %3822 = vmatprep.mubr.bf16.mxu0 0
        %3823 = vmatmul.mubr.bf16.gmra.mrb[0].mxu0 %v954
        %v3824 = vpop.f32.mrb[0].mxu0
        %v3825 = vadd.f32 %v3650, %v3824
        %v3826 = vpop.f32.mrb[0].mxu0
        %v3827 = vpop.f32.mrb[0].mxu0
        %v3828 = vadd.f32 %v3650, %v3827
        %v3829 = vpop.f32.mrb[0].mxu0
        %3830 = vmatprep.mubr.bf16.mxu0 0
        %3831 = vmatmul.mubr.bf16.gmra.mrb[0].mxu0 %v957
        %v3832 = vpop.f32.mrb[0].mxu0
        %v3833 = vadd.f32 %v3650, %v3832
        %v3834 = vpop.f32.mrb[0].mxu0
        %v3835 = vpop.f32.mrb[0].mxu0
        %v3836 = vadd.f32 %v3650, %v3835
        %v3837 = vpop.f32.mrb[0].mxu0
        %3838 = vmatprep.mubr.bf16.mxu0 0
        %3839 = vmatmul.mubr.bf16.gmra.mrb[0].mxu0 %v960
        %v3840 = vpop.f32.mrb[0].mxu0
        %v3841 = vadd.f32 %v3650, %v3840
        %v3842 = vpop.f32.mrb[0].mxu0
        %v3843 = vpop.f32.mrb[0].mxu0
        %v3844 = vadd.f32 %v3650, %v3843
        %v3845 = vpop.f32.mrb[0].mxu0
        %3846 = vdwg.mxu0
        %v3847 = vmax.f32 %v3825, 0.0
        %v3848 = vmax.f32 %v3828, 0.0
        %v3849 = vmax.f32 %v3833, 0.0
        %v3850 = vmax.f32 %v3836, 0.0
        %v3851 = vmax.f32 %v3841, 0.0
        %v3852 = vmax.f32 %v3844, 0.0
        %v3853 = vpack.c.bf16 %v3848, %v3847
        %v3854 = vpack.c.bf16 %v3850, %v3849
        %v3855 = vpack.c.bf16 %v3852, %v3851
        %3856 = vst [vmem:[#allocation3 + $0x90] sm:$0xff] %v3853
        %3857 = vst [vmem:[#allocation3 + $0x98] sm:$0xff] %v3854
        %3858 = vst [vmem:[#allocation3 + $0xa0] sm:$0xff] %v3855
        %3859 = vmatprep.subr.bf16.mxu0 0
        %3860 = vmatpush1.bf16.msra.mxu0 %v3606
        %3861 = vmatprep.subr.bf16.mxu0 0
        %3862 = vmatpush1.bf16.msra.mxu0 %v3607
        %3863 = vmatprep.subr.bf16.mxu0 0
        %3864 = vmatpush1.bf16.msra.mxu0 %v3608
        %3865 = vmatprep.subr.bf16.mxu0 0
        %3866 = vmatpush1.bf16.msra.mxu0 0
        %3867 = vmatprep.subr.bf16.mxu0 0
        %3868 = vmatpush1.bf16.msra.mxu0 0
        %3869 = vmatprep.subr.bf16.mxu0 0
        %3870 = vmatpush1.bf16.msra.mxu0 0
        %3871 = vmatprep.subr.bf16.mxu0 0
        %3872 = vmatpush1.bf16.msra.mxu0 0
        %3873 = vmatprep.subr.bf16.mxu0 0
        %3874 = vmatpush1.bf16.msra.mxu0 0
        %3875 = vmatprep.subr.bf16.mxu0 0
        %3876 = vmatpush1.bf16.msra.mxu0 0
        %3877 = vmatprep.subr.bf16.mxu0 0
        %3878 = vmatpush1.bf16.msra.mxu0 0
        %3879 = vmatprep.subr.bf16.mxu0 0
        %3880 = vmatpush1.bf16.msra.mxu0 0
        %3881 = vmatprep.subr.bf16.mxu0 0
        %3882 = vmatpush1.bf16.msra.mxu0 0
        %3883 = vmatprep.subr.bf16.mxu0 0
        %3884 = vmatpush1.bf16.msra.mxu0 0
        %3885 = vmatprep.subr.bf16.mxu0 0
        %3886 = vmatpush1.bf16.msra.mxu0 0
        %3887 = vmatprep.subr.bf16.mxu0 0
        %3888 = vmatpush1.bf16.msra.mxu0 0
        %3889 = vmatprep.subr.bf16.mxu0 0
        %3890 = vmatpush1.bf16.msra.mxu0 0
        %3891 = vmatprep.mubr.bf16.mxu0 0
        %3892 = vmatmul.mubr.bf16.gmra.mrb[0].mxu0 %v954
        %v3893 = vpop.f32.mrb[0].mxu0
        %v3894 = vadd.f32 %v3650, %v3893
        %v3895 = vpop.f32.mrb[0].mxu0
        %v3896 = vpop.f32.mrb[0].mxu0
        %v3897 = vadd.f32 %v3650, %v3896
        %v3898 = vpop.f32.mrb[0].mxu0
        %3899 = vmatprep.mubr.bf16.mxu0 0
        %3900 = vmatmul.mubr.bf16.gmra.mrb[0].mxu0 %v957
        %v3901 = vpop.f32.mrb[0].mxu0
        %v3902 = vadd.f32 %v3650, %v3901
        %v3903 = vpop.f32.mrb[0].mxu0
        %v3904 = vpop.f32.mrb[0].mxu0
        %v3905 = vadd.f32 %v3650, %v3904
        %v3906 = vpop.f32.mrb[0].mxu0
        %3907 = vmatprep.mubr.bf16.mxu0 0
        %3908 = vmatmul.mubr.bf16.gmra.mrb[0].mxu0 %v960
        %v3909 = vpop.f32.mrb[0].mxu0
        %v3910 = vadd.f32 %v3650, %v3909
        %v3911 = vpop.f32.mrb[0].mxu0
        %v3912 = vpop.f32.mrb[0].mxu0
        %v3913 = vadd.f32 %v3650, %v3912
        %v3914 = vpop.f32.mrb[0].mxu0
        %3915 = vdwg.mxu0
        %v3916 = vmax.f32 %v3894, 0.0
        %v3917 = vmax.f32 %v3897, 0.0
        %v3918 = vmax.f32 %v3902, 0.0
        %v3919 = vmax.f32 %v3905, 0.0
        %v3920 = vmax.f32 %v3910, 0.0
        %v3921 = vmax.f32 %v3913, 0.0
        %v3922 = vpack.c.bf16 %v3917, %v3916
        %v3923 = vpack.c.bf16 %v3919, %v3918
        %v3924 = vpack.c.bf16 %v3921, %v3920
        %3925 = vst [vmem:[#allocation3 + $0xa8] sm:$0xff] %v3922
        %3926 = vst [vmem:[#allocation3 + $0xb0] sm:$0xff] %v3923
        %3927 = vst [vmem:[#allocation3 + $0xb8] sm:$0xff] %v3924
        %3928 = vmatprep.subr.bf16.mxu0 0
        %3929 = vmatpush1.bf16.msra.mxu0 %v3609
        %3930 = vmatprep.subr.bf16.mxu0 0
        %3931 = vmatpush1.bf16.msra.mxu0 %v3610
        %3932 = vmatprep.subr.bf16.mxu0 0
        %3933 = vmatpush1.bf16.msra.mxu0 %v3611
        %3934 = vmatprep.subr.bf16.mxu0 0
        %3935 = vmatpush1.bf16.msra.mxu0 0
        %3936 = vmatprep.subr.bf16.mxu0 0
        %3937 = vmatpush1.bf16.msra.mxu0 0
        %3938 = vmatprep.subr.bf16.mxu0 0
        %3939 = vmatpush1.bf16.msra.mxu0 0
        %3940 = vmatprep.subr.bf16.mxu0 0
        %3941 = vmatpush1.bf16.msra.mxu0 0
        %3942 = vmatprep.subr.bf16.mxu0 0
        %3943 = vmatpush1.bf16.msra.mxu0 0
        %3944 = vmatprep.subr.bf16.mxu0 0
        %3945 = vmatpush1.bf16.msra.mxu0 0
        %3946 = vmatprep.subr.bf16.mxu0 0
        %3947 = vmatpush1.bf16.msra.mxu0 0
        %3948 = vmatprep.subr.bf16.mxu0 0
        %3949 = vmatpush1.bf16.msra.mxu0 0
        %3950 = vmatprep.subr.bf16.mxu0 0
        %3951 = vmatpush1.bf16.msra.mxu0 0
        %3952 = vmatprep.subr.bf16.mxu0 0
        %3953 = vmatpush1.bf16.msra.mxu0 0
        %3954 = vmatprep.subr.bf16.mxu0 0
        %3955 = vmatpush1.bf16.msra.mxu0 0
        %3956 = vmatprep.subr.bf16.mxu0 0
        %3957 = vmatpush1.bf16.msra.mxu0 0
        %3958 = vmatprep.subr.bf16.mxu0 0
        %3959 = vmatpush1.bf16.msra.mxu0 0
        %3960 = vmatprep.mubr.bf16.mxu0 0
        %3961 = vmatmul.mubr.bf16.gmra.mrb[0].mxu0 %v954
        %v3962 = vpop.f32.mrb[0].mxu0
        %v3963 = vadd.f32 %v3650, %v3962
        %v3964 = vpop.f32.mrb[0].mxu0
        %v3965 = vpop.f32.mrb[0].mxu0
        %v3966 = vadd.f32 %v3650, %v3965
        %v3967 = vpop.f32.mrb[0].mxu0
        %3968 = vmatprep.mubr.bf16.mxu0 0
        %3969 = vmatmul.mubr.bf16.gmra.mrb[0].mxu0 %v957
        %v3970 = vpop.f32.mrb[0].mxu0
        %v3971 = vadd.f32 %v3650, %v3970
        %v3972 = vpop.f32.mrb[0].mxu0
        %v3973 = vpop.f32.mrb[0].mxu0
        %v3974 = vadd.f32 %v3650, %v3973
        %v3975 = vpop.f32.mrb[0].mxu0
        %3976 = vmatprep.mubr.bf16.mxu0 0
        %3977 = vmatmul.mubr.bf16.gmra.mrb[0].mxu0 %v960
        %v3978 = vpop.f32.mrb[0].mxu0
        %v3979 = vadd.f32 %v3650, %v3978
        %v3980 = vpop.f32.mrb[0].mxu0
        %v3981 = vpop.f32.mrb[0].mxu0
        %v3982 = vadd.f32 %v3650, %v3981
        %v3983 = vpop.f32.mrb[0].mxu0
        %3984 = vdwg.mxu0
        %v3985 = vmax.f32 %v3963, 0.0
        %v3986 = vmax.f32 %v3966, 0.0
        %v3987 = vmax.f32 %v3971, 0.0
        %v3988 = vmax.f32 %v3974, 0.0
        %v3989 = vmax.f32 %v3979, 0.0
        %v3990 = vmax.f32 %v3982, 0.0
        %v3991 = vpack.c.bf16 %v3986, %v3985
        %v3992 = vpack.c.bf16 %v3988, %v3987
        %v3993 = vpack.c.bf16 %v3990, %v3989
        %3994 = vst [vmem:[#allocation3 + $0xc0] sm:$0xff] %v3991
        %3995 = vst [vmem:[#allocation3 + $0xc8] sm:$0xff] %v3992
        %3996 = vst [vmem:[#allocation3 + $0xd0] sm:$0xff] %v3993
        %3997 = vmatprep.subr.bf16.mxu0 0
        %3998 = vmatpush1.bf16.msra.mxu0 %v3612
        %3999 = vmatprep.subr.bf16.mxu0 0
        %4000 = vmatpush1.bf16.msra.mxu0 %v3613
        %4001 = vmatprep.subr.bf16.mxu0 0
        %4002 = vmatpush1.bf16.msra.mxu0 %v3614
        %4003 = vmatprep.subr.bf16.mxu0 0
        %4004 = vmatpush1.bf16.msra.mxu0 0
        %4005 = vmatprep.subr.bf16.mxu0 0
        %4006 = vmatpush1.bf16.msra.mxu0 0
        %4007 = vmatprep.subr.bf16.mxu0 0
        %4008 = vmatpush1.bf16.msra.mxu0 0
        %4009 = vmatprep.subr.bf16.mxu0 0
        %4010 = vmatpush1.bf16.msra.mxu0 0
        %4011 = vmatprep.subr.bf16.mxu0 0
        %4012 = vmatpush1.bf16.msra.mxu0 0
        %4013 = vmatprep.subr.bf16.mxu0 0
        %4014 = vmatpush1.bf16.msra.mxu0 0
        %4015 = vmatprep.subr.bf16.mxu0 0
        %4016 = vmatpush1.bf16.msra.mxu0 0
        %4017 = vmatprep.subr.bf16.mxu0 0
        %4018 = vmatpush1.bf16.msra.mxu0 0
        %4019 = vmatprep.subr.bf16.mxu0 0
        %4020 = vmatpush1.bf16.msra.mxu0 0
        %4021 = vmatprep.subr.bf16.mxu0 0
        %4022 = vmatpush1.bf16.msra.mxu0 0
        %4023 = vmatprep.subr.bf16.mxu0 0
        %4024 = vmatpush1.bf16.msra.mxu0 0
        %4025 = vmatprep.subr.bf16.mxu0 0
        %4026 = vmatpush1.bf16.msra.mxu0 0
        %4027 = vmatprep.subr.bf16.mxu0 0
        %4028 = vmatpush1.bf16.msra.mxu0 0
        %4029 = vmatprep.mubr.bf16.mxu0 0
        %4030 = vmatmul.mubr.bf16.gmra.mrb[0].mxu0 %v954
        %v4031 = vpop.f32.mrb[0].mxu0
        %v4032 = vadd.f32 %v3650, %v4031
        %v4033 = vpop.f32.mrb[0].mxu0
        %v4034 = vpop.f32.mrb[0].mxu0
        %v4035 = vadd.f32 %v3650, %v4034
        %v4036 = vpop.f32.mrb[0].mxu0
        %4037 = vmatprep.mubr.bf16.mxu0 0
        %4038 = vmatmul.mubr.bf16.gmra.mrb[0].mxu0 %v957
        %v4039 = vpop.f32.mrb[0].mxu0
        %v4040 = vadd.f32 %v3650, %v4039
        %v4041 = vpop.f32.mrb[0].mxu0
        %v4042 = vpop.f32.mrb[0].mxu0
        %v4043 = vadd.f32 %v3650, %v4042
        %v4044 = vpop.f32.mrb[0].mxu0
        %4045 = vmatprep.mubr.bf16.mxu0 0
        %4046 = vmatmul.mubr.bf16.gmra.mrb[0].mxu0 %v960
        %v4047 = vpop.f32.mrb[0].mxu0
        %v4048 = vadd.f32 %v3650, %v4047
        %v4049 = vpop.f32.mrb[0].mxu0
        %v4050 = vpop.f32.mrb[0].mxu0
        %v4051 = vadd.f32 %v3650, %v4050
        %v4052 = vpop.f32.mrb[0].mxu0
        %4053 = vdwg.mxu0
        %v4054 = vmax.f32 %v4032, 0.0
        %v4055 = vmax.f32 %v4035, 0.0
        %v4056 = vmax.f32 %v4040, 0.0
        %v4057 = vmax.f32 %v4043, 0.0
        %v4058 = vmax.f32 %v4048, 0.0
        %v4059 = vmax.f32 %v4051, 0.0
        %v4060 = vpack.c.bf16 %v4055, %v4054
        %v4061 = vpack.c.bf16 %v4057, %v4056
        %v4062 = vpack.c.bf16 %v4059, %v4058
        %4063 = vst [vmem:[#allocation3 + $0xd8] sm:$0xff] %v4060
        %4064 = vst [vmem:[#allocation3 + $0xe0] sm:$0xff] %v4061
        %4065 = vst [vmem:[#allocation3 + $0xe8] sm:$0xff] %v4062
        %4066 = vmatprep.subr.bf16.mxu0 0
        %4067 = vmatpush1.bf16.msra.mxu0 %v3615
        %4068 = vmatprep.subr.bf16.mxu0 0
        %4069 = vmatpush1.bf16.msra.mxu0 %v3616
        %4070 = vmatprep.subr.bf16.mxu0 0
        %4071 = vmatpush1.bf16.msra.mxu0 %v3617
        %4072 = vmatprep.subr.bf16.mxu0 0
        %4073 = vmatpush1.bf16.msra.mxu0 0
        %4074 = vmatprep.subr.bf16.mxu0 0
        %4075 = vmatpush1.bf16.msra.mxu0 0
        %4076 = vmatprep.subr.bf16.mxu0 0
        %4077 = vmatpush1.bf16.msra.mxu0 0
        %4078 = vmatprep.subr.bf16.mxu0 0
        %4079 = vmatpush1.bf16.msra.mxu0 0
        %4080 = vmatprep.subr.bf16.mxu0 0
        %4081 = vmatpush1.bf16.msra.mxu0 0
        %4082 = vmatprep.subr.bf16.mxu0 0
        %4083 = vmatpush1.bf16.msra.mxu0 0
        %4084 = vmatprep.subr.bf16.mxu0 0
        %4085 = vmatpush1.bf16.msra.mxu0 0
        %4086 = vmatprep.subr.bf16.mxu0 0
        %4087 = vmatpush1.bf16.msra.mxu0 0
        %4088 = vmatprep.subr.bf16.mxu0 0
        %4089 = vmatpush1.bf16.msra.mxu0 0
        %4090 = vmatprep.subr.bf16.mxu0 0
        %4091 = vmatpush1.bf16.msra.mxu0 0
        %4092 = vmatprep.subr.bf16.mxu0 0
        %4093 = vmatpush1.bf16.msra.mxu0 0
        %4094 = vmatprep.subr.bf16.mxu0 0
        %4095 = vmatpush1.bf16.msra.mxu0 0
        %4096 = vmatprep.subr.bf16.mxu0 0
        %4097 = vmatpush1.bf16.msra.mxu0 0
        %4098 = vmatprep.mubr.bf16.mxu0 0
        %4099 = vmatmul.mubr.bf16.gmra.mrb[0].mxu0 %v954
        %v4100 = vpop.f32.mrb[0].mxu0
        %v4101 = vadd.f32 %v3650, %v4100
        %v4102 = vpop.f32.mrb[0].mxu0
        %v4103 = vpop.f32.mrb[0].mxu0
        %v4104 = vadd.f32 %v3650, %v4103
        %v4105 = vpop.f32.mrb[0].mxu0
        %4106 = vmatprep.mubr.bf16.mxu0 0
        %4107 = vmatmul.mubr.bf16.gmra.mrb[0].mxu0 %v957
        %v4108 = vpop.f32.mrb[0].mxu0
        %v4109 = vadd.f32 %v3650, %v4108
        %v4110 = vpop.f32.mrb[0].mxu0
        %v4111 = vpop.f32.mrb[0].mxu0
        %v4112 = vadd.f32 %v3650, %v4111
        %v4113 = vpop.f32.mrb[0].mxu0
        %4114 = vmatprep.mubr.bf16.mxu0 0
        %4115 = vmatmul.mubr.bf16.gmra.mrb[0].mxu0 %v960
        %v4116 = vpop.f32.mrb[0].mxu0
        %v4117 = vadd.f32 %v3650, %v4116
        %v4118 = vpop.f32.mrb[0].mxu0
        %v4119 = vpop.f32.mrb[0].mxu0
        %v4120 = vadd.f32 %v3650, %v4119
        %v4121 = vpop.f32.mrb[0].mxu0
        %4122 = vdwg.mxu0
        %v4123 = vmax.f32 %v4101, 0.0
        %v4124 = vmax.f32 %v4104, 0.0
        %v4125 = vmax.f32 %v4109, 0.0
        %v4126 = vmax.f32 %v4112, 0.0
        %v4127 = vmax.f32 %v4117, 0.0
        %v4128 = vmax.f32 %v4120, 0.0
        %v4129 = vpack.c.bf16 %v4124, %v4123
        %v4130 = vpack.c.bf16 %v4126, %v4125
        %v4131 = vpack.c.bf16 %v4128, %v4127
        %4132 = vst [vmem:[#allocation3 + $0xf0] sm:$0xff] %v4129
        %4133 = vst [vmem:[#allocation3 + $0xf8] sm:$0xff] %v4130
        %4134 = vst [vmem:[#allocation3 + $0x100] sm:$0xff] %v4131
        %4135 = vmatprep.subr.bf16.mxu0 0
        %4136 = vmatpush1.bf16.msra.mxu0 %v3618
        %4137 = vmatprep.subr.bf16.mxu0 0
        %4138 = vmatpush1.bf16.msra.mxu0 %v3619
        %4139 = vmatprep.subr.bf16.mxu0 0
        %4140 = vmatpush1.bf16.msra.mxu0 %v3620
        %4141 = vmatprep.subr.bf16.mxu0 0
        %4142 = vmatpush1.bf16.msra.mxu0 0
        %4143 = vmatprep.subr.bf16.mxu0 0
        %4144 = vmatpush1.bf16.msra.mxu0 0
        %4145 = vmatprep.subr.bf16.mxu0 0
        %4146 = vmatpush1.bf16.msra.mxu0 0
        %4147 = vmatprep.subr.bf16.mxu0 0
        %4148 = vmatpush1.bf16.msra.mxu0 0
        %4149 = vmatprep.subr.bf16.mxu0 0
        %4150 = vmatpush1.bf16.msra.mxu0 0
        %4151 = vmatprep.subr.bf16.mxu0 0
        %4152 = vmatpush1.bf16.msra.mxu0 0
        %4153 = vmatprep.subr.bf16.mxu0 0
        %4154 = vmatpush1.bf16.msra.mxu0 0
        %4155 = vmatprep.subr.bf16.mxu0 0
        %4156 = vmatpush1.bf16.msra.mxu0 0
        %4157 = vmatprep.subr.bf16.mxu0 0
        %4158 = vmatpush1.bf16.msra.mxu0 0
        %4159 = vmatprep.subr.bf16.mxu0 0
        %4160 = vmatpush1.bf16.msra.mxu0 0
        %4161 = vmatprep.subr.bf16.mxu0 0
        %4162 = vmatpush1.bf16.msra.mxu0 0
        %4163 = vmatprep.subr.bf16.mxu0 0
        %4164 = vmatpush1.bf16.msra.mxu0 0
        %4165 = vmatprep.subr.bf16.mxu0 0
        %4166 = vmatpush1.bf16.msra.mxu0 0
        %4167 = vmatprep.mubr.bf16.mxu0 0
        %4168 = vmatmul.mubr.bf16.gmra.mrb[0].mxu0 %v954
        %v4169 = vpop.f32.mrb[0].mxu0
        %v4170 = vadd.f32 %v3650, %v4169
        %v4171 = vpop.f32.mrb[0].mxu0
        %v4172 = vpop.f32.mrb[0].mxu0
        %v4173 = vadd.f32 %v3650, %v4172
        %v4174 = vpop.f32.mrb[0].mxu0
        %4175 = vmatprep.mubr.bf16.mxu0 0
        %4176 = vmatmul.mubr.bf16.gmra.mrb[0].mxu0 %v957
        %v4177 = vpop.f32.mrb[0].mxu0
        %v4178 = vadd.f32 %v3650, %v4177
        %v4179 = vpop.f32.mrb[0].mxu0
        %v4180 = vpop.f32.mrb[0].mxu0
        %v4181 = vadd.f32 %v3650, %v4180
        %v4182 = vpop.f32.mrb[0].mxu0
        %4183 = vmatprep.mubr.bf16.mxu0 0
        %4184 = vmatmul.mubr.bf16.gmra.mrb[0].mxu0 %v960
        %v4185 = vpop.f32.mrb[0].mxu0
        %v4186 = vadd.f32 %v3650, %v4185
        %v4187 = vpop.f32.mrb[0].mxu0
        %v4188 = vpop.f32.mrb[0].mxu0
        %v4189 = vadd.f32 %v3650, %v4188
        %v4190 = vpop.f32.mrb[0].mxu0
        %4191 = vdwg.mxu0
        %v4192 = vmax.f32 %v4170, 0.0
        %v4193 = vmax.f32 %v4173, 0.0
        %v4194 = vmax.f32 %v4178, 0.0
        %v4195 = vmax.f32 %v4181, 0.0
        %v4196 = vmax.f32 %v4186, 0.0
        %v4197 = vmax.f32 %v4189, 0.0
        %v4198 = vpack.c.bf16 %v4193, %v4192
        %v4199 = vpack.c.bf16 %v4195, %v4194
        %v4200 = vpack.c.bf16 %v4197, %v4196
        %4201 = vst [vmem:[#allocation3 + $0x108] sm:$0xff] %v4198
        %4202 = vst [vmem:[#allocation3 + $0x110] sm:$0xff] %v4199
        %4203 = vst [vmem:[#allocation3 + $0x118] sm:$0xff] %v4200
        %v4204 = vld [vmem:[#allocation3] sm:$0xff]
        %v4205 = vld [vmem:[#allocation3 + $0x8] sm:$0xff]
        %v4206 = vld [vmem:[#allocation3 + $0x10] sm:$0xff]
        %v4207 = vld [vmem:[#allocation3 + $0x18] sm:$0xff]
        %v4208 = vld [vmem:[#allocation3 + $0x20] sm:$0xff]
        %v4209 = vld [vmem:[#allocation3 + $0x28] sm:$0xff]
        %v4210 = vld [vmem:[#allocation3 + $0x30] sm:$0xff]
        %v4211 = vld [vmem:[#allocation3 + $0x38] sm:$0xff]
        %v4212 = vld [vmem:[#allocation3 + $0x40] sm:$0xff]
        %v4213 = vld [vmem:[#allocation3 + $0x48] sm:$0xff]
        %v4214 = vld [vmem:[#allocation3 + $0x50] sm:$0xff]
        %v4215 = vld [vmem:[#allocation3 + $0x58] sm:$0xff]
        %v4216 = vld [vmem:[#allocation3 + $0x60] sm:$0xff]
        %v4217 = vld [vmem:[#allocation3 + $0x68] sm:$0xff]
        %v4218 = vld [vmem:[#allocation3 + $0x70] sm:$0xff]
        %v4219 = vld [vmem:[#allocation3 + $0x78] sm:$0xff]
        %v4220 = vld [vmem:[#allocation3 + $0x80] sm:$0xff]
        %v4221 = vld [vmem:[#allocation3 + $0x88] sm:$0xff]
        %v4222 = vld [vmem:[#allocation3 + $0x90] sm:$0xff]
        %v4223 = vld [vmem:[#allocation3 + $0x98] sm:$0xff]
        %v4224 = vld [vmem:[#allocation3 + $0xa0] sm:$0xff]
        %v4225 = vld [vmem:[#allocation3 + $0xa8] sm:$0xff]
        %v4226 = vld [vmem:[#allocation3 + $0xb0] sm:$0xff]
        %v4227 = vld [vmem:[#allocation3 + $0xb8] sm:$0xff]
        %v4228 = vld [vmem:[#allocation3 + $0xc0] sm:$0xff]
        %v4229 = vld [vmem:[#allocation3 + $0xc8] sm:$0xff]
        %v4230 = vld [vmem:[#allocation3 + $0xd0] sm:$0xff]
        %v4231 = vld [vmem:[#allocation3 + $0xd8] sm:$0xff]
        %v4232 = vld [vmem:[#allocation3 + $0xe0] sm:$0xff]
        %v4233 = vld [vmem:[#allocation3 + $0xe8] sm:$0xff]
        %v4234 = vld [vmem:[#allocation3 + $0xf0] sm:$0xff]
        %v4235 = vld [vmem:[#allocation3 + $0xf8] sm:$0xff]
        %v4236 = vld [vmem:[#allocation3 + $0x100] sm:$0xff]
        %v4237 = vld [vmem:[#allocation3 + $0x108] sm:$0xff]
        %v4238 = vld [vmem:[#allocation3 + $0x110] sm:$0xff]
        %v4239 = vld [vmem:[#allocation3 + $0x118] sm:$0xff]
        %v4240 = vld [vmem:[#allocation3 + $0x120] sm:$0xff]
        %v4241 = vld [vmem:[#allocation3 + $0x128] sm:$0xff]
        %v4242 = vld [vmem:[#allocation3 + $0x130] sm:$0xff]
        %v4243 = vld [vmem:[#allocation3 + $0x138] sm:$0xff]
        %v4244 = vld [vmem:[#allocation3 + $0x140] sm:$0xff]
        %v4245 = vld [vmem:[#allocation3 + $0x148] sm:$0xff]
        %v4246 = vld [vmem:[#allocation3 + $0x150] sm:$0xff]
        %v4247 = vld [vmem:[#allocation3 + $0x158] sm:$0xff]
        %v4248 = vld [vmem:[#allocation3 + $0x160] sm:$0xff]
        %v4249 = vld [vmem:[#allocation3 + $0xc0] sm:$0xff]
        %v4250 = vld [vmem:[#allocation3 + $0xc8] sm:$0xff]
        %v4251 = vld [vmem:[#allocation3 + $0xd0] sm:$0xff]
        %v4252 = vld [vmem:[#allocation3 + $0xd8] sm:$0xff]
        %v4253 = vld [vmem:[#allocation3 + $0xe0] sm:$0xff]
        %v4254 = vld [vmem:[#allocation3 + $0xe8] sm:$0xff]
        %v4255 = vld [vmem:[#allocation3 + $0xf0] sm:$0xff]
        %v4256 = vld [vmem:[#allocation3 + $0xf8] sm:$0xff]
        %v4257 = vld [vmem:[#allocation3 + $0x100] sm:$0xff]
        %v4258 = vld [vmem:[#allocation3 + $0x108] sm:$0xff]
        %v4259 = vld [vmem:[#allocation3 + $0x110] sm:$0xff]
        %v4260 = vld [vmem:[#allocation3 + $0x118] sm:$0xff]
        %v4261 = vld [vmem:[#allocation3 + $0x120] sm:$0xff]
        %v4262 = vld [vmem:[#allocation3 + $0x128] sm:$0xff]
        %v4263 = vld [vmem:[#allocation3 + $0x130] sm:$0xff]
        %v4264 = vld [vmem:[#allocation3 + $0x138] sm:$0xff]
        %v4265 = vld [vmem:[#allocation3 + $0x140] sm:$0xff]
        %v4266 = vld [vmem:[#allocation3 + $0x148] sm:$0xff]
        %v4267 = vld [vmem:[#allocation3 + $0x150] sm:$0xff]
        %v4268 = vld [vmem:[#allocation3 + $0x158] sm:$0xff]
        %v4269 = vld [vmem:[#allocation3 + $0x160] sm:$0xff]
        %v4270 = vld [vmem:[#allocation3 + $0x168] sm:$0xff]
        %v4271 = vld [vmem:[#allocation3 + $0x170] sm:$0xff]
        %v4272 = vld [vmem:[#allocation3 + $0x178] sm:$0xff]
        %v4273 = vld [vmem:[%s11] sm:$0xf]
        %v4274 = vld [vmem:[%s11 + $0x4] sm:$0xf]
        %v4275 = vld [vmem:[%s11 + $0x8] sm:$0xf]
        %v4276 = vld [vmem:[%s11 + $0xc] sm:$0xf]
        %v4277 = vld [vmem:[%s11 + $0x10] sm:$0xf]
        %v4278 = vld [vmem:[%s11 + $0x14] sm:$0xf]
        %v4279 = vld [vmem:[%s11 + $0x18] sm:$0xf]
        %v4280 = vld [vmem:[%s11 + $0x1c] sm:$0xf]
        %v4281 = vld [vmem:[%s11 + $0x20] sm:$0xf]
        %v4282 = vld [vmem:[%s11 + $0x24] sm:$0xf]
        %v4283 = vld [vmem:[%s11 + $0x28] sm:$0xf]
        %v4284 = vld [vmem:[%s11 + $0x2c] sm:$0xf]
        %v4285 = vld [vmem:[%s11 + $0x30] sm:$0xf]
        %v4286 = vld [vmem:[%s11 + $0x34] sm:$0xf]
        %v4287 = vld [vmem:[%s11 + $0x38] sm:$0xf]
        %v4288 = vld [vmem:[%s11 + $0x3c] sm:$0xf]
        %v4289 = vld [vmem:[%s11 + $0x40] sm:$0xf]
        %v4290 = vld [vmem:[%s11 + $0x44] sm:$0xf]
        %v4291 = vld [vmem:[%s11 + $0x48] sm:$0xf]
        %v4292 = vld [vmem:[%s11 + $0x4c] sm:$0xf]
        %v4293 = vld [vmem:[%s11 + $0x50] sm:$0xf]
        %v4294 = vld [vmem:[%s11 + $0x54] sm:$0xf]
        %v4295 = vld [vmem:[%s11 + $0x58] sm:$0xf]
        %v4296 = vld [vmem:[%s11 + $0x5c] sm:$0xf]
        %v4297 = vld [vmem:[%s11 + $0x60] sm:$0xf]
        %v4298 = vld [vmem:[%s11 + $0x64] sm:$0xf]
        %v4299 = vld [vmem:[%s11 + $0x68] sm:$0xf]
        %v4300 = vld [vmem:[%s11 + $0x6c] sm:$0xf]
        %v4301 = vld [vmem:[%s11 + $0x70] sm:$0xf]
        %v4302 = vld [vmem:[%s11 + $0x74] sm:$0xf]
        %v4303 = vld [vmem:[%s11 + $0x78] sm:$0xf]
        %v4304 = vld [vmem:[%s11 + $0x7c] sm:$0xf]
        %v4305 = vld [vmem:[%s11 + $0x80] sm:$0xf]
        %v4306 = vld [vmem:[%s11 + $0x84] sm:$0xf]
        %v4307 = vld [vmem:[%s11 + $0x88] sm:$0xf]
        %v4308 = vld [vmem:[%s11 + $0x8c] sm:$0xf]
        %v4309 = vld [vmem:[%s11 + $0x90] sm:$0xf]
        %v4310 = vld [vmem:[%s11 + $0x94] sm:$0xf]
        %v4311 = vld [vmem:[%s11 + $0x98] sm:$0xf]
        %v4312 = vld [vmem:[%s11 + $0x9c] sm:$0xf]
        %v4313 = vld [vmem:[%s11 + $0xa0] sm:$0xf]
        %v4314 = vld [vmem:[%s11 + $0xa4] sm:$0xf]
        %v4315 = vld [vmem:[%s11 + $0xa8] sm:$0xf]
        %v4316 = vld [vmem:[%s11 + $0xac] sm:$0xf]
        %v4317 = vld [vmem:[%s11 + $0xb0] sm:$0xf]
        %v4318 = vld [vmem:[%s11 + $0xb4] sm:$0xf]
        %v4319 = vld [vmem:[%s11 + $0xb8] sm:$0xf]
        %v4320 = vld [vmem:[%s11 + $0xbc] sm:$0xf]
        %v4321 = vld [vmem:[%s11 + $0xc0] sm:$0xf]
        %v4322 = vld [vmem:[%s11 + $0xc4] sm:$0xf]
        %v4323 = vld [vmem:[%s11 + $0xc8] sm:$0xf]
        %v4324 = vld [vmem:[%s11 + $0xcc] sm:$0xf]
        %v4325 = vld [vmem:[%s11 + $0xd0] sm:$0xf]
        %v4326 = vld [vmem:[%s11 + $0xd4] sm:$0xf]
        %v4327 = vld [vmem:[%s11 + $0xd8] sm:$0xf]
        %v4328 = vld [vmem:[%s11 + $0xdc] sm:$0xf]
        %v4329 = vld [vmem:[%s11 + $0xe0] sm:$0xf]
        %v4330 = vld [vmem:[%s11 + $0xe4] sm:$0xf]
        %v4331 = vld [vmem:[%s11 + $0xe8] sm:$0xf]
        %v4332 = vld [vmem:[%s11 + $0xec] sm:$0xf]
        %v4333 = vld [vmem:[%s11 + $0xf0] sm:$0xf]
        %v4334 = vld [vmem:[%s11 + $0xf4] sm:$0xf]
        %v4335 = vld [vmem:[%s11 + $0xf8] sm:$0xf]
        %v4336 = vld [vmem:[%s11 + $0xfc] sm:$0xf]
        %v4337 = vld [vmem:[%s11 + $0x100] sm:$0xf]
        %v4338 = vld [vmem:[%s11 + $0x104] sm:$0xf]
        %v4339 = vld [vmem:[%s11 + $0x108] sm:$0xf]
        %v4340 = vld [vmem:[%s11 + $0x10c] sm:$0xf]
        %v4341 = vld [vmem:[%s11 + $0x110] sm:$0xf]
        %v4342 = vld [vmem:[%s11 + $0x114] sm:$0xf]
        %v4343 = vld [vmem:[%s11 + $0x118] sm:$0xf]
        %v4344 = vld [vmem:[%s11 + $0x11c] sm:$0xf]
        %v4345 = vld [vmem:[%s11 + $0x120] sm:$0xf]
        %v4346 = vld [vmem:[%s11 + $0x124] sm:$0xf]
        %v4347 = vld [vmem:[%s11 + $0x128] sm:$0xf]
        %v4348 = vld [vmem:[%s11 + $0x12c] sm:$0xf]
        %v4349 = vld [vmem:[%s11 + $0x130] sm:$0xf]
        %v4350 = vld [vmem:[%s11 + $0x134] sm:$0xf]
        %v4351 = vld [vmem:[%s11 + $0x138] sm:$0xf]
        %v4352 = vld [vmem:[%s11 + $0x13c] sm:$0xf]
        %v4353 = vld [vmem:[%s11 + $0x140] sm:$0xf]
        %v4354 = vld [vmem:[%s11 + $0x144] sm:$0xf]
        %v4355 = vld [vmem:[%s11 + $0x148] sm:$0xf]
        %v4356 = vld [vmem:[%s11 + $0x14c] sm:$0xf]
        %v4357 = vld [vmem:[%s11 + $0x150] sm:$0xf]
        %v4358 = vld [vmem:[%s11 + $0x154] sm:$0xf]
        %v4359 = vld [vmem:[%s11 + $0x158] sm:$0xf]
        %v4360 = vld [vmem:[%s11 + $0x15c] sm:$0xf]
        %v4361 = vld [vmem:[%s11 + $0x160] sm:$0xf]
        %v4362 = vld [vmem:[%s11 + $0x164] sm:$0xf]
        %v4363 = vld [vmem:[%s11 + $0x168] sm:$0xf]
        %v4364 = vld [vmem:[%s11 + $0x16c] sm:$0xf]
        %v4365 = vld [vmem:[%s11 + $0x170] sm:$0xf]
        %v4366 = vld [vmem:[%s11 + $0x174] sm:$0xf]
        %v4367 = vld [vmem:[%s11 + $0x178] sm:$0xf]
        %v4368 = vld [vmem:[%s11 + $0x17c] sm:$0xf]
        %v4369 = vld [vmem:[%s11 + $0x180] sm:$0xf]
        %v4370 = vld [vmem:[%s11 + $0x184] sm:$0xf]
        %v4371 = vld [vmem:[%s11 + $0x188] sm:$0xf]
        %v4372 = vld [vmem:[%s11 + $0x18c] sm:$0xf]
        %v4373 = vld [vmem:[%s11 + $0x190] sm:$0xf]
        %v4374 = vld [vmem:[%s11 + $0x194] sm:$0xf]
        %v4375 = vld [vmem:[%s11 + $0x198] sm:$0xf]
        %v4376 = vld [vmem:[%s11 + $0x19c] sm:$0xf]
        %v4377 = vld [vmem:[%s11 + $0x1a0] sm:$0xf]
        %v4378 = vld [vmem:[%s11 + $0x1a4] sm:$0xf]
        %v4379 = vld [vmem:[%s11 + $0x1a8] sm:$0xf]
        %v4380 = vld [vmem:[%s11 + $0x1ac] sm:$0xf]
        %v4381 = vld [vmem:[%s11 + $0x1b0] sm:$0xf]
        %v4382 = vld [vmem:[%s11 + $0x1b4] sm:$0xf]
        %v4383 = vld [vmem:[%s11 + $0x1b8] sm:$0xf]
        %v4384 = vld [vmem:[%s11 + $0x1bc] sm:$0xf]
        %v4385 = vld [vmem:[%s11 + $0x1c0] sm:$0xf]
        %v4386 = vld [vmem:[%s11 + $0x1c4] sm:$0xf]
        %v4387 = vld [vmem:[%s11 + $0x1c8] sm:$0xf]
        %v4388 = vld [vmem:[%s11 + $0x1cc] sm:$0xf]
        %v4389 = vld [vmem:[%s11 + $0x1d0] sm:$0xf]
        %v4390 = vld [vmem:[%s11 + $0x1d4] sm:$0xf]
        %v4391 = vld [vmem:[%s11 + $0x1d8] sm:$0xf]
        %v4392 = vld [vmem:[%s11 + $0x1dc] sm:$0xf]
        %v4393 = vld [vmem:[%s11 + $0x1e0] sm:$0xf]
        %v4394 = vld [vmem:[%s11 + $0x1e4] sm:$0xf]
        %v4395 = vld [vmem:[%s11 + $0x1e8] sm:$0xf]
        %v4396 = vld [vmem:[%s11 + $0x1ec] sm:$0xf]
        %v4397 = vld [vmem:[%s11 + $0x1f0] sm:$0xf]
        %v4398 = vld [vmem:[%s11 + $0x1f4] sm:$0xf]
        %v4399 = vld [vmem:[%s11 + $0x1f8] sm:$0xf]
        %v4400 = vld [vmem:[%s11 + $0x1fc] sm:$0xf]
        %v4401 = vld [vmem:[%s11 + $0x200] sm:$0xf]
        %v4402 = vld [vmem:[%s11 + $0x204] sm:$0xf]
        %v4403 = vld [vmem:[%s11 + $0x208] sm:$0xf]
        %v4404 = vld [vmem:[%s11 + $0x20c] sm:$0xf]
        %v4405 = vld [vmem:[%s11 + $0x210] sm:$0xf]
        %v4406 = vld [vmem:[%s11 + $0x214] sm:$0xf]
        %v4407 = vld [vmem:[%s11 + $0x218] sm:$0xf]
        %v4408 = vld [vmem:[%s11 + $0x21c] sm:$0xf]
        %v4409 = vld [vmem:[%s11 + $0x220] sm:$0xf]
        %v4410 = vld [vmem:[%s11 + $0x224] sm:$0xf]
        %v4411 = vld [vmem:[%s11 + $0x228] sm:$0xf]
        %v4412 = vld [vmem:[%s11 + $0x22c] sm:$0xf]
        %v4413 = vld [vmem:[%s11 + $0x230] sm:$0xf]
        %v4414 = vld [vmem:[%s11 + $0x234] sm:$0xf]
        %v4415 = vld [vmem:[%s11 + $0x238] sm:$0xf]
        %v4416 = vld [vmem:[%s11 + $0x23c] sm:$0xf]
        %v4417 = vld [vmem:[%s12] sm:$0x1]
        %v4419 = vlaneseq
        %v4420 = vshrl.u32 %v4419, 7
        %v4421 = vsub.s32 0, %v4420
        %v4422 = vrot.slane %v4417, %v4421
        %v4568 = vunpack.c.l.b16 %v4273
        %v4569 = vunpack.c.l.b16 %v4274
        %v4570 = vunpack.c.l.b16 %v4275
        %v4571 = vunpack.c.l.b16 %v4276
        %v4572 = vunpack.c.l.b16 %v4277
        %v4573 = vunpack.c.l.b16 %v4278
        %v4574 = vunpack.c.l.b16 %v4279
        %v4575 = vunpack.c.l.b16 %v4280
        %v4576 = vunpack.c.l.b16 %v4281
        %v4577 = vunpack.c.l.b16 %v4282
        %v4578 = vunpack.c.l.b16 %v4283
        %v4579 = vunpack.c.l.b16 %v4284
        %v4580 = vunpack.c.l.b16 %v4285
        %v4581 = vunpack.c.l.b16 %v4286
        %v4582 = vunpack.c.l.b16 %v4287
        %v4583 = vunpack.c.l.b16 %v4288
        %v4584 = vunpack.c.l.b16 %v4289
        %v4585 = vunpack.c.l.b16 %v4290
        %v4586 = vunpack.c.l.b16 %v4291
        %v4587 = vunpack.c.l.b16 %v4292
        %v4588 = vunpack.c.l.b16 %v4293
        %v4589 = vunpack.c.l.b16 %v4294
        %v4590 = vunpack.c.l.b16 %v4295
        %v4591 = vunpack.c.l.b16 %v4296
        %v4592 = vunpack.c.l.b16 %v4297
        %v4593 = vunpack.c.l.b16 %v4298
        %v4594 = vunpack.c.l.b16 %v4299
        %v4595 = vunpack.c.l.b16 %v4300
        %v4596 = vunpack.c.l.b16 %v4301
        %v4597 = vunpack.c.l.b16 %v4302
        %v4598 = vunpack.c.l.b16 %v4303
        %v4599 = vunpack.c.l.b16 %v4304
        %v4600 = vunpack.c.l.b16 %v4305
        %v4601 = vunpack.c.l.b16 %v4306
        %v4602 = vunpack.c.l.b16 %v4307
        %v4603 = vunpack.c.l.b16 %v4308
        %v4604 = vunpack.c.l.b16 %v4309
        %v4605 = vunpack.c.l.b16 %v4310
        %v4606 = vunpack.c.l.b16 %v4311
        %v4607 = vunpack.c.l.b16 %v4312
        %v4608 = vunpack.c.l.b16 %v4313
        %v4609 = vunpack.c.l.b16 %v4314
        %v4610 = vunpack.c.l.b16 %v4315
        %v4611 = vunpack.c.l.b16 %v4316
        %v4612 = vunpack.c.l.b16 %v4317
        %v4613 = vunpack.c.l.b16 %v4318
        %v4614 = vunpack.c.l.b16 %v4319
        %v4615 = vunpack.c.l.b16 %v4320
        %v4616 = vunpack.c.l.b16 %v4321
        %v4617 = vunpack.c.l.b16 %v4322
        %v4618 = vunpack.c.l.b16 %v4323
        %v4619 = vunpack.c.l.b16 %v4324
        %v4620 = vunpack.c.l.b16 %v4325
        %v4621 = vunpack.c.l.b16 %v4326
        %v4622 = vunpack.c.l.b16 %v4327
        %v4623 = vunpack.c.l.b16 %v4328
        %v4624 = vunpack.c.l.b16 %v4329
        %v4625 = vunpack.c.l.b16 %v4330
        %v4626 = vunpack.c.l.b16 %v4331
        %v4627 = vunpack.c.l.b16 %v4332
        %v4628 = vunpack.c.l.b16 %v4333
        %v4629 = vunpack.c.l.b16 %v4334
        %v4630 = vunpack.c.l.b16 %v4335
        %v4631 = vunpack.c.l.b16 %v4336
        %v4632 = vunpack.c.l.b16 %v4337
        %v4633 = vunpack.c.l.b16 %v4338
        %v4634 = vunpack.c.l.b16 %v4339
        %v4635 = vunpack.c.l.b16 %v4340
        %v4636 = vunpack.c.l.b16 %v4341
        %v4637 = vunpack.c.l.b16 %v4342
        %v4638 = vunpack.c.l.b16 %v4343
        %v4639 = vunpack.c.l.b16 %v4344
        %v4640 = vunpack.c.l.b16 %v4345
        %v4641 = vunpack.c.l.b16 %v4346
        %v4642 = vunpack.c.l.b16 %v4347
        %v4643 = vunpack.c.l.b16 %v4348
        %v4644 = vunpack.c.l.b16 %v4349
        %v4645 = vunpack.c.l.b16 %v4350
        %v4646 = vunpack.c.l.b16 %v4351
        %v4647 = vunpack.c.l.b16 %v4352
        %v4648 = vunpack.c.l.b16 %v4353
        %v4649 = vunpack.c.l.b16 %v4354
        %v4650 = vunpack.c.l.b16 %v4355
        %v4651 = vunpack.c.l.b16 %v4356
        %v4652 = vunpack.c.l.b16 %v4357
        %v4653 = vunpack.c.l.b16 %v4358
        %v4654 = vunpack.c.l.b16 %v4359
        %v4655 = vunpack.c.l.b16 %v4360
        %v4656 = vunpack.c.l.b16 %v4361
        %v4657 = vunpack.c.l.b16 %v4362
        %v4658 = vunpack.c.l.b16 %v4363
        %v4659 = vunpack.c.l.b16 %v4364
        %v4660 = vunpack.c.l.b16 %v4365
        %v4661 = vunpack.c.l.b16 %v4366
        %v4662 = vunpack.c.l.b16 %v4367
        %v4663 = vunpack.c.l.b16 %v4368
        %v4664 = vunpack.c.l.b16 %v4369
        %v4665 = vunpack.c.l.b16 %v4370
        %v4666 = vunpack.c.l.b16 %v4371
        %v4667 = vunpack.c.l.b16 %v4372
        %v4668 = vunpack.c.l.b16 %v4373
        %v4669 = vunpack.c.l.b16 %v4374
        %v4670 = vunpack.c.l.b16 %v4375
        %v4671 = vunpack.c.l.b16 %v4376
        %v4672 = vunpack.c.l.b16 %v4377
        %v4673 = vunpack.c.l.b16 %v4378
        %v4674 = vunpack.c.l.b16 %v4379
        %v4675 = vunpack.c.l.b16 %v4380
        %v4676 = vunpack.c.l.b16 %v4381
        %v4677 = vunpack.c.l.b16 %v4382
        %v4678 = vunpack.c.l.b16 %v4383
        %v4679 = vunpack.c.l.b16 %v4384
        %v4680 = vunpack.c.l.b16 %v4385
        %v4681 = vunpack.c.l.b16 %v4386
        %v4682 = vunpack.c.l.b16 %v4387
        %v4683 = vunpack.c.l.b16 %v4388
        %v4684 = vunpack.c.l.b16 %v4389
        %v4685 = vunpack.c.l.b16 %v4390
        %v4686 = vunpack.c.l.b16 %v4391
        %v4687 = vunpack.c.l.b16 %v4392
        %v4688 = vunpack.c.l.b16 %v4393
        %v4689 = vunpack.c.l.b16 %v4394
        %v4690 = vunpack.c.l.b16 %v4395
        %v4691 = vunpack.c.l.b16 %v4396
        %v4692 = vunpack.c.l.b16 %v4397
        %v4693 = vunpack.c.l.b16 %v4398
        %v4694 = vunpack.c.l.b16 %v4399
        %v4695 = vunpack.c.l.b16 %v4400
        %v4696 = vunpack.c.l.b16 %v4401
        %v4697 = vunpack.c.l.b16 %v4402
        %v4698 = vunpack.c.l.b16 %v4403
        %v4699 = vunpack.c.l.b16 %v4404
        %v4700 = vunpack.c.l.b16 %v4405
        %v4701 = vunpack.c.l.b16 %v4406
        %v4702 = vunpack.c.l.b16 %v4407
        %v4703 = vunpack.c.l.b16 %v4408
        %v4704 = vunpack.c.l.b16 %v4409
        %v4705 = vunpack.c.l.b16 %v4410
        %v4706 = vunpack.c.l.b16 %v4411
        %v4707 = vunpack.c.l.b16 %v4412
        %v4708 = vunpack.c.l.b16 %v4413
        %v4709 = vunpack.c.l.b16 %v4414
        %v4710 = vunpack.c.l.b16 %v4415
        %v4711 = vunpack.c.l.b16 %v4416
        %v4712 = vpack.c.b16 %v4569, %v4568
        %v4713 = vpack.c.b16 %v4571, %v4570
        %v4714 = vpack.c.b16 %v4573, %v4572
        %v4715 = vpack.c.b16 %v4575, %v4574
        %v4716 = vpack.c.b16 %v4577, %v4576
        %v4717 = vpack.c.b16 %v4579, %v4578
        %v4718 = vpack.c.b16 %v4581, %v4580
        %v4719 = vpack.c.b16 %v4583, %v4582
        %v4720 = vpack.c.b16 %v4585, %v4584
        %v4721 = vpack.c.b16 %v4587, %v4586
        %v4722 = vpack.c.b16 %v4589, %v4588
        %v4723 = vpack.c.b16 %v4591, %v4590
        %v4724 = vpack.c.b16 %v4593, %v4592
        %v4725 = vpack.c.b16 %v4595, %v4594
        %v4726 = vpack.c.b16 %v4597, %v4596
        %v4727 = vpack.c.b16 %v4599, %v4598
        %v4728 = vpack.c.b16 %v4601, %v4600
        %v4729 = vpack.c.b16 %v4603, %v4602
        %v4730 = vpack.c.b16 %v4605, %v4604
        %v4731 = vpack.c.b16 %v4607, %v4606
        %v4732 = vpack.c.b16 %v4609, %v4608
        %v4733 = vpack.c.b16 %v4611, %v4610
        %v4734 = vpack.c.b16 %v4613, %v4612
        %v4735 = vpack.c.b16 %v4615, %v4614
        %v4736 = vpack.c.b16 %v4617, %v4616
        %v4737 = vpack.c.b16 %v4619, %v4618
        %v4738 = vpack.c.b16 %v4621, %v4620
        %v4739 = vpack.c.b16 %v4623, %v4622
        %v4740 = vpack.c.b16 %v4625, %v4624
        %v4741 = vpack.c.b16 %v4627, %v4626
        %v4742 = vpack.c.b16 %v4629, %v4628
        %v4743 = vpack.c.b16 %v4631, %v4630
        %v4744 = vpack.c.b16 %v4633, %v4632
        %v4745 = vpack.c.b16 %v4635, %v4634
        %v4746 = vpack.c.b16 %v4637, %v4636
        %v4747 = vpack.c.b16 %v4639, %v4638
        %v4748 = vpack.c.b16 %v4641, %v4640
        %v4749 = vpack.c.b16 %v4643, %v4642
        %v4750 = vpack.c.b16 %v4645, %v4644
        %v4751 = vpack.c.b16 %v4647, %v4646
        %v4752 = vpack.c.b16 %v4649, %v4648
        %v4753 = vpack.c.b16 %v4651, %v4650
        %v4754 = vpack.c.b16 %v4653, %v4652
        %v4755 = vpack.c.b16 %v4655, %v4654
        %v4756 = vpack.c.b16 %v4657, %v4656
        %v4757 = vpack.c.b16 %v4659, %v4658
        %v4758 = vpack.c.b16 %v4661, %v4660
        %v4759 = vpack.c.b16 %v4663, %v4662
        %v4760 = vpack.c.b16 %v4665, %v4664
        %v4761 = vpack.c.b16 %v4667, %v4666
        %v4762 = vpack.c.b16 %v4669, %v4668
        %v4763 = vpack.c.b16 %v4671, %v4670
        %v4764 = vpack.c.b16 %v4673, %v4672
        %v4765 = vpack.c.b16 %v4675, %v4674
        %v4766 = vpack.c.b16 %v4677, %v4676
        %v4767 = vpack.c.b16 %v4679, %v4678
        %v4768 = vpack.c.b16 %v4681, %v4680
        %v4769 = vpack.c.b16 %v4683, %v4682
        %v4770 = vpack.c.b16 %v4685, %v4684
        %v4771 = vpack.c.b16 %v4687, %v4686
        %v4772 = vpack.c.b16 %v4689, %v4688
        %v4773 = vpack.c.b16 %v4691, %v4690
        %v4774 = vpack.c.b16 %v4693, %v4692
        %v4775 = vpack.c.b16 %v4695, %v4694
        %v4776 = vpack.c.b16 %v4697, %v4696
        %v4777 = vpack.c.b16 %v4699, %v4698
        %v4778 = vpack.c.b16 %v4701, %v4700
        %v4779 = vpack.c.b16 %v4703, %v4702
        %v4780 = vpack.c.b16 %v4705, %v4704
        %v4781 = vpack.c.b16 %v4707, %v4706
        %v4782 = vpack.c.b16 %v4709, %v4708
        %v4783 = vpack.c.b16 %v4711, %v4710
        %4856 = vmatprep.subr.bf16.mxu0 0
        %4857 = vmatpush1.bf16.msra.mxu0 %v4712
        %4858 = vmatprep.subr.bf16.mxu0 0
        %4859 = vmatpush1.bf16.msra.mxu0 %v4713
        %4860 = vmatprep.subr.bf16.mxu0 0
        %4861 = vmatpush1.bf16.msra.mxu0 %v4714
        %4862 = vmatprep.subr.bf16.mxu0 0
        %4863 = vmatpush1.bf16.msra.mxu0 %v4715
        %4864 = vmatprep.subr.bf16.mxu0 0
        %4865 = vmatpush1.bf16.msra.mxu0 %v4716
        %4866 = vmatprep.subr.bf16.mxu0 0
        %4867 = vmatpush1.bf16.msra.mxu0 %v4717
        %4868 = vmatprep.subr.bf16.mxu0 0
        %4869 = vmatpush1.bf16.msra.mxu0 %v4718
        %4870 = vmatprep.subr.bf16.mxu0 0
        %4871 = vmatpush1.bf16.msra.mxu0 %v4719
        %4872 = vmatprep.subr.bf16.mxu0 0
        %4873 = vmatpush1.bf16.msra.mxu0 %v4720
        %4874 = vmatprep.subr.bf16.mxu0 0
        %4875 = vmatpush1.bf16.msra.mxu0 %v4721
        %4876 = vmatprep.subr.bf16.mxu0 0
        %4877 = vmatpush1.bf16.msra.mxu0 %v4722
        %4878 = vmatprep.subr.bf16.mxu0 0
        %4879 = vmatpush1.bf16.msra.mxu0 %v4723
        %4880 = vmatprep.subr.bf16.mxu0 0
        %4881 = vmatpush1.bf16.msra.mxu0 %v4724
        %4882 = vmatprep.subr.bf16.mxu0 0
        %4883 = vmatpush1.bf16.msra.mxu0 %v4725
        %4884 = vmatprep.subr.bf16.mxu0 0
        %4885 = vmatpush1.bf16.msra.mxu0 %v4726
        %4886 = vmatprep.subr.bf16.mxu0 0
        %4887 = vmatpush1.bf16.msra.mxu0 %v4727
        %4888 = vmatprep.mubr.bf16.mxu0 %v4207
        %4889 = vmatmul.mubr.bf16.gmra.mrb[0].mxu0 %v4204
        %v4890 = vpop.f32.mrb[0].mxu0
        %v4891 = vadd.f32 %v4422, %v4890
        %v4892 = vpop.f32.mrb[0].mxu0
        %v4893 = vpop.f32.mrb[0].mxu0
        %v4894 = vadd.f32 %v4422, %v4893
        %v4895 = vpop.f32.mrb[0].mxu0
        %4896 = vmatprep.mubr.bf16.mxu0 %v4208
        %4897 = vmatmul.mubr.bf16.gmra.mrb[0].mxu0 %v4205
        %v4898 = vpop.f32.mrb[0].mxu0
        %v4899 = vadd.f32 %v4422, %v4898
        %v4900 = vpop.f32.mrb[0].mxu0
        %v4901 = vpop.f32.mrb[0].mxu0
        %v4902 = vadd.f32 %v4422, %v4901
        %v4903 = vpop.f32.mrb[0].mxu0
        %4904 = vmatprep.mubr.bf16.mxu0 %v4209
        %4905 = vmatmul.mubr.bf16.gmra.mrb[0].mxu0 %v4206
        %v4906 = vpop.f32.mrb[0].mxu0
        %v4907 = vadd.f32 %v4422, %v4906
        %v4908 = vpop.f32.mrb[0].mxu0
        %v4909 = vpop.f32.mrb[0].mxu0
        %v4910 = vadd.f32 %v4422, %v4909
        %v4911 = vpop.f32.mrb[0].mxu0
        %4912 = vmatprep.mubr.bf16.mxu0 %v4210
        %4913 = vmatmul.mubr.bf16.gmra.mrb[0].mxu0 %v4207
        %v4914 = vpop.f32.mrb[0].mxu0
        %v4915 = vadd.f32 %v4422, %v4914
        %v4916 = vpop.f32.mrb[0].mxu0
        %v4917 = vpop.f32.mrb[0].mxu0
        %v4918 = vadd.f32 %v4422, %v4917
        %v4919 = vpop.f32.mrb[0].mxu0
        %4920 = vmatprep.mubr.bf16.mxu0 %v4211
        %4921 = vmatmul.mubr.bf16.gmra.mrb[0].mxu0 %v4208
        %v4922 = vpop.f32.mrb[0].mxu0
        %v4923 = vadd.f32 %v4422, %v4922
        %v4924 = vpop.f32.mrb[0].mxu0
        %v4925 = vpop.f32.mrb[0].mxu0
        %v4926 = vadd.f32 %v4422, %v4925
        %v4927 = vpop.f32.mrb[0].mxu0
        %4928 = vmatprep.mubr.bf16.mxu0 %v4212
        %4929 = vmatmul.mubr.bf16.gmra.mrb[0].mxu0 %v4209
        %v4930 = vpop.f32.mrb[0].mxu0
        %v4931 = vadd.f32 %v4422, %v4930
        %v4932 = vpop.f32.mrb[0].mxu0
        %v4933 = vpop.f32.mrb[0].mxu0
        %v4934 = vadd.f32 %v4422, %v4933
        %v4935 = vpop.f32.mrb[0].mxu0
        %4936 = vmatprep.mubr.bf16.mxu0 %v4213
        %4937 = vmatmul.mubr.bf16.gmra.mrb[0].mxu0 %v4210
        %v4938 = vpop.f32.mrb[0].mxu0
        %v4939 = vadd.f32 %v4422, %v4938
        %v4940 = vpop.f32.mrb[0].mxu0
        %v4941 = vpop.f32.mrb[0].mxu0
        %v4942 = vadd.f32 %v4422, %v4941
        %v4943 = vpop.f32.mrb[0].mxu0
        %4944 = vmatprep.mubr.bf16.mxu0 %v4214
        %4945 = vmatmul.mubr.bf16.gmra.mrb[0].mxu0 %v4211
        %v4946 = vpop.f32.mrb[0].mxu0
        %v4947 = vadd.f32 %v4422, %v4946
        %v4948 = vpop.f32.mrb[0].mxu0
        %v4949 = vpop.f32.mrb[0].mxu0
        %v4950 = vadd.f32 %v4422, %v4949
        %v4951 = vpop.f32.mrb[0].mxu0
        %4952 = vmatprep.mubr.bf16.mxu0 %v4215
        %4953 = vmatmul.mubr.bf16.gmra.mrb[0].mxu0 %v4212
        %v4954 = vpop.f32.mrb[0].mxu0
        %v4955 = vadd.f32 %v4422, %v4954
        %v4956 = vpop.f32.mrb[0].mxu0
        %v4957 = vpop.f32.mrb[0].mxu0
        %v4958 = vadd.f32 %v4422, %v4957
        %v4959 = vpop.f32.mrb[0].mxu0
        %4960 = vmatprep.mubr.bf16.mxu0 %v4216
        %4961 = vmatmul.mubr.bf16.gmra.mrb[0].mxu0 %v4213
        %v4962 = vpop.f32.mrb[0].mxu0
        %v4963 = vadd.f32 %v4422, %v4962
        %v4964 = vpop.f32.mrb[0].mxu0
        %v4965 = vpop.f32.mrb[0].mxu0
        %v4966 = vadd.f32 %v4422, %v4965
        %v4967 = vpop.f32.mrb[0].mxu0
        %4968 = vmatprep.mubr.bf16.mxu0 %v4217
        %4969 = vmatmul.mubr.bf16.gmra.mrb[0].mxu0 %v4214
        %v4970 = vpop.f32.mrb[0].mxu0
        %v4971 = vadd.f32 %v4422, %v4970
        %v4972 = vpop.f32.mrb[0].mxu0
        %v4973 = vpop.f32.mrb[0].mxu0
        %v4974 = vadd.f32 %v4422, %v4973
        %v4975 = vpop.f32.mrb[0].mxu0
        %4976 = vmatprep.mubr.bf16.mxu0 %v4218
        %4977 = vmatmul.mubr.bf16.gmra.mrb[0].mxu0 %v4215
        %v4978 = vpop.f32.mrb[0].mxu0
        %v4979 = vadd.f32 %v4422, %v4978
        %v4980 = vpop.f32.mrb[0].mxu0
        %v4981 = vpop.f32.mrb[0].mxu0
        %v4982 = vadd.f32 %v4422, %v4981
        %v4983 = vpop.f32.mrb[0].mxu0
        %4984 = vmatprep.mubr.bf16.mxu0 %v4219
        %4985 = vmatmul.mubr.bf16.gmra.mrb[0].mxu0 %v4216
        %v4986 = vpop.f32.mrb[0].mxu0
        %v4987 = vadd.f32 %v4422, %v4986
        %v4988 = vpop.f32.mrb[0].mxu0
        %v4989 = vpop.f32.mrb[0].mxu0
        %v4990 = vadd.f32 %v4422, %v4989
        %v4991 = vpop.f32.mrb[0].mxu0
        %4992 = vmatprep.mubr.bf16.mxu0 %v4220
        %4993 = vmatmul.mubr.bf16.gmra.mrb[0].mxu0 %v4217
        %v4994 = vpop.f32.mrb[0].mxu0
        %v4995 = vadd.f32 %v4422, %v4994
        %v4996 = vpop.f32.mrb[0].mxu0
        %v4997 = vpop.f32.mrb[0].mxu0
        %v4998 = vadd.f32 %v4422, %v4997
        %v4999 = vpop.f32.mrb[0].mxu0
        %5000 = vmatprep.mubr.bf16.mxu0 %v4221
        %5001 = vmatmul.mubr.bf16.gmra.mrb[0].mxu0 %v4218
        %v5002 = vpop.f32.mrb[0].mxu0
        %v5003 = vadd.f32 %v4422, %v5002
        %v5004 = vpop.f32.mrb[0].mxu0
        %v5005 = vpop.f32.mrb[0].mxu0
        %v5006 = vadd.f32 %v4422, %v5005
        %v5007 = vpop.f32.mrb[0].mxu0
        %5008 = vmatprep.mubr.bf16.mxu0 %v4222
        %5009 = vmatmul.mubr.bf16.gmra.mrb[0].mxu0 %v4219
        %v5010 = vpop.f32.mrb[0].mxu0
        %v5011 = vadd.f32 %v4422, %v5010
        %v5012 = vpop.f32.mrb[0].mxu0
        %v5013 = vpop.f32.mrb[0].mxu0
        %v5014 = vadd.f32 %v4422, %v5013
        %v5015 = vpop.f32.mrb[0].mxu0
        %5016 = vmatprep.mubr.bf16.mxu0 %v4223
        %5017 = vmatmul.mubr.bf16.gmra.mrb[0].mxu0 %v4220
        %v5018 = vpop.f32.mrb[0].mxu0
        %v5019 = vadd.f32 %v4422, %v5018
        %v5020 = vpop.f32.mrb[0].mxu0
        %v5021 = vpop.f32.mrb[0].mxu0
        %v5022 = vadd.f32 %v4422, %v5021
        %v5023 = vpop.f32.mrb[0].mxu0
        %5024 = vmatprep.mubr.bf16.mxu0 %v4224
        %5025 = vmatmul.mubr.bf16.gmra.mrb[0].mxu0 %v4221
        %v5026 = vpop.f32.mrb[0].mxu0
        %v5027 = vadd.f32 %v4422, %v5026
        %v5028 = vpop.f32.mrb[0].mxu0
        %v5029 = vpop.f32.mrb[0].mxu0
        %v5030 = vadd.f32 %v4422, %v5029
        %v5031 = vpop.f32.mrb[0].mxu0
        %5032 = vmatprep.mubr.bf16.mxu0 %v4225
        %5033 = vmatmul.mubr.bf16.gmra.mrb[0].mxu0 %v4222
        %v5034 = vpop.f32.mrb[0].mxu0
        %v5035 = vadd.f32 %v4422, %v5034
        %v5036 = vpop.f32.mrb[0].mxu0
        %v5037 = vpop.f32.mrb[0].mxu0
        %v5038 = vadd.f32 %v4422, %v5037
        %v5039 = vpop.f32.mrb[0].mxu0
        %5040 = vmatprep.mubr.bf16.mxu0 %v4226
        %5041 = vmatmul.mubr.bf16.gmra.mrb[0].mxu0 %v4223
        %v5042 = vpop.f32.mrb[0].mxu0
        %v5043 = vadd.f32 %v4422, %v5042
        %v5044 = vpop.f32.mrb[0].mxu0
        %v5045 = vpop.f32.mrb[0].mxu0
        %v5046 = vadd.f32 %v4422, %v5045
        %v5047 = vpop.f32.mrb[0].mxu0
        %5048 = vmatprep.mubr.bf16.mxu0 %v4227
        %5049 = vmatmul.mubr.bf16.gmra.mrb[0].mxu0 %v4224
        %v5050 = vpop.f32.mrb[0].mxu0
        %v5051 = vadd.f32 %v4422, %v5050
        %v5052 = vpop.f32.mrb[0].mxu0
        %v5053 = vpop.f32.mrb[0].mxu0
        %v5054 = vadd.f32 %v4422, %v5053
        %v5055 = vpop.f32.mrb[0].mxu0
        %5056 = vmatprep.mubr.bf16.mxu0 %v4228
        %5057 = vmatmul.mubr.bf16.gmra.mrb[0].mxu0 %v4225
        %v5058 = vpop.f32.mrb[0].mxu0
        %v5059 = vadd.f32 %v4422, %v5058
        %v5060 = vpop.f32.mrb[0].mxu0
        %v5061 = vpop.f32.mrb[0].mxu0
        %v5062 = vadd.f32 %v4422, %v5061
        %v5063 = vpop.f32.mrb[0].mxu0
        %5064 = vmatprep.mubr.bf16.mxu0 %v4229
        %5065 = vmatmul.mubr.bf16.gmra.mrb[0].mxu0 %v4226
        %v5066 = vpop.f32.mrb[0].mxu0
        %v5067 = vadd.f32 %v4422, %v5066
        %v5068 = vpop.f32.mrb[0].mxu0
        %v5069 = vpop.f32.mrb[0].mxu0
        %v5070 = vadd.f32 %v4422, %v5069
        %v5071 = vpop.f32.mrb[0].mxu0
        %5072 = vmatprep.mubr.bf16.mxu0 %v4230
        %5073 = vmatmul.mubr.bf16.gmra.mrb[0].mxu0 %v4227
        %v5074 = vpop.f32.mrb[0].mxu0
        %v5075 = vadd.f32 %v4422, %v5074
        %v5076 = vpop.f32.mrb[0].mxu0
        %v5077 = vpop.f32.mrb[0].mxu0
        %v5078 = vadd.f32 %v4422, %v5077
        %v5079 = vpop.f32.mrb[0].mxu0
        %5080 = vdwg.mxu0
        %5081 = vmatprep.subr.bf16.mxu0 0
        %5082 = vmatpush1.bf16.msra.mxu0 %v4728
        %5083 = vmatprep.subr.bf16.mxu0 0
        %5084 = vmatpush1.bf16.msra.mxu0 %v4729
        %5085 = vmatprep.subr.bf16.mxu0 0
        %5086 = vmatpush1.bf16.msra.mxu0 %v4730
        %5087 = vmatprep.subr.bf16.mxu0 0
        %5088 = vmatpush1.bf16.msra.mxu0 %v4731
        %5089 = vmatprep.subr.bf16.mxu0 0
        %5090 = vmatpush1.bf16.msra.mxu0 %v4732
        %5091 = vmatprep.subr.bf16.mxu0 0
        %5092 = vmatpush1.bf16.msra.mxu0 %v4733
        %5093 = vmatprep.subr.bf16.mxu0 0
        %5094 = vmatpush1.bf16.msra.mxu0 %v4734
        %5095 = vmatprep.subr.bf16.mxu0 0
        %5096 = vmatpush1.bf16.msra.mxu0 %v4735
        %5097 = vmatprep.subr.bf16.mxu0 0
        %5098 = vmatpush1.bf16.msra.mxu0 %v4736
        %5099 = vmatprep.subr.bf16.mxu0 0
        %5100 = vmatpush1.bf16.msra.mxu0 %v4737
        %5101 = vmatprep.subr.bf16.mxu0 0
        %5102 = vmatpush1.bf16.msra.mxu0 %v4738
        %5103 = vmatprep.subr.bf16.mxu0 0
        %5104 = vmatpush1.bf16.msra.mxu0 %v4739
        %5105 = vmatprep.subr.bf16.mxu0 0
        %5106 = vmatpush1.bf16.msra.mxu0 %v4740
        %5107 = vmatprep.subr.bf16.mxu0 0
        %5108 = vmatpush1.bf16.msra.mxu0 %v4741
        %5109 = vmatprep.subr.bf16.mxu0 0
        %5110 = vmatpush1.bf16.msra.mxu0 %v4742
        %5111 = vmatprep.subr.bf16.mxu0 0
        %5112 = vmatpush1.bf16.msra.mxu0 %v4743
        %5113 = vmatprep.mubr.bf16.mxu0 %v4213
        %5114 = vmatmul.mubr.bf16.gmra.mrb[0].mxu0 %v4210
        %v5115 = vpop.f32.mrb[0].mxu0
        %v5116 = vadd.f32 %v4891, %v5115
        %v5117 = vpop.f32.mrb[0].mxu0
        %v5118 = vpop.f32.mrb[0].mxu0
        %v5119 = vadd.f32 %v4894, %v5118
        %v5120 = vpop.f32.mrb[0].mxu0
        %5121 = vmatprep.mubr.bf16.mxu0 %v4214
        %5122 = vmatmul.mubr.bf16.gmra.mrb[0].mxu0 %v4211
        %v5123 = vpop.f32.mrb[0].mxu0
        %v5124 = vadd.f32 %v4899, %v5123
        %v5125 = vpop.f32.mrb[0].mxu0
        %v5126 = vpop.f32.mrb[0].mxu0
        %v5127 = vadd.f32 %v4902, %v5126
        %v5128 = vpop.f32.mrb[0].mxu0
        %5129 = vmatprep.mubr.bf16.mxu0 %v4215
        %5130 = vmatmul.mubr.bf16.gmra.mrb[0].mxu0 %v4212
        %v5131 = vpop.f32.mrb[0].mxu0
        %v5132 = vadd.f32 %v4907, %v5131
        %v5133 = vpop.f32.mrb[0].mxu0
        %v5134 = vpop.f32.mrb[0].mxu0
        %v5135 = vadd.f32 %v4910, %v5134
        %v5136 = vpop.f32.mrb[0].mxu0
        %5137 = vmatprep.mubr.bf16.mxu0 %v4216
        %5138 = vmatmul.mubr.bf16.gmra.mrb[0].mxu0 %v4213
        %v5139 = vpop.f32.mrb[0].mxu0
        %v5140 = vadd.f32 %v4915, %v5139
        %v5141 = vpop.f32.mrb[0].mxu0
        %v5142 = vpop.f32.mrb[0].mxu0
        %v5143 = vadd.f32 %v4918, %v5142
        %v5144 = vpop.f32.mrb[0].mxu0
        %5145 = vmatprep.mubr.bf16.mxu0 %v4217
        %5146 = vmatmul.mubr.bf16.gmra.mrb[0].mxu0 %v4214
        %v5147 = vpop.f32.mrb[0].mxu0
        %v5148 = vadd.f32 %v4923, %v5147
        %v5149 = vpop.f32.mrb[0].mxu0
        %v5150 = vpop.f32.mrb[0].mxu0
        %v5151 = vadd.f32 %v4926, %v5150
        %v5152 = vpop.f32.mrb[0].mxu0
        %5153 = vmatprep.mubr.bf16.mxu0 %v4218
        %5154 = vmatmul.mubr.bf16.gmra.mrb[0].mxu0 %v4215
        %v5155 = vpop.f32.mrb[0].mxu0
        %v5156 = vadd.f32 %v4931, %v5155
        %v5157 = vpop.f32.mrb[0].mxu0
        %v5158 = vpop.f32.mrb[0].mxu0
        %v5159 = vadd.f32 %v4934, %v5158
        %v5160 = vpop.f32.mrb[0].mxu0
        %5161 = vmatprep.mubr.bf16.mxu0 %v4219
        %5162 = vmatmul.mubr.bf16.gmra.mrb[0].mxu0 %v4216
        %v5163 = vpop.f32.mrb[0].mxu0
        %v5164 = vadd.f32 %v4939, %v5163
        %v5165 = vpop.f32.mrb[0].mxu0
        %v5166 = vpop.f32.mrb[0].mxu0
        %v5167 = vadd.f32 %v4942, %v5166
        %v5168 = vpop.f32.mrb[0].mxu0
        %5169 = vmatprep.mubr.bf16.mxu0 %v4220
        %5170 = vmatmul.mubr.bf16.gmra.mrb[0].mxu0 %v4217
        %v5171 = vpop.f32.mrb[0].mxu0
        %v5172 = vadd.f32 %v4947, %v5171
        %v5173 = vpop.f32.mrb[0].mxu0
        %v5174 = vpop.f32.mrb[0].mxu0
        %v5175 = vadd.f32 %v4950, %v5174
        %v5176 = vpop.f32.mrb[0].mxu0
        %5177 = vmatprep.mubr.bf16.mxu0 %v4221
        %5178 = vmatmul.mubr.bf16.gmra.mrb[0].mxu0 %v4218
        %v5179 = vpop.f32.mrb[0].mxu0
        %v5180 = vadd.f32 %v4955, %v5179
        %v5181 = vpop.f32.mrb[0].mxu0
        %v5182 = vpop.f32.mrb[0].mxu0
        %v5183 = vadd.f32 %v4958, %v5182
        %v5184 = vpop.f32.mrb[0].mxu0
        %5185 = vmatprep.mubr.bf16.mxu0 %v4222
        %5186 = vmatmul.mubr.bf16.gmra.mrb[0].mxu0 %v4219
        %v5187 = vpop.f32.mrb[0].mxu0
        %v5188 = vadd.f32 %v4963, %v5187
        %v5189 = vpop.f32.mrb[0].mxu0
        %v5190 = vpop.f32.mrb[0].mxu0
        %v5191 = vadd.f32 %v4966, %v5190
        %v5192 = vpop.f32.mrb[0].mxu0
        %5193 = vmatprep.mubr.bf16.mxu0 %v4223
        %5194 = vmatmul.mubr.bf16.gmra.mrb[0].mxu0 %v4220
        %v5195 = vpop.f32.mrb[0].mxu0
        %v5196 = vadd.f32 %v4971, %v5195
        %v5197 = vpop.f32.mrb[0].mxu0
        %v5198 = vpop.f32.mrb[0].mxu0
        %v5199 = vadd.f32 %v4974, %v5198
        %v5200 = vpop.f32.mrb[0].mxu0
        %5201 = vmatprep.mubr.bf16.mxu0 %v4224
        %5202 = vmatmul.mubr.bf16.gmra.mrb[0].mxu0 %v4221
        %v5203 = vpop.f32.mrb[0].mxu0
        %v5204 = vadd.f32 %v4979, %v5203
        %v5205 = vpop.f32.mrb[0].mxu0
        %v5206 = vpop.f32.mrb[0].mxu0
        %v5207 = vadd.f32 %v4982, %v5206
        %v5208 = vpop.f32.mrb[0].mxu0
        %5209 = vmatprep.mubr.bf16.mxu0 %v4225
        %5210 = vmatmul.mubr.bf16.gmra.mrb[0].mxu0 %v4222
        %v5211 = vpop.f32.mrb[0].mxu0
        %v5212 = vadd.f32 %v4987, %v5211
        %v5213 = vpop.f32.mrb[0].mxu0
        %v5214 = vpop.f32.mrb[0].mxu0
        %v5215 = vadd.f32 %v4990, %v5214
        %v5216 = vpop.f32.mrb[0].mxu0
        %5217 = vmatprep.mubr.bf16.mxu0 %v4226
        %5218 = vmatmul.mubr.bf16.gmra.mrb[0].mxu0 %v4223
        %v5219 = vpop.f32.mrb[0].mxu0
        %v5220 = vadd.f32 %v4995, %v5219
        %v5221 = vpop.f32.mrb[0].mxu0
        %v5222 = vpop.f32.mrb[0].mxu0
        %v5223 = vadd.f32 %v4998, %v5222
        %v5224 = vpop.f32.mrb[0].mxu0
        %5225 = vmatprep.mubr.bf16.mxu0 %v4227
        %5226 = vmatmul.mubr.bf16.gmra.mrb[0].mxu0 %v4224
        %v5227 = vpop.f32.mrb[0].mxu0
        %v5228 = vadd.f32 %v5003, %v5227
        %v5229 = vpop.f32.mrb[0].mxu0
        %v5230 = vpop.f32.mrb[0].mxu0
        %v5231 = vadd.f32 %v5006, %v5230
        %v5232 = vpop.f32.mrb[0].mxu0
        %5233 = vmatprep.mubr.bf16.mxu0 %v4228
        %5234 = vmatmul.mubr.bf16.gmra.mrb[0].mxu0 %v4225
        %v5235 = vpop.f32.mrb[0].mxu0
        %v5236 = vadd.f32 %v5011, %v5235
        %v5237 = vpop.f32.mrb[0].mxu0
        %v5238 = vpop.f32.mrb[0].mxu0
        %v5239 = vadd.f32 %v5014, %v5238
        %v5240 = vpop.f32.mrb[0].mxu0
        %5241 = vmatprep.mubr.bf16.mxu0 %v4229
        %5242 = vmatmul.mubr.bf16.gmra.mrb[0].mxu0 %v4226
        %v5243 = vpop.f32.mrb[0].mxu0
        %v5244 = vadd.f32 %v5019, %v5243
        %v5245 = vpop.f32.mrb[0].mxu0
        %v5246 = vpop.f32.mrb[0].mxu0
        %v5247 = vadd.f32 %v5022, %v5246
        %v5248 = vpop.f32.mrb[0].mxu0
        %5249 = vmatprep.mubr.bf16.mxu0 %v4230
        %5250 = vmatmul.mubr.bf16.gmra.mrb[0].mxu0 %v4227
        %v5251 = vpop.f32.mrb[0].mxu0
        %v5252 = vadd.f32 %v5027, %v5251
        %v5253 = vpop.f32.mrb[0].mxu0
        %v5254 = vpop.f32.mrb[0].mxu0
        %v5255 = vadd.f32 %v5030, %v5254
        %v5256 = vpop.f32.mrb[0].mxu0
        %5257 = vmatprep.mubr.bf16.mxu0 %v4231
        %5258 = vmatmul.mubr.bf16.gmra.mrb[0].mxu0 %v4228
        %v5259 = vpop.f32.mrb[0].mxu0
        %v5260 = vadd.f32 %v5035, %v5259
        %v5261 = vpop.f32.mrb[0].mxu0
        %v5262 = vpop.f32.mrb[0].mxu0
        %v5263 = vadd.f32 %v5038, %v5262
        %v5264 = vpop.f32.mrb[0].mxu0
        %5265 = vmatprep.mubr.bf16.mxu0 %v4232
        %5266 = vmatmul.mubr.bf16.gmra.mrb[0].mxu0 %v4229
        %v5267 = vpop.f32.mrb[0].mxu0
        %v5268 = vadd.f32 %v5043, %v5267
        %v5269 = vpop.f32.mrb[0].mxu0
        %v5270 = vpop.f32.mrb[0].mxu0
        %v5271 = vadd.f32 %v5046, %v5270
        %v5272 = vpop.f32.mrb[0].mxu0
        %5273 = vmatprep.mubr.bf16.mxu0 %v4233
        %5274 = vmatmul.mubr.bf16.gmra.mrb[0].mxu0 %v4230
        %v5275 = vpop.f32.mrb[0].mxu0
        %v5276 = vadd.f32 %v5051, %v5275
        %v5277 = vpop.f32.mrb[0].mxu0
        %v5278 = vpop.f32.mrb[0].mxu0
        %v5279 = vadd.f32 %v5054, %v5278
        %v5280 = vpop.f32.mrb[0].mxu0
        %5281 = vmatprep.mubr.bf16.mxu0 %v4234
        %5282 = vmatmul.mubr.bf16.gmra.mrb[0].mxu0 %v4231
        %v5283 = vpop.f32.mrb[0].mxu0
        %v5284 = vadd.f32 %v5059, %v5283
        %v5285 = vpop.f32.mrb[0].mxu0
        %v5286 = vpop.f32.mrb[0].mxu0
        %v5287 = vadd.f32 %v5062, %v5286
        %v5288 = vpop.f32.mrb[0].mxu0
        %5289 = vmatprep.mubr.bf16.mxu0 %v4235
        %5290 = vmatmul.mubr.bf16.gmra.mrb[0].mxu0 %v4232
        %v5291 = vpop.f32.mrb[0].mxu0
        %v5292 = vadd.f32 %v5067, %v5291
        %v5293 = vpop.f32.mrb[0].mxu0
        %v5294 = vpop.f32.mrb[0].mxu0
        %v5295 = vadd.f32 %v5070, %v5294
        %v5296 = vpop.f32.mrb[0].mxu0
        %5297 = vmatprep.mubr.bf16.mxu0 %v4236
        %5298 = vmatmul.mubr.bf16.gmra.mrb[0].mxu0 %v4233
        %v5299 = vpop.f32.mrb[0].mxu0
        %v5300 = vadd.f32 %v5075, %v5299
        %v5301 = vpop.f32.mrb[0].mxu0
        %v5302 = vpop.f32.mrb[0].mxu0
        %v5303 = vadd.f32 %v5078, %v5302
        %v5304 = vpop.f32.mrb[0].mxu0
        %5305 = vdwg.mxu0
        %5306 = vmatprep.subr.bf16.mxu0 0
        %5307 = vmatpush1.bf16.msra.mxu0 %v4744
        %5308 = vmatprep.subr.bf16.mxu0 0
        %5309 = vmatpush1.bf16.msra.mxu0 %v4745
        %5310 = vmatprep.subr.bf16.mxu0 0
        %5311 = vmatpush1.bf16.msra.mxu0 %v4746
        %5312 = vmatprep.subr.bf16.mxu0 0
        %5313 = vmatpush1.bf16.msra.mxu0 %v4747
        %5314 = vmatprep.subr.bf16.mxu0 0
        %5315 = vmatpush1.bf16.msra.mxu0 %v4748
        %5316 = vmatprep.subr.bf16.mxu0 0
        %5317 = vmatpush1.bf16.msra.mxu0 %v4749
        %5318 = vmatprep.subr.bf16.mxu0 0
        %5319 = vmatpush1.bf16.msra.mxu0 %v4750
        %5320 = vmatprep.subr.bf16.mxu0 0
        %5321 = vmatpush1.bf16.msra.mxu0 %v4751
        %5322 = vmatprep.subr.bf16.mxu0 0
        %5323 = vmatpush1.bf16.msra.mxu0 %v4752
        %5324 = vmatprep.subr.bf16.mxu0 0
        %5325 = vmatpush1.bf16.msra.mxu0 %v4753
        %5326 = vmatprep.subr.bf16.mxu0 0
        %5327 = vmatpush1.bf16.msra.mxu0 %v4754
        %5328 = vmatprep.subr.bf16.mxu0 0
        %5329 = vmatpush1.bf16.msra.mxu0 %v4755
        %5330 = vmatprep.subr.bf16.mxu0 0
        %5331 = vmatpush1.bf16.msra.mxu0 %v4756
        %5332 = vmatprep.subr.bf16.mxu0 0
        %5333 = vmatpush1.bf16.msra.mxu0 %v4757
        %5334 = vmatprep.subr.bf16.mxu0 0
        %5335 = vmatpush1.bf16.msra.mxu0 %v4758
        %5336 = vmatprep.subr.bf16.mxu0 0
        %5337 = vmatpush1.bf16.msra.mxu0 %v4759
        %5338 = vmatprep.mubr.bf16.mxu0 %v4219
        %5339 = vmatmul.mubr.bf16.gmra.mrb[0].mxu0 %v4216
        %v5340 = vpop.f32.mrb[0].mxu0
        %v5341 = vadd.f32 %v5116, %v5340
        %v5342 = vpop.f32.mrb[0].mxu0
        %v5343 = vpop.f32.mrb[0].mxu0
        %v5344 = vadd.f32 %v5119, %v5343
        %v5345 = vpop.f32.mrb[0].mxu0
        %5346 = vmatprep.mubr.bf16.mxu0 %v4220
        %5347 = vmatmul.mubr.bf16.gmra.mrb[0].mxu0 %v4217
        %v5348 = vpop.f32.mrb[0].mxu0
        %v5349 = vadd.f32 %v5124, %v5348
        %v5350 = vpop.f32.mrb[0].mxu0
        %v5351 = vpop.f32.mrb[0].mxu0
        %v5352 = vadd.f32 %v5127, %v5351
        %v5353 = vpop.f32.mrb[0].mxu0
        %5354 = vmatprep.mubr.bf16.mxu0 %v4221
        %5355 = vmatmul.mubr.bf16.gmra.mrb[0].mxu0 %v4218
        %v5356 = vpop.f32.mrb[0].mxu0
        %v5357 = vadd.f32 %v5132, %v5356
        %v5358 = vpop.f32.mrb[0].mxu0
        %v5359 = vpop.f32.mrb[0].mxu0
        %v5360 = vadd.f32 %v5135, %v5359
        %v5361 = vpop.f32.mrb[0].mxu0
        %5362 = vmatprep.mubr.bf16.mxu0 %v4222
        %5363 = vmatmul.mubr.bf16.gmra.mrb[0].mxu0 %v4219
        %v5364 = vpop.f32.mrb[0].mxu0
        %v5365 = vadd.f32 %v5140, %v5364
        %v5366 = vpop.f32.mrb[0].mxu0
        %v5367 = vpop.f32.mrb[0].mxu0
        %v5368 = vadd.f32 %v5143, %v5367
        %v5369 = vpop.f32.mrb[0].mxu0
        %5370 = vmatprep.mubr.bf16.mxu0 %v4223
        %5371 = vmatmul.mubr.bf16.gmra.mrb[0].mxu0 %v4220
        %v5372 = vpop.f32.mrb[0].mxu0
        %v5373 = vadd.f32 %v5148, %v5372
        %v5374 = vpop.f32.mrb[0].mxu0
        %v5375 = vpop.f32.mrb[0].mxu0
        %v5376 = vadd.f32 %v5151, %v5375
        %v5377 = vpop.f32.mrb[0].mxu0
        %5378 = vmatprep.mubr.bf16.mxu0 %v4224
        %5379 = vmatmul.mubr.bf16.gmra.mrb[0].mxu0 %v4221
        %v5380 = vpop.f32.mrb[0].mxu0
        %v5381 = vadd.f32 %v5156, %v5380
        %v5382 = vpop.f32.mrb[0].mxu0
        %v5383 = vpop.f32.mrb[0].mxu0
        %v5384 = vadd.f32 %v5159, %v5383
        %v5385 = vpop.f32.mrb[0].mxu0
        %5386 = vmatprep.mubr.bf16.mxu0 %v4225
        %5387 = vmatmul.mubr.bf16.gmra.mrb[0].mxu0 %v4222
        %v5388 = vpop.f32.mrb[0].mxu0
        %v5389 = vadd.f32 %v5164, %v5388
        %v5390 = vpop.f32.mrb[0].mxu0
        %v5391 = vpop.f32.mrb[0].mxu0
        %v5392 = vadd.f32 %v5167, %v5391
        %v5393 = vpop.f32.mrb[0].mxu0
        %5394 = vmatprep.mubr.bf16.mxu0 %v4226
        %5395 = vmatmul.mubr.bf16.gmra.mrb[0].mxu0 %v4223
        %v5396 = vpop.f32.mrb[0].mxu0
        %v5397 = vadd.f32 %v5172, %v5396
        %v5398 = vpop.f32.mrb[0].mxu0
        %v5399 = vpop.f32.mrb[0].mxu0
        %v5400 = vadd.f32 %v5175, %v5399
        %v5401 = vpop.f32.mrb[0].mxu0
        %5402 = vmatprep.mubr.bf16.mxu0 %v4227
        %5403 = vmatmul.mubr.bf16.gmra.mrb[0].mxu0 %v4224
        %v5404 = vpop.f32.mrb[0].mxu0
        %v5405 = vadd.f32 %v5180, %v5404
        %v5406 = vpop.f32.mrb[0].mxu0
        %v5407 = vpop.f32.mrb[0].mxu0
        %v5408 = vadd.f32 %v5183, %v5407
        %v5409 = vpop.f32.mrb[0].mxu0
        %5410 = vmatprep.mubr.bf16.mxu0 %v4228
        %5411 = vmatmul.mubr.bf16.gmra.mrb[0].mxu0 %v4225
        %v5412 = vpop.f32.mrb[0].mxu0
        %v5413 = vadd.f32 %v5188, %v5412
        %v5414 = vpop.f32.mrb[0].mxu0
        %v5415 = vpop.f32.mrb[0].mxu0
        %v5416 = vadd.f32 %v5191, %v5415
        %v5417 = vpop.f32.mrb[0].mxu0
        %5418 = vmatprep.mubr.bf16.mxu0 %v4229
        %5419 = vmatmul.mubr.bf16.gmra.mrb[0].mxu0 %v4226
        %v5420 = vpop.f32.mrb[0].mxu0
        %v5421 = vadd.f32 %v5196, %v5420
        %v5422 = vpop.f32.mrb[0].mxu0
        %v5423 = vpop.f32.mrb[0].mxu0
        %v5424 = vadd.f32 %v5199, %v5423
        %v5425 = vpop.f32.mrb[0].mxu0
        %5426 = vmatprep.mubr.bf16.mxu0 %v4230
        %5427 = vmatmul.mubr.bf16.gmra.mrb[0].mxu0 %v4227
        %v5428 = vpop.f32.mrb[0].mxu0
        %v5429 = vadd.f32 %v5204, %v5428
        %v5430 = vpop.f32.mrb[0].mxu0
        %v5431 = vpop.f32.mrb[0].mxu0
        %v5432 = vadd.f32 %v5207, %v5431
        %v5433 = vpop.f32.mrb[0].mxu0
        %5434 = vmatprep.mubr.bf16.mxu0 %v4231
        %5435 = vmatmul.mubr.bf16.gmra.mrb[0].mxu0 %v4228
        %v5436 = vpop.f32.mrb[0].mxu0
        %v5437 = vadd.f32 %v5212, %v5436
        %v5438 = vpop.f32.mrb[0].mxu0
        %v5439 = vpop.f32.mrb[0].mxu0
        %v5440 = vadd.f32 %v5215, %v5439
        %v5441 = vpop.f32.mrb[0].mxu0
        %5442 = vmatprep.mubr.bf16.mxu0 %v4232
        %5443 = vmatmul.mubr.bf16.gmra.mrb[0].mxu0 %v4229
        %v5444 = vpop.f32.mrb[0].mxu0
        %v5445 = vadd.f32 %v5220, %v5444
        %v5446 = vpop.f32.mrb[0].mxu0
        %v5447 = vpop.f32.mrb[0].mxu0
        %v5448 = vadd.f32 %v5223, %v5447
        %v5449 = vpop.f32.mrb[0].mxu0
        %5450 = vmatprep.mubr.bf16.mxu0 %v4233
        %5451 = vmatmul.mubr.bf16.gmra.mrb[0].mxu0 %v4230
        %v5452 = vpop.f32.mrb[0].mxu0
        %v5453 = vadd.f32 %v5228, %v5452
        %v5454 = vpop.f32.mrb[0].mxu0
        %v5455 = vpop.f32.mrb[0].mxu0
        %v5456 = vadd.f32 %v5231, %v5455
        %v5457 = vpop.f32.mrb[0].mxu0
        %5458 = vmatprep.mubr.bf16.mxu0 %v4234
        %5459 = vmatmul.mubr.bf16.gmra.mrb[0].mxu0 %v4231
        %v5460 = vpop.f32.mrb[0].mxu0
        %v5461 = vadd.f32 %v5236, %v5460
        %v5462 = vpop.f32.mrb[0].mxu0
        %v5463 = vpop.f32.mrb[0].mxu0
        %v5464 = vadd.f32 %v5239, %v5463
        %v5465 = vpop.f32.mrb[0].mxu0
        %5466 = vmatprep.mubr.bf16.mxu0 %v4235
        %5467 = vmatmul.mubr.bf16.gmra.mrb[0].mxu0 %v4232
        %v5468 = vpop.f32.mrb[0].mxu0
        %v5469 = vadd.f32 %v5244, %v5468
        %v5470 = vpop.f32.mrb[0].mxu0
        %v5471 = vpop.f32.mrb[0].mxu0
        %v5472 = vadd.f32 %v5247, %v5471
        %v5473 = vpop.f32.mrb[0].mxu0
        %5474 = vmatprep.mubr.bf16.mxu0 %v4236
        %5475 = vmatmul.mubr.bf16.gmra.mrb[0].mxu0 %v4233
        %v5476 = vpop.f32.mrb[0].mxu0
        %v5477 = vadd.f32 %v5252, %v5476
        %v5478 = vpop.f32.mrb[0].mxu0
        %v5479 = vpop.f32.mrb[0].mxu0
        %v5480 = vadd.f32 %v5255, %v5479
        %v5481 = vpop.f32.mrb[0].mxu0
        %5482 = vmatprep.mubr.bf16.mxu0 %v4237
        %5483 = vmatmul.mubr.bf16.gmra.mrb[0].mxu0 %v4234
        %v5484 = vpop.f32.mrb[0].mxu0
        %v5485 = vadd.f32 %v5260, %v5484
        %v5486 = vpop.f32.mrb[0].mxu0
        %v5487 = vpop.f32.mrb[0].mxu0
        %v5488 = vadd.f32 %v5263, %v5487
        %v5489 = vpop.f32.mrb[0].mxu0
        %5490 = vmatprep.mubr.bf16.mxu0 %v4238
        %5491 = vmatmul.mubr.bf16.gmra.mrb[0].mxu0 %v4235
        %v5492 = vpop.f32.mrb[0].mxu0
        %v5493 = vadd.f32 %v5268, %v5492
        %v5494 = vpop.f32.mrb[0].mxu0
        %v5495 = vpop.f32.mrb[0].mxu0
        %v5496 = vadd.f32 %v5271, %v5495
        %v5497 = vpop.f32.mrb[0].mxu0
        %5498 = vmatprep.mubr.bf16.mxu0 %v4239
        %5499 = vmatmul.mubr.bf16.gmra.mrb[0].mxu0 %v4236
        %v5500 = vpop.f32.mrb[0].mxu0
        %v5501 = vadd.f32 %v5276, %v5500
        %v5502 = vpop.f32.mrb[0].mxu0
        %v5503 = vpop.f32.mrb[0].mxu0
        %v5504 = vadd.f32 %v5279, %v5503
        %v5505 = vpop.f32.mrb[0].mxu0
        %5506 = vmatprep.mubr.bf16.mxu0 %v4240
        %5507 = vmatmul.mubr.bf16.gmra.mrb[0].mxu0 %v4237
        %v5508 = vpop.f32.mrb[0].mxu0
        %v5509 = vadd.f32 %v5284, %v5508
        %v5510 = vpop.f32.mrb[0].mxu0
        %v5511 = vpop.f32.mrb[0].mxu0
        %v5512 = vadd.f32 %v5287, %v5511
        %v5513 = vpop.f32.mrb[0].mxu0
        %5514 = vmatprep.mubr.bf16.mxu0 %v4241
        %5515 = vmatmul.mubr.bf16.gmra.mrb[0].mxu0 %v4238
        %v5516 = vpop.f32.mrb[0].mxu0
        %v5517 = vadd.f32 %v5292, %v5516
        %v5518 = vpop.f32.mrb[0].mxu0
        %v5519 = vpop.f32.mrb[0].mxu0
        %v5520 = vadd.f32 %v5295, %v5519
        %v5521 = vpop.f32.mrb[0].mxu0
        %5522 = vmatprep.mubr.bf16.mxu0 %v4242
        %5523 = vmatmul.mubr.bf16.gmra.mrb[0].mxu0 %v4239
        %v5524 = vpop.f32.mrb[0].mxu0
        %v5525 = vadd.f32 %v5300, %v5524
        %v5526 = vpop.f32.mrb[0].mxu0
        %v5527 = vpop.f32.mrb[0].mxu0
        %v5528 = vadd.f32 %v5303, %v5527
        %v5529 = vpop.f32.mrb[0].mxu0
        %5530 = vdwg.mxu0
        %5531 = vmatprep.subr.bf16.mxu0 0
        %5532 = vmatpush1.bf16.msra.mxu0 %v4760
        %5533 = vmatprep.subr.bf16.mxu0 0
        %5534 = vmatpush1.bf16.msra.mxu0 %v4761
        %5535 = vmatprep.subr.bf16.mxu0 0
        %5536 = vmatpush1.bf16.msra.mxu0 %v4762
        %5537 = vmatprep.subr.bf16.mxu0 0
        %5538 = vmatpush1.bf16.msra.mxu0 %v4763
        %5539 = vmatprep.subr.bf16.mxu0 0
        %5540 = vmatpush1.bf16.msra.mxu0 %v4764
        %5541 = vmatprep.subr.bf16.mxu0 0
        %5542 = vmatpush1.bf16.msra.mxu0 %v4765
        %5543 = vmatprep.subr.bf16.mxu0 0
        %5544 = vmatpush1.bf16.msra.mxu0 %v4766
        %5545 = vmatprep.subr.bf16.mxu0 0
        %5546 = vmatpush1.bf16.msra.mxu0 %v4767
        %5547 = vmatprep.subr.bf16.mxu0 0
        %5548 = vmatpush1.bf16.msra.mxu0 %v4768
        %5549 = vmatprep.subr.bf16.mxu0 0
        %5550 = vmatpush1.bf16.msra.mxu0 %v4769
        %5551 = vmatprep.subr.bf16.mxu0 0
        %5552 = vmatpush1.bf16.msra.mxu0 %v4770
        %5553 = vmatprep.subr.bf16.mxu0 0
        %5554 = vmatpush1.bf16.msra.mxu0 %v4771
        %5555 = vmatprep.subr.bf16.mxu0 0
        %5556 = vmatpush1.bf16.msra.mxu0 %v4772
        %5557 = vmatprep.subr.bf16.mxu0 0
        %5558 = vmatpush1.bf16.msra.mxu0 %v4773
        %5559 = vmatprep.subr.bf16.mxu0 0
        %5560 = vmatpush1.bf16.msra.mxu0 %v4774
        %5561 = vmatprep.subr.bf16.mxu0 0
        %5562 = vmatpush1.bf16.msra.mxu0 %v4775
        %5563 = vmatprep.mubr.bf16.mxu0 %v4225
        %5564 = vmatmul.mubr.bf16.gmra.mrb[0].mxu0 %v4222
        %v5565 = vpop.f32.mrb[0].mxu0
        %v5566 = vadd.f32 %v5341, %v5565
        %v5567 = vpop.f32.mrb[0].mxu0
        %v5568 = vpop.f32.mrb[0].mxu0
        %v5569 = vadd.f32 %v5344, %v5568
        %v5570 = vpop.f32.mrb[0].mxu0
        %5571 = vmatprep.mubr.bf16.mxu0 %v4226
        %5572 = vmatmul.mubr.bf16.gmra.mrb[0].mxu0 %v4223
        %v5573 = vpop.f32.mrb[0].mxu0
        %v5574 = vadd.f32 %v5349, %v5573
        %v5575 = vpop.f32.mrb[0].mxu0
        %v5576 = vpop.f32.mrb[0].mxu0
        %v5577 = vadd.f32 %v5352, %v5576
        %v5578 = vpop.f32.mrb[0].mxu0
        %5579 = vmatprep.mubr.bf16.mxu0 %v4227
        %5580 = vmatmul.mubr.bf16.gmra.mrb[0].mxu0 %v4224
        %v5581 = vpop.f32.mrb[0].mxu0
        %v5582 = vadd.f32 %v5357, %v5581
        %v5583 = vpop.f32.mrb[0].mxu0
        %v5584 = vpop.f32.mrb[0].mxu0
        %v5585 = vadd.f32 %v5360, %v5584
        %v5586 = vpop.f32.mrb[0].mxu0
        %5587 = vmatprep.mubr.bf16.mxu0 %v4228
        %5588 = vmatmul.mubr.bf16.gmra.mrb[0].mxu0 %v4225
        %v5589 = vpop.f32.mrb[0].mxu0
        %v5590 = vadd.f32 %v5365, %v5589
        %v5591 = vpop.f32.mrb[0].mxu0
        %v5592 = vpop.f32.mrb[0].mxu0
        %v5593 = vadd.f32 %v5368, %v5592
        %v5594 = vpop.f32.mrb[0].mxu0
        %5595 = vmatprep.mubr.bf16.mxu0 %v4229
        %5596 = vmatmul.mubr.bf16.gmra.mrb[0].mxu0 %v4226
        %v5597 = vpop.f32.mrb[0].mxu0
        %v5598 = vadd.f32 %v5373, %v5597
        %v5599 = vpop.f32.mrb[0].mxu0
        %v5600 = vpop.f32.mrb[0].mxu0
        %v5601 = vadd.f32 %v5376, %v5600
        %v5602 = vpop.f32.mrb[0].mxu0
        %5603 = vmatprep.mubr.bf16.mxu0 %v4230
        %5604 = vmatmul.mubr.bf16.gmra.mrb[0].mxu0 %v4227
        %v5605 = vpop.f32.mrb[0].mxu0
        %v5606 = vadd.f32 %v5381, %v5605
        %v5607 = vpop.f32.mrb[0].mxu0
        %v5608 = vpop.f32.mrb[0].mxu0
        %v5609 = vadd.f32 %v5384, %v5608
        %v5610 = vpop.f32.mrb[0].mxu0
        %5611 = vmatprep.mubr.bf16.mxu0 %v4231
        %5612 = vmatmul.mubr.bf16.gmra.mrb[0].mxu0 %v4228
        %v5613 = vpop.f32.mrb[0].mxu0
        %v5614 = vadd.f32 %v5389, %v5613
        %v5615 = vpop.f32.mrb[0].mxu0
        %v5616 = vpop.f32.mrb[0].mxu0
        %v5617 = vadd.f32 %v5392, %v5616
        %v5618 = vpop.f32.mrb[0].mxu0
        %5619 = vmatprep.mubr.bf16.mxu0 %v4232
        %5620 = vmatmul.mubr.bf16.gmra.mrb[0].mxu0 %v4229
        %v5621 = vpop.f32.mrb[0].mxu0
        %v5622 = vadd.f32 %v5397, %v5621
        %v5623 = vpop.f32.mrb[0].mxu0
        %v5624 = vpop.f32.mrb[0].mxu0
        %v5625 = vadd.f32 %v5400, %v5624
        %v5626 = vpop.f32.mrb[0].mxu0
        %5627 = vmatprep.mubr.bf16.mxu0 %v4233
        %5628 = vmatmul.mubr.bf16.gmra.mrb[0].mxu0 %v4230
        %v5629 = vpop.f32.mrb[0].mxu0
        %v5630 = vadd.f32 %v5405, %v5629
        %v5631 = vpop.f32.mrb[0].mxu0
        %v5632 = vpop.f32.mrb[0].mxu0
        %v5633 = vadd.f32 %v5408, %v5632
        %v5634 = vpop.f32.mrb[0].mxu0
        %5635 = vmatprep.mubr.bf16.mxu0 %v4234
        %5636 = vmatmul.mubr.bf16.gmra.mrb[0].mxu0 %v4231
        %v5637 = vpop.f32.mrb[0].mxu0
        %v5638 = vadd.f32 %v5413, %v5637
        %v5639 = vpop.f32.mrb[0].mxu0
        %v5640 = vpop.f32.mrb[0].mxu0
        %v5641 = vadd.f32 %v5416, %v5640
        %v5642 = vpop.f32.mrb[0].mxu0
        %5643 = vmatprep.mubr.bf16.mxu0 %v4235
        %5644 = vmatmul.mubr.bf16.gmra.mrb[0].mxu0 %v4232
        %v5645 = vpop.f32.mrb[0].mxu0
        %v5646 = vadd.f32 %v5421, %v5645
        %v5647 = vpop.f32.mrb[0].mxu0
        %v5648 = vpop.f32.mrb[0].mxu0
        %v5649 = vadd.f32 %v5424, %v5648
        %v5650 = vpop.f32.mrb[0].mxu0
        %5651 = vmatprep.mubr.bf16.mxu0 %v4236
        %5652 = vmatmul.mubr.bf16.gmra.mrb[0].mxu0 %v4233
        %v5653 = vpop.f32.mrb[0].mxu0
        %v5654 = vadd.f32 %v5429, %v5653
        %v5655 = vpop.f32.mrb[0].mxu0
        %v5656 = vpop.f32.mrb[0].mxu0
        %v5657 = vadd.f32 %v5432, %v5656
        %v5658 = vpop.f32.mrb[0].mxu0
        %5659 = vmatprep.mubr.bf16.mxu0 %v4237
        %5660 = vmatmul.mubr.bf16.gmra.mrb[0].mxu0 %v4234
        %v5661 = vpop.f32.mrb[0].mxu0
        %v5662 = vadd.f32 %v5437, %v5661
        %v5663 = vpop.f32.mrb[0].mxu0
        %v5664 = vpop.f32.mrb[0].mxu0
        %v5665 = vadd.f32 %v5440, %v5664
        %v5666 = vpop.f32.mrb[0].mxu0
        %5667 = vmatprep.mubr.bf16.mxu0 %v4238
        %5668 = vmatmul.mubr.bf16.gmra.mrb[0].mxu0 %v4235
        %v5669 = vpop.f32.mrb[0].mxu0
        %v5670 = vadd.f32 %v5445, %v5669
        %v5671 = vpop.f32.mrb[0].mxu0
        %v5672 = vpop.f32.mrb[0].mxu0
        %v5673 = vadd.f32 %v5448, %v5672
        %v5674 = vpop.f32.mrb[0].mxu0
        %5675 = vmatprep.mubr.bf16.mxu0 %v4239
        %5676 = vmatmul.mubr.bf16.gmra.mrb[0].mxu0 %v4236
        %v5677 = vpop.f32.mrb[0].mxu0
        %v5678 = vadd.f32 %v5453, %v5677
        %v5679 = vpop.f32.mrb[0].mxu0
        %v5680 = vpop.f32.mrb[0].mxu0
        %v5681 = vadd.f32 %v5456, %v5680
        %v5682 = vpop.f32.mrb[0].mxu0
        %5683 = vmatprep.mubr.bf16.mxu0 %v4240
        %5684 = vmatmul.mubr.bf16.gmra.mrb[0].mxu0 %v4237
        %v5685 = vpop.f32.mrb[0].mxu0
        %v5686 = vadd.f32 %v5461, %v5685
        %v5687 = vpop.f32.mrb[0].mxu0
        %v5688 = vpop.f32.mrb[0].mxu0
        %v5689 = vadd.f32 %v5464, %v5688
        %v5690 = vpop.f32.mrb[0].mxu0
        %5691 = vmatprep.mubr.bf16.mxu0 %v4241
        %5692 = vmatmul.mubr.bf16.gmra.mrb[0].mxu0 %v4238
        %v5693 = vpop.f32.mrb[0].mxu0
        %v5694 = vadd.f32 %v5469, %v5693
        %v5695 = vpop.f32.mrb[0].mxu0
        %v5696 = vpop.f32.mrb[0].mxu0
        %v5697 = vadd.f32 %v5472, %v5696
        %v5698 = vpop.f32.mrb[0].mxu0
        %5699 = vmatprep.mubr.bf16.mxu0 %v4242
        %5700 = vmatmul.mubr.bf16.gmra.mrb[0].mxu0 %v4239
        %v5701 = vpop.f32.mrb[0].mxu0
        %v5702 = vadd.f32 %v5477, %v5701
        %v5703 = vpop.f32.mrb[0].mxu0
        %v5704 = vpop.f32.mrb[0].mxu0
        %v5705 = vadd.f32 %v5480, %v5704
        %v5706 = vpop.f32.mrb[0].mxu0
        %5707 = vmatprep.mubr.bf16.mxu0 %v4243
        %5708 = vmatmul.mubr.bf16.gmra.mrb[0].mxu0 %v4240
        %v5709 = vpop.f32.mrb[0].mxu0
        %v5710 = vadd.f32 %v5485, %v5709
        %v5711 = vpop.f32.mrb[0].mxu0
        %v5712 = vpop.f32.mrb[0].mxu0
        %v5713 = vadd.f32 %v5488, %v5712
        %v5714 = vpop.f32.mrb[0].mxu0
        %5715 = vmatprep.mubr.bf16.mxu0 %v4244
        %5716 = vmatmul.mubr.bf16.gmra.mrb[0].mxu0 %v4241
        %v5717 = vpop.f32.mrb[0].mxu0
        %v5718 = vadd.f32 %v5493, %v5717
        %v5719 = vpop.f32.mrb[0].mxu0
        %v5720 = vpop.f32.mrb[0].mxu0
        %v5721 = vadd.f32 %v5496, %v5720
        %v5722 = vpop.f32.mrb[0].mxu0
        %5723 = vmatprep.mubr.bf16.mxu0 %v4245
        %5724 = vmatmul.mubr.bf16.gmra.mrb[0].mxu0 %v4242
        %v5725 = vpop.f32.mrb[0].mxu0
        %v5726 = vadd.f32 %v5501, %v5725
        %v5727 = vpop.f32.mrb[0].mxu0
        %v5728 = vpop.f32.mrb[0].mxu0
        %v5729 = vadd.f32 %v5504, %v5728
        %v5730 = vpop.f32.mrb[0].mxu0
        %5731 = vmatprep.mubr.bf16.mxu0 %v4246
        %5732 = vmatmul.mubr.bf16.gmra.mrb[0].mxu0 %v4243
        %v5733 = vpop.f32.mrb[0].mxu0
        %v5734 = vadd.f32 %v5509, %v5733
        %v5735 = vpop.f32.mrb[0].mxu0
        %v5736 = vpop.f32.mrb[0].mxu0
        %v5737 = vadd.f32 %v5512, %v5736
        %v5738 = vpop.f32.mrb[0].mxu0
        %5739 = vmatprep.mubr.bf16.mxu0 %v4247
        %5740 = vmatmul.mubr.bf16.gmra.mrb[0].mxu0 %v4244
        %v5741 = vpop.f32.mrb[0].mxu0
        %v5742 = vadd.f32 %v5517, %v5741
        %v5743 = vpop.f32.mrb[0].mxu0
        %v5744 = vpop.f32.mrb[0].mxu0
        %v5745 = vadd.f32 %v5520, %v5744
        %v5746 = vpop.f32.mrb[0].mxu0
        %5747 = vmatprep.mubr.bf16.mxu0 %v4248
        %5748 = vmatmul.mubr.bf16.gmra.mrb[0].mxu0 %v4245
        %v5749 = vpop.f32.mrb[0].mxu0
        %v5750 = vadd.f32 %v5525, %v5749
        %v5751 = vpop.f32.mrb[0].mxu0
        %v5752 = vpop.f32.mrb[0].mxu0
        %v5753 = vadd.f32 %v5528, %v5752
        %v5754 = vpop.f32.mrb[0].mxu0
        %5755 = vdwg.mxu0
        %5756 = vmatprep.subr.bf16.mxu0 0
        %5757 = vmatpush1.bf16.msra.mxu0 %v4776
        %5758 = vmatprep.subr.bf16.mxu0 0
        %5759 = vmatpush1.bf16.msra.mxu0 %v4777
        %5760 = vmatprep.subr.bf16.mxu0 0
        %5761 = vmatpush1.bf16.msra.mxu0 %v4778
        %5762 = vmatprep.subr.bf16.mxu0 0
        %5763 = vmatpush1.bf16.msra.mxu0 %v4779
        %5764 = vmatprep.subr.bf16.mxu0 0
        %5765 = vmatpush1.bf16.msra.mxu0 %v4780
        %5766 = vmatprep.subr.bf16.mxu0 0
        %5767 = vmatpush1.bf16.msra.mxu0 %v4781
        %5768 = vmatprep.subr.bf16.mxu0 0
        %5769 = vmatpush1.bf16.msra.mxu0 %v4782
        %5770 = vmatprep.subr.bf16.mxu0 0
        %5771 = vmatpush1.bf16.msra.mxu0 %v4783
        %5772 = vmatprep.subr.bf16.mxu0 0
        %5773 = vmatpush1.bf16.msra.mxu0 0
        %5774 = vmatprep.subr.bf16.mxu0 0
        %5775 = vmatpush1.bf16.msra.mxu0 0
        %5776 = vmatprep.subr.bf16.mxu0 0
        %5777 = vmatpush1.bf16.msra.mxu0 0
        %5778 = vmatprep.subr.bf16.mxu0 0
        %5779 = vmatpush1.bf16.msra.mxu0 0
        %5780 = vmatprep.subr.bf16.mxu0 0
        %5781 = vmatpush1.bf16.msra.mxu0 0
        %5782 = vmatprep.subr.bf16.mxu0 0
        %5783 = vmatpush1.bf16.msra.mxu0 0
        %5784 = vmatprep.subr.bf16.mxu0 0
        %5785 = vmatpush1.bf16.msra.mxu0 0
        %5786 = vmatprep.subr.bf16.mxu0 0
        %5787 = vmatpush1.bf16.msra.mxu0 0
        %5788 = vmatprep.mubr.bf16.mxu0 0
        %5789 = vmatmul.mubr.bf16.gmra.mrb[0].mxu0 %v4249
        %v5790 = vpop.f32.mrb[0].mxu0
        %v5791 = vadd.f32 %v5566, %v5790
        %v5792 = vpop.f32.mrb[0].mxu0
        %v5793 = vpop.f32.mrb[0].mxu0
        %v5794 = vadd.f32 %v5569, %v5793
        %v5795 = vpop.f32.mrb[0].mxu0
        %5796 = vmatprep.mubr.bf16.mxu0 0
        %5797 = vmatmul.mubr.bf16.gmra.mrb[0].mxu0 %v4250
        %v5798 = vpop.f32.mrb[0].mxu0
        %v5799 = vadd.f32 %v5574, %v5798
        %v5800 = vpop.f32.mrb[0].mxu0
        %v5801 = vpop.f32.mrb[0].mxu0
        %v5802 = vadd.f32 %v5577, %v5801
        %v5803 = vpop.f32.mrb[0].mxu0
        %5804 = vmatprep.mubr.bf16.mxu0 0
        %5805 = vmatmul.mubr.bf16.gmra.mrb[0].mxu0 %v4251
        %v5806 = vpop.f32.mrb[0].mxu0
        %v5807 = vadd.f32 %v5582, %v5806
        %v5808 = vpop.f32.mrb[0].mxu0
        %v5809 = vpop.f32.mrb[0].mxu0
        %v5810 = vadd.f32 %v5585, %v5809
        %v5811 = vpop.f32.mrb[0].mxu0
        %5812 = vmatprep.mubr.bf16.mxu0 0
        %5813 = vmatmul.mubr.bf16.gmra.mrb[0].mxu0 %v4252
        %v5814 = vpop.f32.mrb[0].mxu0
        %v5815 = vadd.f32 %v5590, %v5814
        %v5816 = vpop.f32.mrb[0].mxu0
        %v5817 = vpop.f32.mrb[0].mxu0
        %v5818 = vadd.f32 %v5593, %v5817
        %v5819 = vpop.f32.mrb[0].mxu0
        %5820 = vmatprep.mubr.bf16.mxu0 0
        %5821 = vmatmul.mubr.bf16.gmra.mrb[0].mxu0 %v4253
        %v5822 = vpop.f32.mrb[0].mxu0
        %v5823 = vadd.f32 %v5598, %v5822
        %v5824 = vpop.f32.mrb[0].mxu0
        %v5825 = vpop.f32.mrb[0].mxu0
        %v5826 = vadd.f32 %v5601, %v5825
        %v5827 = vpop.f32.mrb[0].mxu0
        %5828 = vmatprep.mubr.bf16.mxu0 0
        %5829 = vmatmul.mubr.bf16.gmra.mrb[0].mxu0 %v4254
        %v5830 = vpop.f32.mrb[0].mxu0
        %v5831 = vadd.f32 %v5606, %v5830
        %v5832 = vpop.f32.mrb[0].mxu0
        %v5833 = vpop.f32.mrb[0].mxu0
        %v5834 = vadd.f32 %v5609, %v5833
        %v5835 = vpop.f32.mrb[0].mxu0
        %5836 = vmatprep.mubr.bf16.mxu0 0
        %5837 = vmatmul.mubr.bf16.gmra.mrb[0].mxu0 %v4255
        %v5838 = vpop.f32.mrb[0].mxu0
        %v5839 = vadd.f32 %v5614, %v5838
        %v5840 = vpop.f32.mrb[0].mxu0
        %v5841 = vpop.f32.mrb[0].mxu0
        %v5842 = vadd.f32 %v5617, %v5841
        %v5843 = vpop.f32.mrb[0].mxu0
        %5844 = vmatprep.mubr.bf16.mxu0 0
        %5845 = vmatmul.mubr.bf16.gmra.mrb[0].mxu0 %v4256
        %v5846 = vpop.f32.mrb[0].mxu0
        %v5847 = vadd.f32 %v5622, %v5846
        %v5848 = vpop.f32.mrb[0].mxu0
        %v5849 = vpop.f32.mrb[0].mxu0
        %v5850 = vadd.f32 %v5625, %v5849
        %v5851 = vpop.f32.mrb[0].mxu0
        %5852 = vmatprep.mubr.bf16.mxu0 0
        %5853 = vmatmul.mubr.bf16.gmra.mrb[0].mxu0 %v4257
        %v5854 = vpop.f32.mrb[0].mxu0
        %v5855 = vadd.f32 %v5630, %v5854
        %v5856 = vpop.f32.mrb[0].mxu0
        %v5857 = vpop.f32.mrb[0].mxu0
        %v5858 = vadd.f32 %v5633, %v5857
        %v5859 = vpop.f32.mrb[0].mxu0
        %5860 = vmatprep.mubr.bf16.mxu0 0
        %5861 = vmatmul.mubr.bf16.gmra.mrb[0].mxu0 %v4258
        %v5862 = vpop.f32.mrb[0].mxu0
        %v5863 = vadd.f32 %v5638, %v5862
        %v5864 = vpop.f32.mrb[0].mxu0
        %v5865 = vpop.f32.mrb[0].mxu0
        %v5866 = vadd.f32 %v5641, %v5865
        %v5867 = vpop.f32.mrb[0].mxu0
        %5868 = vmatprep.mubr.bf16.mxu0 0
        %5869 = vmatmul.mubr.bf16.gmra.mrb[0].mxu0 %v4259
        %v5870 = vpop.f32.mrb[0].mxu0
        %v5871 = vadd.f32 %v5646, %v5870
        %v5872 = vpop.f32.mrb[0].mxu0
        %v5873 = vpop.f32.mrb[0].mxu0
        %v5874 = vadd.f32 %v5649, %v5873
        %v5875 = vpop.f32.mrb[0].mxu0
        %5876 = vmatprep.mubr.bf16.mxu0 0
        %5877 = vmatmul.mubr.bf16.gmra.mrb[0].mxu0 %v4260
        %v5878 = vpop.f32.mrb[0].mxu0
        %v5879 = vadd.f32 %v5654, %v5878
        %v5880 = vpop.f32.mrb[0].mxu0
        %v5881 = vpop.f32.mrb[0].mxu0
        %v5882 = vadd.f32 %v5657, %v5881
        %v5883 = vpop.f32.mrb[0].mxu0
        %5884 = vmatprep.mubr.bf16.mxu0 0
        %5885 = vmatmul.mubr.bf16.gmra.mrb[0].mxu0 %v4261
        %v5886 = vpop.f32.mrb[0].mxu0
        %v5887 = vadd.f32 %v5662, %v5886
        %v5888 = vpop.f32.mrb[0].mxu0
        %v5889 = vpop.f32.mrb[0].mxu0
        %v5890 = vadd.f32 %v5665, %v5889
        %v5891 = vpop.f32.mrb[0].mxu0
        %5892 = vmatprep.mubr.bf16.mxu0 0
        %5893 = vmatmul.mubr.bf16.gmra.mrb[0].mxu0 %v4262
        %v5894 = vpop.f32.mrb[0].mxu0
        %v5895 = vadd.f32 %v5670, %v5894
        %v5896 = vpop.f32.mrb[0].mxu0
        %v5897 = vpop.f32.mrb[0].mxu0
        %v5898 = vadd.f32 %v5673, %v5897
        %v5899 = vpop.f32.mrb[0].mxu0
        %5900 = vmatprep.mubr.bf16.mxu0 0
        %5901 = vmatmul.mubr.bf16.gmra.mrb[0].mxu0 %v4263
        %v5902 = vpop.f32.mrb[0].mxu0
        %v5903 = vadd.f32 %v5678, %v5902
        %v5904 = vpop.f32.mrb[0].mxu0
        %v5905 = vpop.f32.mrb[0].mxu0
        %v5906 = vadd.f32 %v5681, %v5905
        %v5907 = vpop.f32.mrb[0].mxu0
        %5908 = vmatprep.mubr.bf16.mxu0 0
        %5909 = vmatmul.mubr.bf16.gmra.mrb[0].mxu0 %v4264
        %v5910 = vpop.f32.mrb[0].mxu0
        %v5911 = vadd.f32 %v5686, %v5910
        %v5912 = vpop.f32.mrb[0].mxu0
        %v5913 = vpop.f32.mrb[0].mxu0
        %v5914 = vadd.f32 %v5689, %v5913
        %v5915 = vpop.f32.mrb[0].mxu0
        %5916 = vmatprep.mubr.bf16.mxu0 0
        %5917 = vmatmul.mubr.bf16.gmra.mrb[0].mxu0 %v4265
        %v5918 = vpop.f32.mrb[0].mxu0
        %v5919 = vadd.f32 %v5694, %v5918
        %v5920 = vpop.f32.mrb[0].mxu0
        %v5921 = vpop.f32.mrb[0].mxu0
        %v5922 = vadd.f32 %v5697, %v5921
        %v5923 = vpop.f32.mrb[0].mxu0
        %5924 = vmatprep.mubr.bf16.mxu0 0
        %5925 = vmatmul.mubr.bf16.gmra.mrb[0].mxu0 %v4266
        %v5926 = vpop.f32.mrb[0].mxu0
        %v5927 = vadd.f32 %v5702, %v5926
        %v5928 = vpop.f32.mrb[0].mxu0
        %v5929 = vpop.f32.mrb[0].mxu0
        %v5930 = vadd.f32 %v5705, %v5929
        %v5931 = vpop.f32.mrb[0].mxu0
        %5932 = vmatprep.mubr.bf16.mxu0 0
        %5933 = vmatmul.mubr.bf16.gmra.mrb[0].mxu0 %v4267
        %v5934 = vpop.f32.mrb[0].mxu0
        %v5935 = vadd.f32 %v5710, %v5934
        %v5936 = vpop.f32.mrb[0].mxu0
        %v5937 = vpop.f32.mrb[0].mxu0
        %v5938 = vadd.f32 %v5713, %v5937
        %v5939 = vpop.f32.mrb[0].mxu0
        %5940 = vmatprep.mubr.bf16.mxu0 0
        %5941 = vmatmul.mubr.bf16.gmra.mrb[0].mxu0 %v4268
        %v5942 = vpop.f32.mrb[0].mxu0
        %v5943 = vadd.f32 %v5718, %v5942
        %v5944 = vpop.f32.mrb[0].mxu0
        %v5945 = vpop.f32.mrb[0].mxu0
        %v5946 = vadd.f32 %v5721, %v5945
        %v5947 = vpop.f32.mrb[0].mxu0
        %5948 = vmatprep.mubr.bf16.mxu0 0
        %5949 = vmatmul.mubr.bf16.gmra.mrb[0].mxu0 %v4269
        %v5950 = vpop.f32.mrb[0].mxu0
        %v5951 = vadd.f32 %v5726, %v5950
        %v5952 = vpop.f32.mrb[0].mxu0
        %v5953 = vpop.f32.mrb[0].mxu0
        %v5954 = vadd.f32 %v5729, %v5953
        %v5955 = vpop.f32.mrb[0].mxu0
        %5956 = vmatprep.mubr.bf16.mxu0 0
        %5957 = vmatmul.mubr.bf16.gmra.mrb[0].mxu0 %v4270
        %v5958 = vpop.f32.mrb[0].mxu0
        %v5959 = vadd.f32 %v5734, %v5958
        %v5960 = vpop.f32.mrb[0].mxu0
        %v5961 = vpop.f32.mrb[0].mxu0
        %v5962 = vadd.f32 %v5737, %v5961
        %v5963 = vpop.f32.mrb[0].mxu0
        %5964 = vmatprep.mubr.bf16.mxu0 0
        %5965 = vmatmul.mubr.bf16.gmra.mrb[0].mxu0 %v4271
        %v5966 = vpop.f32.mrb[0].mxu0
        %v5967 = vadd.f32 %v5742, %v5966
        %v5968 = vpop.f32.mrb[0].mxu0
        %v5969 = vpop.f32.mrb[0].mxu0
        %v5970 = vadd.f32 %v5745, %v5969
        %v5971 = vpop.f32.mrb[0].mxu0
        %5972 = vmatprep.mubr.bf16.mxu0 0
        %5973 = vmatmul.mubr.bf16.gmra.mrb[0].mxu0 %v4272
        %v5974 = vpop.f32.mrb[0].mxu0
        %v5975 = vadd.f32 %v5750, %v5974
        %v5976 = vpop.f32.mrb[0].mxu0
        %v5977 = vpop.f32.mrb[0].mxu0
        %v5978 = vadd.f32 %v5753, %v5977
        %v5979 = vpop.f32.mrb[0].mxu0
        %5980 = vdwg.mxu0
        %v5981 = vmax.f32 %v5791, 0.0
        %v5982 = vmax.f32 %v5794, 0.0
        %v5983 = vmax.f32 %v5799, 0.0
        %v5984 = vmax.f32 %v5802, 0.0
        %v5985 = vmax.f32 %v5807, 0.0
        %v5986 = vmax.f32 %v5810, 0.0
        %v5987 = vmax.f32 %v5815, 0.0
        %v5988 = vmax.f32 %v5818, 0.0
        %v5989 = vmax.f32 %v5823, 0.0
        %v5990 = vmax.f32 %v5826, 0.0
        %v5991 = vmax.f32 %v5831, 0.0
        %v5992 = vmax.f32 %v5834, 0.0
        %v5993 = vmax.f32 %v5839, 0.0
        %v5994 = vmax.f32 %v5842, 0.0
        %v5995 = vmax.f32 %v5847, 0.0
        %v5996 = vmax.f32 %v5850, 0.0
        %v5997 = vmax.f32 %v5855, 0.0
        %v5998 = vmax.f32 %v5858, 0.0
        %v5999 = vmax.f32 %v5863, 0.0
        %v6000 = vmax.f32 %v5866, 0.0
        %v6001 = vmax.f32 %v5871, 0.0
        %v6002 = vmax.f32 %v5874, 0.0
        %v6003 = vmax.f32 %v5879, 0.0
        %v6004 = vmax.f32 %v5882, 0.0
        %v6005 = vmax.f32 %v5887, 0.0
        %v6006 = vmax.f32 %v5890, 0.0
        %v6007 = vmax.f32 %v5895, 0.0
        %v6008 = vmax.f32 %v5898, 0.0
        %v6009 = vmax.f32 %v5903, 0.0
        %v6010 = vmax.f32 %v5906, 0.0
        %v6011 = vmax.f32 %v5911, 0.0
        %v6012 = vmax.f32 %v5914, 0.0
        %v6013 = vmax.f32 %v5919, 0.0
        %v6014 = vmax.f32 %v5922, 0.0
        %v6015 = vmax.f32 %v5927, 0.0
        %v6016 = vmax.f32 %v5930, 0.0
        %v6017 = vmax.f32 %v5935, 0.0
        %v6018 = vmax.f32 %v5938, 0.0
        %v6019 = vmax.f32 %v5943, 0.0
        %v6020 = vmax.f32 %v5946, 0.0
        %v6021 = vmax.f32 %v5951, 0.0
        %v6022 = vmax.f32 %v5954, 0.0
        %v6023 = vmax.f32 %v5959, 0.0
        %v6024 = vmax.f32 %v5962, 0.0
        %v6025 = vmax.f32 %v5967, 0.0
        %v6026 = vmax.f32 %v5970, 0.0
        %v6027 = vmax.f32 %v5975, 0.0
        %v6028 = vmax.f32 %v5978, 0.0
        %v6029 = vadd.f32 %v5981, %v3361
        %v6030 = vadd.f32 %v5982, %v3365
        %v6031 = vadd.f32 %v5983, %v3371
        %v6032 = vadd.f32 %v5984, %v3375
        %v6033 = vadd.f32 %v5985, %v3381
        %v6034 = vadd.f32 %v5986, %v3385
        %v6035 = vadd.f32 %v5987, %v3391
        %v6036 = vadd.f32 %v5988, %v3395
        %v6037 = vadd.f32 %v5989, %v3401
        %v6038 = vadd.f32 %v5990, %v3405
        %v6039 = vadd.f32 %v5991, %v3411
        %v6040 = vadd.f32 %v5992, %v3415
        %v6041 = vadd.f32 %v5993, %v3421
        %v6042 = vadd.f32 %v5994, %v3425
        %v6043 = vadd.f32 %v5995, %v3431
        %v6044 = vadd.f32 %v5996, %v3435
        %v6045 = vadd.f32 %v5997, %v3441
        %v6046 = vadd.f32 %v5998, %v3445
        %v6047 = vadd.f32 %v5999, %v3451
        %v6048 = vadd.f32 %v6000, %v3455
        %v6049 = vadd.f32 %v6001, %v3461
        %v6050 = vadd.f32 %v6002, %v3465
        %v6051 = vadd.f32 %v6003, %v3471
        %v6052 = vadd.f32 %v6004, %v3475
        %v6053 = vadd.f32 %v6005, %v3481
        %v6054 = vadd.f32 %v6006, %v3485
        %v6055 = vadd.f32 %v6007, %v3491
        %v6056 = vadd.f32 %v6008, %v3495
        %v6057 = vadd.f32 %v6009, %v3501
        %v6058 = vadd.f32 %v6010, %v3505
        %v6059 = vadd.f32 %v6011, %v3511
        %v6060 = vadd.f32 %v6012, %v3515
        %v6061 = vadd.f32 %v6013, %v3521
        %v6062 = vadd.f32 %v6014, %v3525
        %v6063 = vadd.f32 %v6015, %v3531
        %v6064 = vadd.f32 %v6016, %v3535
        %v6065 = vadd.f32 %v6017, %v3541
        %v6066 = vadd.f32 %v6018, %v3545
        %v6067 = vadd.f32 %v6019, %v3551
        %v6068 = vadd.f32 %v6020, %v3555
        %v6069 = vadd.f32 %v6021, %v3561
        %v6070 = vadd.f32 %v6022, %v3565
        %v6071 = vadd.f32 %v6023, %v3571
        %v6072 = vadd.f32 %v6024, %v3575
        %v6073 = vadd.f32 %v6025, %v3581
        %v6074 = vadd.f32 %v6026, %v3585
        %v6075 = vadd.f32 %v6027, %v3591
        %v6076 = vadd.f32 %v6028, %v3595
        %v6077 = vld [vmem:[%s2] sm:$0x7]
        %v6078 = vpack.c.bf16 %v6030, %v6029
        %v6079 = vpack.c.bf16 %v6032, %v6031
        %v6080 = vpack.c.bf16 %v6034, %v6033
        %v6081 = vpack.c.bf16 %v6036, %v6035
        %v6082 = vpack.c.bf16 %v6038, %v6037
        %v6083 = vpack.c.bf16 %v6040, %v6039
        %v6084 = vpack.c.bf16 %v6042, %v6041
        %v6085 = vpack.c.bf16 %v6044, %v6043
        %v6086 = vpack.c.bf16 %v6046, %v6045
        %v6087 = vpack.c.bf16 %v6048, %v6047
        %v6088 = vpack.c.bf16 %v6050, %v6049
        %v6089 = vpack.c.bf16 %v6052, %v6051
        %v6090 = vpack.c.bf16 %v6054, %v6053
        %v6091 = vpack.c.bf16 %v6056, %v6055
        %v6092 = vpack.c.bf16 %v6058, %v6057
        %v6093 = vpack.c.bf16 %v6060, %v6059
        %v6094 = vpack.c.bf16 %v6062, %v6061
        %v6095 = vpack.c.bf16 %v6064, %v6063
        %v6096 = vpack.c.bf16 %v6066, %v6065
        %v6097 = vpack.c.bf16 %v6068, %v6067
        %v6098 = vpack.c.bf16 %v6070, %v6069
        %v6099 = vpack.c.bf16 %v6072, %v6071
        %v6100 = vpack.c.bf16 %v6074, %v6073
        %v6101 = vpack.c.bf16 %v6076, %v6075
        %v6104 = vunpack.c.l.s4 1966171168
        %v6105 = vunpack.c.0.s8 %v6104
        %v6106 = vlaneseq
        %v6107 = vshrl.u32 %v6106, 7
        %v6108 = vsub.s32 %v6105, %v6107
        %v6109 = vrot.slane %v6077, %v6108
        %v6110 = vcombine.high %v6109, %v6109
        %v6112 = vunpack.c.l.s4 1966171168
        %v6113 = vunpack.c.0.s8 %v6112
        %v6114 = vlaneseq
        %v6115 = vshrl.u32 %v6114, 7
        %v6116 = vsub.s32 %v6113, %v6115
        %v6117 = vrot.slane %v6109, %v6116
        %v6119 = vunpack.c.l.s4 1966171168
        %v6120 = vunpack.c.0.s8 %v6119
        %v6121 = vlaneseq
        %v6122 = vshrl.u32 %v6121, 7
        %v6123 = vsub.s32 %v6120, %v6122
        %v6124 = vrot.slane %v6110, %v6123
        %v6125 = vcombine.high %v6117, %v6117
        %6129 = vmatprep.subr.bf16.mxu0 0
        %6130 = vmatpush1.bf16.msra.mxu0 %v6078
        %6131 = vmatprep.subr.bf16.mxu0 0
        %6132 = vmatpush1.bf16.msra.mxu0 %v6079
        %6133 = vmatprep.subr.bf16.mxu0 0
        %6134 = vmatpush1.bf16.msra.mxu0 %v6080
        %6135 = vmatprep.subr.bf16.mxu0 0
        %6136 = vmatpush1.bf16.msra.mxu0 %v6081
        %6137 = vmatprep.subr.bf16.mxu0 0
        %6138 = vmatpush1.bf16.msra.mxu0 %v6082
        %6139 = vmatprep.subr.bf16.mxu0 0
        %6140 = vmatpush1.bf16.msra.mxu0 %v6083
        %6141 = vmatprep.subr.bf16.mxu0 0
        %6142 = vmatpush1.bf16.msra.mxu0 %v6084
        %6143 = vmatprep.subr.bf16.mxu0 0
        %6144 = vmatpush1.bf16.msra.mxu0 %v6085
        %6145 = vmatprep.subr.bf16.mxu0 0
        %6146 = vmatpush1.bf16.msra.mxu0 %v6086
        %6147 = vmatprep.subr.bf16.mxu0 0
        %6148 = vmatpush1.bf16.msra.mxu0 %v6087
        %6149 = vmatprep.subr.bf16.mxu0 0
        %6150 = vmatpush1.bf16.msra.mxu0 %v6088
        %6151 = vmatprep.subr.bf16.mxu0 0
        %6152 = vmatpush1.bf16.msra.mxu0 %v6089
        %6153 = vmatprep.subr.bf16.mxu0 0
        %6154 = vmatpush1.bf16.msra.mxu0 %v6090
        %6155 = vmatprep.subr.bf16.mxu0 0
        %6156 = vmatpush1.bf16.msra.mxu0 %v6091
        %6157 = vmatprep.subr.bf16.mxu0 0
        %6158 = vmatpush1.bf16.msra.mxu0 %v6092
        %6159 = vmatprep.subr.bf16.mxu0 0
        %6160 = vmatpush1.bf16.msra.mxu0 %v6093
        %6161 = vmatprep.mubr.bf16.mxu0 %v6124
        %6162 = vmatmul.mubr.bf16.gmra.mrb[0].mxu0 %v6117
        %v6163 = vpop.f32.mrb[0].mxu0
        %v6164 = vadd.f32 0.0, %v6163
        %v6165 = vpop.f32.mrb[0].mxu0
        %v6166 = vpop.f32.mrb[0].mxu0
        %v6167 = vpop.f32.mrb[0].mxu0
        %6168 = vdwg.mxu0
        %6169 = vmatprep.subr.bf16.mxu0 0
        %6170 = vmatpush1.bf16.msra.mxu0 %v6094
        %6171 = vmatprep.subr.bf16.mxu0 0
        %6172 = vmatpush1.bf16.msra.mxu0 %v6095
        %6173 = vmatprep.subr.bf16.mxu0 0
        %6174 = vmatpush1.bf16.msra.mxu0 %v6096
        %6175 = vmatprep.subr.bf16.mxu0 0
        %6176 = vmatpush1.bf16.msra.mxu0 %v6097
        %6177 = vmatprep.subr.bf16.mxu0 0
        %6178 = vmatpush1.bf16.msra.mxu0 %v6098
        %6179 = vmatprep.subr.bf16.mxu0 0
        %6180 = vmatpush1.bf16.msra.mxu0 %v6099
        %6181 = vmatprep.subr.bf16.mxu0 0
        %6182 = vmatpush1.bf16.msra.mxu0 %v6100
        %6183 = vmatprep.subr.bf16.mxu0 0
        %6184 = vmatpush1.bf16.msra.mxu0 %v6101
        %6185 = vmatprep.subr.bf16.mxu0 0
        %6186 = vmatpush1.bf16.msra.mxu0 0
        %6187 = vmatprep.subr.bf16.mxu0 0
        %6188 = vmatpush1.bf16.msra.mxu0 0
        %6189 = vmatprep.subr.bf16.mxu0 0
        %6190 = vmatpush1.bf16.msra.mxu0 0
        %6191 = vmatprep.subr.bf16.mxu0 0
        %6192 = vmatpush1.bf16.msra.mxu0 0
        %6193 = vmatprep.subr.bf16.mxu0 0
        %6194 = vmatpush1.bf16.msra.mxu0 0
        %6195 = vmatprep.subr.bf16.mxu0 0
        %6196 = vmatpush1.bf16.msra.mxu0 0
        %6197 = vmatprep.subr.bf16.mxu0 0
        %6198 = vmatpush1.bf16.msra.mxu0 0
        %6199 = vmatprep.subr.bf16.mxu0 0
        %6200 = vmatpush1.bf16.msra.mxu0 0
        %6201 = vmatprep.mubr.bf16.mxu0 0
        %6202 = vmatmul.mubr.bf16.gmra.mrb[0].mxu0 %v6125
        %v6203 = vpop.f32.mrb[0].mxu0
        %v6204 = vadd.f32 %v6164, %v6203
        %v6205 = vpop.f32.mrb[0].mxu0
        %v6206 = vpop.f32.mrb[0].mxu0
        %v6207 = vpop.f32.mrb[0].mxu0
        %6208 = vdwg.mxu0
        %v6209 = vld [vmem:[%s13] sm:$0xff]
        %v6210 = vld [vmem:[%s13 + $0x8] sm:$0xff]
        %v6211 = vld [vmem:[%s13 + $0x10] sm:$0xff]
        %v6212 = vld [vmem:[%s13 + $0x18] sm:$0xff]
        %v6213 = vld [vmem:[%s13 + $0x20] sm:$0xff]
        %v6214 = vld [vmem:[%s13 + $0x28] sm:$0xff]
        %v6215 = vld [vmem:[%s13 + $0x30] sm:$0xff]
        %v6216 = vld [vmem:[%s13 + $0x38] sm:$0xff]
        %v6217 = vld [vmem:[%s13 + $0x40] sm:$0xff]
        %v6218 = vld [vmem:[%s13 + $0x48] sm:$0xff]
        %v6219 = vld [vmem:[%s13 + $0x50] sm:$0xff]
        %v6220 = vld [vmem:[%s13 + $0x58] sm:$0xff]
        %v6221 = vld [vmem:[%s13 + $0x60] sm:$0xff]
        %v6222 = vld [vmem:[%s13 + $0x68] sm:$0xff]
        %v6223 = vld [vmem:[%s13 + $0x70] sm:$0xff]
        %v6224 = vld [vmem:[%s13 + $0x78] sm:$0xff]
        %v6225 = vld [vmem:[%s14] sm:$0x1]
        %6226 = vmatprep.subr.mxu0 0.0
        %6227 = vmatpush1.msra.mxu0 %v6209
        %6228 = vmatprep.subr.mxu0 0.0
        %6229 = vmatpush1.msra.mxu0 %v6210
        %6230 = vmatprep.subr.mxu0 0.0
        %6231 = vmatpush1.msra.mxu0 %v6211
        %6232 = vmatprep.subr.mxu0 0.0
        %6233 = vmatpush1.msra.mxu0 %v6212
        %6234 = vmatprep.subr.mxu0 0.0
        %6235 = vmatpush1.msra.mxu0 %v6213
        %6236 = vmatprep.subr.mxu0 0.0
        %6237 = vmatpush1.msra.mxu0 %v6214
        %6238 = vmatprep.subr.mxu0 0.0
        %6239 = vmatpush1.msra.mxu0 %v6215
        %6240 = vmatprep.subr.mxu0 0.0
        %6241 = vmatpush1.msra.mxu0 %v6216
        %6242 = vmatprep.subr.mxu0 0.0
        %6243 = vmatpush1.msra.mxu0 %v6217
        %6244 = vmatprep.subr.mxu0 0.0
        %6245 = vmatpush1.msra.mxu0 %v6218
        %6246 = vmatprep.subr.mxu0 0.0
        %6247 = vmatpush1.msra.mxu0 %v6219
        %6248 = vmatprep.subr.mxu0 0.0
        %6249 = vmatpush1.msra.mxu0 %v6220
        %6250 = vmatprep.subr.mxu0 0.0
        %6251 = vmatpush1.msra.mxu0 %v6221
        %6252 = vmatprep.subr.mxu0 0.0
        %6253 = vmatpush1.msra.mxu0 %v6222
        %6254 = vmatprep.subr.mxu0 0.0
        %6255 = vmatpush1.msra.mxu0 %v6223
        %6256 = vmatprep.subr.mxu0 0.0
        %6257 = vmatpush1.msra.mxu0 %v6224
        %6258 = vmatprep.subr.mxu0 0.0
        %6259 = vmatpush1.msra.mxu0 0.0
        %6260 = vmatprep.subr.mxu0 0.0
        %6261 = vmatpush1.msra.mxu0 0.0
        %6262 = vmatprep.subr.mxu0 0.0
        %6263 = vmatpush1.msra.mxu0 0.0
        %6264 = vmatprep.subr.mxu0 0.0
        %6265 = vmatpush1.msra.mxu0 0.0
        %6266 = vmatprep.subr.mxu0 0.0
        %6267 = vmatpush1.msra.mxu0 0.0
        %6268 = vmatprep.subr.mxu0 0.0
        %6269 = vmatpush1.msra.mxu0 0.0
        %6270 = vmatprep.subr.mxu0 0.0
        %6271 = vmatpush1.msra.mxu0 0.0
        %6272 = vmatprep.subr.mxu0 0.0
        %6273 = vmatpush1.msra.mxu0 0.0
        %6274 = vmatprep.subr.mxu0 0.0
        %6275 = vmatpush1.msra.mxu0 0.0
        %6276 = vmatprep.subr.mxu0 0.0
        %6277 = vmatpush1.msra.mxu0 0.0
        %6278 = vmatprep.subr.mxu0 0.0
        %6279 = vmatpush1.msra.mxu0 0.0
        %6280 = vmatprep.subr.mxu0 0.0
        %6281 = vmatpush1.msra.mxu0 0.0
        %6282 = vmatprep.subr.mxu0 0.0
        %6283 = vmatpush1.msra.mxu0 0.0
        %6284 = vmatprep.subr.mxu0 0.0
        %6285 = vmatpush1.msra.mxu0 0.0
        %6286 = vmatprep.subr.mxu0 0.0
        %6287 = vmatpush1.msra.mxu0 0.0
        %6288 = vmatprep.subr.mxu0 0.0
        %6289 = vmatpush1.msra.mxu0 0.0
        %6290 = vmatprep.mubr.f32.mxu0 0.0
        %6291 = vmatmul.mubr.f32.gmra.mrb[0].mxu0 %v6204
        %v6292 = vpop.f32.mrb[0].mxu0
        %v6293 = vadd.f32 %v6225, %v6292
        %v6294 = vpop.f32.mrb[0].mxu0
        %6295 = vdwg.mxu0
        %v6296 = vxor.u32 %v6293, 2147483648
        %v6297 = vmul.f32 %v6296, 1.442695
        %v6298 = vpow.pop %v6297
        %v6299 = vadd.f32 %v6298, 1.0
        %v6300 = vrcp.pop %v6299
        %v6301 = vmul.f32 1.0, %v6300
        %vm6302 = vcmask 32768
        %6303 = vst.msk [vmem:[%s486] sm:$0x1] %vm6302, %v6301
        %s6304 = sand.u32 %s357, 1
        %s6305 = scalar_lea.sflag [#allocation5], %s6304
        %s6306 = sand.u32 %s357, 1
        %s6307 = scalar_lea.vmem [#allocation4], %s6306
        // Predicated region
        $region81: #{stgcn_forward.1} parent=79 // pred_check
          %p6308 = pneg %p367
        $region82: #{stgcn_forward.1} parent=79 // pred_check_branch
          %6310 = sbr.rel (%p6308) target = $region84
        $region83: #{stgcn_forward.1} parent=79 // pred_region
          %s6312 = ssub.s32 16, 16
          %6313 = vsyncadd %s6305, %s6312
          %s6314 = smul.addr %s29, 16
          %s6315 = scalar_lea.hbm %s15, %s6314
          %s6317 = sshll.u32 %s6307, 4
          %s6318 = int_to_ptr.vmem [resolvable:$true] %s6317
          %6320 = dma.vmem_to_hbm [thread:$0]  %s6318, 16, %s6315, %s6305
        $region84: #{stgcn_forward.1} parent=79 // pred_fallthru
          _
      $region80: #{stgcn_forward.1} parent=5 // pred_fallthru
        _
      %p6321 = scmp.le.s32.totalorder 2, %s24
      // Predicated region
      $region85: #{stgcn_forward.1} parent=5 // pred_check
        %p6322 = pneg %p6321
      $region86: #{stgcn_forward.1} parent=5 // pred_check_branch
        %6324 = sbr.rel (%p6322) target = $region88
      $region87: #{stgcn_forward.1} parent=5 // pred_region
        %s6325 = ssub.s32 %s24, 2
        // Predicated region
        $region89: #{stgcn_forward.1} parent=87 // pred_check
          %p6326 = pneg %p373
        $region90: #{stgcn_forward.1} parent=87 // pred_check_branch
          %6328 = sbr.rel (%p6326) target = $region92
        $region91: #{stgcn_forward.1} parent=87 // pred_region
          %s6329 = sand.u32 %s358, 1
          %s6330 = scalar_lea.sflag [#allocation5], %s6329
          %s6331 = sand.u32 %s358, 1
          %s6332 = scalar_lea.vmem [#allocation4], %s6331
          %6333 = dma.done %s6330, 16
        $region92: #{stgcn_forward.1} parent=87 // pred_fallthru
          _
      $region88: #{stgcn_forward.1} parent=5 // pred_fallthru
        _
    $region6: #{stgcn_forward.1} parent=1 // loop_footer
      %s28 = sadd.s32 1, %s24
    $region7: #{stgcn_forward.1} parent=1 // loop_footer_branch
      %23 = sbr.rel target = $region3
    $region8: #{stgcn_forward.1} parent=1 // loop_exit
      _
    %6334 = vsyncpa [#allocation5], 1
    %s6335 = scalar_lea.sflag [#allocation5], 1
    %6336 = vsyncpa %s6335, 1

</llo_original>
